<compile_context>
chip_gen: v7x
topology: tpu7x:2x2x1
jax: 0.10.0
libtpu: 0.0.40
codegen_flags: <defaults>
</compile_context>

<pallas_src>
import functools

import jax
import jax.numpy as jnp
from jax.experimental import pallas as pl
from jax.experimental.pallas import tpu as pltpu


def _round_up(x, m):
    return ((x + m - 1) // m) * m


def _dense_block_kernel(x_ref, w_ref, b_ref, o_ref, a_ref,
                        *, H, W, WP, C, CPAD, L):
    """Fused [conv3x3(pad=1) + ReLU] * L for one batch element.

    Grid = (B,). The padded activation lives in the f32 VMEM scratch `a_ref`
    for the entire layer sweep; each layer is 9 tap-accumulated bf16 MXU
    matmuls over the "wide" (row-stride = WP) flattened activation.

      x_ref : (1, (H+2)*WP, C)      spatially padded, C-channel input
      w_ref : (L*9, CPAD, CPAD)     all layers' per-tap weights, bf16
      b_ref : (L, 1, CPAD)          all layers' biases, f32
      o_ref : (1, H*WP, C)          wide output, only the C real channels
      a_ref : (A_ROWS, CPAD)        persistent padded activation scratch (f32)
    """
    HP = H + 2
    HPWP = HP * WP
    N_WIDE = H * WP

    # ---- stage input: zero the whole scratch (padding ring, pad channels,
    # tail rows), then one narrow (C-lane) store of the real channels ---------
    a_ref[...] = jnp.zeros_like(a_ref)
    a_ref[pl.ds(0, HPWP), pl.ds(0, C)] = x_ref[0].astype(jnp.float32)

    # ---- L x (conv3x3 + bias + ReLU), everything stays in VMEM --------------
    for l in range(L):
        acc = None
        for dy in range(3):
            for dx in range(3):
                t = 9 * l + 3 * dy + dx
                # Tap (dy, dx) is a contiguous row slice of the flattened
                # padded activation at static offset dy*WP + dx.
                lhs = a_ref[pl.ds(dy * WP + dx, N_WIDE), :].astype(jnp.bfloat16)
                d = jnp.dot(lhs, w_ref[t], preferred_element_type=jnp.float32)
                acc = d if acc is None else acc + d
        out = jnp.maximum(acc + b_ref[l], 0.0)            # f32 epilogue

        if l < L - 1:
            # Feed the next layer: wide row stride == padded row stride, so a
            # single contiguous store into the interior (starting at WP+1);
            # the garbage wide columns land exactly in the padding ring and
            # are zeroed so the ring stays zero between layers.
            col = jax.lax.broadcasted_iota(jnp.int32, (N_WIDE, CPAD), 0) % WP
            a_ref[pl.ds(WP + 1, N_WIDE), :] = jnp.where(col < W, out, 0.0)
        else:
            # Emit only the C real channels (masked narrow store, but ~CPAD/C
            # times less HBM traffic than a CPAD-wide output when C << 128).
            o_ref[0] = out[:, :C].astype(o_ref.dtype)


@jax.jit
def _dense_block_forward(x_nchw, w_stack, b_stack):
    B, C, H, W = x_nchw.shape
    CPAD = w_stack.shape[-1]
    L = b_stack.shape[0]
    WP = _round_up(W + 2, 8)          # internal padded width, sublane-aligned
    HP = H + 2
    HPWP = HP * WP
    N_WIDE = H * WP
    A_ROWS = _round_up(HPWP + 2, 8)   # +2 so tap (2,2) never reads OOB

    # NCHW -> NHWC; ONE spatial halo pad for the whole fused block.  Channels
    # stay at the real C -- the channel pad to CPAD happens inside the kernel.
    x_nhwc = jnp.transpose(x_nchw, (0, 2, 3, 1))
    xp = jnp.pad(x_nhwc, ((0, 0), (1, 1), (1, WP - 1 - W), (0, 0)))
    xp = xp.reshape(B, HPWP, C)

    kernel = functools.partial(_dense_block_kernel,
                               H=H, W=W, WP=WP, C=C, CPAD=CPAD, L=L)
    out_wide = pl.pallas_call(
        kernel,
        out_shape=jax.ShapeDtypeStruct((B, N_WIDE, C), x_nchw.dtype),
        grid=(B,),
        in_specs=[
            pl.BlockSpec((1, HPWP, C), lambda b: (b, 0, 0)),           # input
            pl.BlockSpec((L * 9, CPAD, CPAD), lambda b: (0, 0, 0)),    # weights (bf16, resident)
            pl.BlockSpec((L, 1, CPAD), lambda b: (0, 0, 0)),           # biases (f32, resident)
        ],
        out_specs=pl.BlockSpec((1, N_WIDE, C), lambda b: (b, 0, 0)),
        scratch_shapes=[
            pltpu.VMEM((A_ROWS, CPAD), jnp.float32),   # persistent padded activation
        ],
        compiler_params=pltpu.CompilerParams(
            dimension_semantics=("parallel",)),
    )(xp, w_stack, b_stack)

    # (B, H*WP, C) -> drop the wide garbage columns, back to NCHW.
    out = out_wide.reshape(B, H, WP, C)[:, :, :W, :]
    return jnp.transpose(out, (0, 3, 1, 2))


class DenseBlockPallas:
    """Sequential [Conv2d(C, C, 3, padding=1) -> ReLU] * num_layers (fused)."""

    def __init__(self, in_channels, num_layers, key):
        self.C = in_channels
        self.CPAD = _round_up(max(in_channels, 1), 128)
        self.params = []                 # [(w_hwio, b)] f32, for the reference
        fan_in = in_channels * 9
        bound = 1.0 / (fan_in ** 0.5)    # mimic PyTorch default init range
        w_taps, b_vecs = [], []
        for _ in range(num_layers):
            key, kw, kb = jax.random.split(key, 3)
            w_oihw = jax.random.uniform(kw, (in_channels, in_channels, 3, 3),
                                        jnp.float32, -bound, bound)
            b = jax.random.uniform(kb, (in_channels,), jnp.float32, -bound, bound)
            w_hwio = jnp.transpose(w_oihw, (2, 3, 1, 0))     # (3,3,Cin,Cout)
            self.params.append((w_hwio, b))
            # Zero-pad channels to CPAD; one (CPAD, CPAD) matrix per tap.
            w_pad = jnp.zeros((3, 3, self.CPAD, self.CPAD), jnp.float32)
            w_pad = w_pad.at[:, :, :in_channels, :in_channels].set(w_hwio)
            w_taps.append(w_pad.reshape(9, self.CPAD, self.CPAD))
            b_vecs.append(jnp.zeros((self.CPAD,), jnp.float32)
                          .at[:in_channels].set(b))
        # (L*9, CPAD, CPAD) bf16 MXU weights; (L, 1, CPAD) f32 biases.
        self.w_stack = jnp.concatenate(w_taps, axis=0).astype(jnp.bfloat16)
        self.b_stack = jnp.stack(b_vecs)[:, None, :]

    def __call__(self, x_nchw):
        return _dense_block_forward(x_nchw, self.w_stack, self.b_stack)


def _reference(x_nchw, params):
    """Pure-JAX f32 reference (lax conv) matching PyTorch DenseBlock.forward."""
    x = x_nchw
    for w_hwio, b in params:
        w_oihw = jnp.transpose(w_hwio, (3, 2, 0, 1))
        x = jax.lax.conv_general_dilated(
            x, w_oihw, window_strides=(1, 1), padding="SAME",
            dimension_numbers=("NCHW", "OIHW", "NCHW"))
        x = jax.nn.relu(x + b[None, :, None, None])
    return x


if __name__ == "__main__":
    key = jax.random.PRNGKey(0)
    k_x, k_p = jax.random.split(key)

    B, C, H, W = 2, 4, 16, 16
    num_layers = 2
    x = jax.random.normal(k_x, (B, C, H, W), jnp.float32)

    block = DenseBlockPallas(in_channels=C, num_layers=num_layers, key=k_p)

    out = jax.block_until_ready(block(x))
    ref = jax.block_until_ready(_reference(x, block.params))

    assert out.shape == (B, C, H, W)
    # bf16 MXU operands (f32 accumulate / f32 activation master copy): loosen
    # tolerance vs. the f32 reference.
    assert jnp.allclose(out, ref, atol=5e-2, rtol=5e-2), \
        float(jnp.max(jnp.abs(out - ref)))

    print("KERNEL_OK")
</pallas_src>

<mosaic_0001>
module attributes {stable_mosaic.version = 11 : i64} {
  func.func @_dense_block_kernel(%arg0: i32, %arg1: memref<1x432x4xf32, #tpu.memory_space<vmem>>, %arg2: memref<18x128x128xbf16, #tpu.memory_space<vmem>>, %arg3: memref<2x1x128xf32, #tpu.memory_space<vmem>>, %arg4: memref<1x384x4xf32, #tpu.memory_space<vmem>>, %arg5: memref<440x128xf32, #tpu.memory_space<vmem>>) attributes {dimension_semantics = [#tpu.dimension_semantics<parallel>], iteration_bounds = array<i64: 2>, scalar_prefetch = 0 : i64, scratch_operands = 1 : i64, tpu.core_type = #tpu.core_type<tc>, window_params = [{transform_indices = @transform_0, window_bounds = array<i64: 1, 432, 4>}, {pipeline_mode = #tpu.pipeline_mode<synchronous>, transform_indices = @transform_1, window_bounds = array<i64: 18, 128, 128>}, {pipeline_mode = #tpu.pipeline_mode<synchronous>, transform_indices = @transform_2, window_bounds = array<i64: 2, 1, 128>}, {transform_indices = @transform_3, window_bounds = array<i64: 1, 384, 4>}]} {
    %cst = arith.constant 0.000000e+00 : f32
    %0 = vector.broadcast %cst : f32 to vector<440x128xf32>
    %c0 = arith.constant 0 : index
    %c0_0 = arith.constant 0 : index
    %1 = vector.load %arg5[%c0, %c0_0] : memref<440x128xf32, #tpu.memory_space<vmem>>, vector<440x128xf32>
    tpu.vector_store %arg5[%c0, %c0_0], %0 {strides = array<i32>} : memref<440x128xf32, #tpu.memory_space<vmem>>, vector<440x128xf32>,
    %c0_1 = arith.constant 0 : index
    %c0_2 = arith.constant 0 : index
    %c0_3 = arith.constant 0 : index
    %2 = vector.load %arg1[%c0_1, %c0_2, %c0_3] : memref<1x432x4xf32, #tpu.memory_space<vmem>>, vector<1x432x4xf32>
    %3 = vector.shape_cast %2 : vector<1x432x4xf32> to vector<432x4xf32>
    %c0_4 = arith.constant 0 : index
    %c0_5 = arith.constant 0 : index
    %4 = vector.load %arg5[%c0_4, %c0_5] : memref<440x128xf32, #tpu.memory_space<vmem>>, vector<432x4xf32>
    tpu.vector_store %arg5[%c0_4, %c0_5], %3 {strides = array<i32>} : memref<440x128xf32, #tpu.memory_space<vmem>>, vector<432x4xf32>,
    %c0_6 = arith.constant 0 : index
    %c0_7 = arith.constant 0 : index
    %5 = vector.load %arg5[%c0_6, %c0_7] : memref<440x128xf32, #tpu.memory_space<vmem>>, vector<384x128xf32>
    %6 = arith.truncf %5 : vector<384x128xf32> to vector<384x128xbf16>
    %c0_8 = arith.constant 0 : index
    %c0_9 = arith.constant 0 : index
    %c0_10 = arith.constant 0 : index
    %7 = vector.load %arg2[%c0_8, %c0_9, %c0_10] : memref<18x128x128xbf16, #tpu.memory_space<vmem>>, vector<1x128x128xbf16>
    %8 = vector.shape_cast %7 : vector<1x128x128xbf16> to vector<128x128xbf16>
    %cst_11 = arith.constant dense<0.000000e+00> : vector<384x128xf32>
    %9 = tpu.matmul %6, %8, %cst_11 {dimension_numbers = #tpu.dot_dimension_numbers<[1], [0], [0], [1], [0, 0, 1, 1], [], []>} : vector<384x128xbf16>, vector<128x128xbf16>, vector<384x128xf32> -> vector<384x128xf32>
    %c1 = arith.constant 1 : index
    %c0_12 = arith.constant 0 : index
    %10 = vector.load %arg5[%c1, %c0_12] : memref<440x128xf32, #tpu.memory_space<vmem>>, vector<384x128xf32>
    %11 = arith.truncf %10 : vector<384x128xf32> to vector<384x128xbf16>
    %c1_13 = arith.constant 1 : index
    %c0_14 = arith.constant 0 : index
    %c0_15 = arith.constant 0 : index
    %12 = vector.load %arg2[%c1_13, %c0_14, %c0_15] : memref<18x128x128xbf16, #tpu.memory_space<vmem>>, vector<1x128x128xbf16>
    %13 = vector.shape_cast %12 : vector<1x128x128xbf16> to vector<128x128xbf16>
    %cst_16 = arith.constant dense<0.000000e+00> : vector<384x128xf32>
    %14 = tpu.matmul %11, %13, %cst_16 {dimension_numbers = #tpu.dot_dimension_numbers<[1], [0], [0], [1], [0, 0, 1, 1], [], []>} : vector<384x128xbf16>, vector<128x128xbf16>, vector<384x128xf32> -> vector<384x128xf32>
    %15 = arith.addf %9, %14 : vector<384x128xf32>
    %c2 = arith.constant 2 : index
    %c0_17 = arith.constant 0 : index
    %16 = vector.load %arg5[%c2, %c0_17] : memref<440x128xf32, #tpu.memory_space<vmem>>, vector<384x128xf32>
    %17 = arith.truncf %16 : vector<384x128xf32> to vector<384x128xbf16>
    %c2_18 = arith.constant 2 : index
    %c0_19 = arith.constant 0 : index
    %c0_20 = arith.constant 0 : index
    %18 = vector.load %arg2[%c2_18, %c0_19, %c0_20] : memref<18x128x128xbf16, #tpu.memory_space<vmem>>, vector<1x128x128xbf16>
    %19 = vector.shape_cast %18 : vector<1x128x128xbf16> to vector<128x128xbf16>
    %cst_21 = arith.constant dense<0.000000e+00> : vector<384x128xf32>
    %20 = tpu.matmul %17, %19, %cst_21 {dimension_numbers = #tpu.dot_dimension_numbers<[1], [0], [0], [1], [0, 0, 1, 1], [], []>} : vector<384x128xbf16>, vector<128x128xbf16>, vector<384x128xf32> -> vector<384x128xf32>
    %21 = arith.addf %15, %20 : vector<384x128xf32>
    %c24 = arith.constant 24 : index
    %c0_22 = arith.constant 0 : index
    %22 = vector.load %arg5[%c24, %c0_22] : memref<440x128xf32, #tpu.memory_space<vmem>>, vector<384x128xf32>
    %23 = arith.truncf %22 : vector<384x128xf32> to vector<384x128xbf16>
    %c3 = arith.constant 3 : index
    %c0_23 = arith.constant 0 : index
    %c0_24 = arith.constant 0 : index
    %24 = vector.load %arg2[%c3, %c0_23, %c0_24] : memref<18x128x128xbf16, #tpu.memory_space<vmem>>, vector<1x128x128xbf16>
    %25 = vector.shape_cast %24 : vector<1x128x128xbf16> to vector<128x128xbf16>
    %cst_25 = arith.constant dense<0.000000e+00> : vector<384x128xf32>
    %26 = tpu.matmul %23, %25, %cst_25 {dimension_numbers = #tpu.dot_dimension_numbers<[1], [0], [0], [1], [0, 0, 1, 1], [], []>} : vector<384x128xbf16>, vector<128x128xbf16>, vector<384x128xf32> -> vector<384x128xf32>
    %27 = arith.addf %21, %26 : vector<384x128xf32>
    %c25 = arith.constant 25 : index
    %c0_26 = arith.constant 0 : index
    %28 = vector.load %arg5[%c25, %c0_26] : memref<440x128xf32, #tpu.memory_space<vmem>>, vector<384x128xf32>
    %29 = arith.truncf %28 : vector<384x128xf32> to vector<384x128xbf16>
    %c4 = arith.constant 4 : index
    %c0_27 = arith.constant 0 : index
    %c0_28 = arith.constant 0 : index
    %30 = vector.load %arg2[%c4, %c0_27, %c0_28] : memref<18x128x128xbf16, #tpu.memory_space<vmem>>, vector<1x128x128xbf16>
    %31 = vector.shape_cast %30 : vector<1x128x128xbf16> to vector<128x128xbf16>
    %cst_29 = arith.constant dense<0.000000e+00> : vector<384x128xf32>
    %32 = tpu.matmul %29, %31, %cst_29 {dimension_numbers = #tpu.dot_dimension_numbers<[1], [0], [0], [1], [0, 0, 1, 1], [], []>} : vector<384x128xbf16>, vector<128x128xbf16>, vector<384x128xf32> -> vector<384x128xf32>
    %33 = arith.addf %27, %32 : vector<384x128xf32>
    %c26 = arith.constant 26 : index
    %c0_30 = arith.constant 0 : index
    %34 = vector.load %arg5[%c26, %c0_30] : memref<440x128xf32, #tpu.memory_space<vmem>>, vector<384x128xf32>
    %35 = arith.truncf %34 : vector<384x128xf32> to vector<384x128xbf16>
    %c5 = arith.constant 5 : index
    %c0_31 = arith.constant 0 : index
    %c0_32 = arith.constant 0 : index
    %36 = vector.load %arg2[%c5, %c0_31, %c0_32] : memref<18x128x128xbf16, #tpu.memory_space<vmem>>, vector<1x128x128xbf16>
    %37 = vector.shape_cast %36 : vector<1x128x128xbf16> to vector<128x128xbf16>
    %cst_33 = arith.constant dense<0.000000e+00> : vector<384x128xf32>
    %38 = tpu.matmul %35, %37, %cst_33 {dimension_numbers = #tpu.dot_dimension_numbers<[1], [0], [0], [1], [0, 0, 1, 1], [], []>} : vector<384x128xbf16>, vector<128x128xbf16>, vector<384x128xf32> -> vector<384x128xf32>
    %39 = arith.addf %33, %38 : vector<384x128xf32>
    %c48 = arith.constant 48 : index
    %c0_34 = arith.constant 0 : index
    %40 = vector.load %arg5[%c48, %c0_34] : memref<440x128xf32, #tpu.memory_space<vmem>>, vector<384x128xf32>
    %41 = arith.truncf %40 : vector<384x128xf32> to vector<384x128xbf16>
    %c6 = arith.constant 6 : index
    %c0_35 = arith.constant 0 : index
    %c0_36 = arith.constant 0 : index
    %42 = vector.load %arg2[%c6, %c0_35, %c0_36] : memref<18x128x128xbf16, #tpu.memory_space<vmem>>, vector<1x128x128xbf16>
    %43 = vector.shape_cast %42 : vector<1x128x128xbf16> to vector<128x128xbf16>
    %cst_37 = arith.constant dense<0.000000e+00> : vector<384x128xf32>
    %44 = tpu.matmul %41, %43, %cst_37 {dimension_numbers = #tpu.dot_dimension_numbers<[1], [0], [0], [1], [0, 0, 1, 1], [], []>} : vector<384x128xbf16>, vector<128x128xbf16>, vector<384x128xf32> -> vector<384x128xf32>
    %45 = arith.addf %39, %44 : vector<384x128xf32>
    %c49 = arith.constant 49 : index
    %c0_38 = arith.constant 0 : index
    %46 = vector.load %arg5[%c49, %c0_38] : memref<440x128xf32, #tpu.memory_space<vmem>>, vector<384x128xf32>
    %47 = arith.truncf %46 : vector<384x128xf32> to vector<384x128xbf16>
    %c7 = arith.constant 7 : index
    %c0_39 = arith.constant 0 : index
    %c0_40 = arith.constant 0 : index
    %48 = vector.load %arg2[%c7, %c0_39, %c0_40] : memref<18x128x128xbf16, #tpu.memory_space<vmem>>, vector<1x128x128xbf16>
    %49 = vector.shape_cast %48 : vector<1x128x128xbf16> to vector<128x128xbf16>
    %cst_41 = arith.constant dense<0.000000e+00> : vector<384x128xf32>
    %50 = tpu.matmul %47, %49, %cst_41 {dimension_numbers = #tpu.dot_dimension_numbers<[1], [0], [0], [1], [0, 0, 1, 1], [], []>} : vector<384x128xbf16>, vector<128x128xbf16>, vector<384x128xf32> -> vector<384x128xf32>
    %51 = arith.addf %45, %50 : vector<384x128xf32>
    %c50 = arith.constant 50 : index
    %c0_42 = arith.constant 0 : index
    %52 = vector.load %arg5[%c50, %c0_42] : memref<440x128xf32, #tpu.memory_space<vmem>>, vector<384x128xf32>
    %53 = arith.truncf %52 : vector<384x128xf32> to vector<384x128xbf16>
    %c8 = arith.constant 8 : index
    %c0_43 = arith.constant 0 : index
    %c0_44 = arith.constant 0 : index
    %54 = vector.load %arg2[%c8, %c0_43, %c0_44] : memref<18x128x128xbf16, #tpu.memory_space<vmem>>, vector<1x128x128xbf16>
    %55 = vector.shape_cast %54 : vector<1x128x128xbf16> to vector<128x128xbf16>
    %cst_45 = arith.constant dense<0.000000e+00> : vector<384x128xf32>
    %56 = tpu.matmul %53, %55, %cst_45 {dimension_numbers = #tpu.dot_dimension_numbers<[1], [0], [0], [1], [0, 0, 1, 1], [], []>} : vector<384x128xbf16>, vector<128x128xbf16>, vector<384x128xf32> -> vector<384x128xf32>
    %57 = arith.addf %51, %56 : vector<384x128xf32>
    %c0_46 = arith.constant 0 : index
    %c0_47 = arith.constant 0 : index
    %c0_48 = arith.constant 0 : index
    %58 = vector.load %arg3[%c0_46, %c0_47, %c0_48] : memref<2x1x128xf32, #tpu.memory_space<vmem>>, vector<1x1x128xf32>
    %59 = vector.shape_cast %58 : vector<1x1x128xf32> to vector<1x128xf32>
    %60 = vector.broadcast %59 : vector<1x128xf32> to vector<384x128xf32>
    %61 = arith.addf %57, %60 : vector<384x128xf32>
    %cst_49 = arith.constant 0.000000e+00 : f32
    %62 = vector.broadcast %cst_49 : f32 to vector<384x128xf32>
    %63 = arith.maximumf %61, %62 : vector<384x128xf32>
    %64 = tpu.iota {dimensions = array<i32: 0>} : vector<384x128xi32>
    %c24_i32 = arith.constant 24 : i32
    %c0_i32 = arith.constant 0 : i32
    %65 = arith.cmpi eq, %c24_i32, %c0_i32 : i32
    %c1_i32 = arith.constant 1 : i32
    %66 = arith.select %65, %c1_i32, %c24_i32 : i32
    %67 = vector.broadcast %66 : i32 to vector<384x128xi32>
    %68 = arith.remsi %64, %67 : vector<384x128xi32>
    %c0_i32_50 = arith.constant 0 : i32
    %69 = vector.broadcast %c0_i32_50 : i32 to vector<384x128xi32>
    %70 = arith.cmpi ne, %68, %69 : vector<384x128xi32>
    %c0_i32_51 = arith.constant 0 : i32
    %71 = vector.broadcast %c0_i32_51 : i32 to vector<384x128xi32>
    %72 = arith.cmpi slt, %68, %71 : vector<384x128xi32>
    %c0_i32_52 = arith.constant 0 : i32
    %73 = arith.cmpi slt, %66, %c0_i32_52 : i32
    %74 = vector.broadcast %73 : i1 to vector<384x128xi1>
    %75 = vector.broadcast %74 : vector<384x128xi1> to vector<384x128xi1>
    %76 = arith.xori %72, %75 : vector<384x128xi1>
    %77 = arith.andi %76, %70 : vector<384x128xi1>
    %78 = vector.broadcast %66 : i32 to vector<384x128xi32>
    %79 = arith.addi %68, %78 : vector<384x128xi32>
    %80 = arith.select %77, %79, %68 : vector<384x128xi1>, vector<384x128xi32>
    %c16_i32 = arith.constant 16 : i32
    %81 = vector.broadcast %c16_i32 : i32 to vector<384x128xi32>
    %82 = arith.cmpi slt, %80, %81 : vector<384x128xi32>
    %cst_53 = arith.constant 0.000000e+00 : f32
    %83 = vector.broadcast %cst_53 : f32 to vector<384x128xf32>
    %84 = arith.select %82, %63, %83 : vector<384x128xi1>, vector<384x128xf32>
    %c25_54 = arith.constant 25 : index
    %c0_55 = arith.constant 0 : index
    %85 = vector.load %arg5[%c25_54, %c0_55] : memref<440x128xf32, #tpu.memory_space<vmem>>, vector<384x128xf32>
    tpu.vector_store %arg5[%c25_54, %c0_55], %84 {strides = array<i32>} : memref<440x128xf32, #tpu.memory_space<vmem>>, vector<384x128xf32>,
    %c0_56 = arith.constant 0 : index
    %c0_57 = arith.constant 0 : index
    %86 = vector.load %arg5[%c0_56, %c0_57] : memref<440x128xf32, #tpu.memory_space<vmem>>, vector<384x128xf32>
    %87 = arith.truncf %86 : vector<384x128xf32> to vector<384x128xbf16>
    %c9 = arith.constant 9 : index
    %c0_58 = arith.constant 0 : index
    %c0_59 = arith.constant 0 : index
    %88 = vector.load %arg2[%c9, %c0_58, %c0_59] : memref<18x128x128xbf16, #tpu.memory_space<vmem>>, vector<1x128x128xbf16>
    %89 = vector.shape_cast %88 : vector<1x128x128xbf16> to vector<128x128xbf16>
    %cst_60 = arith.constant dense<0.000000e+00> : vector<384x128xf32>
    %90 = tpu.matmul %87, %89, %cst_60 {dimension_numbers = #tpu.dot_dimension_numbers<[1], [0], [0], [1], [0, 0, 1, 1], [], []>} : vector<384x128xbf16>, vector<128x128xbf16>, vector<384x128xf32> -> vector<384x128xf32>
    %c1_61 = arith.constant 1 : index
    %c0_62 = arith.constant 0 : index
    %91 = vector.load %arg5[%c1_61, %c0_62] : memref<440x128xf32, #tpu.memory_space<vmem>>, vector<384x128xf32>
    %92 = arith.truncf %91 : vector<384x128xf32> to vector<384x128xbf16>
    %c10 = arith.constant 10 : index
    %c0_63 = arith.constant 0 : index
    %c0_64 = arith.constant 0 : index
    %93 = vector.load %arg2[%c10, %c0_63, %c0_64] : memref<18x128x128xbf16, #tpu.memory_space<vmem>>, vector<1x128x128xbf16>
    %94 = vector.shape_cast %93 : vector<1x128x128xbf16> to vector<128x128xbf16>
    %cst_65 = arith.constant dense<0.000000e+00> : vector<384x128xf32>
    %95 = tpu.matmul %92, %94, %cst_65 {dimension_numbers = #tpu.dot_dimension_numbers<[1], [0], [0], [1], [0, 0, 1, 1], [], []>} : vector<384x128xbf16>, vector<128x128xbf16>, vector<384x128xf32> -> vector<384x128xf32>
    %96 = arith.addf %90, %95 : vector<384x128xf32>
    %c2_66 = arith.constant 2 : index
    %c0_67 = arith.constant 0 : index
    %97 = vector.load %arg5[%c2_66, %c0_67] : memref<440x128xf32, #tpu.memory_space<vmem>>, vector<384x128xf32>
    %98 = arith.truncf %97 : vector<384x128xf32> to vector<384x128xbf16>
    %c11 = arith.constant 11 : index
    %c0_68 = arith.constant 0 : index
    %c0_69 = arith.constant 0 : index
    %99 = vector.load %arg2[%c11, %c0_68, %c0_69] : memref<18x128x128xbf16, #tpu.memory_space<vmem>>, vector<1x128x128xbf16>
    %100 = vector.shape_cast %99 : vector<1x128x128xbf16> to vector<128x128xbf16>
    %cst_70 = arith.constant dense<0.000000e+00> : vector<384x128xf32>
    %101 = tpu.matmul %98, %100, %cst_70 {dimension_numbers = #tpu.dot_dimension_numbers<[1], [0], [0], [1], [0, 0, 1, 1], [], []>} : vector<384x128xbf16>, vector<128x128xbf16>, vector<384x128xf32> -> vector<384x128xf32>
    %102 = arith.addf %96, %101 : vector<384x128xf32>
    %c24_71 = arith.constant 24 : index
    %c0_72 = arith.constant 0 : index
    %103 = vector.load %arg5[%c24_71, %c0_72] : memref<440x128xf32, #tpu.memory_space<vmem>>, vector<384x128xf32>
    %104 = arith.truncf %103 : vector<384x128xf32> to vector<384x128xbf16>
    %c12 = arith.constant 12 : index
    %c0_73 = arith.constant 0 : index
    %c0_74 = arith.constant 0 : index
    %105 = vector.load %arg2[%c12, %c0_73, %c0_74] : memref<18x128x128xbf16, #tpu.memory_space<vmem>>, vector<1x128x128xbf16>
    %106 = vector.shape_cast %105 : vector<1x128x128xbf16> to vector<128x128xbf16>
    %cst_75 = arith.constant dense<0.000000e+00> : vector<384x128xf32>
    %107 = tpu.matmul %104, %106, %cst_75 {dimension_numbers = #tpu.dot_dimension_numbers<[1], [0], [0], [1], [0, 0, 1, 1], [], []>} : vector<384x128xbf16>, vector<128x128xbf16>, vector<384x128xf32> -> vector<384x128xf32>
    %108 = arith.addf %102, %107 : vector<384x128xf32>
    %c25_76 = arith.constant 25 : index
    %c0_77 = arith.constant 0 : index
    %109 = vector.load %arg5[%c25_76, %c0_77] : memref<440x128xf32, #tpu.memory_space<vmem>>, vector<384x128xf32>
    %110 = arith.truncf %109 : vector<384x128xf32> to vector<384x128xbf16>
    %c13 = arith.constant 13 : index
    %c0_78 = arith.constant 0 : index
    %c0_79 = arith.constant 0 : index
    %111 = vector.load %arg2[%c13, %c0_78, %c0_79] : memref<18x128x128xbf16, #tpu.memory_space<vmem>>, vector<1x128x128xbf16>
    %112 = vector.shape_cast %111 : vector<1x128x128xbf16> to vector<128x128xbf16>
    %cst_80 = arith.constant dense<0.000000e+00> : vector<384x128xf32>
    %113 = tpu.matmul %110, %112, %cst_80 {dimension_numbers = #tpu.dot_dimension_numbers<[1], [0], [0], [1], [0, 0, 1, 1], [], []>} : vector<384x128xbf16>, vector<128x128xbf16>, vector<384x128xf32> -> vector<384x128xf32>
    %114 = arith.addf %108, %113 : vector<384x128xf32>
    %c26_81 = arith.constant 26 : index
    %c0_82 = arith.constant 0 : index
    %115 = vector.load %arg5[%c26_81, %c0_82] : memref<440x128xf32, #tpu.memory_space<vmem>>, vector<384x128xf32>
    %116 = arith.truncf %115 : vector<384x128xf32> to vector<384x128xbf16>
    %c14 = arith.constant 14 : index
    %c0_83 = arith.constant 0 : index
    %c0_84 = arith.constant 0 : index
    %117 = vector.load %arg2[%c14, %c0_83, %c0_84] : memref<18x128x128xbf16, #tpu.memory_space<vmem>>, vector<1x128x128xbf16>
    %118 = vector.shape_cast %117 : vector<1x128x128xbf16> to vector<128x128xbf16>
    %cst_85 = arith.constant dense<0.000000e+00> : vector<384x128xf32>
    %119 = tpu.matmul %116, %118, %cst_85 {dimension_numbers = #tpu.dot_dimension_numbers<[1], [0], [0], [1], [0, 0, 1, 1], [], []>} : vector<384x128xbf16>, vector<128x128xbf16>, vector<384x128xf32> -> vector<384x128xf32>
    %120 = arith.addf %114, %119 : vector<384x128xf32>
    %c48_86 = arith.constant 48 : index
    %c0_87 = arith.constant 0 : index
    %121 = vector.load %arg5[%c48_86, %c0_87] : memref<440x128xf32, #tpu.memory_space<vmem>>, vector<384x128xf32>
    %122 = arith.truncf %121 : vector<384x128xf32> to vector<384x128xbf16>
    %c15 = arith.constant 15 : index
    %c0_88 = arith.constant 0 : index
    %c0_89 = arith.constant 0 : index
    %123 = vector.load %arg2[%c15, %c0_88, %c0_89] : memref<18x128x128xbf16, #tpu.memory_space<vmem>>, vector<1x128x128xbf16>
    %124 = vector.shape_cast %123 : vector<1x128x128xbf16> to vector<128x128xbf16>
    %cst_90 = arith.constant dense<0.000000e+00> : vector<384x128xf32>
    %125 = tpu.matmul %122, %124, %cst_90 {dimension_numbers = #tpu.dot_dimension_numbers<[1], [0], [0], [1], [0, 0, 1, 1], [], []>} : vector<384x128xbf16>, vector<128x128xbf16>, vector<384x128xf32> -> vector<384x128xf32>
    %126 = arith.addf %120, %125 : vector<384x128xf32>
    %c49_91 = arith.constant 49 : index
    %c0_92 = arith.constant 0 : index
    %127 = vector.load %arg5[%c49_91, %c0_92] : memref<440x128xf32, #tpu.memory_space<vmem>>, vector<384x128xf32>
    %128 = arith.truncf %127 : vector<384x128xf32> to vector<384x128xbf16>
    %c16 = arith.constant 16 : index
    %c0_93 = arith.constant 0 : index
    %c0_94 = arith.constant 0 : index
    %129 = vector.load %arg2[%c16, %c0_93, %c0_94] : memref<18x128x128xbf16, #tpu.memory_space<vmem>>, vector<1x128x128xbf16>
    %130 = vector.shape_cast %129 : vector<1x128x128xbf16> to vector<128x128xbf16>
    %cst_95 = arith.constant dense<0.000000e+00> : vector<384x128xf32>
    %131 = tpu.matmul %128, %130, %cst_95 {dimension_numbers = #tpu.dot_dimension_numbers<[1], [0], [0], [1], [0, 0, 1, 1], [], []>} : vector<384x128xbf16>, vector<128x128xbf16>, vector<384x128xf32> -> vector<384x128xf32>
    %132 = arith.addf %126, %131 : vector<384x128xf32>
    %c50_96 = arith.constant 50 : index
    %c0_97 = arith.constant 0 : index
    %133 = vector.load %arg5[%c50_96, %c0_97] : memref<440x128xf32, #tpu.memory_space<vmem>>, vector<384x128xf32>
    %134 = arith.truncf %133 : vector<384x128xf32> to vector<384x128xbf16>
    %c17 = arith.constant 17 : index
    %c0_98 = arith.constant 0 : index
    %c0_99 = arith.constant 0 : index
    %135 = vector.load %arg2[%c17, %c0_98, %c0_99] : memref<18x128x128xbf16, #tpu.memory_space<vmem>>, vector<1x128x128xbf16>
    %136 = vector.shape_cast %135 : vector<1x128x128xbf16> to vector<128x128xbf16>
    %cst_100 = arith.constant dense<0.000000e+00> : vector<384x128xf32>
    %137 = tpu.matmul %134, %136, %cst_100 {dimension_numbers = #tpu.dot_dimension_numbers<[1], [0], [0], [1], [0, 0, 1, 1], [], []>} : vector<384x128xbf16>, vector<128x128xbf16>, vector<384x128xf32> -> vector<384x128xf32>
    %138 = arith.addf %132, %137 : vector<384x128xf32>
    %c1_101 = arith.constant 1 : index
    %c0_102 = arith.constant 0 : index
    %c0_103 = arith.constant 0 : index
    %139 = vector.load %arg3[%c1_101, %c0_102, %c0_103] : memref<2x1x128xf32, #tpu.memory_space<vmem>>, vector<1x1x128xf32>
    %140 = vector.shape_cast %139 : vector<1x1x128xf32> to vector<1x128xf32>
    %141 = vector.broadcast %140 : vector<1x128xf32> to vector<384x128xf32>
    %142 = arith.addf %138, %141 : vector<384x128xf32>
    %cst_104 = arith.constant 0.000000e+00 : f32
    %143 = vector.broadcast %cst_104 : f32 to vector<384x128xf32>
    %144 = arith.maximumf %142, %143 : vector<384x128xf32>
    %145 = vector.extract_strided_slice %144 {offsets = [0, 0], sizes = [384, 4], strides = [1, 1]} : vector<384x128xf32> to vector<384x4xf32>
    %c0_105 = arith.constant 0 : index
    %c0_106 = arith.constant 0 : index
    %c0_107 = arith.constant 0 : index
    %146 = vector.load %arg4[%c0_105, %c0_106, %c0_107] : memref<1x384x4xf32, #tpu.memory_space<vmem>>, vector<1x384x4xf32>
    %147 = vector.shape_cast %146 : vector<1x384x4xf32> to vector<384x4xf32>
    %148 = vector.shape_cast %145 : vector<384x4xf32> to vector<1x384x4xf32>
    tpu.vector_store %arg4[%c0_105, %c0_106, %c0_107], %148 {strides = array<i32>} : memref<1x384x4xf32, #tpu.memory_space<vmem>>, vector<1x384x4xf32>,
    return
  }
  func.func @transform_0(%arg0: i32) -> (i32, i32, i32) {
    %c0_i32 = arith.constant 0 : i32
    %c0_i32_0 = arith.constant 0 : i32
    %c0_i32_1 = arith.constant 0 : i32
    return %arg0, %c0_i32, %c0_i32_0 : i32, i32, i32
  }
  func.func @transform_1(%arg0: i32) -> (i32, i32, i32) {
    %c0_i32 = arith.constant 0 : i32
    %c0_i32_0 = arith.constant 0 : i32
    %c0_i32_1 = arith.constant 0 : i32
    %c0_i32_2 = arith.constant 0 : i32
    return %c0_i32, %c0_i32_0, %c0_i32_1 : i32, i32, i32
  }
  func.func @transform_2(%arg0: i32) -> (i32, i32, i32) {
    %c0_i32 = arith.constant 0 : i32
    %c0_i32_0 = arith.constant 0 : i32
    %c0_i32_1 = arith.constant 0 : i32
    %c0_i32_2 = arith.constant 0 : i32
    return %c0_i32, %c0_i32_0, %c0_i32_1 : i32, i32, i32
  }
  func.func @transform_3(%arg0: i32) -> (i32, i32, i32) {
    %c0_i32 = arith.constant 0 : i32
    %c0_i32_0 = arith.constant 0 : i32
    %c0_i32_1 = arith.constant 0 : i32
    return %arg0, %c0_i32, %c0_i32_0 : i32, i32, i32
  }
}

</mosaic_0001>

<llo_original>
// kernel: _dense_block_forward.1
$region0: #{_dense_block_forward.1}
  #allocation0 [shape = 'u32[]', space=smem, size = 0x4, offset = 0x4, fixed_abs, tag = 'smem constant byte address 0x4 - core index']
  #allocation1 [shape = 'u32[144,128]{1,0:T(1,128)}', space=vmem, size = 0x12000, scoped, tag = 'internal scratch']
  #allocation2 [shape = 'f32[440,128]{1,0:T(8,128)}', space=vmem, size = 0x37000, scoped, tag = 'scratch operand']
  %s0 = inlined_call_operand.vmem [shape: f32[2,432,4], index: 0, kind: input, shape index: {}]
  %s1 = inlined_call_operand.vmem [shape: bf16[18,128,128], index: 1, kind: input, shape index: {}]
  %s2 = inlined_call_operand.vmem [shape: f32[2,1,128], index: 2, kind: input, shape index: {}]
  %s3 = inlined_call_operand.vmem [shape: f32[2,384,4], index: 3, kind: output, shape index: {}]
  %s4 = sld [smem:[#allocation0]]
  $region45: #{_dense_block_forward.1} parent=0
    _
  %s6 = ssub.s32 1, %s4
  %s7 = scalar_select 0, %s6, %s4
  loop: start=0, step=1, limit=4
  $region2: #{_dense_block_forward.1} parent=0 // loop_pre_header
    _
  $region3: #{_dense_block_forward.1} parent=0 // loop_header
    %s9 = sphi 0, %s13
    %p10 = scmp.ge.s32.totalorder %s9, 4
    %s19 = sphi 0, %s21
    %s22 = sphi 0, %s19
    %s23 = sphi 0, %s22
    %s39 = sphi 0, %s23
    %s43 = sphi 0, %s43
    %s45 = sphi 0, %s43
    %s46 = sphi 0, %s45
    %s60 = sphi 0, %s46
    %s64 = sphi 0, %s64
    %s66 = sphi 0, %s64
    %s67 = sphi 0, %s66
    %s81 = sphi 0, %s67
    %s87 = sphi 0, %s89
    %s90 = sphi 0, %s87
    %s91 = sphi 0, %s90
    %s107 = sphi 0, %s91
  $region4: #{_dense_block_forward.1} parent=0 // loop_header_branch
    %12 = sbr.rel (%p10) target = $region8
  $region5: #{_dense_block_forward.1} parent=0 // loop_body
    %s14 = ssub.s32 %s9, 1
    %s15 = ssub.s32 %s9, 2
    %s16 = sadd.s32 %s9, 1
    %s17 = ssub.s32 %s9, %s16
    %p18 = scmp.eq.s32.totalorder %s17, 0
    %s20 = sadd.s32 %s19, 1
    %s21 = scalar_select %p18, %s19, %s20
    %p24 = pneg %p18
    %p25 = scmp.eq.s32.totalorder %s9, 1
    %p26 = por %p24, %p25
    %p27 = scmp.ne.s32.totalorder %s19, %s22
    %p28 = scmp.eq.s32.totalorder %s9, 0
    %p29 = por %p27, %p28
    %p30 = scmp.ne.s32.totalorder %s19, %s22
    %p31 = scmp.eq.s32.totalorder %s14, 1
    %p32 = por %p30, %p31
    %p33 = scmp.ne.s32.totalorder %s22, %s23
    %p34 = scmp.eq.s32.totalorder %s14, 0
    %p35 = por %p33, %p34
    %p36 = scmp.ne.s32.totalorder %s22, %s23
    %p37 = scmp.eq.s32.totalorder %s15, 1
    %p38 = por %p36, %p37
    %p40 = scmp.ne.s32.totalorder %s23, %s39
    %p41 = scmp.eq.s32.totalorder %s15, 0
    %p42 = por %p40, %p41
    %s44 = sadd.s32 %s43, 1
    %p47 = scmp.eq.s32.totalorder %s9, 1
    %p48 = scmp.ne.s32.totalorder %s43, %s45
    %p49 = scmp.eq.s32.totalorder %s9, 0
    %p50 = por %p48, %p49
    %p51 = scmp.ne.s32.totalorder %s43, %s45
    %p52 = scmp.eq.s32.totalorder %s14, 1
    %p53 = por %p51, %p52
    %p54 = scmp.ne.s32.totalorder %s45, %s46
    %p55 = scmp.eq.s32.totalorder %s14, 0
    %p56 = por %p54, %p55
    %p57 = scmp.ne.s32.totalorder %s45, %s46
    %p58 = scmp.eq.s32.totalorder %s15, 1
    %p59 = por %p57, %p58
    %p61 = scmp.ne.s32.totalorder %s46, %s60
    %p62 = scmp.eq.s32.totalorder %s15, 0
    %p63 = por %p61, %p62
    %s65 = sadd.s32 %s64, 1
    %p68 = scmp.eq.s32.totalorder %s9, 1
    %p69 = scmp.ne.s32.totalorder %s64, %s66
    %p70 = scmp.eq.s32.totalorder %s9, 0
    %p71 = por %p69, %p70
    %p72 = scmp.ne.s32.totalorder %s64, %s66
    %p73 = scmp.eq.s32.totalorder %s14, 1
    %p74 = por %p72, %p73
    %p75 = scmp.ne.s32.totalorder %s66, %s67
    %p76 = scmp.eq.s32.totalorder %s14, 0
    %p77 = por %p75, %p76
    %p78 = scmp.ne.s32.totalorder %s66, %s67
    %p79 = scmp.eq.s32.totalorder %s15, 1
    %p80 = por %p78, %p79
    %p82 = scmp.ne.s32.totalorder %s67, %s81
    %p83 = scmp.eq.s32.totalorder %s15, 0
    %p84 = por %p82, %p83
    %s85 = ssub.s32 %s9, %s16
    %p86 = scmp.eq.s32.totalorder %s85, 0
    %s88 = sadd.s32 %s87, 1
    %s89 = scalar_select %p86, %s87, %s88
    %p92 = pneg %p86
    %p93 = scmp.eq.s32.totalorder %s9, 1
    %p94 = por %p92, %p93
    %p95 = scmp.ne.s32.totalorder %s87, %s90
    %p96 = scmp.eq.s32.totalorder %s9, 0
    %p97 = por %p95, %p96
    %p98 = scmp.ne.s32.totalorder %s87, %s90
    %p99 = scmp.eq.s32.totalorder %s14, 1
    %p100 = por %p98, %p99
    %p101 = scmp.ne.s32.totalorder %s90, %s91
    %p102 = scmp.eq.s32.totalorder %s14, 0
    %p103 = por %p101, %p102
    %p104 = scmp.ne.s32.totalorder %s90, %s91
    %p105 = scmp.eq.s32.totalorder %s15, 1
    %p106 = por %p104, %p105
    %p108 = scmp.ne.s32.totalorder %s91, %s107
    %p109 = scmp.eq.s32.totalorder %s15, 0
    %p110 = por %p108, %p109
    %p111 = scmp.le.s32.totalorder 1, %s9
    %p112 = scmp.lt.s32.totalorder %s9, 3
    %p113 = pnand %p111, %p112
    %p114 = pneg %p113
    // Predicated region
    $region9: #{_dense_block_forward.1} parent=5 // pred_check
      _
    $region10: #{_dense_block_forward.1} parent=5 // pred_check_branch
      %116 = sbr.rel (%p113) target = $region12
    $region11: #{_dense_block_forward.1} parent=5 // pred_region
      %s117 = ssub.s32 %s9, 1
      // Predicated region
      $region13: #{_dense_block_forward.1} parent=11 // pred_check
        %p118 = pneg %p56
      $region14: #{_dense_block_forward.1} parent=11 // pred_check_branch
        %120 = sbr.rel (%p118) target = $region16
      $region15: #{_dense_block_forward.1} parent=11 // pred_region
        _
      $region16: #{_dense_block_forward.1} parent=11 // pred_fallthru
        _
      // Predicated region
      $region17: #{_dense_block_forward.1} parent=11 // pred_check
        %p121 = pneg %p77
      $region18: #{_dense_block_forward.1} parent=11 // pred_check_branch
        %123 = sbr.rel (%p121) target = $region20
      $region19: #{_dense_block_forward.1} parent=11 // pred_region
        _
      $region20: #{_dense_block_forward.1} parent=11 // pred_fallthru
        _
    $region12: #{_dense_block_forward.1} parent=5 // pred_fallthru
      _
    %p124 = scmp.lt.s32.totalorder %s9, 2
    // Predicated region
    $region21: #{_dense_block_forward.1} parent=5 // pred_check
      %p125 = pneg %p124
    $region22: #{_dense_block_forward.1} parent=5 // pred_check_branch
      %127 = sbr.rel (%p125) target = $region24
    $region23: #{_dense_block_forward.1} parent=5 // pred_region
      // Predicated region
      $region25: #{_dense_block_forward.1} parent=23 // pred_check
        %p128 = pneg %p29
      $region26: #{_dense_block_forward.1} parent=23 // pred_check_branch
        %130 = sbr.rel (%p128) target = $region28
      $region27: #{_dense_block_forward.1} parent=23 // pred_region
        %p131 = scmp.lt.s32.totalorder %s9, 1
        %s132 = scalar_select %p131, %s9, 1
        %s133 = smul.addr %s132, 54
        %s134 = smul.addr %s133, 8
        %s135 = scalar_lea.vmem %s0, %s134
      $region28: #{_dense_block_forward.1} parent=23 // pred_fallthru
        _
    $region24: #{_dense_block_forward.1} parent=5 // pred_fallthru
      _
    %p136 = scmp.le.s32.totalorder 1, %s9
    %p137 = scmp.lt.s32.totalorder %s9, 3
    %p138 = pnand %p136, %p137
    %p139 = pneg %p138
    // Predicated region
    $region29: #{_dense_block_forward.1} parent=5 // pred_check
      _
    $region30: #{_dense_block_forward.1} parent=5 // pred_check_branch
      %141 = sbr.rel (%p138) target = $region32
    $region31: #{_dense_block_forward.1} parent=5 // pred_region
      %s142 = ssub.s32 %s9, 1
      %p143 = scmp.lt.s32.totalorder %s14, 1
      %s144 = scalar_select %p143, %s14, 1
      %s145 = smul.addr %s144, 54
      %s146 = smul.addr %s145, 8
      %s147 = scalar_lea.vmem %s0, %s146
      %p148 = pneg %p35
      %p149 = pneg %p32
      %p150 = pneg %p56
      %p151 = pneg %p53
      %p152 = pneg %p77
      %p153 = pneg %p74
      %p154 = pneg %p103
      %p155 = pneg %p100
      %p156 = scmp.lt.s32.totalorder %s14, 1
      %s157 = scalar_select %p156, %s14, 1
      %s158 = smul.addr %s157, 48
      %s159 = smul.addr %s158, 8
      %s160 = scalar_lea.vmem %s3, %s159
      %p161 = scmp.lt.s32.totalorder %s14, 1
      %s162 = scalar_select %p161, %s14, 1
      %s163 = smul.addr %s162, 54
      %s164 = smul.addr %s163, 8
      %s165 = scalar_lea.vmem %s0, %s164
      %p166 = scmp.lt.s32.totalorder %s14, 1
      %s167 = scalar_select %p166, %s14, 1
      %s168 = smul.addr %s167, 48
      %s169 = smul.addr %s168, 8
      %s170 = scalar_lea.vmem %s3, %s169
      %172 = vst [vmem:[#allocation2] sm:$0xff] 0.0
      %173 = vst [vmem:[#allocation2 + $0x8] sm:$0xff] 0.0
      %174 = vst [vmem:[#allocation2 + $0x10] sm:$0xff] 0.0
      %175 = vst [vmem:[#allocation2 + $0x18] sm:$0xff] 0.0
      %176 = vst [vmem:[#allocation2 + $0x20] sm:$0xff] 0.0
      %177 = vst [vmem:[#allocation2 + $0x28] sm:$0xff] 0.0
      %178 = vst [vmem:[#allocation2 + $0x30] sm:$0xff] 0.0
      %179 = vst [vmem:[#allocation2 + $0x38] sm:$0xff] 0.0
      %180 = vst [vmem:[#allocation2 + $0x40] sm:$0xff] 0.0
      %181 = vst [vmem:[#allocation2 + $0x48] sm:$0xff] 0.0
      %182 = vst [vmem:[#allocation2 + $0x50] sm:$0xff] 0.0
      %183 = vst [vmem:[#allocation2 + $0x58] sm:$0xff] 0.0
      %184 = vst [vmem:[#allocation2 + $0x60] sm:$0xff] 0.0
      %185 = vst [vmem:[#allocation2 + $0x68] sm:$0xff] 0.0
      %186 = vst [vmem:[#allocation2 + $0x70] sm:$0xff] 0.0
      %187 = vst [vmem:[#allocation2 + $0x78] sm:$0xff] 0.0
      %188 = vst [vmem:[#allocation2 + $0x80] sm:$0xff] 0.0
      %189 = vst [vmem:[#allocation2 + $0x88] sm:$0xff] 0.0
      %190 = vst [vmem:[#allocation2 + $0x90] sm:$0xff] 0.0
      %191 = vst [vmem:[#allocation2 + $0x98] sm:$0xff] 0.0
      %192 = vst [vmem:[#allocation2 + $0xa0] sm:$0xff] 0.0
      %193 = vst [vmem:[#allocation2 + $0xa8] sm:$0xff] 0.0
      %194 = vst [vmem:[#allocation2 + $0xb0] sm:$0xff] 0.0
      %195 = vst [vmem:[#allocation2 + $0xb8] sm:$0xff] 0.0
      %196 = vst [vmem:[#allocation2 + $0xc0] sm:$0xff] 0.0
      %197 = vst [vmem:[#allocation2 + $0xc8] sm:$0xff] 0.0
      %198 = vst [vmem:[#allocation2 + $0xd0] sm:$0xff] 0.0
      %199 = vst [vmem:[#allocation2 + $0xd8] sm:$0xff] 0.0
      %200 = vst [vmem:[#allocation2 + $0xe0] sm:$0xff] 0.0
      %201 = vst [vmem:[#allocation2 + $0xe8] sm:$0xff] 0.0
      %202 = vst [vmem:[#allocation2 + $0xf0] sm:$0xff] 0.0
      %203 = vst [vmem:[#allocation2 + $0xf8] sm:$0xff] 0.0
      %204 = vst [vmem:[#allocation2 + $0x100] sm:$0xff] 0.0
      %205 = vst [vmem:[#allocation2 + $0x108] sm:$0xff] 0.0
      %206 = vst [vmem:[#allocation2 + $0x110] sm:$0xff] 0.0
      %207 = vst [vmem:[#allocation2 + $0x118] sm:$0xff] 0.0
      %208 = vst [vmem:[#allocation2 + $0x120] sm:$0xff] 0.0
      %209 = vst [vmem:[#allocation2 + $0x128] sm:$0xff] 0.0
      %210 = vst [vmem:[#allocation2 + $0x130] sm:$0xff] 0.0
      %211 = vst [vmem:[#allocation2 + $0x138] sm:$0xff] 0.0
      %212 = vst [vmem:[#allocation2 + $0x140] sm:$0xff] 0.0
      %213 = vst [vmem:[#allocation2 + $0x148] sm:$0xff] 0.0
      %214 = vst [vmem:[#allocation2 + $0x150] sm:$0xff] 0.0
      %215 = vst [vmem:[#allocation2 + $0x158] sm:$0xff] 0.0
      %216 = vst [vmem:[#allocation2 + $0x160] sm:$0xff] 0.0
      %217 = vst [vmem:[#allocation2 + $0x168] sm:$0xff] 0.0
      %218 = vst [vmem:[#allocation2 + $0x170] sm:$0xff] 0.0
      %219 = vst [vmem:[#allocation2 + $0x178] sm:$0xff] 0.0
      %220 = vst [vmem:[#allocation2 + $0x180] sm:$0xff] 0.0
      %221 = vst [vmem:[#allocation2 + $0x188] sm:$0xff] 0.0
      %222 = vst [vmem:[#allocation2 + $0x190] sm:$0xff] 0.0
      %223 = vst [vmem:[#allocation2 + $0x198] sm:$0xff] 0.0
      %224 = vst [vmem:[#allocation2 + $0x1a0] sm:$0xff] 0.0
      %225 = vst [vmem:[#allocation2 + $0x1a8] sm:$0xff] 0.0
      %226 = vst [vmem:[#allocation2 + $0x1b0] sm:$0xff] 0.0
      %v227 = vld [vmem:[%s165] sm:$0xff]
      %v228 = vld [vmem:[%s165 + $0x8] sm:$0xff]
      %v229 = vld [vmem:[%s165 + $0x10] sm:$0xff]
      %v230 = vld [vmem:[%s165 + $0x18] sm:$0xff]
      %v231 = vld [vmem:[%s165 + $0x20] sm:$0xff]
      %v232 = vld [vmem:[%s165 + $0x28] sm:$0xff]
      %v233 = vld [vmem:[%s165 + $0x30] sm:$0xff]
      %v234 = vld [vmem:[%s165 + $0x38] sm:$0xff]
      %v235 = vld [vmem:[%s165 + $0x40] sm:$0xff]
      %v236 = vld [vmem:[%s165 + $0x48] sm:$0xff]
      %v237 = vld [vmem:[%s165 + $0x50] sm:$0xff]
      %v238 = vld [vmem:[%s165 + $0x58] sm:$0xff]
      %v239 = vld [vmem:[%s165 + $0x60] sm:$0xff]
      %v240 = vld [vmem:[%s165 + $0x68] sm:$0xff]
      %v241 = vld [vmem:[%s165 + $0x70] sm:$0xff]
      %v242 = vld [vmem:[%s165 + $0x78] sm:$0xff]
      %v243 = vld [vmem:[%s165 + $0x80] sm:$0xff]
      %v244 = vld [vmem:[%s165 + $0x88] sm:$0xff]
      %v245 = vld [vmem:[%s165 + $0x90] sm:$0xff]
      %v246 = vld [vmem:[%s165 + $0x98] sm:$0xff]
      %v247 = vld [vmem:[%s165 + $0xa0] sm:$0xff]
      %v248 = vld [vmem:[%s165 + $0xa8] sm:$0xff]
      %v249 = vld [vmem:[%s165 + $0xb0] sm:$0xff]
      %v250 = vld [vmem:[%s165 + $0xb8] sm:$0xff]
      %v251 = vld [vmem:[%s165 + $0xc0] sm:$0xff]
      %v252 = vld [vmem:[%s165 + $0xc8] sm:$0xff]
      %v253 = vld [vmem:[%s165 + $0xd0] sm:$0xff]
      %v254 = vld [vmem:[%s165 + $0xd8] sm:$0xff]
      %v255 = vld [vmem:[%s165 + $0xe0] sm:$0xff]
      %v256 = vld [vmem:[%s165 + $0xe8] sm:$0xff]
      %v257 = vld [vmem:[%s165 + $0xf0] sm:$0xff]
      %v258 = vld [vmem:[%s165 + $0xf8] sm:$0xff]
      %v259 = vld [vmem:[%s165 + $0x100] sm:$0xff]
      %v260 = vld [vmem:[%s165 + $0x108] sm:$0xff]
      %v261 = vld [vmem:[%s165 + $0x110] sm:$0xff]
      %v262 = vld [vmem:[%s165 + $0x118] sm:$0xff]
      %v263 = vld [vmem:[%s165 + $0x120] sm:$0xff]
      %v264 = vld [vmem:[%s165 + $0x128] sm:$0xff]
      %v265 = vld [vmem:[%s165 + $0x130] sm:$0xff]
      %v266 = vld [vmem:[%s165 + $0x138] sm:$0xff]
      %v267 = vld [vmem:[%s165 + $0x140] sm:$0xff]
      %v268 = vld [vmem:[%s165 + $0x148] sm:$0xff]
      %v269 = vld [vmem:[%s165 + $0x150] sm:$0xff]
      %v270 = vld [vmem:[%s165 + $0x158] sm:$0xff]
      %v271 = vld [vmem:[%s165 + $0x160] sm:$0xff]
      %v272 = vld [vmem:[%s165 + $0x168] sm:$0xff]
      %v273 = vld [vmem:[%s165 + $0x170] sm:$0xff]
      %v274 = vld [vmem:[%s165 + $0x178] sm:$0xff]
      %v275 = vld [vmem:[%s165 + $0x180] sm:$0xff]
      %v276 = vld [vmem:[%s165 + $0x188] sm:$0xff]
      %v277 = vld [vmem:[%s165 + $0x190] sm:$0xff]
      %v278 = vld [vmem:[%s165 + $0x198] sm:$0xff]
      %v279 = vld [vmem:[%s165 + $0x1a0] sm:$0xff]
      %v280 = vld [vmem:[%s165 + $0x1a8] sm:$0xff]
      %vm281 = vcmask 31744
      %282 = vst.msk [vmem:[#allocation2] sm:$0xff] %vm281, %v227
      %283 = vst.msk [vmem:[#allocation2 + $0x8] sm:$0xff] %vm281, %v228
      %284 = vst.msk [vmem:[#allocation2 + $0x10] sm:$0xff] %vm281, %v229
      %285 = vst.msk [vmem:[#allocation2 + $0x18] sm:$0xff] %vm281, %v230
      %286 = vst.msk [vmem:[#allocation2 + $0x20] sm:$0xff] %vm281, %v231
      %287 = vst.msk [vmem:[#allocation2 + $0x28] sm:$0xff] %vm281, %v232
      %288 = vst.msk [vmem:[#allocation2 + $0x30] sm:$0xff] %vm281, %v233
      %289 = vst.msk [vmem:[#allocation2 + $0x38] sm:$0xff] %vm281, %v234
      %290 = vst.msk [vmem:[#allocation2 + $0x40] sm:$0xff] %vm281, %v235
      %291 = vst.msk [vmem:[#allocation2 + $0x48] sm:$0xff] %vm281, %v236
      %292 = vst.msk [vmem:[#allocation2 + $0x50] sm:$0xff] %vm281, %v237
      %293 = vst.msk [vmem:[#allocation2 + $0x58] sm:$0xff] %vm281, %v238
      %294 = vst.msk [vmem:[#allocation2 + $0x60] sm:$0xff] %vm281, %v239
      %295 = vst.msk [vmem:[#allocation2 + $0x68] sm:$0xff] %vm281, %v240
      %296 = vst.msk [vmem:[#allocation2 + $0x70] sm:$0xff] %vm281, %v241
      %297 = vst.msk [vmem:[#allocation2 + $0x78] sm:$0xff] %vm281, %v242
      %298 = vst.msk [vmem:[#allocation2 + $0x80] sm:$0xff] %vm281, %v243
      %299 = vst.msk [vmem:[#allocation2 + $0x88] sm:$0xff] %vm281, %v244
      %300 = vst.msk [vmem:[#allocation2 + $0x90] sm:$0xff] %vm281, %v245
      %301 = vst.msk [vmem:[#allocation2 + $0x98] sm:$0xff] %vm281, %v246
      %302 = vst.msk [vmem:[#allocation2 + $0xa0] sm:$0xff] %vm281, %v247
      %303 = vst.msk [vmem:[#allocation2 + $0xa8] sm:$0xff] %vm281, %v248
      %304 = vst.msk [vmem:[#allocation2 + $0xb0] sm:$0xff] %vm281, %v249
      %305 = vst.msk [vmem:[#allocation2 + $0xb8] sm:$0xff] %vm281, %v250
      %306 = vst.msk [vmem:[#allocation2 + $0xc0] sm:$0xff] %vm281, %v251
      %307 = vst.msk [vmem:[#allocation2 + $0xc8] sm:$0xff] %vm281, %v252
      %308 = vst.msk [vmem:[#allocation2 + $0xd0] sm:$0xff] %vm281, %v253
      %309 = vst.msk [vmem:[#allocation2 + $0xd8] sm:$0xff] %vm281, %v254
      %310 = vst.msk [vmem:[#allocation2 + $0xe0] sm:$0xff] %vm281, %v255
      %311 = vst.msk [vmem:[#allocation2 + $0xe8] sm:$0xff] %vm281, %v256
      %312 = vst.msk [vmem:[#allocation2 + $0xf0] sm:$0xff] %vm281, %v257
      %313 = vst.msk [vmem:[#allocation2 + $0xf8] sm:$0xff] %vm281, %v258
      %314 = vst.msk [vmem:[#allocation2 + $0x100] sm:$0xff] %vm281, %v259
      %315 = vst.msk [vmem:[#allocation2 + $0x108] sm:$0xff] %vm281, %v260
      %316 = vst.msk [vmem:[#allocation2 + $0x110] sm:$0xff] %vm281, %v261
      %317 = vst.msk [vmem:[#allocation2 + $0x118] sm:$0xff] %vm281, %v262
      %318 = vst.msk [vmem:[#allocation2 + $0x120] sm:$0xff] %vm281, %v263
      %319 = vst.msk [vmem:[#allocation2 + $0x128] sm:$0xff] %vm281, %v264
      %320 = vst.msk [vmem:[#allocation2 + $0x130] sm:$0xff] %vm281, %v265
      %321 = vst.msk [vmem:[#allocation2 + $0x138] sm:$0xff] %vm281, %v266
      %322 = vst.msk [vmem:[#allocation2 + $0x140] sm:$0xff] %vm281, %v267
      %323 = vst.msk [vmem:[#allocation2 + $0x148] sm:$0xff] %vm281, %v268
      %324 = vst.msk [vmem:[#allocation2 + $0x150] sm:$0xff] %vm281, %v269
      %325 = vst.msk [vmem:[#allocation2 + $0x158] sm:$0xff] %vm281, %v270
      %326 = vst.msk [vmem:[#allocation2 + $0x160] sm:$0xff] %vm281, %v271
      %327 = vst.msk [vmem:[#allocation2 + $0x168] sm:$0xff] %vm281, %v272
      %328 = vst.msk [vmem:[#allocation2 + $0x170] sm:$0xff] %vm281, %v273
      %329 = vst.msk [vmem:[#allocation2 + $0x178] sm:$0xff] %vm281, %v274
      %330 = vst.msk [vmem:[#allocation2 + $0x180] sm:$0xff] %vm281, %v275
      %331 = vst.msk [vmem:[#allocation2 + $0x188] sm:$0xff] %vm281, %v276
      %332 = vst.msk [vmem:[#allocation2 + $0x190] sm:$0xff] %vm281, %v277
      %333 = vst.msk [vmem:[#allocation2 + $0x198] sm:$0xff] %vm281, %v278
      %334 = vst.msk [vmem:[#allocation2 + $0x1a0] sm:$0xff] %vm281, %v279
      %335 = vst.msk [vmem:[#allocation2 + $0x1a8] sm:$0xff] %vm281, %v280
      %v336 = vld [vmem:[#allocation2] sm:$0xff]
      %v337 = vld [vmem:[#allocation2 + $0x8] sm:$0xff]
      %v338 = vld [vmem:[#allocation2 + $0x10] sm:$0xff]
      %v339 = vld [vmem:[#allocation2 + $0x18] sm:$0xff]
      %v340 = vld [vmem:[#allocation2 + $0x20] sm:$0xff]
      %v341 = vld [vmem:[#allocation2 + $0x28] sm:$0xff]
      %v342 = vld [vmem:[#allocation2 + $0x30] sm:$0xff]
      %v343 = vld [vmem:[#allocation2 + $0x38] sm:$0xff]
      %v344 = vld [vmem:[#allocation2 + $0x40] sm:$0xff]
      %v345 = vld [vmem:[#allocation2 + $0x48] sm:$0xff]
      %v346 = vld [vmem:[#allocation2 + $0x50] sm:$0xff]
      %v347 = vld [vmem:[#allocation2 + $0x58] sm:$0xff]
      %v348 = vld [vmem:[#allocation2 + $0x60] sm:$0xff]
      %v349 = vld [vmem:[#allocation2 + $0x68] sm:$0xff]
      %v350 = vld [vmem:[#allocation2 + $0x70] sm:$0xff]
      %v351 = vld [vmem:[#allocation2 + $0x78] sm:$0xff]
      %v352 = vld [vmem:[#allocation2 + $0x80] sm:$0xff]
      %v353 = vld [vmem:[#allocation2 + $0x88] sm:$0xff]
      %v354 = vld [vmem:[#allocation2 + $0x90] sm:$0xff]
      %v355 = vld [vmem:[#allocation2 + $0x98] sm:$0xff]
      %v356 = vld [vmem:[#allocation2 + $0xa0] sm:$0xff]
      %v357 = vld [vmem:[#allocation2 + $0xa8] sm:$0xff]
      %v358 = vld [vmem:[#allocation2 + $0xb0] sm:$0xff]
      %v359 = vld [vmem:[#allocation2 + $0xb8] sm:$0xff]
      %v360 = vld [vmem:[#allocation2 + $0xc0] sm:$0xff]
      %v361 = vld [vmem:[#allocation2 + $0xc8] sm:$0xff]
      %v362 = vld [vmem:[#allocation2 + $0xd0] sm:$0xff]
      %v363 = vld [vmem:[#allocation2 + $0xd8] sm:$0xff]
      %v364 = vld [vmem:[#allocation2 + $0xe0] sm:$0xff]
      %v365 = vld [vmem:[#allocation2 + $0xe8] sm:$0xff]
      %v366 = vld [vmem:[#allocation2 + $0xf0] sm:$0xff]
      %v367 = vld [vmem:[#allocation2 + $0xf8] sm:$0xff]
      %v368 = vld [vmem:[#allocation2 + $0x100] sm:$0xff]
      %v369 = vld [vmem:[#allocation2 + $0x108] sm:$0xff]
      %v370 = vld [vmem:[#allocation2 + $0x110] sm:$0xff]
      %v371 = vld [vmem:[#allocation2 + $0x118] sm:$0xff]
      %v372 = vld [vmem:[#allocation2 + $0x120] sm:$0xff]
      %v373 = vld [vmem:[#allocation2 + $0x128] sm:$0xff]
      %v374 = vld [vmem:[#allocation2 + $0x130] sm:$0xff]
      %v375 = vld [vmem:[#allocation2 + $0x138] sm:$0xff]
      %v376 = vld [vmem:[#allocation2 + $0x140] sm:$0xff]
      %v377 = vld [vmem:[#allocation2 + $0x148] sm:$0xff]
      %v378 = vld [vmem:[#allocation2 + $0x150] sm:$0xff]
      %v379 = vld [vmem:[#allocation2 + $0x158] sm:$0xff]
      %v380 = vld [vmem:[#allocation2 + $0x160] sm:$0xff]
      %v381 = vld [vmem:[#allocation2 + $0x168] sm:$0xff]
      %v382 = vld [vmem:[#allocation2 + $0x170] sm:$0xff]
      %v383 = vld [vmem:[#allocation2 + $0x178] sm:$0xff]
      %v384 = vpack.c.bf16 %v337, %v336
      %v385 = vpack.c.bf16 %v339, %v338
      %v386 = vpack.c.bf16 %v341, %v340
      %v387 = vpack.c.bf16 %v343, %v342
      %v388 = vpack.c.bf16 %v345, %v344
      %v389 = vpack.c.bf16 %v347, %v346
      %v390 = vpack.c.bf16 %v349, %v348
      %v391 = vpack.c.bf16 %v351, %v350
      %v392 = vpack.c.bf16 %v353, %v352
      %v393 = vpack.c.bf16 %v355, %v354
      %v394 = vpack.c.bf16 %v357, %v356
      %v395 = vpack.c.bf16 %v359, %v358
      %v396 = vpack.c.bf16 %v361, %v360
      %v397 = vpack.c.bf16 %v363, %v362
      %v398 = vpack.c.bf16 %v365, %v364
      %v399 = vpack.c.bf16 %v367, %v366
      %v400 = vpack.c.bf16 %v369, %v368
      %v401 = vpack.c.bf16 %v371, %v370
      %v402 = vpack.c.bf16 %v373, %v372
      %v403 = vpack.c.bf16 %v375, %v374
      %v404 = vpack.c.bf16 %v377, %v376
      %v405 = vpack.c.bf16 %v379, %v378
      %v406 = vpack.c.bf16 %v381, %v380
      %v407 = vpack.c.bf16 %v383, %v382
      %v408 = vld [vmem:[%s1] sm:$0xf]
      %v409 = vld [vmem:[%s1 + $0x4] sm:$0xf]
      %v410 = vld [vmem:[%s1 + $0x8] sm:$0xf]
      %v411 = vld [vmem:[%s1 + $0xc] sm:$0xf]
      %v412 = vld [vmem:[%s1 + $0x10] sm:$0xf]
      %v413 = vld [vmem:[%s1 + $0x14] sm:$0xf]
      %v414 = vld [vmem:[%s1 + $0x18] sm:$0xf]
      %v415 = vld [vmem:[%s1 + $0x1c] sm:$0xf]
      %v416 = vld [vmem:[%s1 + $0x20] sm:$0xf]
      %v417 = vld [vmem:[%s1 + $0x24] sm:$0xf]
      %v418 = vld [vmem:[%s1 + $0x28] sm:$0xf]
      %v419 = vld [vmem:[%s1 + $0x2c] sm:$0xf]
      %v420 = vld [vmem:[%s1 + $0x30] sm:$0xf]
      %v421 = vld [vmem:[%s1 + $0x34] sm:$0xf]
      %v422 = vld [vmem:[%s1 + $0x38] sm:$0xf]
      %v423 = vld [vmem:[%s1 + $0x3c] sm:$0xf]
      %v424 = vld [vmem:[#allocation2 + $0x1] sm:$0xff]
      %v425 = vld [vmem:[#allocation2 + $0x9] sm:$0xff]
      %v426 = vld [vmem:[#allocation2 + $0x11] sm:$0xff]
      %v427 = vld [vmem:[#allocation2 + $0x19] sm:$0xff]
      %v428 = vld [vmem:[#allocation2 + $0x21] sm:$0xff]
      %v429 = vld [vmem:[#allocation2 + $0x29] sm:$0xff]
      %v430 = vld [vmem:[#allocation2 + $0x31] sm:$0xff]
      %v431 = vld [vmem:[#allocation2 + $0x39] sm:$0xff]
      %v432 = vld [vmem:[#allocation2 + $0x41] sm:$0xff]
      %v433 = vld [vmem:[#allocation2 + $0x49] sm:$0xff]
      %v434 = vld [vmem:[#allocation2 + $0x51] sm:$0xff]
      %v435 = vld [vmem:[#allocation2 + $0x59] sm:$0xff]
      %v436 = vld [vmem:[#allocation2 + $0x61] sm:$0xff]
      %v437 = vld [vmem:[#allocation2 + $0x69] sm:$0xff]
      %v438 = vld [vmem:[#allocation2 + $0x71] sm:$0xff]
      %v439 = vld [vmem:[#allocation2 + $0x79] sm:$0xff]
      %v440 = vld [vmem:[#allocation2 + $0x81] sm:$0xff]
      %v441 = vld [vmem:[#allocation2 + $0x89] sm:$0xff]
      %v442 = vld [vmem:[#allocation2 + $0x91] sm:$0xff]
      %v443 = vld [vmem:[#allocation2 + $0x99] sm:$0xff]
      %v444 = vld [vmem:[#allocation2 + $0xa1] sm:$0xff]
      %v445 = vld [vmem:[#allocation2 + $0xa9] sm:$0xff]
      %v446 = vld [vmem:[#allocation2 + $0xb1] sm:$0xff]
      %v447 = vld [vmem:[#allocation2 + $0xb9] sm:$0xff]
      %v448 = vld [vmem:[#allocation2 + $0xc1] sm:$0xff]
      %v449 = vld [vmem:[#allocation2 + $0xc9] sm:$0xff]
      %v450 = vld [vmem:[#allocation2 + $0xd1] sm:$0xff]
      %v451 = vld [vmem:[#allocation2 + $0xd9] sm:$0xff]
      %v452 = vld [vmem:[#allocation2 + $0xe1] sm:$0xff]
      %v453 = vld [vmem:[#allocation2 + $0xe9] sm:$0xff]
      %v454 = vld [vmem:[#allocation2 + $0xf1] sm:$0xff]
      %v455 = vld [vmem:[#allocation2 + $0xf9] sm:$0xff]
      %v456 = vld [vmem:[#allocation2 + $0x101] sm:$0xff]
      %v457 = vld [vmem:[#allocation2 + $0x109] sm:$0xff]
      %v458 = vld [vmem:[#allocation2 + $0x111] sm:$0xff]
      %v459 = vld [vmem:[#allocation2 + $0x119] sm:$0xff]
      %v460 = vld [vmem:[#allocation2 + $0x121] sm:$0xff]
      %v461 = vld [vmem:[#allocation2 + $0x129] sm:$0xff]
      %v462 = vld [vmem:[#allocation2 + $0x131] sm:$0xff]
      %v463 = vld [vmem:[#allocation2 + $0x139] sm:$0xff]
      %v464 = vld [vmem:[#allocation2 + $0x141] sm:$0xff]
      %v465 = vld [vmem:[#allocation2 + $0x149] sm:$0xff]
      %v466 = vld [vmem:[#allocation2 + $0x151] sm:$0xff]
      %v467 = vld [vmem:[#allocation2 + $0x159] sm:$0xff]
      %v468 = vld [vmem:[#allocation2 + $0x161] sm:$0xff]
      %v469 = vld [vmem:[#allocation2 + $0x169] sm:$0xff]
      %v470 = vld [vmem:[#allocation2 + $0x171] sm:$0xff]
      %v471 = vld [vmem:[#allocation2 + $0x179] sm:$0xff]
      %v472 = vpack.c.bf16 %v425, %v424
      %v473 = vpack.c.bf16 %v427, %v426
      %v474 = vpack.c.bf16 %v429, %v428
      %v475 = vpack.c.bf16 %v431, %v430
      %v476 = vpack.c.bf16 %v433, %v432
      %v477 = vpack.c.bf16 %v435, %v434
      %v478 = vpack.c.bf16 %v437, %v436
      %v479 = vpack.c.bf16 %v439, %v438
      %v480 = vpack.c.bf16 %v441, %v440
      %v481 = vpack.c.bf16 %v443, %v442
      %v482 = vpack.c.bf16 %v445, %v444
      %v483 = vpack.c.bf16 %v447, %v446
      %v484 = vpack.c.bf16 %v449, %v448
      %v485 = vpack.c.bf16 %v451, %v450
      %v486 = vpack.c.bf16 %v453, %v452
      %v487 = vpack.c.bf16 %v455, %v454
      %v488 = vpack.c.bf16 %v457, %v456
      %v489 = vpack.c.bf16 %v459, %v458
      %v490 = vpack.c.bf16 %v461, %v460
      %v491 = vpack.c.bf16 %v463, %v462
      %v492 = vpack.c.bf16 %v465, %v464
      %v493 = vpack.c.bf16 %v467, %v466
      %v494 = vpack.c.bf16 %v469, %v468
      %v495 = vpack.c.bf16 %v471, %v470
      %s496 = scalar_lea.vmem %s1, 64
      %v497 = vld [vmem:[%s496] sm:$0xf]
      %v498 = vld [vmem:[%s496 + $0x4] sm:$0xf]
      %v499 = vld [vmem:[%s496 + $0x8] sm:$0xf]
      %v500 = vld [vmem:[%s496 + $0xc] sm:$0xf]
      %v501 = vld [vmem:[%s496 + $0x10] sm:$0xf]
      %v502 = vld [vmem:[%s496 + $0x14] sm:$0xf]
      %v503 = vld [vmem:[%s496 + $0x18] sm:$0xf]
      %v504 = vld [vmem:[%s496 + $0x1c] sm:$0xf]
      %v505 = vld [vmem:[%s496 + $0x20] sm:$0xf]
      %v506 = vld [vmem:[%s496 + $0x24] sm:$0xf]
      %v507 = vld [vmem:[%s496 + $0x28] sm:$0xf]
      %v508 = vld [vmem:[%s496 + $0x2c] sm:$0xf]
      %v509 = vld [vmem:[%s496 + $0x30] sm:$0xf]
      %v510 = vld [vmem:[%s496 + $0x34] sm:$0xf]
      %v511 = vld [vmem:[%s496 + $0x38] sm:$0xf]
      %v512 = vld [vmem:[%s496 + $0x3c] sm:$0xf]
      %v529 = vunpack.c.l.b16 %v497
      %v530 = vunpack.c.l.b16 %v498
      %v531 = vunpack.c.l.b16 %v499
      %v532 = vunpack.c.l.b16 %v500
      %v533 = vunpack.c.l.b16 %v501
      %v534 = vunpack.c.l.b16 %v502
      %v535 = vunpack.c.l.b16 %v503
      %v536 = vunpack.c.l.b16 %v504
      %v537 = vunpack.c.l.b16 %v505
      %v538 = vunpack.c.l.b16 %v506
      %v539 = vunpack.c.l.b16 %v507
      %v540 = vunpack.c.l.b16 %v508
      %v541 = vunpack.c.l.b16 %v509
      %v542 = vunpack.c.l.b16 %v510
      %v543 = vunpack.c.l.b16 %v511
      %v544 = vunpack.c.l.b16 %v512
      %v545 = vpack.c.b16 %v530, %v529
      %v546 = vpack.c.b16 %v532, %v531
      %v547 = vpack.c.b16 %v534, %v533
      %v548 = vpack.c.b16 %v536, %v535
      %v549 = vpack.c.b16 %v538, %v537
      %v550 = vpack.c.b16 %v540, %v539
      %v551 = vpack.c.b16 %v542, %v541
      %v552 = vpack.c.b16 %v544, %v543
      %561 = vmatprep.subr.bf16.mxu0 0
      %562 = vmatpush1.bf16.msra.mxu0 %v545
      %563 = vmatprep.subr.bf16.mxu0 0
      %564 = vmatpush1.bf16.msra.mxu0 %v546
      %565 = vmatprep.subr.bf16.mxu0 0
      %566 = vmatpush1.bf16.msra.mxu0 %v547
      %567 = vmatprep.subr.bf16.mxu0 0
      %568 = vmatpush1.bf16.msra.mxu0 %v548
      %569 = vmatprep.subr.bf16.mxu0 0
      %570 = vmatpush1.bf16.msra.mxu0 %v549
      %571 = vmatprep.subr.bf16.mxu0 0
      %572 = vmatpush1.bf16.msra.mxu0 %v550
      %573 = vmatprep.subr.bf16.mxu0 0
      %574 = vmatpush1.bf16.msra.mxu0 %v551
      %575 = vmatprep.subr.bf16.mxu0 0
      %576 = vmatpush1.bf16.msra.mxu0 %v552
      %577 = vmatprep.subr.bf16.mxu0 0
      %578 = vmatpush1.bf16.msra.mxu0 0
      %579 = vmatprep.subr.bf16.mxu0 0
      %580 = vmatpush1.bf16.msra.mxu0 0
      %581 = vmatprep.subr.bf16.mxu0 0
      %582 = vmatpush1.bf16.msra.mxu0 0
      %583 = vmatprep.subr.bf16.mxu0 0
      %584 = vmatpush1.bf16.msra.mxu0 0
      %585 = vmatprep.subr.bf16.mxu0 0
      %586 = vmatpush1.bf16.msra.mxu0 0
      %587 = vmatprep.subr.bf16.mxu0 0
      %588 = vmatpush1.bf16.msra.mxu0 0
      %589 = vmatprep.subr.bf16.mxu0 0
      %590 = vmatpush1.bf16.msra.mxu0 0
      %591 = vmatprep.subr.bf16.mxu0 0
      %592 = vmatpush1.bf16.msra.mxu0 0
      %593 = vmatprep.mubr.bf16.mxu0 0
      %594 = vmatmul.mubr.bf16.gmra.mrb[0].mxu0 %v472
      %v595 = vpop.f32.mrb[0].mxu0
      %v596 = vadd.f32 0.0, %v595
      %v597 = vpop.f32.mrb[0].mxu0
      %v598 = vpop.f32.mrb[0].mxu0
      %v599 = vadd.f32 0.0, %v598
      %v600 = vpop.f32.mrb[0].mxu0
      %601 = vmatprep.mubr.bf16.mxu0 0
      %602 = vmatmul.mubr.bf16.gmra.mrb[0].mxu0 %v473
      %v603 = vpop.f32.mrb[0].mxu0
      %v604 = vadd.f32 0.0, %v603
      %v605 = vpop.f32.mrb[0].mxu0
      %v606 = vpop.f32.mrb[0].mxu0
      %v607 = vadd.f32 0.0, %v606
      %v608 = vpop.f32.mrb[0].mxu0
      %609 = vmatprep.mubr.bf16.mxu0 0
      %610 = vmatmul.mubr.bf16.gmra.mrb[0].mxu0 %v474
      %v611 = vpop.f32.mrb[0].mxu0
      %v612 = vadd.f32 0.0, %v611
      %v613 = vpop.f32.mrb[0].mxu0
      %v614 = vpop.f32.mrb[0].mxu0
      %v615 = vadd.f32 0.0, %v614
      %v616 = vpop.f32.mrb[0].mxu0
      %617 = vmatprep.mubr.bf16.mxu0 0
      %618 = vmatmul.mubr.bf16.gmra.mrb[0].mxu0 %v475
      %v619 = vpop.f32.mrb[0].mxu0
      %v620 = vadd.f32 0.0, %v619
      %v621 = vpop.f32.mrb[0].mxu0
      %v622 = vpop.f32.mrb[0].mxu0
      %v623 = vadd.f32 0.0, %v622
      %v624 = vpop.f32.mrb[0].mxu0
      %625 = vmatprep.mubr.bf16.mxu0 0
      %626 = vmatmul.mubr.bf16.gmra.mrb[0].mxu0 %v476
      %v627 = vpop.f32.mrb[0].mxu0
      %v628 = vadd.f32 0.0, %v627
      %v629 = vpop.f32.mrb[0].mxu0
      %v630 = vpop.f32.mrb[0].mxu0
      %v631 = vadd.f32 0.0, %v630
      %v632 = vpop.f32.mrb[0].mxu0
      %633 = vmatprep.mubr.bf16.mxu0 0
      %634 = vmatmul.mubr.bf16.gmra.mrb[0].mxu0 %v477
      %v635 = vpop.f32.mrb[0].mxu0
      %v636 = vadd.f32 0.0, %v635
      %v637 = vpop.f32.mrb[0].mxu0
      %v638 = vpop.f32.mrb[0].mxu0
      %v639 = vadd.f32 0.0, %v638
      %v640 = vpop.f32.mrb[0].mxu0
      %641 = vmatprep.mubr.bf16.mxu0 0
      %642 = vmatmul.mubr.bf16.gmra.mrb[0].mxu0 %v478
      %v643 = vpop.f32.mrb[0].mxu0
      %v644 = vadd.f32 0.0, %v643
      %v645 = vpop.f32.mrb[0].mxu0
      %v646 = vpop.f32.mrb[0].mxu0
      %v647 = vadd.f32 0.0, %v646
      %v648 = vpop.f32.mrb[0].mxu0
      %649 = vmatprep.mubr.bf16.mxu0 0
      %650 = vmatmul.mubr.bf16.gmra.mrb[0].mxu0 %v479
      %v651 = vpop.f32.mrb[0].mxu0
      %v652 = vadd.f32 0.0, %v651
      %v653 = vpop.f32.mrb[0].mxu0
      %v654 = vpop.f32.mrb[0].mxu0
      %v655 = vadd.f32 0.0, %v654
      %v656 = vpop.f32.mrb[0].mxu0
      %657 = vmatprep.mubr.bf16.mxu0 0
      %658 = vmatmul.mubr.bf16.gmra.mrb[0].mxu0 %v480
      %v659 = vpop.f32.mrb[0].mxu0
      %v660 = vadd.f32 0.0, %v659
      %v661 = vpop.f32.mrb[0].mxu0
      %v662 = vpop.f32.mrb[0].mxu0
      %v663 = vadd.f32 0.0, %v662
      %v664 = vpop.f32.mrb[0].mxu0
      %665 = vmatprep.mubr.bf16.mxu0 0
      %666 = vmatmul.mubr.bf16.gmra.mrb[0].mxu0 %v481
      %v667 = vpop.f32.mrb[0].mxu0
      %v668 = vadd.f32 0.0, %v667
      %v669 = vpop.f32.mrb[0].mxu0
      %v670 = vpop.f32.mrb[0].mxu0
      %v671 = vadd.f32 0.0, %v670
      %v672 = vpop.f32.mrb[0].mxu0
      %673 = vmatprep.mubr.bf16.mxu0 0
      %674 = vmatmul.mubr.bf16.gmra.mrb[0].mxu0 %v482
      %v675 = vpop.f32.mrb[0].mxu0
      %v676 = vadd.f32 0.0, %v675
      %v677 = vpop.f32.mrb[0].mxu0
      %v678 = vpop.f32.mrb[0].mxu0
      %v679 = vadd.f32 0.0, %v678
      %v680 = vpop.f32.mrb[0].mxu0
      %681 = vmatprep.mubr.bf16.mxu0 0
      %682 = vmatmul.mubr.bf16.gmra.mrb[0].mxu0 %v483
      %v683 = vpop.f32.mrb[0].mxu0
      %v684 = vadd.f32 0.0, %v683
      %v685 = vpop.f32.mrb[0].mxu0
      %v686 = vpop.f32.mrb[0].mxu0
      %v687 = vadd.f32 0.0, %v686
      %v688 = vpop.f32.mrb[0].mxu0
      %689 = vmatprep.mubr.bf16.mxu0 0
      %690 = vmatmul.mubr.bf16.gmra.mrb[0].mxu0 %v484
      %v691 = vpop.f32.mrb[0].mxu0
      %v692 = vadd.f32 0.0, %v691
      %v693 = vpop.f32.mrb[0].mxu0
      %v694 = vpop.f32.mrb[0].mxu0
      %v695 = vadd.f32 0.0, %v694
      %v696 = vpop.f32.mrb[0].mxu0
      %697 = vmatprep.mubr.bf16.mxu0 0
      %698 = vmatmul.mubr.bf16.gmra.mrb[0].mxu0 %v485
      %v699 = vpop.f32.mrb[0].mxu0
      %v700 = vadd.f32 0.0, %v699
      %v701 = vpop.f32.mrb[0].mxu0
      %v702 = vpop.f32.mrb[0].mxu0
      %v703 = vadd.f32 0.0, %v702
      %v704 = vpop.f32.mrb[0].mxu0
      %705 = vmatprep.mubr.bf16.mxu0 0
      %706 = vmatmul.mubr.bf16.gmra.mrb[0].mxu0 %v486
      %v707 = vpop.f32.mrb[0].mxu0
      %v708 = vadd.f32 0.0, %v707
      %v709 = vpop.f32.mrb[0].mxu0
      %v710 = vpop.f32.mrb[0].mxu0
      %v711 = vadd.f32 0.0, %v710
      %v712 = vpop.f32.mrb[0].mxu0
      %713 = vmatprep.mubr.bf16.mxu0 0
      %714 = vmatmul.mubr.bf16.gmra.mrb[0].mxu0 %v487
      %v715 = vpop.f32.mrb[0].mxu0
      %v716 = vadd.f32 0.0, %v715
      %v717 = vpop.f32.mrb[0].mxu0
      %v718 = vpop.f32.mrb[0].mxu0
      %v719 = vadd.f32 0.0, %v718
      %v720 = vpop.f32.mrb[0].mxu0
      %721 = vmatprep.mubr.bf16.mxu0 0
      %722 = vmatmul.mubr.bf16.gmra.mrb[0].mxu0 %v488
      %v723 = vpop.f32.mrb[0].mxu0
      %v724 = vadd.f32 0.0, %v723
      %v725 = vpop.f32.mrb[0].mxu0
      %v726 = vpop.f32.mrb[0].mxu0
      %v727 = vadd.f32 0.0, %v726
      %v728 = vpop.f32.mrb[0].mxu0
      %729 = vmatprep.mubr.bf16.mxu0 0
      %730 = vmatmul.mubr.bf16.gmra.mrb[0].mxu0 %v489
      %v731 = vpop.f32.mrb[0].mxu0
      %v732 = vadd.f32 0.0, %v731
      %v733 = vpop.f32.mrb[0].mxu0
      %v734 = vpop.f32.mrb[0].mxu0
      %v735 = vadd.f32 0.0, %v734
      %v736 = vpop.f32.mrb[0].mxu0
      %737 = vmatprep.mubr.bf16.mxu0 0
      %738 = vmatmul.mubr.bf16.gmra.mrb[0].mxu0 %v490
      %v739 = vpop.f32.mrb[0].mxu0
      %v740 = vadd.f32 0.0, %v739
      %v741 = vpop.f32.mrb[0].mxu0
      %v742 = vpop.f32.mrb[0].mxu0
      %v743 = vadd.f32 0.0, %v742
      %v744 = vpop.f32.mrb[0].mxu0
      %745 = vmatprep.mubr.bf16.mxu0 0
      %746 = vmatmul.mubr.bf16.gmra.mrb[0].mxu0 %v491
      %v747 = vpop.f32.mrb[0].mxu0
      %v748 = vadd.f32 0.0, %v747
      %v749 = vpop.f32.mrb[0].mxu0
      %v750 = vpop.f32.mrb[0].mxu0
      %v751 = vadd.f32 0.0, %v750
      %v752 = vpop.f32.mrb[0].mxu0
      %753 = vmatprep.mubr.bf16.mxu0 0
      %754 = vmatmul.mubr.bf16.gmra.mrb[0].mxu0 %v492
      %v755 = vpop.f32.mrb[0].mxu0
      %v756 = vadd.f32 0.0, %v755
      %v757 = vpop.f32.mrb[0].mxu0
      %v758 = vpop.f32.mrb[0].mxu0
      %v759 = vadd.f32 0.0, %v758
      %v760 = vpop.f32.mrb[0].mxu0
      %761 = vmatprep.mubr.bf16.mxu0 0
      %762 = vmatmul.mubr.bf16.gmra.mrb[0].mxu0 %v493
      %v763 = vpop.f32.mrb[0].mxu0
      %v764 = vadd.f32 0.0, %v763
      %v765 = vpop.f32.mrb[0].mxu0
      %v766 = vpop.f32.mrb[0].mxu0
      %v767 = vadd.f32 0.0, %v766
      %v768 = vpop.f32.mrb[0].mxu0
      %769 = vmatprep.mubr.bf16.mxu0 0
      %770 = vmatmul.mubr.bf16.gmra.mrb[0].mxu0 %v494
      %v771 = vpop.f32.mrb[0].mxu0
      %v772 = vadd.f32 0.0, %v771
      %v773 = vpop.f32.mrb[0].mxu0
      %v774 = vpop.f32.mrb[0].mxu0
      %v775 = vadd.f32 0.0, %v774
      %v776 = vpop.f32.mrb[0].mxu0
      %777 = vmatprep.mubr.bf16.mxu0 0
      %778 = vmatmul.mubr.bf16.gmra.mrb[0].mxu0 %v495
      %v779 = vpop.f32.mrb[0].mxu0
      %v780 = vadd.f32 0.0, %v779
      %v781 = vpop.f32.mrb[0].mxu0
      %v782 = vpop.f32.mrb[0].mxu0
      %v783 = vadd.f32 0.0, %v782
      %v784 = vpop.f32.mrb[0].mxu0
      %785 = vdwg.mxu0
      %v802 = vunpack.c.l.b16 %v408
      %v803 = vunpack.c.l.b16 %v409
      %v804 = vunpack.c.l.b16 %v410
      %v805 = vunpack.c.l.b16 %v411
      %v806 = vunpack.c.l.b16 %v412
      %v807 = vunpack.c.l.b16 %v413
      %v808 = vunpack.c.l.b16 %v414
      %v809 = vunpack.c.l.b16 %v415
      %v810 = vunpack.c.l.b16 %v416
      %v811 = vunpack.c.l.b16 %v417
      %v812 = vunpack.c.l.b16 %v418
      %v813 = vunpack.c.l.b16 %v419
      %v814 = vunpack.c.l.b16 %v420
      %v815 = vunpack.c.l.b16 %v421
      %v816 = vunpack.c.l.b16 %v422
      %v817 = vunpack.c.l.b16 %v423
      %v818 = vpack.c.b16 %v803, %v802
      %v819 = vpack.c.b16 %v805, %v804
      %v820 = vpack.c.b16 %v807, %v806
      %v821 = vpack.c.b16 %v809, %v808
      %v822 = vpack.c.b16 %v811, %v810
      %v823 = vpack.c.b16 %v813, %v812
      %v824 = vpack.c.b16 %v815, %v814
      %v825 = vpack.c.b16 %v817, %v816
      %834 = vmatprep.subr.bf16.mxu0 0
      %835 = vmatpush1.bf16.msra.mxu0 %v818
      %836 = vmatprep.subr.bf16.mxu0 0
      %837 = vmatpush1.bf16.msra.mxu0 %v819
      %838 = vmatprep.subr.bf16.mxu0 0
      %839 = vmatpush1.bf16.msra.mxu0 %v820
      %840 = vmatprep.subr.bf16.mxu0 0
      %841 = vmatpush1.bf16.msra.mxu0 %v821
      %842 = vmatprep.subr.bf16.mxu0 0
      %843 = vmatpush1.bf16.msra.mxu0 %v822
      %844 = vmatprep.subr.bf16.mxu0 0
      %845 = vmatpush1.bf16.msra.mxu0 %v823
      %846 = vmatprep.subr.bf16.mxu0 0
      %847 = vmatpush1.bf16.msra.mxu0 %v824
      %848 = vmatprep.subr.bf16.mxu0 0
      %849 = vmatpush1.bf16.msra.mxu0 %v825
      %850 = vmatprep.subr.bf16.mxu0 0
      %851 = vmatpush1.bf16.msra.mxu0 0
      %852 = vmatprep.subr.bf16.mxu0 0
      %853 = vmatpush1.bf16.msra.mxu0 0
      %854 = vmatprep.subr.bf16.mxu0 0
      %855 = vmatpush1.bf16.msra.mxu0 0
      %856 = vmatprep.subr.bf16.mxu0 0
      %857 = vmatpush1.bf16.msra.mxu0 0
      %858 = vmatprep.subr.bf16.mxu0 0
      %859 = vmatpush1.bf16.msra.mxu0 0
      %860 = vmatprep.subr.bf16.mxu0 0
      %861 = vmatpush1.bf16.msra.mxu0 0
      %862 = vmatprep.subr.bf16.mxu0 0
      %863 = vmatpush1.bf16.msra.mxu0 0
      %864 = vmatprep.subr.bf16.mxu0 0
      %865 = vmatpush1.bf16.msra.mxu0 0
      %866 = vmatprep.mubr.bf16.mxu0 0
      %867 = vmatmul.mubr.bf16.gmra.mrb[0].mxu0 %v384
      %v868 = vpop.f32.mrb[0].mxu0
      %v869 = vadd.f32 %v596, %v868
      %v870 = vpop.f32.mrb[0].mxu0
      %v871 = vpop.f32.mrb[0].mxu0
      %v872 = vadd.f32 %v599, %v871
      %v873 = vpop.f32.mrb[0].mxu0
      %874 = vmatprep.mubr.bf16.mxu0 0
      %875 = vmatmul.mubr.bf16.gmra.mrb[0].mxu0 %v385
      %v876 = vpop.f32.mrb[0].mxu0
      %v877 = vadd.f32 %v604, %v876
      %v878 = vpop.f32.mrb[0].mxu0
      %v879 = vpop.f32.mrb[0].mxu0
      %v880 = vadd.f32 %v607, %v879
      %v881 = vpop.f32.mrb[0].mxu0
      %882 = vmatprep.mubr.bf16.mxu0 0
      %883 = vmatmul.mubr.bf16.gmra.mrb[0].mxu0 %v386
      %v884 = vpop.f32.mrb[0].mxu0
      %v885 = vadd.f32 %v612, %v884
      %v886 = vpop.f32.mrb[0].mxu0
      %v887 = vpop.f32.mrb[0].mxu0
      %v888 = vadd.f32 %v615, %v887
      %v889 = vpop.f32.mrb[0].mxu0
      %890 = vmatprep.mubr.bf16.mxu0 0
      %891 = vmatmul.mubr.bf16.gmra.mrb[0].mxu0 %v387
      %v892 = vpop.f32.mrb[0].mxu0
      %v893 = vadd.f32 %v620, %v892
      %v894 = vpop.f32.mrb[0].mxu0
      %v895 = vpop.f32.mrb[0].mxu0
      %v896 = vadd.f32 %v623, %v895
      %v897 = vpop.f32.mrb[0].mxu0
      %898 = vmatprep.mubr.bf16.mxu0 0
      %899 = vmatmul.mubr.bf16.gmra.mrb[0].mxu0 %v388
      %v900 = vpop.f32.mrb[0].mxu0
      %v901 = vadd.f32 %v628, %v900
      %v902 = vpop.f32.mrb[0].mxu0
      %v903 = vpop.f32.mrb[0].mxu0
      %v904 = vadd.f32 %v631, %v903
      %v905 = vpop.f32.mrb[0].mxu0
      %906 = vmatprep.mubr.bf16.mxu0 0
      %907 = vmatmul.mubr.bf16.gmra.mrb[0].mxu0 %v389
      %v908 = vpop.f32.mrb[0].mxu0
      %v909 = vadd.f32 %v636, %v908
      %v910 = vpop.f32.mrb[0].mxu0
      %v911 = vpop.f32.mrb[0].mxu0
      %v912 = vadd.f32 %v639, %v911
      %v913 = vpop.f32.mrb[0].mxu0
      %914 = vmatprep.mubr.bf16.mxu0 0
      %915 = vmatmul.mubr.bf16.gmra.mrb[0].mxu0 %v390
      %v916 = vpop.f32.mrb[0].mxu0
      %v917 = vadd.f32 %v644, %v916
      %v918 = vpop.f32.mrb[0].mxu0
      %v919 = vpop.f32.mrb[0].mxu0
      %v920 = vadd.f32 %v647, %v919
      %v921 = vpop.f32.mrb[0].mxu0
      %922 = vmatprep.mubr.bf16.mxu0 0
      %923 = vmatmul.mubr.bf16.gmra.mrb[0].mxu0 %v391
      %v924 = vpop.f32.mrb[0].mxu0
      %v925 = vadd.f32 %v652, %v924
      %v926 = vpop.f32.mrb[0].mxu0
      %v927 = vpop.f32.mrb[0].mxu0
      %v928 = vadd.f32 %v655, %v927
      %v929 = vpop.f32.mrb[0].mxu0
      %930 = vmatprep.mubr.bf16.mxu0 0
      %931 = vmatmul.mubr.bf16.gmra.mrb[0].mxu0 %v392
      %v932 = vpop.f32.mrb[0].mxu0
      %v933 = vadd.f32 %v660, %v932
      %v934 = vpop.f32.mrb[0].mxu0
      %v935 = vpop.f32.mrb[0].mxu0
      %v936 = vadd.f32 %v663, %v935
      %v937 = vpop.f32.mrb[0].mxu0
      %938 = vmatprep.mubr.bf16.mxu0 0
      %939 = vmatmul.mubr.bf16.gmra.mrb[0].mxu0 %v393
      %v940 = vpop.f32.mrb[0].mxu0
      %v941 = vadd.f32 %v668, %v940
      %v942 = vpop.f32.mrb[0].mxu0
      %v943 = vpop.f32.mrb[0].mxu0
      %v944 = vadd.f32 %v671, %v943
      %v945 = vpop.f32.mrb[0].mxu0
      %946 = vmatprep.mubr.bf16.mxu0 0
      %947 = vmatmul.mubr.bf16.gmra.mrb[0].mxu0 %v394
      %v948 = vpop.f32.mrb[0].mxu0
      %v949 = vadd.f32 %v676, %v948
      %v950 = vpop.f32.mrb[0].mxu0
      %v951 = vpop.f32.mrb[0].mxu0
      %v952 = vadd.f32 %v679, %v951
      %v953 = vpop.f32.mrb[0].mxu0
      %954 = vmatprep.mubr.bf16.mxu0 0
      %955 = vmatmul.mubr.bf16.gmra.mrb[0].mxu0 %v395
      %v956 = vpop.f32.mrb[0].mxu0
      %v957 = vadd.f32 %v684, %v956
      %v958 = vpop.f32.mrb[0].mxu0
      %v959 = vpop.f32.mrb[0].mxu0
      %v960 = vadd.f32 %v687, %v959
      %v961 = vpop.f32.mrb[0].mxu0
      %962 = vmatprep.mubr.bf16.mxu0 0
      %963 = vmatmul.mubr.bf16.gmra.mrb[0].mxu0 %v396
      %v964 = vpop.f32.mrb[0].mxu0
      %v965 = vadd.f32 %v692, %v964
      %v966 = vpop.f32.mrb[0].mxu0
      %v967 = vpop.f32.mrb[0].mxu0
      %v968 = vadd.f32 %v695, %v967
      %v969 = vpop.f32.mrb[0].mxu0
      %970 = vmatprep.mubr.bf16.mxu0 0
      %971 = vmatmul.mubr.bf16.gmra.mrb[0].mxu0 %v397
      %v972 = vpop.f32.mrb[0].mxu0
      %v973 = vadd.f32 %v700, %v972
      %v974 = vpop.f32.mrb[0].mxu0
      %v975 = vpop.f32.mrb[0].mxu0
      %v976 = vadd.f32 %v703, %v975
      %v977 = vpop.f32.mrb[0].mxu0
      %978 = vmatprep.mubr.bf16.mxu0 0
      %979 = vmatmul.mubr.bf16.gmra.mrb[0].mxu0 %v398
      %v980 = vpop.f32.mrb[0].mxu0
      %v981 = vadd.f32 %v708, %v980
      %v982 = vpop.f32.mrb[0].mxu0
      %v983 = vpop.f32.mrb[0].mxu0
      %v984 = vadd.f32 %v711, %v983
      %v985 = vpop.f32.mrb[0].mxu0
      %986 = vmatprep.mubr.bf16.mxu0 0
      %987 = vmatmul.mubr.bf16.gmra.mrb[0].mxu0 %v399
      %v988 = vpop.f32.mrb[0].mxu0
      %v989 = vadd.f32 %v716, %v988
      %v990 = vpop.f32.mrb[0].mxu0
      %v991 = vpop.f32.mrb[0].mxu0
      %v992 = vadd.f32 %v719, %v991
      %v993 = vpop.f32.mrb[0].mxu0
      %994 = vmatprep.mubr.bf16.mxu0 0
      %995 = vmatmul.mubr.bf16.gmra.mrb[0].mxu0 %v400
      %v996 = vpop.f32.mrb[0].mxu0
      %v997 = vadd.f32 %v724, %v996
      %v998 = vpop.f32.mrb[0].mxu0
      %v999 = vpop.f32.mrb[0].mxu0
      %v1000 = vadd.f32 %v727, %v999
      %v1001 = vpop.f32.mrb[0].mxu0
      %1002 = vmatprep.mubr.bf16.mxu0 0
      %1003 = vmatmul.mubr.bf16.gmra.mrb[0].mxu0 %v401
      %v1004 = vpop.f32.mrb[0].mxu0
      %v1005 = vadd.f32 %v732, %v1004
      %v1006 = vpop.f32.mrb[0].mxu0
      %v1007 = vpop.f32.mrb[0].mxu0
      %v1008 = vadd.f32 %v735, %v1007
      %v1009 = vpop.f32.mrb[0].mxu0
      %1010 = vmatprep.mubr.bf16.mxu0 0
      %1011 = vmatmul.mubr.bf16.gmra.mrb[0].mxu0 %v402
      %v1012 = vpop.f32.mrb[0].mxu0
      %v1013 = vadd.f32 %v740, %v1012
      %v1014 = vpop.f32.mrb[0].mxu0
      %v1015 = vpop.f32.mrb[0].mxu0
      %v1016 = vadd.f32 %v743, %v1015
      %v1017 = vpop.f32.mrb[0].mxu0
      %1018 = vmatprep.mubr.bf16.mxu0 0
      %1019 = vmatmul.mubr.bf16.gmra.mrb[0].mxu0 %v403
      %v1020 = vpop.f32.mrb[0].mxu0
      %v1021 = vadd.f32 %v748, %v1020
      %v1022 = vpop.f32.mrb[0].mxu0
      %v1023 = vpop.f32.mrb[0].mxu0
      %v1024 = vadd.f32 %v751, %v1023
      %v1025 = vpop.f32.mrb[0].mxu0
      %1026 = vmatprep.mubr.bf16.mxu0 0
      %1027 = vmatmul.mubr.bf16.gmra.mrb[0].mxu0 %v404
      %v1028 = vpop.f32.mrb[0].mxu0
      %v1029 = vadd.f32 %v756, %v1028
      %v1030 = vpop.f32.mrb[0].mxu0
      %v1031 = vpop.f32.mrb[0].mxu0
      %v1032 = vadd.f32 %v759, %v1031
      %v1033 = vpop.f32.mrb[0].mxu0
      %1034 = vmatprep.mubr.bf16.mxu0 0
      %1035 = vmatmul.mubr.bf16.gmra.mrb[0].mxu0 %v405
      %v1036 = vpop.f32.mrb[0].mxu0
      %v1037 = vadd.f32 %v764, %v1036
      %v1038 = vpop.f32.mrb[0].mxu0
      %v1039 = vpop.f32.mrb[0].mxu0
      %v1040 = vadd.f32 %v767, %v1039
      %v1041 = vpop.f32.mrb[0].mxu0
      %1042 = vmatprep.mubr.bf16.mxu0 0
      %1043 = vmatmul.mubr.bf16.gmra.mrb[0].mxu0 %v406
      %v1044 = vpop.f32.mrb[0].mxu0
      %v1045 = vadd.f32 %v772, %v1044
      %v1046 = vpop.f32.mrb[0].mxu0
      %v1047 = vpop.f32.mrb[0].mxu0
      %v1048 = vadd.f32 %v775, %v1047
      %v1049 = vpop.f32.mrb[0].mxu0
      %1050 = vmatprep.mubr.bf16.mxu0 0
      %1051 = vmatmul.mubr.bf16.gmra.mrb[0].mxu0 %v407
      %v1052 = vpop.f32.mrb[0].mxu0
      %v1053 = vadd.f32 %v780, %v1052
      %v1054 = vpop.f32.mrb[0].mxu0
      %v1055 = vpop.f32.mrb[0].mxu0
      %v1056 = vadd.f32 %v783, %v1055
      %v1057 = vpop.f32.mrb[0].mxu0
      %1058 = vdwg.mxu0
      %v1059 = vld [vmem:[#allocation2 + $0x2] sm:$0xff]
      %v1060 = vld [vmem:[#allocation2 + $0xa] sm:$0xff]
      %v1061 = vld [vmem:[#allocation2 + $0x12] sm:$0xff]
      %v1062 = vld [vmem:[#allocation2 + $0x1a] sm:$0xff]
      %v1063 = vld [vmem:[#allocation2 + $0x22] sm:$0xff]
      %v1064 = vld [vmem:[#allocation2 + $0x2a] sm:$0xff]
      %v1065 = vld [vmem:[#allocation2 + $0x32] sm:$0xff]
      %v1066 = vld [vmem:[#allocation2 + $0x3a] sm:$0xff]
      %v1067 = vld [vmem:[#allocation2 + $0x42] sm:$0xff]
      %v1068 = vld [vmem:[#allocation2 + $0x4a] sm:$0xff]
      %v1069 = vld [vmem:[#allocation2 + $0x52] sm:$0xff]
      %v1070 = vld [vmem:[#allocation2 + $0x5a] sm:$0xff]
      %v1071 = vld [vmem:[#allocation2 + $0x62] sm:$0xff]
      %v1072 = vld [vmem:[#allocation2 + $0x6a] sm:$0xff]
      %v1073 = vld [vmem:[#allocation2 + $0x72] sm:$0xff]
      %v1074 = vld [vmem:[#allocation2 + $0x7a] sm:$0xff]
      %v1075 = vld [vmem:[#allocation2 + $0x82] sm:$0xff]
      %v1076 = vld [vmem:[#allocation2 + $0x8a] sm:$0xff]
      %v1077 = vld [vmem:[#allocation2 + $0x92] sm:$0xff]
      %v1078 = vld [vmem:[#allocation2 + $0x9a] sm:$0xff]
      %v1079 = vld [vmem:[#allocation2 + $0xa2] sm:$0xff]
      %v1080 = vld [vmem:[#allocation2 + $0xaa] sm:$0xff]
      %v1081 = vld [vmem:[#allocation2 + $0xb2] sm:$0xff]
      %v1082 = vld [vmem:[#allocation2 + $0xba] sm:$0xff]
      %v1083 = vld [vmem:[#allocation2 + $0xc2] sm:$0xff]
      %v1084 = vld [vmem:[#allocation2 + $0xca] sm:$0xff]
      %v1085 = vld [vmem:[#allocation2 + $0xd2] sm:$0xff]
      %v1086 = vld [vmem:[#allocation2 + $0xda] sm:$0xff]
      %v1087 = vld [vmem:[#allocation2 + $0xe2] sm:$0xff]
      %v1088 = vld [vmem:[#allocation2 + $0xea] sm:$0xff]
      %v1089 = vld [vmem:[#allocation2 + $0xf2] sm:$0xff]
      %v1090 = vld [vmem:[#allocation2 + $0xfa] sm:$0xff]
      %v1091 = vld [vmem:[#allocation2 + $0x102] sm:$0xff]
      %v1092 = vld [vmem:[#allocation2 + $0x10a] sm:$0xff]
      %v1093 = vld [vmem:[#allocation2 + $0x112] sm:$0xff]
      %v1094 = vld [vmem:[#allocation2 + $0x11a] sm:$0xff]
      %v1095 = vld [vmem:[#allocation2 + $0x122] sm:$0xff]
      %v1096 = vld [vmem:[#allocation2 + $0x12a] sm:$0xff]
      %v1097 = vld [vmem:[#allocation2 + $0x132] sm:$0xff]
      %v1098 = vld [vmem:[#allocation2 + $0x13a] sm:$0xff]
      %v1099 = vld [vmem:[#allocation2 + $0x142] sm:$0xff]
      %v1100 = vld [vmem:[#allocation2 + $0x14a] sm:$0xff]
      %v1101 = vld [vmem:[#allocation2 + $0x152] sm:$0xff]
      %v1102 = vld [vmem:[#allocation2 + $0x15a] sm:$0xff]
      %v1103 = vld [vmem:[#allocation2 + $0x162] sm:$0xff]
      %v1104 = vld [vmem:[#allocation2 + $0x16a] sm:$0xff]
      %v1105 = vld [vmem:[#allocation2 + $0x172] sm:$0xff]
      %v1106 = vld [vmem:[#allocation2 + $0x17a] sm:$0xff]
      %v1107 = vpack.c.bf16 %v1060, %v1059
      %v1108 = vpack.c.bf16 %v1062, %v1061
      %v1109 = vpack.c.bf16 %v1064, %v1063
      %v1110 = vpack.c.bf16 %v1066, %v1065
      %v1111 = vpack.c.bf16 %v1068, %v1067
      %v1112 = vpack.c.bf16 %v1070, %v1069
      %v1113 = vpack.c.bf16 %v1072, %v1071
      %v1114 = vpack.c.bf16 %v1074, %v1073
      %v1115 = vpack.c.bf16 %v1076, %v1075
      %v1116 = vpack.c.bf16 %v1078, %v1077
      %v1117 = vpack.c.bf16 %v1080, %v1079
      %v1118 = vpack.c.bf16 %v1082, %v1081
      %v1119 = vpack.c.bf16 %v1084, %v1083
      %v1120 = vpack.c.bf16 %v1086, %v1085
      %v1121 = vpack.c.bf16 %v1088, %v1087
      %v1122 = vpack.c.bf16 %v1090, %v1089
      %v1123 = vpack.c.bf16 %v1092, %v1091
      %v1124 = vpack.c.bf16 %v1094, %v1093
      %v1125 = vpack.c.bf16 %v1096, %v1095
      %v1126 = vpack.c.bf16 %v1098, %v1097
      %v1127 = vpack.c.bf16 %v1100, %v1099
      %v1128 = vpack.c.bf16 %v1102, %v1101
      %v1129 = vpack.c.bf16 %v1104, %v1103
      %v1130 = vpack.c.bf16 %v1106, %v1105
      %s1131 = scalar_lea.vmem %s1, 128
      %v1132 = vld [vmem:[%s1131] sm:$0xf]
      %v1133 = vld [vmem:[%s1131 + $0x4] sm:$0xf]
      %v1134 = vld [vmem:[%s1131 + $0x8] sm:$0xf]
      %v1135 = vld [vmem:[%s1131 + $0xc] sm:$0xf]
      %v1136 = vld [vmem:[%s1131 + $0x10] sm:$0xf]
      %v1137 = vld [vmem:[%s1131 + $0x14] sm:$0xf]
      %v1138 = vld [vmem:[%s1131 + $0x18] sm:$0xf]
      %v1139 = vld [vmem:[%s1131 + $0x1c] sm:$0xf]
      %v1140 = vld [vmem:[%s1131 + $0x20] sm:$0xf]
      %v1141 = vld [vmem:[%s1131 + $0x24] sm:$0xf]
      %v1142 = vld [vmem:[%s1131 + $0x28] sm:$0xf]
      %v1143 = vld [vmem:[%s1131 + $0x2c] sm:$0xf]
      %v1144 = vld [vmem:[%s1131 + $0x30] sm:$0xf]
      %v1145 = vld [vmem:[%s1131 + $0x34] sm:$0xf]
      %v1146 = vld [vmem:[%s1131 + $0x38] sm:$0xf]
      %v1147 = vld [vmem:[%s1131 + $0x3c] sm:$0xf]
      %v1164 = vunpack.c.l.b16 %v1132
      %v1165 = vunpack.c.l.b16 %v1133
      %v1166 = vunpack.c.l.b16 %v1134
      %v1167 = vunpack.c.l.b16 %v1135
      %v1168 = vunpack.c.l.b16 %v1136
      %v1169 = vunpack.c.l.b16 %v1137
      %v1170 = vunpack.c.l.b16 %v1138
      %v1171 = vunpack.c.l.b16 %v1139
      %v1172 = vunpack.c.l.b16 %v1140
      %v1173 = vunpack.c.l.b16 %v1141
      %v1174 = vunpack.c.l.b16 %v1142
      %v1175 = vunpack.c.l.b16 %v1143
      %v1176 = vunpack.c.l.b16 %v1144
      %v1177 = vunpack.c.l.b16 %v1145
      %v1178 = vunpack.c.l.b16 %v1146
      %v1179 = vunpack.c.l.b16 %v1147
      %v1180 = vpack.c.b16 %v1165, %v1164
      %v1181 = vpack.c.b16 %v1167, %v1166
      %v1182 = vpack.c.b16 %v1169, %v1168
      %v1183 = vpack.c.b16 %v1171, %v1170
      %v1184 = vpack.c.b16 %v1173, %v1172
      %v1185 = vpack.c.b16 %v1175, %v1174
      %v1186 = vpack.c.b16 %v1177, %v1176
      %v1187 = vpack.c.b16 %v1179, %v1178
      %1196 = vmatprep.subr.bf16.mxu0 0
      %1197 = vmatpush1.bf16.msra.mxu0 %v1180
      %1198 = vmatprep.subr.bf16.mxu0 0
      %1199 = vmatpush1.bf16.msra.mxu0 %v1181
      %1200 = vmatprep.subr.bf16.mxu0 0
      %1201 = vmatpush1.bf16.msra.mxu0 %v1182
      %1202 = vmatprep.subr.bf16.mxu0 0
      %1203 = vmatpush1.bf16.msra.mxu0 %v1183
      %1204 = vmatprep.subr.bf16.mxu0 0
      %1205 = vmatpush1.bf16.msra.mxu0 %v1184
      %1206 = vmatprep.subr.bf16.mxu0 0
      %1207 = vmatpush1.bf16.msra.mxu0 %v1185
      %1208 = vmatprep.subr.bf16.mxu0 0
      %1209 = vmatpush1.bf16.msra.mxu0 %v1186
      %1210 = vmatprep.subr.bf16.mxu0 0
      %1211 = vmatpush1.bf16.msra.mxu0 %v1187
      %1212 = vmatprep.subr.bf16.mxu0 0
      %1213 = vmatpush1.bf16.msra.mxu0 0
      %1214 = vmatprep.subr.bf16.mxu0 0
      %1215 = vmatpush1.bf16.msra.mxu0 0
      %1216 = vmatprep.subr.bf16.mxu0 0
      %1217 = vmatpush1.bf16.msra.mxu0 0
      %1218 = vmatprep.subr.bf16.mxu0 0
      %1219 = vmatpush1.bf16.msra.mxu0 0
      %1220 = vmatprep.subr.bf16.mxu0 0
      %1221 = vmatpush1.bf16.msra.mxu0 0
      %1222 = vmatprep.subr.bf16.mxu0 0
      %1223 = vmatpush1.bf16.msra.mxu0 0
      %1224 = vmatprep.subr.bf16.mxu0 0
      %1225 = vmatpush1.bf16.msra.mxu0 0
      %1226 = vmatprep.subr.bf16.mxu0 0
      %1227 = vmatpush1.bf16.msra.mxu0 0
      %1228 = vmatprep.mubr.bf16.mxu0 0
      %1229 = vmatmul.mubr.bf16.gmra.mrb[0].mxu0 %v1107
      %v1230 = vpop.f32.mrb[0].mxu0
      %v1231 = vadd.f32 0.0, %v1230
      %v1232 = vpop.f32.mrb[0].mxu0
      %v1233 = vpop.f32.mrb[0].mxu0
      %v1234 = vadd.f32 0.0, %v1233
      %v1235 = vpop.f32.mrb[0].mxu0
      %1236 = vmatprep.mubr.bf16.mxu0 0
      %1237 = vmatmul.mubr.bf16.gmra.mrb[0].mxu0 %v1108
      %v1238 = vpop.f32.mrb[0].mxu0
      %v1239 = vadd.f32 0.0, %v1238
      %v1240 = vpop.f32.mrb[0].mxu0
      %v1241 = vpop.f32.mrb[0].mxu0
      %v1242 = vadd.f32 0.0, %v1241
      %v1243 = vpop.f32.mrb[0].mxu0
      %1244 = vmatprep.mubr.bf16.mxu0 0
      %1245 = vmatmul.mubr.bf16.gmra.mrb[0].mxu0 %v1109
      %v1246 = vpop.f32.mrb[0].mxu0
      %v1247 = vadd.f32 0.0, %v1246
      %v1248 = vpop.f32.mrb[0].mxu0
      %v1249 = vpop.f32.mrb[0].mxu0
      %v1250 = vadd.f32 0.0, %v1249
      %v1251 = vpop.f32.mrb[0].mxu0
      %1252 = vmatprep.mubr.bf16.mxu0 0
      %1253 = vmatmul.mubr.bf16.gmra.mrb[0].mxu0 %v1110
      %v1254 = vpop.f32.mrb[0].mxu0
      %v1255 = vadd.f32 0.0, %v1254
      %v1256 = vpop.f32.mrb[0].mxu0
      %v1257 = vpop.f32.mrb[0].mxu0
      %v1258 = vadd.f32 0.0, %v1257
      %v1259 = vpop.f32.mrb[0].mxu0
      %1260 = vmatprep.mubr.bf16.mxu0 0
      %1261 = vmatmul.mubr.bf16.gmra.mrb[0].mxu0 %v1111
      %v1262 = vpop.f32.mrb[0].mxu0
      %v1263 = vadd.f32 0.0, %v1262
      %v1264 = vpop.f32.mrb[0].mxu0
      %v1265 = vpop.f32.mrb[0].mxu0
      %v1266 = vadd.f32 0.0, %v1265
      %v1267 = vpop.f32.mrb[0].mxu0
      %1268 = vmatprep.mubr.bf16.mxu0 0
      %1269 = vmatmul.mubr.bf16.gmra.mrb[0].mxu0 %v1112
      %v1270 = vpop.f32.mrb[0].mxu0
      %v1271 = vadd.f32 0.0, %v1270
      %v1272 = vpop.f32.mrb[0].mxu0
      %v1273 = vpop.f32.mrb[0].mxu0
      %v1274 = vadd.f32 0.0, %v1273
      %v1275 = vpop.f32.mrb[0].mxu0
      %1276 = vmatprep.mubr.bf16.mxu0 0
      %1277 = vmatmul.mubr.bf16.gmra.mrb[0].mxu0 %v1113
      %v1278 = vpop.f32.mrb[0].mxu0
      %v1279 = vadd.f32 0.0, %v1278
      %v1280 = vpop.f32.mrb[0].mxu0
      %v1281 = vpop.f32.mrb[0].mxu0
      %v1282 = vadd.f32 0.0, %v1281
      %v1283 = vpop.f32.mrb[0].mxu0
      %1284 = vmatprep.mubr.bf16.mxu0 0
      %1285 = vmatmul.mubr.bf16.gmra.mrb[0].mxu0 %v1114
      %v1286 = vpop.f32.mrb[0].mxu0
      %v1287 = vadd.f32 0.0, %v1286
      %v1288 = vpop.f32.mrb[0].mxu0
      %v1289 = vpop.f32.mrb[0].mxu0
      %v1290 = vadd.f32 0.0, %v1289
      %v1291 = vpop.f32.mrb[0].mxu0
      %1292 = vmatprep.mubr.bf16.mxu0 0
      %1293 = vmatmul.mubr.bf16.gmra.mrb[0].mxu0 %v1115
      %v1294 = vpop.f32.mrb[0].mxu0
      %v1295 = vadd.f32 0.0, %v1294
      %v1296 = vpop.f32.mrb[0].mxu0
      %v1297 = vpop.f32.mrb[0].mxu0
      %v1298 = vadd.f32 0.0, %v1297
      %v1299 = vpop.f32.mrb[0].mxu0
      %1300 = vmatprep.mubr.bf16.mxu0 0
      %1301 = vmatmul.mubr.bf16.gmra.mrb[0].mxu0 %v1116
      %v1302 = vpop.f32.mrb[0].mxu0
      %v1303 = vadd.f32 0.0, %v1302
      %v1304 = vpop.f32.mrb[0].mxu0
      %v1305 = vpop.f32.mrb[0].mxu0
      %v1306 = vadd.f32 0.0, %v1305
      %v1307 = vpop.f32.mrb[0].mxu0
      %1308 = vmatprep.mubr.bf16.mxu0 0
      %1309 = vmatmul.mubr.bf16.gmra.mrb[0].mxu0 %v1117
      %v1310 = vpop.f32.mrb[0].mxu0
      %v1311 = vadd.f32 0.0, %v1310
      %v1312 = vpop.f32.mrb[0].mxu0
      %v1313 = vpop.f32.mrb[0].mxu0
      %v1314 = vadd.f32 0.0, %v1313
      %v1315 = vpop.f32.mrb[0].mxu0
      %1316 = vmatprep.mubr.bf16.mxu0 0
      %1317 = vmatmul.mubr.bf16.gmra.mrb[0].mxu0 %v1118
      %v1318 = vpop.f32.mrb[0].mxu0
      %v1319 = vadd.f32 0.0, %v1318
      %v1320 = vpop.f32.mrb[0].mxu0
      %v1321 = vpop.f32.mrb[0].mxu0
      %v1322 = vadd.f32 0.0, %v1321
      %v1323 = vpop.f32.mrb[0].mxu0
      %1324 = vmatprep.mubr.bf16.mxu0 0
      %1325 = vmatmul.mubr.bf16.gmra.mrb[0].mxu0 %v1119
      %v1326 = vpop.f32.mrb[0].mxu0
      %v1327 = vadd.f32 0.0, %v1326
      %v1328 = vpop.f32.mrb[0].mxu0
      %v1329 = vpop.f32.mrb[0].mxu0
      %v1330 = vadd.f32 0.0, %v1329
      %v1331 = vpop.f32.mrb[0].mxu0
      %1332 = vmatprep.mubr.bf16.mxu0 0
      %1333 = vmatmul.mubr.bf16.gmra.mrb[0].mxu0 %v1120
      %v1334 = vpop.f32.mrb[0].mxu0
      %v1335 = vadd.f32 0.0, %v1334
      %v1336 = vpop.f32.mrb[0].mxu0
      %v1337 = vpop.f32.mrb[0].mxu0
      %v1338 = vadd.f32 0.0, %v1337
      %v1339 = vpop.f32.mrb[0].mxu0
      %1340 = vmatprep.mubr.bf16.mxu0 0
      %1341 = vmatmul.mubr.bf16.gmra.mrb[0].mxu0 %v1121
      %v1342 = vpop.f32.mrb[0].mxu0
      %v1343 = vadd.f32 0.0, %v1342
      %v1344 = vpop.f32.mrb[0].mxu0
      %v1345 = vpop.f32.mrb[0].mxu0
      %v1346 = vadd.f32 0.0, %v1345
      %v1347 = vpop.f32.mrb[0].mxu0
      %1348 = vmatprep.mubr.bf16.mxu0 0
      %1349 = vmatmul.mubr.bf16.gmra.mrb[0].mxu0 %v1122
      %v1350 = vpop.f32.mrb[0].mxu0
      %v1351 = vadd.f32 0.0, %v1350
      %v1352 = vpop.f32.mrb[0].mxu0
      %v1353 = vpop.f32.mrb[0].mxu0
      %v1354 = vadd.f32 0.0, %v1353
      %v1355 = vpop.f32.mrb[0].mxu0
      %1356 = vmatprep.mubr.bf16.mxu0 0
      %1357 = vmatmul.mubr.bf16.gmra.mrb[0].mxu0 %v1123
      %v1358 = vpop.f32.mrb[0].mxu0
      %v1359 = vadd.f32 0.0, %v1358
      %v1360 = vpop.f32.mrb[0].mxu0
      %v1361 = vpop.f32.mrb[0].mxu0
      %v1362 = vadd.f32 0.0, %v1361
      %v1363 = vpop.f32.mrb[0].mxu0
      %1364 = vmatprep.mubr.bf16.mxu0 0
      %1365 = vmatmul.mubr.bf16.gmra.mrb[0].mxu0 %v1124
      %v1366 = vpop.f32.mrb[0].mxu0
      %v1367 = vadd.f32 0.0, %v1366
      %v1368 = vpop.f32.mrb[0].mxu0
      %v1369 = vpop.f32.mrb[0].mxu0
      %v1370 = vadd.f32 0.0, %v1369
      %v1371 = vpop.f32.mrb[0].mxu0
      %1372 = vmatprep.mubr.bf16.mxu0 0
      %1373 = vmatmul.mubr.bf16.gmra.mrb[0].mxu0 %v1125
      %v1374 = vpop.f32.mrb[0].mxu0
      %v1375 = vadd.f32 0.0, %v1374
      %v1376 = vpop.f32.mrb[0].mxu0
      %v1377 = vpop.f32.mrb[0].mxu0
      %v1378 = vadd.f32 0.0, %v1377
      %v1379 = vpop.f32.mrb[0].mxu0
      %1380 = vmatprep.mubr.bf16.mxu0 0
      %1381 = vmatmul.mubr.bf16.gmra.mrb[0].mxu0 %v1126
      %v1382 = vpop.f32.mrb[0].mxu0
      %v1383 = vadd.f32 0.0, %v1382
      %v1384 = vpop.f32.mrb[0].mxu0
      %v1385 = vpop.f32.mrb[0].mxu0
      %v1386 = vadd.f32 0.0, %v1385
      %v1387 = vpop.f32.mrb[0].mxu0
      %1388 = vmatprep.mubr.bf16.mxu0 0
      %1389 = vmatmul.mubr.bf16.gmra.mrb[0].mxu0 %v1127
      %v1390 = vpop.f32.mrb[0].mxu0
      %v1391 = vadd.f32 0.0, %v1390
      %v1392 = vpop.f32.mrb[0].mxu0
      %v1393 = vpop.f32.mrb[0].mxu0
      %v1394 = vadd.f32 0.0, %v1393
      %v1395 = vpop.f32.mrb[0].mxu0
      %1396 = vmatprep.mubr.bf16.mxu0 0
      %1397 = vmatmul.mubr.bf16.gmra.mrb[0].mxu0 %v1128
      %v1398 = vpop.f32.mrb[0].mxu0
      %v1399 = vadd.f32 0.0, %v1398
      %v1400 = vpop.f32.mrb[0].mxu0
      %v1401 = vpop.f32.mrb[0].mxu0
      %v1402 = vadd.f32 0.0, %v1401
      %v1403 = vpop.f32.mrb[0].mxu0
      %1404 = vmatprep.mubr.bf16.mxu0 0
      %1405 = vmatmul.mubr.bf16.gmra.mrb[0].mxu0 %v1129
      %v1406 = vpop.f32.mrb[0].mxu0
      %v1407 = vadd.f32 0.0, %v1406
      %v1408 = vpop.f32.mrb[0].mxu0
      %v1409 = vpop.f32.mrb[0].mxu0
      %v1410 = vadd.f32 0.0, %v1409
      %v1411 = vpop.f32.mrb[0].mxu0
      %1412 = vmatprep.mubr.bf16.mxu0 0
      %1413 = vmatmul.mubr.bf16.gmra.mrb[0].mxu0 %v1130
      %v1414 = vpop.f32.mrb[0].mxu0
      %v1415 = vadd.f32 0.0, %v1414
      %v1416 = vpop.f32.mrb[0].mxu0
      %v1417 = vpop.f32.mrb[0].mxu0
      %v1418 = vadd.f32 0.0, %v1417
      %v1419 = vpop.f32.mrb[0].mxu0
      %1420 = vdwg.mxu0
      %v1421 = vadd.f32 %v869, %v1231
      %v1422 = vadd.f32 %v872, %v1234
      %v1423 = vadd.f32 %v877, %v1239
      %v1424 = vadd.f32 %v880, %v1242
      %v1425 = vadd.f32 %v885, %v1247
      %v1426 = vadd.f32 %v888, %v1250
      %v1427 = vadd.f32 %v893, %v1255
      %v1428 = vadd.f32 %v896, %v1258
      %v1429 = vadd.f32 %v901, %v1263
      %v1430 = vadd.f32 %v904, %v1266
      %v1431 = vadd.f32 %v909, %v1271
      %v1432 = vadd.f32 %v912, %v1274
      %v1433 = vadd.f32 %v917, %v1279
      %v1434 = vadd.f32 %v920, %v1282
      %v1435 = vadd.f32 %v925, %v1287
      %v1436 = vadd.f32 %v928, %v1290
      %v1437 = vadd.f32 %v933, %v1295
      %v1438 = vadd.f32 %v936, %v1298
      %v1439 = vadd.f32 %v941, %v1303
      %v1440 = vadd.f32 %v944, %v1306
      %v1441 = vadd.f32 %v949, %v1311
      %v1442 = vadd.f32 %v952, %v1314
      %v1443 = vadd.f32 %v957, %v1319
      %v1444 = vadd.f32 %v960, %v1322
      %v1445 = vadd.f32 %v965, %v1327
      %v1446 = vadd.f32 %v968, %v1330
      %v1447 = vadd.f32 %v973, %v1335
      %v1448 = vadd.f32 %v976, %v1338
      %v1449 = vadd.f32 %v981, %v1343
      %v1450 = vadd.f32 %v984, %v1346
      %v1451 = vadd.f32 %v989, %v1351
      %v1452 = vadd.f32 %v992, %v1354
      %v1453 = vadd.f32 %v997, %v1359
      %v1454 = vadd.f32 %v1000, %v1362
      %v1455 = vadd.f32 %v1005, %v1367
      %v1456 = vadd.f32 %v1008, %v1370
      %v1457 = vadd.f32 %v1013, %v1375
      %v1458 = vadd.f32 %v1016, %v1378
      %v1459 = vadd.f32 %v1021, %v1383
      %v1460 = vadd.f32 %v1024, %v1386
      %v1461 = vadd.f32 %v1029, %v1391
      %v1462 = vadd.f32 %v1032, %v1394
      %v1463 = vadd.f32 %v1037, %v1399
      %v1464 = vadd.f32 %v1040, %v1402
      %v1465 = vadd.f32 %v1045, %v1407
      %v1466 = vadd.f32 %v1048, %v1410
      %v1467 = vadd.f32 %v1053, %v1415
      %v1468 = vadd.f32 %v1056, %v1418
      %v1469 = vld [vmem:[#allocation2 + $0x18] sm:$0xff]
      %v1470 = vld [vmem:[#allocation2 + $0x20] sm:$0xff]
      %v1471 = vld [vmem:[#allocation2 + $0x28] sm:$0xff]
      %v1472 = vld [vmem:[#allocation2 + $0x30] sm:$0xff]
      %v1473 = vld [vmem:[#allocation2 + $0x38] sm:$0xff]
      %v1474 = vld [vmem:[#allocation2 + $0x40] sm:$0xff]
      %v1475 = vld [vmem:[#allocation2 + $0x48] sm:$0xff]
      %v1476 = vld [vmem:[#allocation2 + $0x50] sm:$0xff]
      %v1477 = vld [vmem:[#allocation2 + $0x58] sm:$0xff]
      %v1478 = vld [vmem:[#allocation2 + $0x60] sm:$0xff]
      %v1479 = vld [vmem:[#allocation2 + $0x68] sm:$0xff]
      %v1480 = vld [vmem:[#allocation2 + $0x70] sm:$0xff]
      %v1481 = vld [vmem:[#allocation2 + $0x78] sm:$0xff]
      %v1482 = vld [vmem:[#allocation2 + $0x80] sm:$0xff]
      %v1483 = vld [vmem:[#allocation2 + $0x88] sm:$0xff]
      %v1484 = vld [vmem:[#allocation2 + $0x90] sm:$0xff]
      %v1485 = vld [vmem:[#allocation2 + $0x98] sm:$0xff]
      %v1486 = vld [vmem:[#allocation2 + $0xa0] sm:$0xff]
      %v1487 = vld [vmem:[#allocation2 + $0xa8] sm:$0xff]
      %v1488 = vld [vmem:[#allocation2 + $0xb0] sm:$0xff]
      %v1489 = vld [vmem:[#allocation2 + $0xb8] sm:$0xff]
      %v1490 = vld [vmem:[#allocation2 + $0xc0] sm:$0xff]
      %v1491 = vld [vmem:[#allocation2 + $0xc8] sm:$0xff]
      %v1492 = vld [vmem:[#allocation2 + $0xd0] sm:$0xff]
      %v1493 = vld [vmem:[#allocation2 + $0xd8] sm:$0xff]
      %v1494 = vld [vmem:[#allocation2 + $0xe0] sm:$0xff]
      %v1495 = vld [vmem:[#allocation2 + $0xe8] sm:$0xff]
      %v1496 = vld [vmem:[#allocation2 + $0xf0] sm:$0xff]
      %v1497 = vld [vmem:[#allocation2 + $0xf8] sm:$0xff]
      %v1498 = vld [vmem:[#allocation2 + $0x100] sm:$0xff]
      %v1499 = vld [vmem:[#allocation2 + $0x108] sm:$0xff]
      %v1500 = vld [vmem:[#allocation2 + $0x110] sm:$0xff]
      %v1501 = vld [vmem:[#allocation2 + $0x118] sm:$0xff]
      %v1502 = vld [vmem:[#allocation2 + $0x120] sm:$0xff]
      %v1503 = vld [vmem:[#allocation2 + $0x128] sm:$0xff]
      %v1504 = vld [vmem:[#allocation2 + $0x130] sm:$0xff]
      %v1505 = vld [vmem:[#allocation2 + $0x138] sm:$0xff]
      %v1506 = vld [vmem:[#allocation2 + $0x140] sm:$0xff]
      %v1507 = vld [vmem:[#allocation2 + $0x148] sm:$0xff]
      %v1508 = vld [vmem:[#allocation2 + $0x150] sm:$0xff]
      %v1509 = vld [vmem:[#allocation2 + $0x158] sm:$0xff]
      %v1510 = vld [vmem:[#allocation2 + $0x160] sm:$0xff]
      %v1511 = vld [vmem:[#allocation2 + $0x168] sm:$0xff]
      %v1512 = vld [vmem:[#allocation2 + $0x170] sm:$0xff]
      %v1513 = vld [vmem:[#allocation2 + $0x178] sm:$0xff]
      %v1514 = vld [vmem:[#allocation2 + $0x180] sm:$0xff]
      %v1515 = vld [vmem:[#allocation2 + $0x188] sm:$0xff]
      %v1516 = vld [vmem:[#allocation2 + $0x190] sm:$0xff]
      %v1517 = vpack.c.bf16 %v1470, %v1469
      %v1518 = vpack.c.bf16 %v1472, %v1471
      %v1519 = vpack.c.bf16 %v1474, %v1473
      %v1520 = vpack.c.bf16 %v1476, %v1475
      %v1521 = vpack.c.bf16 %v1478, %v1477
      %v1522 = vpack.c.bf16 %v1480, %v1479
      %v1523 = vpack.c.bf16 %v1482, %v1481
      %v1524 = vpack.c.bf16 %v1484, %v1483
      %v1525 = vpack.c.bf16 %v1486, %v1485
      %v1526 = vpack.c.bf16 %v1488, %v1487
      %v1527 = vpack.c.bf16 %v1490, %v1489
      %v1528 = vpack.c.bf16 %v1492, %v1491
      %v1529 = vpack.c.bf16 %v1494, %v1493
      %v1530 = vpack.c.bf16 %v1496, %v1495
      %v1531 = vpack.c.bf16 %v1498, %v1497
      %v1532 = vpack.c.bf16 %v1500, %v1499
      %v1533 = vpack.c.bf16 %v1502, %v1501
      %v1534 = vpack.c.bf16 %v1504, %v1503
      %v1535 = vpack.c.bf16 %v1506, %v1505
      %v1536 = vpack.c.bf16 %v1508, %v1507
      %v1537 = vpack.c.bf16 %v1510, %v1509
      %v1538 = vpack.c.bf16 %v1512, %v1511
      %v1539 = vpack.c.bf16 %v1514, %v1513
      %v1540 = vpack.c.bf16 %v1516, %v1515
      %s1541 = scalar_lea.vmem %s1, 192
      %v1542 = vld [vmem:[%s1541] sm:$0xf]
      %v1543 = vld [vmem:[%s1541 + $0x4] sm:$0xf]
      %v1544 = vld [vmem:[%s1541 + $0x8] sm:$0xf]
      %v1545 = vld [vmem:[%s1541 + $0xc] sm:$0xf]
      %v1546 = vld [vmem:[%s1541 + $0x10] sm:$0xf]
      %v1547 = vld [vmem:[%s1541 + $0x14] sm:$0xf]
      %v1548 = vld [vmem:[%s1541 + $0x18] sm:$0xf]
      %v1549 = vld [vmem:[%s1541 + $0x1c] sm:$0xf]
      %v1550 = vld [vmem:[%s1541 + $0x20] sm:$0xf]
      %v1551 = vld [vmem:[%s1541 + $0x24] sm:$0xf]
      %v1552 = vld [vmem:[%s1541 + $0x28] sm:$0xf]
      %v1553 = vld [vmem:[%s1541 + $0x2c] sm:$0xf]
      %v1554 = vld [vmem:[%s1541 + $0x30] sm:$0xf]
      %v1555 = vld [vmem:[%s1541 + $0x34] sm:$0xf]
      %v1556 = vld [vmem:[%s1541 + $0x38] sm:$0xf]
      %v1557 = vld [vmem:[%s1541 + $0x3c] sm:$0xf]
      %v1574 = vunpack.c.l.b16 %v1542
      %v1575 = vunpack.c.l.b16 %v1543
      %v1576 = vunpack.c.l.b16 %v1544
      %v1577 = vunpack.c.l.b16 %v1545
      %v1578 = vunpack.c.l.b16 %v1546
      %v1579 = vunpack.c.l.b16 %v1547
      %v1580 = vunpack.c.l.b16 %v1548
      %v1581 = vunpack.c.l.b16 %v1549
      %v1582 = vunpack.c.l.b16 %v1550
      %v1583 = vunpack.c.l.b16 %v1551
      %v1584 = vunpack.c.l.b16 %v1552
      %v1585 = vunpack.c.l.b16 %v1553
      %v1586 = vunpack.c.l.b16 %v1554
      %v1587 = vunpack.c.l.b16 %v1555
      %v1588 = vunpack.c.l.b16 %v1556
      %v1589 = vunpack.c.l.b16 %v1557
      %v1590 = vpack.c.b16 %v1575, %v1574
      %v1591 = vpack.c.b16 %v1577, %v1576
      %v1592 = vpack.c.b16 %v1579, %v1578
      %v1593 = vpack.c.b16 %v1581, %v1580
      %v1594 = vpack.c.b16 %v1583, %v1582
      %v1595 = vpack.c.b16 %v1585, %v1584
      %v1596 = vpack.c.b16 %v1587, %v1586
      %v1597 = vpack.c.b16 %v1589, %v1588
      %1606 = vmatprep.subr.bf16.mxu0 0
      %1607 = vmatpush1.bf16.msra.mxu0 %v1590
      %1608 = vmatprep.subr.bf16.mxu0 0
      %1609 = vmatpush1.bf16.msra.mxu0 %v1591
      %1610 = vmatprep.subr.bf16.mxu0 0
      %1611 = vmatpush1.bf16.msra.mxu0 %v1592
      %1612 = vmatprep.subr.bf16.mxu0 0
      %1613 = vmatpush1.bf16.msra.mxu0 %v1593
      %1614 = vmatprep.subr.bf16.mxu0 0
      %1615 = vmatpush1.bf16.msra.mxu0 %v1594
      %1616 = vmatprep.subr.bf16.mxu0 0
      %1617 = vmatpush1.bf16.msra.mxu0 %v1595
      %1618 = vmatprep.subr.bf16.mxu0 0
      %1619 = vmatpush1.bf16.msra.mxu0 %v1596
      %1620 = vmatprep.subr.bf16.mxu0 0
      %1621 = vmatpush1.bf16.msra.mxu0 %v1597
      %1622 = vmatprep.subr.bf16.mxu0 0
      %1623 = vmatpush1.bf16.msra.mxu0 0
      %1624 = vmatprep.subr.bf16.mxu0 0
      %1625 = vmatpush1.bf16.msra.mxu0 0
      %1626 = vmatprep.subr.bf16.mxu0 0
      %1627 = vmatpush1.bf16.msra.mxu0 0
      %1628 = vmatprep.subr.bf16.mxu0 0
      %1629 = vmatpush1.bf16.msra.mxu0 0
      %1630 = vmatprep.subr.bf16.mxu0 0
      %1631 = vmatpush1.bf16.msra.mxu0 0
      %1632 = vmatprep.subr.bf16.mxu0 0
      %1633 = vmatpush1.bf16.msra.mxu0 0
      %1634 = vmatprep.subr.bf16.mxu0 0
      %1635 = vmatpush1.bf16.msra.mxu0 0
      %1636 = vmatprep.subr.bf16.mxu0 0
      %1637 = vmatpush1.bf16.msra.mxu0 0
      %1638 = vmatprep.mubr.bf16.mxu0 0
      %1639 = vmatmul.mubr.bf16.gmra.mrb[0].mxu0 %v1517
      %v1640 = vpop.f32.mrb[0].mxu0
      %v1641 = vadd.f32 0.0, %v1640
      %v1642 = vpop.f32.mrb[0].mxu0
      %v1643 = vpop.f32.mrb[0].mxu0
      %v1644 = vadd.f32 0.0, %v1643
      %v1645 = vpop.f32.mrb[0].mxu0
      %1646 = vmatprep.mubr.bf16.mxu0 0
      %1647 = vmatmul.mubr.bf16.gmra.mrb[0].mxu0 %v1518
      %v1648 = vpop.f32.mrb[0].mxu0
      %v1649 = vadd.f32 0.0, %v1648
      %v1650 = vpop.f32.mrb[0].mxu0
      %v1651 = vpop.f32.mrb[0].mxu0
      %v1652 = vadd.f32 0.0, %v1651
      %v1653 = vpop.f32.mrb[0].mxu0
      %1654 = vmatprep.mubr.bf16.mxu0 0
      %1655 = vmatmul.mubr.bf16.gmra.mrb[0].mxu0 %v1519
      %v1656 = vpop.f32.mrb[0].mxu0
      %v1657 = vadd.f32 0.0, %v1656
      %v1658 = vpop.f32.mrb[0].mxu0
      %v1659 = vpop.f32.mrb[0].mxu0
      %v1660 = vadd.f32 0.0, %v1659
      %v1661 = vpop.f32.mrb[0].mxu0
      %1662 = vmatprep.mubr.bf16.mxu0 0
      %1663 = vmatmul.mubr.bf16.gmra.mrb[0].mxu0 %v1520
      %v1664 = vpop.f32.mrb[0].mxu0
      %v1665 = vadd.f32 0.0, %v1664
      %v1666 = vpop.f32.mrb[0].mxu0
      %v1667 = vpop.f32.mrb[0].mxu0
      %v1668 = vadd.f32 0.0, %v1667
      %v1669 = vpop.f32.mrb[0].mxu0
      %1670 = vmatprep.mubr.bf16.mxu0 0
      %1671 = vmatmul.mubr.bf16.gmra.mrb[0].mxu0 %v1521
      %v1672 = vpop.f32.mrb[0].mxu0
      %v1673 = vadd.f32 0.0, %v1672
      %v1674 = vpop.f32.mrb[0].mxu0
      %v1675 = vpop.f32.mrb[0].mxu0
      %v1676 = vadd.f32 0.0, %v1675
      %v1677 = vpop.f32.mrb[0].mxu0
      %1678 = vmatprep.mubr.bf16.mxu0 0
      %1679 = vmatmul.mubr.bf16.gmra.mrb[0].mxu0 %v1522
      %v1680 = vpop.f32.mrb[0].mxu0
      %v1681 = vadd.f32 0.0, %v1680
      %v1682 = vpop.f32.mrb[0].mxu0
      %v1683 = vpop.f32.mrb[0].mxu0
      %v1684 = vadd.f32 0.0, %v1683
      %v1685 = vpop.f32.mrb[0].mxu0
      %1686 = vmatprep.mubr.bf16.mxu0 0
      %1687 = vmatmul.mubr.bf16.gmra.mrb[0].mxu0 %v1523
      %v1688 = vpop.f32.mrb[0].mxu0
      %v1689 = vadd.f32 0.0, %v1688
      %v1690 = vpop.f32.mrb[0].mxu0
      %v1691 = vpop.f32.mrb[0].mxu0
      %v1692 = vadd.f32 0.0, %v1691
      %v1693 = vpop.f32.mrb[0].mxu0
      %1694 = vmatprep.mubr.bf16.mxu0 0
      %1695 = vmatmul.mubr.bf16.gmra.mrb[0].mxu0 %v1524
      %v1696 = vpop.f32.mrb[0].mxu0
      %v1697 = vadd.f32 0.0, %v1696
      %v1698 = vpop.f32.mrb[0].mxu0
      %v1699 = vpop.f32.mrb[0].mxu0
      %v1700 = vadd.f32 0.0, %v1699
      %v1701 = vpop.f32.mrb[0].mxu0
      %1702 = vmatprep.mubr.bf16.mxu0 0
      %1703 = vmatmul.mubr.bf16.gmra.mrb[0].mxu0 %v1525
      %v1704 = vpop.f32.mrb[0].mxu0
      %v1705 = vadd.f32 0.0, %v1704
      %v1706 = vpop.f32.mrb[0].mxu0
      %v1707 = vpop.f32.mrb[0].mxu0
      %v1708 = vadd.f32 0.0, %v1707
      %v1709 = vpop.f32.mrb[0].mxu0
      %1710 = vmatprep.mubr.bf16.mxu0 0
      %1711 = vmatmul.mubr.bf16.gmra.mrb[0].mxu0 %v1526
      %v1712 = vpop.f32.mrb[0].mxu0
      %v1713 = vadd.f32 0.0, %v1712
      %v1714 = vpop.f32.mrb[0].mxu0
      %v1715 = vpop.f32.mrb[0].mxu0
      %v1716 = vadd.f32 0.0, %v1715
      %v1717 = vpop.f32.mrb[0].mxu0
      %1718 = vmatprep.mubr.bf16.mxu0 0
      %1719 = vmatmul.mubr.bf16.gmra.mrb[0].mxu0 %v1527
      %v1720 = vpop.f32.mrb[0].mxu0
      %v1721 = vadd.f32 0.0, %v1720
      %v1722 = vpop.f32.mrb[0].mxu0
      %v1723 = vpop.f32.mrb[0].mxu0
      %v1724 = vadd.f32 0.0, %v1723
      %v1725 = vpop.f32.mrb[0].mxu0
      %1726 = vmatprep.mubr.bf16.mxu0 0
      %1727 = vmatmul.mubr.bf16.gmra.mrb[0].mxu0 %v1528
      %v1728 = vpop.f32.mrb[0].mxu0
      %v1729 = vadd.f32 0.0, %v1728
      %v1730 = vpop.f32.mrb[0].mxu0
      %v1731 = vpop.f32.mrb[0].mxu0
      %v1732 = vadd.f32 0.0, %v1731
      %v1733 = vpop.f32.mrb[0].mxu0
      %1734 = vmatprep.mubr.bf16.mxu0 0
      %1735 = vmatmul.mubr.bf16.gmra.mrb[0].mxu0 %v1529
      %v1736 = vpop.f32.mrb[0].mxu0
      %v1737 = vadd.f32 0.0, %v1736
      %v1738 = vpop.f32.mrb[0].mxu0
      %v1739 = vpop.f32.mrb[0].mxu0
      %v1740 = vadd.f32 0.0, %v1739
      %v1741 = vpop.f32.mrb[0].mxu0
      %1742 = vmatprep.mubr.bf16.mxu0 0
      %1743 = vmatmul.mubr.bf16.gmra.mrb[0].mxu0 %v1530
      %v1744 = vpop.f32.mrb[0].mxu0
      %v1745 = vadd.f32 0.0, %v1744
      %v1746 = vpop.f32.mrb[0].mxu0
      %v1747 = vpop.f32.mrb[0].mxu0
      %v1748 = vadd.f32 0.0, %v1747
      %v1749 = vpop.f32.mrb[0].mxu0
      %1750 = vmatprep.mubr.bf16.mxu0 0
      %1751 = vmatmul.mubr.bf16.gmra.mrb[0].mxu0 %v1531
      %v1752 = vpop.f32.mrb[0].mxu0
      %v1753 = vadd.f32 0.0, %v1752
      %v1754 = vpop.f32.mrb[0].mxu0
      %v1755 = vpop.f32.mrb[0].mxu0
      %v1756 = vadd.f32 0.0, %v1755
      %v1757 = vpop.f32.mrb[0].mxu0
      %1758 = vmatprep.mubr.bf16.mxu0 0
      %1759 = vmatmul.mubr.bf16.gmra.mrb[0].mxu0 %v1532
      %v1760 = vpop.f32.mrb[0].mxu0
      %v1761 = vadd.f32 0.0, %v1760
      %v1762 = vpop.f32.mrb[0].mxu0
      %v1763 = vpop.f32.mrb[0].mxu0
      %v1764 = vadd.f32 0.0, %v1763
      %v1765 = vpop.f32.mrb[0].mxu0
      %1766 = vmatprep.mubr.bf16.mxu0 0
      %1767 = vmatmul.mubr.bf16.gmra.mrb[0].mxu0 %v1533
      %v1768 = vpop.f32.mrb[0].mxu0
      %v1769 = vadd.f32 0.0, %v1768
      %v1770 = vpop.f32.mrb[0].mxu0
      %v1771 = vpop.f32.mrb[0].mxu0
      %v1772 = vadd.f32 0.0, %v1771
      %v1773 = vpop.f32.mrb[0].mxu0
      %1774 = vmatprep.mubr.bf16.mxu0 0
      %1775 = vmatmul.mubr.bf16.gmra.mrb[0].mxu0 %v1534
      %v1776 = vpop.f32.mrb[0].mxu0
      %v1777 = vadd.f32 0.0, %v1776
      %v1778 = vpop.f32.mrb[0].mxu0
      %v1779 = vpop.f32.mrb[0].mxu0
      %v1780 = vadd.f32 0.0, %v1779
      %v1781 = vpop.f32.mrb[0].mxu0
      %1782 = vmatprep.mubr.bf16.mxu0 0
      %1783 = vmatmul.mubr.bf16.gmra.mrb[0].mxu0 %v1535
      %v1784 = vpop.f32.mrb[0].mxu0
      %v1785 = vadd.f32 0.0, %v1784
      %v1786 = vpop.f32.mrb[0].mxu0
      %v1787 = vpop.f32.mrb[0].mxu0
      %v1788 = vadd.f32 0.0, %v1787
      %v1789 = vpop.f32.mrb[0].mxu0
      %1790 = vmatprep.mubr.bf16.mxu0 0
      %1791 = vmatmul.mubr.bf16.gmra.mrb[0].mxu0 %v1536
      %v1792 = vpop.f32.mrb[0].mxu0
      %v1793 = vadd.f32 0.0, %v1792
      %v1794 = vpop.f32.mrb[0].mxu0
      %v1795 = vpop.f32.mrb[0].mxu0
      %v1796 = vadd.f32 0.0, %v1795
      %v1797 = vpop.f32.mrb[0].mxu0
      %1798 = vmatprep.mubr.bf16.mxu0 0
      %1799 = vmatmul.mubr.bf16.gmra.mrb[0].mxu0 %v1537
      %v1800 = vpop.f32.mrb[0].mxu0
      %v1801 = vadd.f32 0.0, %v1800
      %v1802 = vpop.f32.mrb[0].mxu0
      %v1803 = vpop.f32.mrb[0].mxu0
      %v1804 = vadd.f32 0.0, %v1803
      %v1805 = vpop.f32.mrb[0].mxu0
      %1806 = vmatprep.mubr.bf16.mxu0 0
      %1807 = vmatmul.mubr.bf16.gmra.mrb[0].mxu0 %v1538
      %v1808 = vpop.f32.mrb[0].mxu0
      %v1809 = vadd.f32 0.0, %v1808
      %v1810 = vpop.f32.mrb[0].mxu0
      %v1811 = vpop.f32.mrb[0].mxu0
      %v1812 = vadd.f32 0.0, %v1811
      %v1813 = vpop.f32.mrb[0].mxu0
      %1814 = vmatprep.mubr.bf16.mxu0 0
      %1815 = vmatmul.mubr.bf16.gmra.mrb[0].mxu0 %v1539
      %v1816 = vpop.f32.mrb[0].mxu0
      %v1817 = vadd.f32 0.0, %v1816
      %v1818 = vpop.f32.mrb[0].mxu0
      %v1819 = vpop.f32.mrb[0].mxu0
      %v1820 = vadd.f32 0.0, %v1819
      %v1821 = vpop.f32.mrb[0].mxu0
      %1822 = vmatprep.mubr.bf16.mxu0 0
      %1823 = vmatmul.mubr.bf16.gmra.mrb[0].mxu0 %v1540
      %v1824 = vpop.f32.mrb[0].mxu0
      %v1825 = vadd.f32 0.0, %v1824
      %v1826 = vpop.f32.mrb[0].mxu0
      %v1827 = vpop.f32.mrb[0].mxu0
      %v1828 = vadd.f32 0.0, %v1827
      %v1829 = vpop.f32.mrb[0].mxu0
      %1830 = vdwg.mxu0
      %v1831 = vadd.f32 %v1421, %v1641
      %v1832 = vadd.f32 %v1422, %v1644
      %v1833 = vadd.f32 %v1423, %v1649
      %v1834 = vadd.f32 %v1424, %v1652
      %v1835 = vadd.f32 %v1425, %v1657
      %v1836 = vadd.f32 %v1426, %v1660
      %v1837 = vadd.f32 %v1427, %v1665
      %v1838 = vadd.f32 %v1428, %v1668
      %v1839 = vadd.f32 %v1429, %v1673
      %v1840 = vadd.f32 %v1430, %v1676
      %v1841 = vadd.f32 %v1431, %v1681
      %v1842 = vadd.f32 %v1432, %v1684
      %v1843 = vadd.f32 %v1433, %v1689
      %v1844 = vadd.f32 %v1434, %v1692
      %v1845 = vadd.f32 %v1435, %v1697
      %v1846 = vadd.f32 %v1436, %v1700
      %v1847 = vadd.f32 %v1437, %v1705
      %v1848 = vadd.f32 %v1438, %v1708
      %v1849 = vadd.f32 %v1439, %v1713
      %v1850 = vadd.f32 %v1440, %v1716
      %v1851 = vadd.f32 %v1441, %v1721
      %v1852 = vadd.f32 %v1442, %v1724
      %v1853 = vadd.f32 %v1443, %v1729
      %v1854 = vadd.f32 %v1444, %v1732
      %v1855 = vadd.f32 %v1445, %v1737
      %v1856 = vadd.f32 %v1446, %v1740
      %v1857 = vadd.f32 %v1447, %v1745
      %v1858 = vadd.f32 %v1448, %v1748
      %v1859 = vadd.f32 %v1449, %v1753
      %v1860 = vadd.f32 %v1450, %v1756
      %v1861 = vadd.f32 %v1451, %v1761
      %v1862 = vadd.f32 %v1452, %v1764
      %v1863 = vadd.f32 %v1453, %v1769
      %v1864 = vadd.f32 %v1454, %v1772
      %v1865 = vadd.f32 %v1455, %v1777
      %v1866 = vadd.f32 %v1456, %v1780
      %v1867 = vadd.f32 %v1457, %v1785
      %v1868 = vadd.f32 %v1458, %v1788
      %v1869 = vadd.f32 %v1459, %v1793
      %v1870 = vadd.f32 %v1460, %v1796
      %v1871 = vadd.f32 %v1461, %v1801
      %v1872 = vadd.f32 %v1462, %v1804
      %v1873 = vadd.f32 %v1463, %v1809
      %v1874 = vadd.f32 %v1464, %v1812
      %v1875 = vadd.f32 %v1465, %v1817
      %v1876 = vadd.f32 %v1466, %v1820
      %v1877 = vadd.f32 %v1467, %v1825
      %v1878 = vadd.f32 %v1468, %v1828
      %v1879 = vld [vmem:[#allocation2 + $0x19] sm:$0xff]
      %v1880 = vld [vmem:[#allocation2 + $0x21] sm:$0xff]
      %v1881 = vld [vmem:[#allocation2 + $0x29] sm:$0xff]
      %v1882 = vld [vmem:[#allocation2 + $0x31] sm:$0xff]
      %v1883 = vld [vmem:[#allocation2 + $0x39] sm:$0xff]
      %v1884 = vld [vmem:[#allocation2 + $0x41] sm:$0xff]
      %v1885 = vld [vmem:[#allocation2 + $0x49] sm:$0xff]
      %v1886 = vld [vmem:[#allocation2 + $0x51] sm:$0xff]
      %v1887 = vld [vmem:[#allocation2 + $0x59] sm:$0xff]
      %v1888 = vld [vmem:[#allocation2 + $0x61] sm:$0xff]
      %v1889 = vld [vmem:[#allocation2 + $0x69] sm:$0xff]
      %v1890 = vld [vmem:[#allocation2 + $0x71] sm:$0xff]
      %v1891 = vld [vmem:[#allocation2 + $0x79] sm:$0xff]
      %v1892 = vld [vmem:[#allocation2 + $0x81] sm:$0xff]
      %v1893 = vld [vmem:[#allocation2 + $0x89] sm:$0xff]
      %v1894 = vld [vmem:[#allocation2 + $0x91] sm:$0xff]
      %v1895 = vld [vmem:[#allocation2 + $0x99] sm:$0xff]
      %v1896 = vld [vmem:[#allocation2 + $0xa1] sm:$0xff]
      %v1897 = vld [vmem:[#allocation2 + $0xa9] sm:$0xff]
      %v1898 = vld [vmem:[#allocation2 + $0xb1] sm:$0xff]
      %v1899 = vld [vmem:[#allocation2 + $0xb9] sm:$0xff]
      %v1900 = vld [vmem:[#allocation2 + $0xc1] sm:$0xff]
      %v1901 = vld [vmem:[#allocation2 + $0xc9] sm:$0xff]
      %v1902 = vld [vmem:[#allocation2 + $0xd1] sm:$0xff]
      %v1903 = vld [vmem:[#allocation2 + $0xd9] sm:$0xff]
      %v1904 = vld [vmem:[#allocation2 + $0xe1] sm:$0xff]
      %v1905 = vld [vmem:[#allocation2 + $0xe9] sm:$0xff]
      %v1906 = vld [vmem:[#allocation2 + $0xf1] sm:$0xff]
      %v1907 = vld [vmem:[#allocation2 + $0xf9] sm:$0xff]
      %v1908 = vld [vmem:[#allocation2 + $0x101] sm:$0xff]
      %v1909 = vld [vmem:[#allocation2 + $0x109] sm:$0xff]
      %v1910 = vld [vmem:[#allocation2 + $0x111] sm:$0xff]
      %v1911 = vld [vmem:[#allocation2 + $0x119] sm:$0xff]
      %v1912 = vld [vmem:[#allocation2 + $0x121] sm:$0xff]
      %v1913 = vld [vmem:[#allocation2 + $0x129] sm:$0xff]
      %v1914 = vld [vmem:[#allocation2 + $0x131] sm:$0xff]
      %v1915 = vld [vmem:[#allocation2 + $0x139] sm:$0xff]
      %v1916 = vld [vmem:[#allocation2 + $0x141] sm:$0xff]
      %v1917 = vld [vmem:[#allocation2 + $0x149] sm:$0xff]
      %v1918 = vld [vmem:[#allocation2 + $0x151] sm:$0xff]
      %v1919 = vld [vmem:[#allocation2 + $0x159] sm:$0xff]
      %v1920 = vld [vmem:[#allocation2 + $0x161] sm:$0xff]
      %v1921 = vld [vmem:[#allocation2 + $0x169] sm:$0xff]
      %v1922 = vld [vmem:[#allocation2 + $0x171] sm:$0xff]
      %v1923 = vld [vmem:[#allocation2 + $0x179] sm:$0xff]
      %v1924 = vld [vmem:[#allocation2 + $0x181] sm:$0xff]
      %v1925 = vld [vmem:[#allocation2 + $0x189] sm:$0xff]
      %v1926 = vld [vmem:[#allocation2 + $0x191] sm:$0xff]
      %v1927 = vpack.c.bf16 %v1880, %v1879
      %v1928 = vpack.c.bf16 %v1882, %v1881
      %v1929 = vpack.c.bf16 %v1884, %v1883
      %v1930 = vpack.c.bf16 %v1886, %v1885
      %v1931 = vpack.c.bf16 %v1888, %v1887
      %v1932 = vpack.c.bf16 %v1890, %v1889
      %v1933 = vpack.c.bf16 %v1892, %v1891
      %v1934 = vpack.c.bf16 %v1894, %v1893
      %v1935 = vpack.c.bf16 %v1896, %v1895
      %v1936 = vpack.c.bf16 %v1898, %v1897
      %v1937 = vpack.c.bf16 %v1900, %v1899
      %v1938 = vpack.c.bf16 %v1902, %v1901
      %v1939 = vpack.c.bf16 %v1904, %v1903
      %v1940 = vpack.c.bf16 %v1906, %v1905
      %v1941 = vpack.c.bf16 %v1908, %v1907
      %v1942 = vpack.c.bf16 %v1910, %v1909
      %v1943 = vpack.c.bf16 %v1912, %v1911
      %v1944 = vpack.c.bf16 %v1914, %v1913
      %v1945 = vpack.c.bf16 %v1916, %v1915
      %v1946 = vpack.c.bf16 %v1918, %v1917
      %v1947 = vpack.c.bf16 %v1920, %v1919
      %v1948 = vpack.c.bf16 %v1922, %v1921
      %v1949 = vpack.c.bf16 %v1924, %v1923
      %v1950 = vpack.c.bf16 %v1926, %v1925
      %s1951 = scalar_lea.vmem %s1, 256
      %v1952 = vld [vmem:[%s1951] sm:$0xf]
      %v1953 = vld [vmem:[%s1951 + $0x4] sm:$0xf]
      %v1954 = vld [vmem:[%s1951 + $0x8] sm:$0xf]
      %v1955 = vld [vmem:[%s1951 + $0xc] sm:$0xf]
      %v1956 = vld [vmem:[%s1951 + $0x10] sm:$0xf]
      %v1957 = vld [vmem:[%s1951 + $0x14] sm:$0xf]
      %v1958 = vld [vmem:[%s1951 + $0x18] sm:$0xf]
      %v1959 = vld [vmem:[%s1951 + $0x1c] sm:$0xf]
      %v1960 = vld [vmem:[%s1951 + $0x20] sm:$0xf]
      %v1961 = vld [vmem:[%s1951 + $0x24] sm:$0xf]
      %v1962 = vld [vmem:[%s1951 + $0x28] sm:$0xf]
      %v1963 = vld [vmem:[%s1951 + $0x2c] sm:$0xf]
      %v1964 = vld [vmem:[%s1951 + $0x30] sm:$0xf]
      %v1965 = vld [vmem:[%s1951 + $0x34] sm:$0xf]
      %v1966 = vld [vmem:[%s1951 + $0x38] sm:$0xf]
      %v1967 = vld [vmem:[%s1951 + $0x3c] sm:$0xf]
      %v1984 = vunpack.c.l.b16 %v1952
      %v1985 = vunpack.c.l.b16 %v1953
      %v1986 = vunpack.c.l.b16 %v1954
      %v1987 = vunpack.c.l.b16 %v1955
      %v1988 = vunpack.c.l.b16 %v1956
      %v1989 = vunpack.c.l.b16 %v1957
      %v1990 = vunpack.c.l.b16 %v1958
      %v1991 = vunpack.c.l.b16 %v1959
      %v1992 = vunpack.c.l.b16 %v1960
      %v1993 = vunpack.c.l.b16 %v1961
      %v1994 = vunpack.c.l.b16 %v1962
      %v1995 = vunpack.c.l.b16 %v1963
      %v1996 = vunpack.c.l.b16 %v1964
      %v1997 = vunpack.c.l.b16 %v1965
      %v1998 = vunpack.c.l.b16 %v1966
      %v1999 = vunpack.c.l.b16 %v1967
      %v2000 = vpack.c.b16 %v1985, %v1984
      %v2001 = vpack.c.b16 %v1987, %v1986
      %v2002 = vpack.c.b16 %v1989, %v1988
      %v2003 = vpack.c.b16 %v1991, %v1990
      %v2004 = vpack.c.b16 %v1993, %v1992
      %v2005 = vpack.c.b16 %v1995, %v1994
      %v2006 = vpack.c.b16 %v1997, %v1996
      %v2007 = vpack.c.b16 %v1999, %v1998
      %2016 = vmatprep.subr.bf16.mxu0 0
      %2017 = vmatpush1.bf16.msra.mxu0 %v2000
      %2018 = vmatprep.subr.bf16.mxu0 0
      %2019 = vmatpush1.bf16.msra.mxu0 %v2001
      %2020 = vmatprep.subr.bf16.mxu0 0
      %2021 = vmatpush1.bf16.msra.mxu0 %v2002
      %2022 = vmatprep.subr.bf16.mxu0 0
      %2023 = vmatpush1.bf16.msra.mxu0 %v2003
      %2024 = vmatprep.subr.bf16.mxu0 0
      %2025 = vmatpush1.bf16.msra.mxu0 %v2004
      %2026 = vmatprep.subr.bf16.mxu0 0
      %2027 = vmatpush1.bf16.msra.mxu0 %v2005
      %2028 = vmatprep.subr.bf16.mxu0 0
      %2029 = vmatpush1.bf16.msra.mxu0 %v2006
      %2030 = vmatprep.subr.bf16.mxu0 0
      %2031 = vmatpush1.bf16.msra.mxu0 %v2007
      %2032 = vmatprep.subr.bf16.mxu0 0
      %2033 = vmatpush1.bf16.msra.mxu0 0
      %2034 = vmatprep.subr.bf16.mxu0 0
      %2035 = vmatpush1.bf16.msra.mxu0 0
      %2036 = vmatprep.subr.bf16.mxu0 0
      %2037 = vmatpush1.bf16.msra.mxu0 0
      %2038 = vmatprep.subr.bf16.mxu0 0
      %2039 = vmatpush1.bf16.msra.mxu0 0
      %2040 = vmatprep.subr.bf16.mxu0 0
      %2041 = vmatpush1.bf16.msra.mxu0 0
      %2042 = vmatprep.subr.bf16.mxu0 0
      %2043 = vmatpush1.bf16.msra.mxu0 0
      %2044 = vmatprep.subr.bf16.mxu0 0
      %2045 = vmatpush1.bf16.msra.mxu0 0
      %2046 = vmatprep.subr.bf16.mxu0 0
      %2047 = vmatpush1.bf16.msra.mxu0 0
      %2048 = vmatprep.mubr.bf16.mxu0 0
      %2049 = vmatmul.mubr.bf16.gmra.mrb[0].mxu0 %v1927
      %v2050 = vpop.f32.mrb[0].mxu0
      %v2051 = vadd.f32 0.0, %v2050
      %v2052 = vpop.f32.mrb[0].mxu0
      %v2053 = vpop.f32.mrb[0].mxu0
      %v2054 = vadd.f32 0.0, %v2053
      %v2055 = vpop.f32.mrb[0].mxu0
      %2056 = vmatprep.mubr.bf16.mxu0 0
      %2057 = vmatmul.mubr.bf16.gmra.mrb[0].mxu0 %v1928
      %v2058 = vpop.f32.mrb[0].mxu0
      %v2059 = vadd.f32 0.0, %v2058
      %v2060 = vpop.f32.mrb[0].mxu0
      %v2061 = vpop.f32.mrb[0].mxu0
      %v2062 = vadd.f32 0.0, %v2061
      %v2063 = vpop.f32.mrb[0].mxu0
      %2064 = vmatprep.mubr.bf16.mxu0 0
      %2065 = vmatmul.mubr.bf16.gmra.mrb[0].mxu0 %v1929
      %v2066 = vpop.f32.mrb[0].mxu0
      %v2067 = vadd.f32 0.0, %v2066
      %v2068 = vpop.f32.mrb[0].mxu0
      %v2069 = vpop.f32.mrb[0].mxu0
      %v2070 = vadd.f32 0.0, %v2069
      %v2071 = vpop.f32.mrb[0].mxu0
      %2072 = vmatprep.mubr.bf16.mxu0 0
      %2073 = vmatmul.mubr.bf16.gmra.mrb[0].mxu0 %v1930
      %v2074 = vpop.f32.mrb[0].mxu0
      %v2075 = vadd.f32 0.0, %v2074
      %v2076 = vpop.f32.mrb[0].mxu0
      %v2077 = vpop.f32.mrb[0].mxu0
      %v2078 = vadd.f32 0.0, %v2077
      %v2079 = vpop.f32.mrb[0].mxu0
      %2080 = vmatprep.mubr.bf16.mxu0 0
      %2081 = vmatmul.mubr.bf16.gmra.mrb[0].mxu0 %v1931
      %v2082 = vpop.f32.mrb[0].mxu0
      %v2083 = vadd.f32 0.0, %v2082
      %v2084 = vpop.f32.mrb[0].mxu0
      %v2085 = vpop.f32.mrb[0].mxu0
      %v2086 = vadd.f32 0.0, %v2085
      %v2087 = vpop.f32.mrb[0].mxu0
      %2088 = vmatprep.mubr.bf16.mxu0 0
      %2089 = vmatmul.mubr.bf16.gmra.mrb[0].mxu0 %v1932
      %v2090 = vpop.f32.mrb[0].mxu0
      %v2091 = vadd.f32 0.0, %v2090
      %v2092 = vpop.f32.mrb[0].mxu0
      %v2093 = vpop.f32.mrb[0].mxu0
      %v2094 = vadd.f32 0.0, %v2093
      %v2095 = vpop.f32.mrb[0].mxu0
      %2096 = vmatprep.mubr.bf16.mxu0 0
      %2097 = vmatmul.mubr.bf16.gmra.mrb[0].mxu0 %v1933
      %v2098 = vpop.f32.mrb[0].mxu0
      %v2099 = vadd.f32 0.0, %v2098
      %v2100 = vpop.f32.mrb[0].mxu0
      %v2101 = vpop.f32.mrb[0].mxu0
      %v2102 = vadd.f32 0.0, %v2101
      %v2103 = vpop.f32.mrb[0].mxu0
      %2104 = vmatprep.mubr.bf16.mxu0 0
      %2105 = vmatmul.mubr.bf16.gmra.mrb[0].mxu0 %v1934
      %v2106 = vpop.f32.mrb[0].mxu0
      %v2107 = vadd.f32 0.0, %v2106
      %v2108 = vpop.f32.mrb[0].mxu0
      %v2109 = vpop.f32.mrb[0].mxu0
      %v2110 = vadd.f32 0.0, %v2109
      %v2111 = vpop.f32.mrb[0].mxu0
      %2112 = vmatprep.mubr.bf16.mxu0 0
      %2113 = vmatmul.mubr.bf16.gmra.mrb[0].mxu0 %v1935
      %v2114 = vpop.f32.mrb[0].mxu0
      %v2115 = vadd.f32 0.0, %v2114
      %v2116 = vpop.f32.mrb[0].mxu0
      %v2117 = vpop.f32.mrb[0].mxu0
      %v2118 = vadd.f32 0.0, %v2117
      %v2119 = vpop.f32.mrb[0].mxu0
      %2120 = vmatprep.mubr.bf16.mxu0 0
      %2121 = vmatmul.mubr.bf16.gmra.mrb[0].mxu0 %v1936
      %v2122 = vpop.f32.mrb[0].mxu0
      %v2123 = vadd.f32 0.0, %v2122
      %v2124 = vpop.f32.mrb[0].mxu0
      %v2125 = vpop.f32.mrb[0].mxu0
      %v2126 = vadd.f32 0.0, %v2125
      %v2127 = vpop.f32.mrb[0].mxu0
      %2128 = vmatprep.mubr.bf16.mxu0 0
      %2129 = vmatmul.mubr.bf16.gmra.mrb[0].mxu0 %v1937
      %v2130 = vpop.f32.mrb[0].mxu0
      %v2131 = vadd.f32 0.0, %v2130
      %v2132 = vpop.f32.mrb[0].mxu0
      %v2133 = vpop.f32.mrb[0].mxu0
      %v2134 = vadd.f32 0.0, %v2133
      %v2135 = vpop.f32.mrb[0].mxu0
      %2136 = vmatprep.mubr.bf16.mxu0 0
      %2137 = vmatmul.mubr.bf16.gmra.mrb[0].mxu0 %v1938
      %v2138 = vpop.f32.mrb[0].mxu0
      %v2139 = vadd.f32 0.0, %v2138
      %v2140 = vpop.f32.mrb[0].mxu0
      %v2141 = vpop.f32.mrb[0].mxu0
      %v2142 = vadd.f32 0.0, %v2141
      %v2143 = vpop.f32.mrb[0].mxu0
      %2144 = vmatprep.mubr.bf16.mxu0 0
      %2145 = vmatmul.mubr.bf16.gmra.mrb[0].mxu0 %v1939
      %v2146 = vpop.f32.mrb[0].mxu0
      %v2147 = vadd.f32 0.0, %v2146
      %v2148 = vpop.f32.mrb[0].mxu0
      %v2149 = vpop.f32.mrb[0].mxu0
      %v2150 = vadd.f32 0.0, %v2149
      %v2151 = vpop.f32.mrb[0].mxu0
      %2152 = vmatprep.mubr.bf16.mxu0 0
      %2153 = vmatmul.mubr.bf16.gmra.mrb[0].mxu0 %v1940
      %v2154 = vpop.f32.mrb[0].mxu0
      %v2155 = vadd.f32 0.0, %v2154
      %v2156 = vpop.f32.mrb[0].mxu0
      %v2157 = vpop.f32.mrb[0].mxu0
      %v2158 = vadd.f32 0.0, %v2157
      %v2159 = vpop.f32.mrb[0].mxu0
      %2160 = vmatprep.mubr.bf16.mxu0 0
      %2161 = vmatmul.mubr.bf16.gmra.mrb[0].mxu0 %v1941
      %v2162 = vpop.f32.mrb[0].mxu0
      %v2163 = vadd.f32 0.0, %v2162
      %v2164 = vpop.f32.mrb[0].mxu0
      %v2165 = vpop.f32.mrb[0].mxu0
      %v2166 = vadd.f32 0.0, %v2165
      %v2167 = vpop.f32.mrb[0].mxu0
      %2168 = vmatprep.mubr.bf16.mxu0 0
      %2169 = vmatmul.mubr.bf16.gmra.mrb[0].mxu0 %v1942
      %v2170 = vpop.f32.mrb[0].mxu0
      %v2171 = vadd.f32 0.0, %v2170
      %v2172 = vpop.f32.mrb[0].mxu0
      %v2173 = vpop.f32.mrb[0].mxu0
      %v2174 = vadd.f32 0.0, %v2173
      %v2175 = vpop.f32.mrb[0].mxu0
      %2176 = vmatprep.mubr.bf16.mxu0 0
      %2177 = vmatmul.mubr.bf16.gmra.mrb[0].mxu0 %v1943
      %v2178 = vpop.f32.mrb[0].mxu0
      %v2179 = vadd.f32 0.0, %v2178
      %v2180 = vpop.f32.mrb[0].mxu0
      %v2181 = vpop.f32.mrb[0].mxu0
      %v2182 = vadd.f32 0.0, %v2181
      %v2183 = vpop.f32.mrb[0].mxu0
      %2184 = vmatprep.mubr.bf16.mxu0 0
      %2185 = vmatmul.mubr.bf16.gmra.mrb[0].mxu0 %v1944
      %v2186 = vpop.f32.mrb[0].mxu0
      %v2187 = vadd.f32 0.0, %v2186
      %v2188 = vpop.f32.mrb[0].mxu0
      %v2189 = vpop.f32.mrb[0].mxu0
      %v2190 = vadd.f32 0.0, %v2189
      %v2191 = vpop.f32.mrb[0].mxu0
      %2192 = vmatprep.mubr.bf16.mxu0 0
      %2193 = vmatmul.mubr.bf16.gmra.mrb[0].mxu0 %v1945
      %v2194 = vpop.f32.mrb[0].mxu0
      %v2195 = vadd.f32 0.0, %v2194
      %v2196 = vpop.f32.mrb[0].mxu0
      %v2197 = vpop.f32.mrb[0].mxu0
      %v2198 = vadd.f32 0.0, %v2197
      %v2199 = vpop.f32.mrb[0].mxu0
      %2200 = vmatprep.mubr.bf16.mxu0 0
      %2201 = vmatmul.mubr.bf16.gmra.mrb[0].mxu0 %v1946
      %v2202 = vpop.f32.mrb[0].mxu0
      %v2203 = vadd.f32 0.0, %v2202
      %v2204 = vpop.f32.mrb[0].mxu0
      %v2205 = vpop.f32.mrb[0].mxu0
      %v2206 = vadd.f32 0.0, %v2205
      %v2207 = vpop.f32.mrb[0].mxu0
      %2208 = vmatprep.mubr.bf16.mxu0 0
      %2209 = vmatmul.mubr.bf16.gmra.mrb[0].mxu0 %v1947
      %v2210 = vpop.f32.mrb[0].mxu0
      %v2211 = vadd.f32 0.0, %v2210
      %v2212 = vpop.f32.mrb[0].mxu0
      %v2213 = vpop.f32.mrb[0].mxu0
      %v2214 = vadd.f32 0.0, %v2213
      %v2215 = vpop.f32.mrb[0].mxu0
      %2216 = vmatprep.mubr.bf16.mxu0 0
      %2217 = vmatmul.mubr.bf16.gmra.mrb[0].mxu0 %v1948
      %v2218 = vpop.f32.mrb[0].mxu0
      %v2219 = vadd.f32 0.0, %v2218
      %v2220 = vpop.f32.mrb[0].mxu0
      %v2221 = vpop.f32.mrb[0].mxu0
      %v2222 = vadd.f32 0.0, %v2221
      %v2223 = vpop.f32.mrb[0].mxu0
      %2224 = vmatprep.mubr.bf16.mxu0 0
      %2225 = vmatmul.mubr.bf16.gmra.mrb[0].mxu0 %v1949
      %v2226 = vpop.f32.mrb[0].mxu0
      %v2227 = vadd.f32 0.0, %v2226
      %v2228 = vpop.f32.mrb[0].mxu0
      %v2229 = vpop.f32.mrb[0].mxu0
      %v2230 = vadd.f32 0.0, %v2229
      %v2231 = vpop.f32.mrb[0].mxu0
      %2232 = vmatprep.mubr.bf16.mxu0 0
      %2233 = vmatmul.mubr.bf16.gmra.mrb[0].mxu0 %v1950
      %v2234 = vpop.f32.mrb[0].mxu0
      %v2235 = vadd.f32 0.0, %v2234
      %v2236 = vpop.f32.mrb[0].mxu0
      %v2237 = vpop.f32.mrb[0].mxu0
      %v2238 = vadd.f32 0.0, %v2237
      %v2239 = vpop.f32.mrb[0].mxu0
      %2240 = vdwg.mxu0
      %v2241 = vadd.f32 %v1831, %v2051
      %v2242 = vadd.f32 %v1832, %v2054
      %v2243 = vadd.f32 %v1833, %v2059
      %v2244 = vadd.f32 %v1834, %v2062
      %v2245 = vadd.f32 %v1835, %v2067
      %v2246 = vadd.f32 %v1836, %v2070
      %v2247 = vadd.f32 %v1837, %v2075
      %v2248 = vadd.f32 %v1838, %v2078
      %v2249 = vadd.f32 %v1839, %v2083
      %v2250 = vadd.f32 %v1840, %v2086
      %v2251 = vadd.f32 %v1841, %v2091
      %v2252 = vadd.f32 %v1842, %v2094
      %v2253 = vadd.f32 %v1843, %v2099
      %v2254 = vadd.f32 %v1844, %v2102
      %v2255 = vadd.f32 %v1845, %v2107
      %v2256 = vadd.f32 %v1846, %v2110
      %v2257 = vadd.f32 %v1847, %v2115
      %v2258 = vadd.f32 %v1848, %v2118
      %v2259 = vadd.f32 %v1849, %v2123
      %v2260 = vadd.f32 %v1850, %v2126
      %v2261 = vadd.f32 %v1851, %v2131
      %v2262 = vadd.f32 %v1852, %v2134
      %v2263 = vadd.f32 %v1853, %v2139
      %v2264 = vadd.f32 %v1854, %v2142
      %v2265 = vadd.f32 %v1855, %v2147
      %v2266 = vadd.f32 %v1856, %v2150
      %v2267 = vadd.f32 %v1857, %v2155
      %v2268 = vadd.f32 %v1858, %v2158
      %v2269 = vadd.f32 %v1859, %v2163
      %v2270 = vadd.f32 %v1860, %v2166
      %v2271 = vadd.f32 %v1861, %v2171
      %v2272 = vadd.f32 %v1862, %v2174
      %v2273 = vadd.f32 %v1863, %v2179
      %v2274 = vadd.f32 %v1864, %v2182
      %v2275 = vadd.f32 %v1865, %v2187
      %v2276 = vadd.f32 %v1866, %v2190
      %v2277 = vadd.f32 %v1867, %v2195
      %v2278 = vadd.f32 %v1868, %v2198
      %v2279 = vadd.f32 %v1869, %v2203
      %v2280 = vadd.f32 %v1870, %v2206
      %v2281 = vadd.f32 %v1871, %v2211
      %v2282 = vadd.f32 %v1872, %v2214
      %v2283 = vadd.f32 %v1873, %v2219
      %v2284 = vadd.f32 %v1874, %v2222
      %v2285 = vadd.f32 %v1875, %v2227
      %v2286 = vadd.f32 %v1876, %v2230
      %v2287 = vadd.f32 %v1877, %v2235
      %v2288 = vadd.f32 %v1878, %v2238
      %v2289 = vld [vmem:[#allocation2 + $0x1a] sm:$0xff]
      %v2290 = vld [vmem:[#allocation2 + $0x22] sm:$0xff]
      %v2291 = vld [vmem:[#allocation2 + $0x2a] sm:$0xff]
      %v2292 = vld [vmem:[#allocation2 + $0x32] sm:$0xff]
      %v2293 = vld [vmem:[#allocation2 + $0x3a] sm:$0xff]
      %v2294 = vld [vmem:[#allocation2 + $0x42] sm:$0xff]
      %v2295 = vld [vmem:[#allocation2 + $0x4a] sm:$0xff]
      %v2296 = vld [vmem:[#allocation2 + $0x52] sm:$0xff]
      %v2297 = vld [vmem:[#allocation2 + $0x5a] sm:$0xff]
      %v2298 = vld [vmem:[#allocation2 + $0x62] sm:$0xff]
      %v2299 = vld [vmem:[#allocation2 + $0x6a] sm:$0xff]
      %v2300 = vld [vmem:[#allocation2 + $0x72] sm:$0xff]
      %v2301 = vld [vmem:[#allocation2 + $0x7a] sm:$0xff]
      %v2302 = vld [vmem:[#allocation2 + $0x82] sm:$0xff]
      %v2303 = vld [vmem:[#allocation2 + $0x8a] sm:$0xff]
      %v2304 = vld [vmem:[#allocation2 + $0x92] sm:$0xff]
      %v2305 = vld [vmem:[#allocation2 + $0x9a] sm:$0xff]
      %v2306 = vld [vmem:[#allocation2 + $0xa2] sm:$0xff]
      %v2307 = vld [vmem:[#allocation2 + $0xaa] sm:$0xff]
      %v2308 = vld [vmem:[#allocation2 + $0xb2] sm:$0xff]
      %v2309 = vld [vmem:[#allocation2 + $0xba] sm:$0xff]
      %v2310 = vld [vmem:[#allocation2 + $0xc2] sm:$0xff]
      %v2311 = vld [vmem:[#allocation2 + $0xca] sm:$0xff]
      %v2312 = vld [vmem:[#allocation2 + $0xd2] sm:$0xff]
      %v2313 = vld [vmem:[#allocation2 + $0xda] sm:$0xff]
      %v2314 = vld [vmem:[#allocation2 + $0xe2] sm:$0xff]
      %v2315 = vld [vmem:[#allocation2 + $0xea] sm:$0xff]
      %v2316 = vld [vmem:[#allocation2 + $0xf2] sm:$0xff]
      %v2317 = vld [vmem:[#allocation2 + $0xfa] sm:$0xff]
      %v2318 = vld [vmem:[#allocation2 + $0x102] sm:$0xff]
      %v2319 = vld [vmem:[#allocation2 + $0x10a] sm:$0xff]
      %v2320 = vld [vmem:[#allocation2 + $0x112] sm:$0xff]
      %v2321 = vld [vmem:[#allocation2 + $0x11a] sm:$0xff]
      %v2322 = vld [vmem:[#allocation2 + $0x122] sm:$0xff]
      %v2323 = vld [vmem:[#allocation2 + $0x12a] sm:$0xff]
      %v2324 = vld [vmem:[#allocation2 + $0x132] sm:$0xff]
      %v2325 = vld [vmem:[#allocation2 + $0x13a] sm:$0xff]
      %v2326 = vld [vmem:[#allocation2 + $0x142] sm:$0xff]
      %v2327 = vld [vmem:[#allocation2 + $0x14a] sm:$0xff]
      %v2328 = vld [vmem:[#allocation2 + $0x152] sm:$0xff]
      %v2329 = vld [vmem:[#allocation2 + $0x15a] sm:$0xff]
      %v2330 = vld [vmem:[#allocation2 + $0x162] sm:$0xff]
      %v2331 = vld [vmem:[#allocation2 + $0x16a] sm:$0xff]
      %v2332 = vld [vmem:[#allocation2 + $0x172] sm:$0xff]
      %v2333 = vld [vmem:[#allocation2 + $0x17a] sm:$0xff]
      %v2334 = vld [vmem:[#allocation2 + $0x182] sm:$0xff]
      %v2335 = vld [vmem:[#allocation2 + $0x18a] sm:$0xff]
      %v2336 = vld [vmem:[#allocation2 + $0x192] sm:$0xff]
      %v2337 = vpack.c.bf16 %v2290, %v2289
      %v2338 = vpack.c.bf16 %v2292, %v2291
      %v2339 = vpack.c.bf16 %v2294, %v2293
      %v2340 = vpack.c.bf16 %v2296, %v2295
      %v2341 = vpack.c.bf16 %v2298, %v2297
      %v2342 = vpack.c.bf16 %v2300, %v2299
      %v2343 = vpack.c.bf16 %v2302, %v2301
      %v2344 = vpack.c.bf16 %v2304, %v2303
      %v2345 = vpack.c.bf16 %v2306, %v2305
      %v2346 = vpack.c.bf16 %v2308, %v2307
      %v2347 = vpack.c.bf16 %v2310, %v2309
      %v2348 = vpack.c.bf16 %v2312, %v2311
      %v2349 = vpack.c.bf16 %v2314, %v2313
      %v2350 = vpack.c.bf16 %v2316, %v2315
      %v2351 = vpack.c.bf16 %v2318, %v2317
      %v2352 = vpack.c.bf16 %v2320, %v2319
      %v2353 = vpack.c.bf16 %v2322, %v2321
      %v2354 = vpack.c.bf16 %v2324, %v2323
      %v2355 = vpack.c.bf16 %v2326, %v2325
      %v2356 = vpack.c.bf16 %v2328, %v2327
      %v2357 = vpack.c.bf16 %v2330, %v2329
      %v2358 = vpack.c.bf16 %v2332, %v2331
      %v2359 = vpack.c.bf16 %v2334, %v2333
      %v2360 = vpack.c.bf16 %v2336, %v2335
      %s2361 = scalar_lea.vmem %s1, 320
      %v2362 = vld [vmem:[%s2361] sm:$0xf]
      %v2363 = vld [vmem:[%s2361 + $0x4] sm:$0xf]
      %v2364 = vld [vmem:[%s2361 + $0x8] sm:$0xf]
      %v2365 = vld [vmem:[%s2361 + $0xc] sm:$0xf]
      %v2366 = vld [vmem:[%s2361 + $0x10] sm:$0xf]
      %v2367 = vld [vmem:[%s2361 + $0x14] sm:$0xf]
      %v2368 = vld [vmem:[%s2361 + $0x18] sm:$0xf]
      %v2369 = vld [vmem:[%s2361 + $0x1c] sm:$0xf]
      %v2370 = vld [vmem:[%s2361 + $0x20] sm:$0xf]
      %v2371 = vld [vmem:[%s2361 + $0x24] sm:$0xf]
      %v2372 = vld [vmem:[%s2361 + $0x28] sm:$0xf]
      %v2373 = vld [vmem:[%s2361 + $0x2c] sm:$0xf]
      %v2374 = vld [vmem:[%s2361 + $0x30] sm:$0xf]
      %v2375 = vld [vmem:[%s2361 + $0x34] sm:$0xf]
      %v2376 = vld [vmem:[%s2361 + $0x38] sm:$0xf]
      %v2377 = vld [vmem:[%s2361 + $0x3c] sm:$0xf]
      %v2394 = vunpack.c.l.b16 %v2362
      %v2395 = vunpack.c.l.b16 %v2363
      %v2396 = vunpack.c.l.b16 %v2364
      %v2397 = vunpack.c.l.b16 %v2365
      %v2398 = vunpack.c.l.b16 %v2366
      %v2399 = vunpack.c.l.b16 %v2367
      %v2400 = vunpack.c.l.b16 %v2368
      %v2401 = vunpack.c.l.b16 %v2369
      %v2402 = vunpack.c.l.b16 %v2370
      %v2403 = vunpack.c.l.b16 %v2371
      %v2404 = vunpack.c.l.b16 %v2372
      %v2405 = vunpack.c.l.b16 %v2373
      %v2406 = vunpack.c.l.b16 %v2374
      %v2407 = vunpack.c.l.b16 %v2375
      %v2408 = vunpack.c.l.b16 %v2376
      %v2409 = vunpack.c.l.b16 %v2377
      %v2410 = vpack.c.b16 %v2395, %v2394
      %v2411 = vpack.c.b16 %v2397, %v2396
      %v2412 = vpack.c.b16 %v2399, %v2398
      %v2413 = vpack.c.b16 %v2401, %v2400
      %v2414 = vpack.c.b16 %v2403, %v2402
      %v2415 = vpack.c.b16 %v2405, %v2404
      %v2416 = vpack.c.b16 %v2407, %v2406
      %v2417 = vpack.c.b16 %v2409, %v2408
      %2426 = vmatprep.subr.bf16.mxu0 0
      %2427 = vmatpush1.bf16.msra.mxu0 %v2410
      %2428 = vmatprep.subr.bf16.mxu0 0
      %2429 = vmatpush1.bf16.msra.mxu0 %v2411
      %2430 = vmatprep.subr.bf16.mxu0 0
      %2431 = vmatpush1.bf16.msra.mxu0 %v2412
      %2432 = vmatprep.subr.bf16.mxu0 0
      %2433 = vmatpush1.bf16.msra.mxu0 %v2413
      %2434 = vmatprep.subr.bf16.mxu0 0
      %2435 = vmatpush1.bf16.msra.mxu0 %v2414
      %2436 = vmatprep.subr.bf16.mxu0 0
      %2437 = vmatpush1.bf16.msra.mxu0 %v2415
      %2438 = vmatprep.subr.bf16.mxu0 0
      %2439 = vmatpush1.bf16.msra.mxu0 %v2416
      %2440 = vmatprep.subr.bf16.mxu0 0
      %2441 = vmatpush1.bf16.msra.mxu0 %v2417
      %2442 = vmatprep.subr.bf16.mxu0 0
      %2443 = vmatpush1.bf16.msra.mxu0 0
      %2444 = vmatprep.subr.bf16.mxu0 0
      %2445 = vmatpush1.bf16.msra.mxu0 0
      %2446 = vmatprep.subr.bf16.mxu0 0
      %2447 = vmatpush1.bf16.msra.mxu0 0
      %2448 = vmatprep.subr.bf16.mxu0 0
      %2449 = vmatpush1.bf16.msra.mxu0 0
      %2450 = vmatprep.subr.bf16.mxu0 0
      %2451 = vmatpush1.bf16.msra.mxu0 0
      %2452 = vmatprep.subr.bf16.mxu0 0
      %2453 = vmatpush1.bf16.msra.mxu0 0
      %2454 = vmatprep.subr.bf16.mxu0 0
      %2455 = vmatpush1.bf16.msra.mxu0 0
      %2456 = vmatprep.subr.bf16.mxu0 0
      %2457 = vmatpush1.bf16.msra.mxu0 0
      %2458 = vmatprep.mubr.bf16.mxu0 0
      %2459 = vmatmul.mubr.bf16.gmra.mrb[0].mxu0 %v2337
      %v2460 = vpop.f32.mrb[0].mxu0
      %v2461 = vadd.f32 0.0, %v2460
      %v2462 = vpop.f32.mrb[0].mxu0
      %v2463 = vpop.f32.mrb[0].mxu0
      %v2464 = vadd.f32 0.0, %v2463
      %v2465 = vpop.f32.mrb[0].mxu0
      %2466 = vmatprep.mubr.bf16.mxu0 0
      %2467 = vmatmul.mubr.bf16.gmra.mrb[0].mxu0 %v2338
      %v2468 = vpop.f32.mrb[0].mxu0
      %v2469 = vadd.f32 0.0, %v2468
      %v2470 = vpop.f32.mrb[0].mxu0
      %v2471 = vpop.f32.mrb[0].mxu0
      %v2472 = vadd.f32 0.0, %v2471
      %v2473 = vpop.f32.mrb[0].mxu0
      %2474 = vmatprep.mubr.bf16.mxu0 0
      %2475 = vmatmul.mubr.bf16.gmra.mrb[0].mxu0 %v2339
      %v2476 = vpop.f32.mrb[0].mxu0
      %v2477 = vadd.f32 0.0, %v2476
      %v2478 = vpop.f32.mrb[0].mxu0
      %v2479 = vpop.f32.mrb[0].mxu0
      %v2480 = vadd.f32 0.0, %v2479
      %v2481 = vpop.f32.mrb[0].mxu0
      %2482 = vmatprep.mubr.bf16.mxu0 0
      %2483 = vmatmul.mubr.bf16.gmra.mrb[0].mxu0 %v2340
      %v2484 = vpop.f32.mrb[0].mxu0
      %v2485 = vadd.f32 0.0, %v2484
      %v2486 = vpop.f32.mrb[0].mxu0
      %v2487 = vpop.f32.mrb[0].mxu0
      %v2488 = vadd.f32 0.0, %v2487
      %v2489 = vpop.f32.mrb[0].mxu0
      %2490 = vmatprep.mubr.bf16.mxu0 0
      %2491 = vmatmul.mubr.bf16.gmra.mrb[0].mxu0 %v2341
      %v2492 = vpop.f32.mrb[0].mxu0
      %v2493 = vadd.f32 0.0, %v2492
      %v2494 = vpop.f32.mrb[0].mxu0
      %v2495 = vpop.f32.mrb[0].mxu0
      %v2496 = vadd.f32 0.0, %v2495
      %v2497 = vpop.f32.mrb[0].mxu0
      %2498 = vmatprep.mubr.bf16.mxu0 0
      %2499 = vmatmul.mubr.bf16.gmra.mrb[0].mxu0 %v2342
      %v2500 = vpop.f32.mrb[0].mxu0
      %v2501 = vadd.f32 0.0, %v2500
      %v2502 = vpop.f32.mrb[0].mxu0
      %v2503 = vpop.f32.mrb[0].mxu0
      %v2504 = vadd.f32 0.0, %v2503
      %v2505 = vpop.f32.mrb[0].mxu0
      %2506 = vmatprep.mubr.bf16.mxu0 0
      %2507 = vmatmul.mubr.bf16.gmra.mrb[0].mxu0 %v2343
      %v2508 = vpop.f32.mrb[0].mxu0
      %v2509 = vadd.f32 0.0, %v2508
      %v2510 = vpop.f32.mrb[0].mxu0
      %v2511 = vpop.f32.mrb[0].mxu0
      %v2512 = vadd.f32 0.0, %v2511
      %v2513 = vpop.f32.mrb[0].mxu0
      %2514 = vmatprep.mubr.bf16.mxu0 0
      %2515 = vmatmul.mubr.bf16.gmra.mrb[0].mxu0 %v2344
      %v2516 = vpop.f32.mrb[0].mxu0
      %v2517 = vadd.f32 0.0, %v2516
      %v2518 = vpop.f32.mrb[0].mxu0
      %v2519 = vpop.f32.mrb[0].mxu0
      %v2520 = vadd.f32 0.0, %v2519
      %v2521 = vpop.f32.mrb[0].mxu0
      %2522 = vmatprep.mubr.bf16.mxu0 0
      %2523 = vmatmul.mubr.bf16.gmra.mrb[0].mxu0 %v2345
      %v2524 = vpop.f32.mrb[0].mxu0
      %v2525 = vadd.f32 0.0, %v2524
      %v2526 = vpop.f32.mrb[0].mxu0
      %v2527 = vpop.f32.mrb[0].mxu0
      %v2528 = vadd.f32 0.0, %v2527
      %v2529 = vpop.f32.mrb[0].mxu0
      %2530 = vmatprep.mubr.bf16.mxu0 0
      %2531 = vmatmul.mubr.bf16.gmra.mrb[0].mxu0 %v2346
      %v2532 = vpop.f32.mrb[0].mxu0
      %v2533 = vadd.f32 0.0, %v2532
      %v2534 = vpop.f32.mrb[0].mxu0
      %v2535 = vpop.f32.mrb[0].mxu0
      %v2536 = vadd.f32 0.0, %v2535
      %v2537 = vpop.f32.mrb[0].mxu0
      %2538 = vmatprep.mubr.bf16.mxu0 0
      %2539 = vmatmul.mubr.bf16.gmra.mrb[0].mxu0 %v2347
      %v2540 = vpop.f32.mrb[0].mxu0
      %v2541 = vadd.f32 0.0, %v2540
      %v2542 = vpop.f32.mrb[0].mxu0
      %v2543 = vpop.f32.mrb[0].mxu0
      %v2544 = vadd.f32 0.0, %v2543
      %v2545 = vpop.f32.mrb[0].mxu0
      %2546 = vmatprep.mubr.bf16.mxu0 0
      %2547 = vmatmul.mubr.bf16.gmra.mrb[0].mxu0 %v2348
      %v2548 = vpop.f32.mrb[0].mxu0
      %v2549 = vadd.f32 0.0, %v2548
      %v2550 = vpop.f32.mrb[0].mxu0
      %v2551 = vpop.f32.mrb[0].mxu0
      %v2552 = vadd.f32 0.0, %v2551
      %v2553 = vpop.f32.mrb[0].mxu0
      %2554 = vmatprep.mubr.bf16.mxu0 0
      %2555 = vmatmul.mubr.bf16.gmra.mrb[0].mxu0 %v2349
      %v2556 = vpop.f32.mrb[0].mxu0
      %v2557 = vadd.f32 0.0, %v2556
      %v2558 = vpop.f32.mrb[0].mxu0
      %v2559 = vpop.f32.mrb[0].mxu0
      %v2560 = vadd.f32 0.0, %v2559
      %v2561 = vpop.f32.mrb[0].mxu0
      %2562 = vmatprep.mubr.bf16.mxu0 0
      %2563 = vmatmul.mubr.bf16.gmra.mrb[0].mxu0 %v2350
      %v2564 = vpop.f32.mrb[0].mxu0
      %v2565 = vadd.f32 0.0, %v2564
      %v2566 = vpop.f32.mrb[0].mxu0
      %v2567 = vpop.f32.mrb[0].mxu0
      %v2568 = vadd.f32 0.0, %v2567
      %v2569 = vpop.f32.mrb[0].mxu0
      %2570 = vmatprep.mubr.bf16.mxu0 0
      %2571 = vmatmul.mubr.bf16.gmra.mrb[0].mxu0 %v2351
      %v2572 = vpop.f32.mrb[0].mxu0
      %v2573 = vadd.f32 0.0, %v2572
      %v2574 = vpop.f32.mrb[0].mxu0
      %v2575 = vpop.f32.mrb[0].mxu0
      %v2576 = vadd.f32 0.0, %v2575
      %v2577 = vpop.f32.mrb[0].mxu0
      %2578 = vmatprep.mubr.bf16.mxu0 0
      %2579 = vmatmul.mubr.bf16.gmra.mrb[0].mxu0 %v2352
      %v2580 = vpop.f32.mrb[0].mxu0
      %v2581 = vadd.f32 0.0, %v2580
      %v2582 = vpop.f32.mrb[0].mxu0
      %v2583 = vpop.f32.mrb[0].mxu0
      %v2584 = vadd.f32 0.0, %v2583
      %v2585 = vpop.f32.mrb[0].mxu0
      %2586 = vmatprep.mubr.bf16.mxu0 0
      %2587 = vmatmul.mubr.bf16.gmra.mrb[0].mxu0 %v2353
      %v2588 = vpop.f32.mrb[0].mxu0
      %v2589 = vadd.f32 0.0, %v2588
      %v2590 = vpop.f32.mrb[0].mxu0
      %v2591 = vpop.f32.mrb[0].mxu0
      %v2592 = vadd.f32 0.0, %v2591
      %v2593 = vpop.f32.mrb[0].mxu0
      %2594 = vmatprep.mubr.bf16.mxu0 0
      %2595 = vmatmul.mubr.bf16.gmra.mrb[0].mxu0 %v2354
      %v2596 = vpop.f32.mrb[0].mxu0
      %v2597 = vadd.f32 0.0, %v2596
      %v2598 = vpop.f32.mrb[0].mxu0
      %v2599 = vpop.f32.mrb[0].mxu0
      %v2600 = vadd.f32 0.0, %v2599
      %v2601 = vpop.f32.mrb[0].mxu0
      %2602 = vmatprep.mubr.bf16.mxu0 0
      %2603 = vmatmul.mubr.bf16.gmra.mrb[0].mxu0 %v2355
      %v2604 = vpop.f32.mrb[0].mxu0
      %v2605 = vadd.f32 0.0, %v2604
      %v2606 = vpop.f32.mrb[0].mxu0
      %v2607 = vpop.f32.mrb[0].mxu0
      %v2608 = vadd.f32 0.0, %v2607
      %v2609 = vpop.f32.mrb[0].mxu0
      %2610 = vmatprep.mubr.bf16.mxu0 0
      %2611 = vmatmul.mubr.bf16.gmra.mrb[0].mxu0 %v2356
      %v2612 = vpop.f32.mrb[0].mxu0
      %v2613 = vadd.f32 0.0, %v2612
      %v2614 = vpop.f32.mrb[0].mxu0
      %v2615 = vpop.f32.mrb[0].mxu0
      %v2616 = vadd.f32 0.0, %v2615
      %v2617 = vpop.f32.mrb[0].mxu0
      %2618 = vmatprep.mubr.bf16.mxu0 0
      %2619 = vmatmul.mubr.bf16.gmra.mrb[0].mxu0 %v2357
      %v2620 = vpop.f32.mrb[0].mxu0
      %v2621 = vadd.f32 0.0, %v2620
      %v2622 = vpop.f32.mrb[0].mxu0
      %v2623 = vpop.f32.mrb[0].mxu0
      %v2624 = vadd.f32 0.0, %v2623
      %v2625 = vpop.f32.mrb[0].mxu0
      %2626 = vmatprep.mubr.bf16.mxu0 0
      %2627 = vmatmul.mubr.bf16.gmra.mrb[0].mxu0 %v2358
      %v2628 = vpop.f32.mrb[0].mxu0
      %v2629 = vadd.f32 0.0, %v2628
      %v2630 = vpop.f32.mrb[0].mxu0
      %v2631 = vpop.f32.mrb[0].mxu0
      %v2632 = vadd.f32 0.0, %v2631
      %v2633 = vpop.f32.mrb[0].mxu0
      %2634 = vmatprep.mubr.bf16.mxu0 0
      %2635 = vmatmul.mubr.bf16.gmra.mrb[0].mxu0 %v2359
      %v2636 = vpop.f32.mrb[0].mxu0
      %v2637 = vadd.f32 0.0, %v2636
      %v2638 = vpop.f32.mrb[0].mxu0
      %v2639 = vpop.f32.mrb[0].mxu0
      %v2640 = vadd.f32 0.0, %v2639
      %v2641 = vpop.f32.mrb[0].mxu0
      %2642 = vmatprep.mubr.bf16.mxu0 0
      %2643 = vmatmul.mubr.bf16.gmra.mrb[0].mxu0 %v2360
      %v2644 = vpop.f32.mrb[0].mxu0
      %v2645 = vadd.f32 0.0, %v2644
      %v2646 = vpop.f32.mrb[0].mxu0
      %v2647 = vpop.f32.mrb[0].mxu0
      %v2648 = vadd.f32 0.0, %v2647
      %v2649 = vpop.f32.mrb[0].mxu0
      %2650 = vdwg.mxu0
      %v2651 = vadd.f32 %v2241, %v2461
      %v2652 = vadd.f32 %v2242, %v2464
      %v2653 = vadd.f32 %v2243, %v2469
      %v2654 = vadd.f32 %v2244, %v2472
      %v2655 = vadd.f32 %v2245, %v2477
      %v2656 = vadd.f32 %v2246, %v2480
      %v2657 = vadd.f32 %v2247, %v2485
      %v2658 = vadd.f32 %v2248, %v2488
      %v2659 = vadd.f32 %v2249, %v2493
      %v2660 = vadd.f32 %v2250, %v2496
      %v2661 = vadd.f32 %v2251, %v2501
      %v2662 = vadd.f32 %v2252, %v2504
      %v2663 = vadd.f32 %v2253, %v2509
      %v2664 = vadd.f32 %v2254, %v2512
      %v2665 = vadd.f32 %v2255, %v2517
      %v2666 = vadd.f32 %v2256, %v2520
      %v2667 = vadd.f32 %v2257, %v2525
      %v2668 = vadd.f32 %v2258, %v2528
      %v2669 = vadd.f32 %v2259, %v2533
      %v2670 = vadd.f32 %v2260, %v2536
      %v2671 = vadd.f32 %v2261, %v2541
      %v2672 = vadd.f32 %v2262, %v2544
      %v2673 = vadd.f32 %v2263, %v2549
      %v2674 = vadd.f32 %v2264, %v2552
      %v2675 = vadd.f32 %v2265, %v2557
      %v2676 = vadd.f32 %v2266, %v2560
      %v2677 = vadd.f32 %v2267, %v2565
      %v2678 = vadd.f32 %v2268, %v2568
      %v2679 = vadd.f32 %v2269, %v2573
      %v2680 = vadd.f32 %v2270, %v2576
      %v2681 = vadd.f32 %v2271, %v2581
      %v2682 = vadd.f32 %v2272, %v2584
      %v2683 = vadd.f32 %v2273, %v2589
      %v2684 = vadd.f32 %v2274, %v2592
      %v2685 = vadd.f32 %v2275, %v2597
      %v2686 = vadd.f32 %v2276, %v2600
      %v2687 = vadd.f32 %v2277, %v2605
      %v2688 = vadd.f32 %v2278, %v2608
      %v2689 = vadd.f32 %v2279, %v2613
      %v2690 = vadd.f32 %v2280, %v2616
      %v2691 = vadd.f32 %v2281, %v2621
      %v2692 = vadd.f32 %v2282, %v2624
      %v2693 = vadd.f32 %v2283, %v2629
      %v2694 = vadd.f32 %v2284, %v2632
      %v2695 = vadd.f32 %v2285, %v2637
      %v2696 = vadd.f32 %v2286, %v2640
      %v2697 = vadd.f32 %v2287, %v2645
      %v2698 = vadd.f32 %v2288, %v2648
      %v2699 = vld [vmem:[#allocation2 + $0x30] sm:$0xff]
      %v2700 = vld [vmem:[#allocation2 + $0x38] sm:$0xff]
      %v2701 = vld [vmem:[#allocation2 + $0x40] sm:$0xff]
      %v2702 = vld [vmem:[#allocation2 + $0x48] sm:$0xff]
      %v2703 = vld [vmem:[#allocation2 + $0x50] sm:$0xff]
      %v2704 = vld [vmem:[#allocation2 + $0x58] sm:$0xff]
      %v2705 = vld [vmem:[#allocation2 + $0x60] sm:$0xff]
      %v2706 = vld [vmem:[#allocation2 + $0x68] sm:$0xff]
      %v2707 = vld [vmem:[#allocation2 + $0x70] sm:$0xff]
      %v2708 = vld [vmem:[#allocation2 + $0x78] sm:$0xff]
      %v2709 = vld [vmem:[#allocation2 + $0x80] sm:$0xff]
      %v2710 = vld [vmem:[#allocation2 + $0x88] sm:$0xff]
      %v2711 = vld [vmem:[#allocation2 + $0x90] sm:$0xff]
      %v2712 = vld [vmem:[#allocation2 + $0x98] sm:$0xff]
      %v2713 = vld [vmem:[#allocation2 + $0xa0] sm:$0xff]
      %v2714 = vld [vmem:[#allocation2 + $0xa8] sm:$0xff]
      %v2715 = vld [vmem:[#allocation2 + $0xb0] sm:$0xff]
      %v2716 = vld [vmem:[#allocation2 + $0xb8] sm:$0xff]
      %v2717 = vld [vmem:[#allocation2 + $0xc0] sm:$0xff]
      %v2718 = vld [vmem:[#allocation2 + $0xc8] sm:$0xff]
      %v2719 = vld [vmem:[#allocation2 + $0xd0] sm:$0xff]
      %v2720 = vld [vmem:[#allocation2 + $0xd8] sm:$0xff]
      %v2721 = vld [vmem:[#allocation2 + $0xe0] sm:$0xff]
      %v2722 = vld [vmem:[#allocation2 + $0xe8] sm:$0xff]
      %v2723 = vld [vmem:[#allocation2 + $0xf0] sm:$0xff]
      %v2724 = vld [vmem:[#allocation2 + $0xf8] sm:$0xff]
      %v2725 = vld [vmem:[#allocation2 + $0x100] sm:$0xff]
      %v2726 = vld [vmem:[#allocation2 + $0x108] sm:$0xff]
      %v2727 = vld [vmem:[#allocation2 + $0x110] sm:$0xff]
      %v2728 = vld [vmem:[#allocation2 + $0x118] sm:$0xff]
      %v2729 = vld [vmem:[#allocation2 + $0x120] sm:$0xff]
      %v2730 = vld [vmem:[#allocation2 + $0x128] sm:$0xff]
      %v2731 = vld [vmem:[#allocation2 + $0x130] sm:$0xff]
      %v2732 = vld [vmem:[#allocation2 + $0x138] sm:$0xff]
      %v2733 = vld [vmem:[#allocation2 + $0x140] sm:$0xff]
      %v2734 = vld [vmem:[#allocation2 + $0x148] sm:$0xff]
      %v2735 = vld [vmem:[#allocation2 + $0x150] sm:$0xff]
      %v2736 = vld [vmem:[#allocation2 + $0x158] sm:$0xff]
      %v2737 = vld [vmem:[#allocation2 + $0x160] sm:$0xff]
      %v2738 = vld [vmem:[#allocation2 + $0x168] sm:$0xff]
      %v2739 = vld [vmem:[#allocation2 + $0x170] sm:$0xff]
      %v2740 = vld [vmem:[#allocation2 + $0x178] sm:$0xff]
      %v2741 = vld [vmem:[#allocation2 + $0x180] sm:$0xff]
      %v2742 = vld [vmem:[#allocation2 + $0x188] sm:$0xff]
      %v2743 = vld [vmem:[#allocation2 + $0x190] sm:$0xff]
      %v2744 = vld [vmem:[#allocation2 + $0x198] sm:$0xff]
      %v2745 = vld [vmem:[#allocation2 + $0x1a0] sm:$0xff]
      %v2746 = vld [vmem:[#allocation2 + $0x1a8] sm:$0xff]
      %v2747 = vpack.c.bf16 %v2700, %v2699
      %v2748 = vpack.c.bf16 %v2702, %v2701
      %v2749 = vpack.c.bf16 %v2704, %v2703
      %v2750 = vpack.c.bf16 %v2706, %v2705
      %v2751 = vpack.c.bf16 %v2708, %v2707
      %v2752 = vpack.c.bf16 %v2710, %v2709
      %v2753 = vpack.c.bf16 %v2712, %v2711
      %v2754 = vpack.c.bf16 %v2714, %v2713
      %v2755 = vpack.c.bf16 %v2716, %v2715
      %v2756 = vpack.c.bf16 %v2718, %v2717
      %v2757 = vpack.c.bf16 %v2720, %v2719
      %v2758 = vpack.c.bf16 %v2722, %v2721
      %v2759 = vpack.c.bf16 %v2724, %v2723
      %v2760 = vpack.c.bf16 %v2726, %v2725
      %v2761 = vpack.c.bf16 %v2728, %v2727
      %v2762 = vpack.c.bf16 %v2730, %v2729
      %v2763 = vpack.c.bf16 %v2732, %v2731
      %v2764 = vpack.c.bf16 %v2734, %v2733
      %v2765 = vpack.c.bf16 %v2736, %v2735
      %v2766 = vpack.c.bf16 %v2738, %v2737
      %v2767 = vpack.c.bf16 %v2740, %v2739
      %v2768 = vpack.c.bf16 %v2742, %v2741
      %v2769 = vpack.c.bf16 %v2744, %v2743
      %v2770 = vpack.c.bf16 %v2746, %v2745
      %s2771 = scalar_lea.vmem %s1, 384
      %v2772 = vld [vmem:[%s2771] sm:$0xf]
      %v2773 = vld [vmem:[%s2771 + $0x4] sm:$0xf]
      %v2774 = vld [vmem:[%s2771 + $0x8] sm:$0xf]
      %v2775 = vld [vmem:[%s2771 + $0xc] sm:$0xf]
      %v2776 = vld [vmem:[%s2771 + $0x10] sm:$0xf]
      %v2777 = vld [vmem:[%s2771 + $0x14] sm:$0xf]
      %v2778 = vld [vmem:[%s2771 + $0x18] sm:$0xf]
      %v2779 = vld [vmem:[%s2771 + $0x1c] sm:$0xf]
      %v2780 = vld [vmem:[%s2771 + $0x20] sm:$0xf]
      %v2781 = vld [vmem:[%s2771 + $0x24] sm:$0xf]
      %v2782 = vld [vmem:[%s2771 + $0x28] sm:$0xf]
      %v2783 = vld [vmem:[%s2771 + $0x2c] sm:$0xf]
      %v2784 = vld [vmem:[%s2771 + $0x30] sm:$0xf]
      %v2785 = vld [vmem:[%s2771 + $0x34] sm:$0xf]
      %v2786 = vld [vmem:[%s2771 + $0x38] sm:$0xf]
      %v2787 = vld [vmem:[%s2771 + $0x3c] sm:$0xf]
      %v2804 = vunpack.c.l.b16 %v2772
      %v2805 = vunpack.c.l.b16 %v2773
      %v2806 = vunpack.c.l.b16 %v2774
      %v2807 = vunpack.c.l.b16 %v2775
      %v2808 = vunpack.c.l.b16 %v2776
      %v2809 = vunpack.c.l.b16 %v2777
      %v2810 = vunpack.c.l.b16 %v2778
      %v2811 = vunpack.c.l.b16 %v2779
      %v2812 = vunpack.c.l.b16 %v2780
      %v2813 = vunpack.c.l.b16 %v2781
      %v2814 = vunpack.c.l.b16 %v2782
      %v2815 = vunpack.c.l.b16 %v2783
      %v2816 = vunpack.c.l.b16 %v2784
      %v2817 = vunpack.c.l.b16 %v2785
      %v2818 = vunpack.c.l.b16 %v2786
      %v2819 = vunpack.c.l.b16 %v2787
      %v2820 = vpack.c.b16 %v2805, %v2804
      %v2821 = vpack.c.b16 %v2807, %v2806
      %v2822 = vpack.c.b16 %v2809, %v2808
      %v2823 = vpack.c.b16 %v2811, %v2810
      %v2824 = vpack.c.b16 %v2813, %v2812
      %v2825 = vpack.c.b16 %v2815, %v2814
      %v2826 = vpack.c.b16 %v2817, %v2816
      %v2827 = vpack.c.b16 %v2819, %v2818
      %2836 = vmatprep.subr.bf16.mxu0 0
      %2837 = vmatpush1.bf16.msra.mxu0 %v2820
      %2838 = vmatprep.subr.bf16.mxu0 0
      %2839 = vmatpush1.bf16.msra.mxu0 %v2821
      %2840 = vmatprep.subr.bf16.mxu0 0
      %2841 = vmatpush1.bf16.msra.mxu0 %v2822
      %2842 = vmatprep.subr.bf16.mxu0 0
      %2843 = vmatpush1.bf16.msra.mxu0 %v2823
      %2844 = vmatprep.subr.bf16.mxu0 0
      %2845 = vmatpush1.bf16.msra.mxu0 %v2824
      %2846 = vmatprep.subr.bf16.mxu0 0
      %2847 = vmatpush1.bf16.msra.mxu0 %v2825
      %2848 = vmatprep.subr.bf16.mxu0 0
      %2849 = vmatpush1.bf16.msra.mxu0 %v2826
      %2850 = vmatprep.subr.bf16.mxu0 0
      %2851 = vmatpush1.bf16.msra.mxu0 %v2827
      %2852 = vmatprep.subr.bf16.mxu0 0
      %2853 = vmatpush1.bf16.msra.mxu0 0
      %2854 = vmatprep.subr.bf16.mxu0 0
      %2855 = vmatpush1.bf16.msra.mxu0 0
      %2856 = vmatprep.subr.bf16.mxu0 0
      %2857 = vmatpush1.bf16.msra.mxu0 0
      %2858 = vmatprep.subr.bf16.mxu0 0
      %2859 = vmatpush1.bf16.msra.mxu0 0
      %2860 = vmatprep.subr.bf16.mxu0 0
      %2861 = vmatpush1.bf16.msra.mxu0 0
      %2862 = vmatprep.subr.bf16.mxu0 0
      %2863 = vmatpush1.bf16.msra.mxu0 0
      %2864 = vmatprep.subr.bf16.mxu0 0
      %2865 = vmatpush1.bf16.msra.mxu0 0
      %2866 = vmatprep.subr.bf16.mxu0 0
      %2867 = vmatpush1.bf16.msra.mxu0 0
      %2868 = vmatprep.mubr.bf16.mxu0 0
      %2869 = vmatmul.mubr.bf16.gmra.mrb[0].mxu0 %v2747
      %v2870 = vpop.f32.mrb[0].mxu0
      %v2871 = vadd.f32 0.0, %v2870
      %v2872 = vpop.f32.mrb[0].mxu0
      %v2873 = vpop.f32.mrb[0].mxu0
      %v2874 = vadd.f32 0.0, %v2873
      %v2875 = vpop.f32.mrb[0].mxu0
      %2876 = vmatprep.mubr.bf16.mxu0 0
      %2877 = vmatmul.mubr.bf16.gmra.mrb[0].mxu0 %v2748
      %v2878 = vpop.f32.mrb[0].mxu0
      %v2879 = vadd.f32 0.0, %v2878
      %v2880 = vpop.f32.mrb[0].mxu0
      %v2881 = vpop.f32.mrb[0].mxu0
      %v2882 = vadd.f32 0.0, %v2881
      %v2883 = vpop.f32.mrb[0].mxu0
      %2884 = vmatprep.mubr.bf16.mxu0 0
      %2885 = vmatmul.mubr.bf16.gmra.mrb[0].mxu0 %v2749
      %v2886 = vpop.f32.mrb[0].mxu0
      %v2887 = vadd.f32 0.0, %v2886
      %v2888 = vpop.f32.mrb[0].mxu0
      %v2889 = vpop.f32.mrb[0].mxu0
      %v2890 = vadd.f32 0.0, %v2889
      %v2891 = vpop.f32.mrb[0].mxu0
      %2892 = vmatprep.mubr.bf16.mxu0 0
      %2893 = vmatmul.mubr.bf16.gmra.mrb[0].mxu0 %v2750
      %v2894 = vpop.f32.mrb[0].mxu0
      %v2895 = vadd.f32 0.0, %v2894
      %v2896 = vpop.f32.mrb[0].mxu0
      %v2897 = vpop.f32.mrb[0].mxu0
      %v2898 = vadd.f32 0.0, %v2897
      %v2899 = vpop.f32.mrb[0].mxu0
      %2900 = vmatprep.mubr.bf16.mxu0 0
      %2901 = vmatmul.mubr.bf16.gmra.mrb[0].mxu0 %v2751
      %v2902 = vpop.f32.mrb[0].mxu0
      %v2903 = vadd.f32 0.0, %v2902
      %v2904 = vpop.f32.mrb[0].mxu0
      %v2905 = vpop.f32.mrb[0].mxu0
      %v2906 = vadd.f32 0.0, %v2905
      %v2907 = vpop.f32.mrb[0].mxu0
      %2908 = vmatprep.mubr.bf16.mxu0 0
      %2909 = vmatmul.mubr.bf16.gmra.mrb[0].mxu0 %v2752
      %v2910 = vpop.f32.mrb[0].mxu0
      %v2911 = vadd.f32 0.0, %v2910
      %v2912 = vpop.f32.mrb[0].mxu0
      %v2913 = vpop.f32.mrb[0].mxu0
      %v2914 = vadd.f32 0.0, %v2913
      %v2915 = vpop.f32.mrb[0].mxu0
      %2916 = vmatprep.mubr.bf16.mxu0 0
      %2917 = vmatmul.mubr.bf16.gmra.mrb[0].mxu0 %v2753
      %v2918 = vpop.f32.mrb[0].mxu0
      %v2919 = vadd.f32 0.0, %v2918
      %v2920 = vpop.f32.mrb[0].mxu0
      %v2921 = vpop.f32.mrb[0].mxu0
      %v2922 = vadd.f32 0.0, %v2921
      %v2923 = vpop.f32.mrb[0].mxu0
      %2924 = vmatprep.mubr.bf16.mxu0 0
      %2925 = vmatmul.mubr.bf16.gmra.mrb[0].mxu0 %v2754
      %v2926 = vpop.f32.mrb[0].mxu0
      %v2927 = vadd.f32 0.0, %v2926
      %v2928 = vpop.f32.mrb[0].mxu0
      %v2929 = vpop.f32.mrb[0].mxu0
      %v2930 = vadd.f32 0.0, %v2929
      %v2931 = vpop.f32.mrb[0].mxu0
      %2932 = vmatprep.mubr.bf16.mxu0 0
      %2933 = vmatmul.mubr.bf16.gmra.mrb[0].mxu0 %v2755
      %v2934 = vpop.f32.mrb[0].mxu0
      %v2935 = vadd.f32 0.0, %v2934
      %v2936 = vpop.f32.mrb[0].mxu0
      %v2937 = vpop.f32.mrb[0].mxu0
      %v2938 = vadd.f32 0.0, %v2937
      %v2939 = vpop.f32.mrb[0].mxu0
      %2940 = vmatprep.mubr.bf16.mxu0 0
      %2941 = vmatmul.mubr.bf16.gmra.mrb[0].mxu0 %v2756
      %v2942 = vpop.f32.mrb[0].mxu0
      %v2943 = vadd.f32 0.0, %v2942
      %v2944 = vpop.f32.mrb[0].mxu0
      %v2945 = vpop.f32.mrb[0].mxu0
      %v2946 = vadd.f32 0.0, %v2945
      %v2947 = vpop.f32.mrb[0].mxu0
      %2948 = vmatprep.mubr.bf16.mxu0 0
      %2949 = vmatmul.mubr.bf16.gmra.mrb[0].mxu0 %v2757
      %v2950 = vpop.f32.mrb[0].mxu0
      %v2951 = vadd.f32 0.0, %v2950
      %v2952 = vpop.f32.mrb[0].mxu0
      %v2953 = vpop.f32.mrb[0].mxu0
      %v2954 = vadd.f32 0.0, %v2953
      %v2955 = vpop.f32.mrb[0].mxu0
      %2956 = vmatprep.mubr.bf16.mxu0 0
      %2957 = vmatmul.mubr.bf16.gmra.mrb[0].mxu0 %v2758
      %v2958 = vpop.f32.mrb[0].mxu0
      %v2959 = vadd.f32 0.0, %v2958
      %v2960 = vpop.f32.mrb[0].mxu0
      %v2961 = vpop.f32.mrb[0].mxu0
      %v2962 = vadd.f32 0.0, %v2961
      %v2963 = vpop.f32.mrb[0].mxu0
      %2964 = vmatprep.mubr.bf16.mxu0 0
      %2965 = vmatmul.mubr.bf16.gmra.mrb[0].mxu0 %v2759
      %v2966 = vpop.f32.mrb[0].mxu0
      %v2967 = vadd.f32 0.0, %v2966
      %v2968 = vpop.f32.mrb[0].mxu0
      %v2969 = vpop.f32.mrb[0].mxu0
      %v2970 = vadd.f32 0.0, %v2969
      %v2971 = vpop.f32.mrb[0].mxu0
      %2972 = vmatprep.mubr.bf16.mxu0 0
      %2973 = vmatmul.mubr.bf16.gmra.mrb[0].mxu0 %v2760
      %v2974 = vpop.f32.mrb[0].mxu0
      %v2975 = vadd.f32 0.0, %v2974
      %v2976 = vpop.f32.mrb[0].mxu0
      %v2977 = vpop.f32.mrb[0].mxu0
      %v2978 = vadd.f32 0.0, %v2977
      %v2979 = vpop.f32.mrb[0].mxu0
      %2980 = vmatprep.mubr.bf16.mxu0 0
      %2981 = vmatmul.mubr.bf16.gmra.mrb[0].mxu0 %v2761
      %v2982 = vpop.f32.mrb[0].mxu0
      %v2983 = vadd.f32 0.0, %v2982
      %v2984 = vpop.f32.mrb[0].mxu0
      %v2985 = vpop.f32.mrb[0].mxu0
      %v2986 = vadd.f32 0.0, %v2985
      %v2987 = vpop.f32.mrb[0].mxu0
      %2988 = vmatprep.mubr.bf16.mxu0 0
      %2989 = vmatmul.mubr.bf16.gmra.mrb[0].mxu0 %v2762
      %v2990 = vpop.f32.mrb[0].mxu0
      %v2991 = vadd.f32 0.0, %v2990
      %v2992 = vpop.f32.mrb[0].mxu0
      %v2993 = vpop.f32.mrb[0].mxu0
      %v2994 = vadd.f32 0.0, %v2993
      %v2995 = vpop.f32.mrb[0].mxu0
      %2996 = vmatprep.mubr.bf16.mxu0 0
      %2997 = vmatmul.mubr.bf16.gmra.mrb[0].mxu0 %v2763
      %v2998 = vpop.f32.mrb[0].mxu0
      %v2999 = vadd.f32 0.0, %v2998
      %v3000 = vpop.f32.mrb[0].mxu0
      %v3001 = vpop.f32.mrb[0].mxu0
      %v3002 = vadd.f32 0.0, %v3001
      %v3003 = vpop.f32.mrb[0].mxu0
      %3004 = vmatprep.mubr.bf16.mxu0 0
      %3005 = vmatmul.mubr.bf16.gmra.mrb[0].mxu0 %v2764
      %v3006 = vpop.f32.mrb[0].mxu0
      %v3007 = vadd.f32 0.0, %v3006
      %v3008 = vpop.f32.mrb[0].mxu0
      %v3009 = vpop.f32.mrb[0].mxu0
      %v3010 = vadd.f32 0.0, %v3009
      %v3011 = vpop.f32.mrb[0].mxu0
      %3012 = vmatprep.mubr.bf16.mxu0 0
      %3013 = vmatmul.mubr.bf16.gmra.mrb[0].mxu0 %v2765
      %v3014 = vpop.f32.mrb[0].mxu0
      %v3015 = vadd.f32 0.0, %v3014
      %v3016 = vpop.f32.mrb[0].mxu0
      %v3017 = vpop.f32.mrb[0].mxu0
      %v3018 = vadd.f32 0.0, %v3017
      %v3019 = vpop.f32.mrb[0].mxu0
      %3020 = vmatprep.mubr.bf16.mxu0 0
      %3021 = vmatmul.mubr.bf16.gmra.mrb[0].mxu0 %v2766
      %v3022 = vpop.f32.mrb[0].mxu0
      %v3023 = vadd.f32 0.0, %v3022
      %v3024 = vpop.f32.mrb[0].mxu0
      %v3025 = vpop.f32.mrb[0].mxu0
      %v3026 = vadd.f32 0.0, %v3025
      %v3027 = vpop.f32.mrb[0].mxu0
      %3028 = vmatprep.mubr.bf16.mxu0 0
      %3029 = vmatmul.mubr.bf16.gmra.mrb[0].mxu0 %v2767
      %v3030 = vpop.f32.mrb[0].mxu0
      %v3031 = vadd.f32 0.0, %v3030
      %v3032 = vpop.f32.mrb[0].mxu0
      %v3033 = vpop.f32.mrb[0].mxu0
      %v3034 = vadd.f32 0.0, %v3033
      %v3035 = vpop.f32.mrb[0].mxu0
      %3036 = vmatprep.mubr.bf16.mxu0 0
      %3037 = vmatmul.mubr.bf16.gmra.mrb[0].mxu0 %v2768
      %v3038 = vpop.f32.mrb[0].mxu0
      %v3039 = vadd.f32 0.0, %v3038
      %v3040 = vpop.f32.mrb[0].mxu0
      %v3041 = vpop.f32.mrb[0].mxu0
      %v3042 = vadd.f32 0.0, %v3041
      %v3043 = vpop.f32.mrb[0].mxu0
      %3044 = vmatprep.mubr.bf16.mxu0 0
      %3045 = vmatmul.mubr.bf16.gmra.mrb[0].mxu0 %v2769
      %v3046 = vpop.f32.mrb[0].mxu0
      %v3047 = vadd.f32 0.0, %v3046
      %v3048 = vpop.f32.mrb[0].mxu0
      %v3049 = vpop.f32.mrb[0].mxu0
      %v3050 = vadd.f32 0.0, %v3049
      %v3051 = vpop.f32.mrb[0].mxu0
      %3052 = vmatprep.mubr.bf16.mxu0 0
      %3053 = vmatmul.mubr.bf16.gmra.mrb[0].mxu0 %v2770
      %v3054 = vpop.f32.mrb[0].mxu0
      %v3055 = vadd.f32 0.0, %v3054
      %v3056 = vpop.f32.mrb[0].mxu0
      %v3057 = vpop.f32.mrb[0].mxu0
      %v3058 = vadd.f32 0.0, %v3057
      %v3059 = vpop.f32.mrb[0].mxu0
      %3060 = vdwg.mxu0
      %v3061 = vadd.f32 %v2651, %v2871
      %v3062 = vadd.f32 %v2652, %v2874
      %v3063 = vadd.f32 %v2653, %v2879
      %v3064 = vadd.f32 %v2654, %v2882
      %v3065 = vadd.f32 %v2655, %v2887
      %v3066 = vadd.f32 %v2656, %v2890
      %v3067 = vadd.f32 %v2657, %v2895
      %v3068 = vadd.f32 %v2658, %v2898
      %v3069 = vadd.f32 %v2659, %v2903
      %v3070 = vadd.f32 %v2660, %v2906
      %v3071 = vadd.f32 %v2661, %v2911
      %v3072 = vadd.f32 %v2662, %v2914
      %v3073 = vadd.f32 %v2663, %v2919
      %v3074 = vadd.f32 %v2664, %v2922
      %v3075 = vadd.f32 %v2665, %v2927
      %v3076 = vadd.f32 %v2666, %v2930
      %v3077 = vadd.f32 %v2667, %v2935
      %v3078 = vadd.f32 %v2668, %v2938
      %v3079 = vadd.f32 %v2669, %v2943
      %v3080 = vadd.f32 %v2670, %v2946
      %v3081 = vadd.f32 %v2671, %v2951
      %v3082 = vadd.f32 %v2672, %v2954
      %v3083 = vadd.f32 %v2673, %v2959
      %v3084 = vadd.f32 %v2674, %v2962
      %v3085 = vadd.f32 %v2675, %v2967
      %v3086 = vadd.f32 %v2676, %v2970
      %v3087 = vadd.f32 %v2677, %v2975
      %v3088 = vadd.f32 %v2678, %v2978
      %v3089 = vadd.f32 %v2679, %v2983
      %v3090 = vadd.f32 %v2680, %v2986
      %v3091 = vadd.f32 %v2681, %v2991
      %v3092 = vadd.f32 %v2682, %v2994
      %v3093 = vadd.f32 %v2683, %v2999
      %v3094 = vadd.f32 %v2684, %v3002
      %v3095 = vadd.f32 %v2685, %v3007
      %v3096 = vadd.f32 %v2686, %v3010
      %v3097 = vadd.f32 %v2687, %v3015
      %v3098 = vadd.f32 %v2688, %v3018
      %v3099 = vadd.f32 %v2689, %v3023
      %v3100 = vadd.f32 %v2690, %v3026
      %v3101 = vadd.f32 %v2691, %v3031
      %v3102 = vadd.f32 %v2692, %v3034
      %v3103 = vadd.f32 %v2693, %v3039
      %v3104 = vadd.f32 %v2694, %v3042
      %v3105 = vadd.f32 %v2695, %v3047
      %v3106 = vadd.f32 %v2696, %v3050
      %v3107 = vadd.f32 %v2697, %v3055
      %v3108 = vadd.f32 %v2698, %v3058
      %v3109 = vld [vmem:[#allocation2 + $0x31] sm:$0xff]
      %v3110 = vld [vmem:[#allocation2 + $0x39] sm:$0xff]
      %v3111 = vld [vmem:[#allocation2 + $0x41] sm:$0xff]
      %v3112 = vld [vmem:[#allocation2 + $0x49] sm:$0xff]
      %v3113 = vld [vmem:[#allocation2 + $0x51] sm:$0xff]
      %v3114 = vld [vmem:[#allocation2 + $0x59] sm:$0xff]
      %v3115 = vld [vmem:[#allocation2 + $0x61] sm:$0xff]
      %v3116 = vld [vmem:[#allocation2 + $0x69] sm:$0xff]
      %v3117 = vld [vmem:[#allocation2 + $0x71] sm:$0xff]
      %v3118 = vld [vmem:[#allocation2 + $0x79] sm:$0xff]
      %v3119 = vld [vmem:[#allocation2 + $0x81] sm:$0xff]
      %v3120 = vld [vmem:[#allocation2 + $0x89] sm:$0xff]
      %v3121 = vld [vmem:[#allocation2 + $0x91] sm:$0xff]
      %v3122 = vld [vmem:[#allocation2 + $0x99] sm:$0xff]
      %v3123 = vld [vmem:[#allocation2 + $0xa1] sm:$0xff]
      %v3124 = vld [vmem:[#allocation2 + $0xa9] sm:$0xff]
      %v3125 = vld [vmem:[#allocation2 + $0xb1] sm:$0xff]
      %v3126 = vld [vmem:[#allocation2 + $0xb9] sm:$0xff]
      %v3127 = vld [vmem:[#allocation2 + $0xc1] sm:$0xff]
      %v3128 = vld [vmem:[#allocation2 + $0xc9] sm:$0xff]
      %v3129 = vld [vmem:[#allocation2 + $0xd1] sm:$0xff]
      %v3130 = vld [vmem:[#allocation2 + $0xd9] sm:$0xff]
      %v3131 = vld [vmem:[#allocation2 + $0xe1] sm:$0xff]
      %v3132 = vld [vmem:[#allocation2 + $0xe9] sm:$0xff]
      %v3133 = vld [vmem:[#allocation2 + $0xf1] sm:$0xff]
      %v3134 = vld [vmem:[#allocation2 + $0xf9] sm:$0xff]
      %v3135 = vld [vmem:[#allocation2 + $0x101] sm:$0xff]
      %v3136 = vld [vmem:[#allocation2 + $0x109] sm:$0xff]
      %v3137 = vld [vmem:[#allocation2 + $0x111] sm:$0xff]
      %v3138 = vld [vmem:[#allocation2 + $0x119] sm:$0xff]
      %v3139 = vld [vmem:[#allocation2 + $0x121] sm:$0xff]
      %v3140 = vld [vmem:[#allocation2 + $0x129] sm:$0xff]
      %v3141 = vld [vmem:[#allocation2 + $0x131] sm:$0xff]
      %v3142 = vld [vmem:[#allocation2 + $0x139] sm:$0xff]
      %v3143 = vld [vmem:[#allocation2 + $0x141] sm:$0xff]
      %v3144 = vld [vmem:[#allocation2 + $0x149] sm:$0xff]
      %v3145 = vld [vmem:[#allocation2 + $0x151] sm:$0xff]
      %v3146 = vld [vmem:[#allocation2 + $0x159] sm:$0xff]
      %v3147 = vld [vmem:[#allocation2 + $0x161] sm:$0xff]
      %v3148 = vld [vmem:[#allocation2 + $0x169] sm:$0xff]
      %v3149 = vld [vmem:[#allocation2 + $0x171] sm:$0xff]
      %v3150 = vld [vmem:[#allocation2 + $0x179] sm:$0xff]
      %v3151 = vld [vmem:[#allocation2 + $0x181] sm:$0xff]
      %v3152 = vld [vmem:[#allocation2 + $0x189] sm:$0xff]
      %v3153 = vld [vmem:[#allocation2 + $0x191] sm:$0xff]
      %v3154 = vld [vmem:[#allocation2 + $0x199] sm:$0xff]
      %v3155 = vld [vmem:[#allocation2 + $0x1a1] sm:$0xff]
      %v3156 = vld [vmem:[#allocation2 + $0x1a9] sm:$0xff]
      %v3157 = vpack.c.bf16 %v3110, %v3109
      %v3158 = vpack.c.bf16 %v3112, %v3111
      %v3159 = vpack.c.bf16 %v3114, %v3113
      %v3160 = vpack.c.bf16 %v3116, %v3115
      %v3161 = vpack.c.bf16 %v3118, %v3117
      %v3162 = vpack.c.bf16 %v3120, %v3119
      %v3163 = vpack.c.bf16 %v3122, %v3121
      %v3164 = vpack.c.bf16 %v3124, %v3123
      %v3165 = vpack.c.bf16 %v3126, %v3125
      %v3166 = vpack.c.bf16 %v3128, %v3127
      %v3167 = vpack.c.bf16 %v3130, %v3129
      %v3168 = vpack.c.bf16 %v3132, %v3131
      %v3169 = vpack.c.bf16 %v3134, %v3133
      %v3170 = vpack.c.bf16 %v3136, %v3135
      %v3171 = vpack.c.bf16 %v3138, %v3137
      %v3172 = vpack.c.bf16 %v3140, %v3139
      %v3173 = vpack.c.bf16 %v3142, %v3141
      %v3174 = vpack.c.bf16 %v3144, %v3143
      %v3175 = vpack.c.bf16 %v3146, %v3145
      %v3176 = vpack.c.bf16 %v3148, %v3147
      %v3177 = vpack.c.bf16 %v3150, %v3149
      %v3178 = vpack.c.bf16 %v3152, %v3151
      %v3179 = vpack.c.bf16 %v3154, %v3153
      %v3180 = vpack.c.bf16 %v3156, %v3155
      %s3181 = scalar_lea.vmem %s1, 448
      %v3182 = vld [vmem:[%s3181] sm:$0xf]
      %v3183 = vld [vmem:[%s3181 + $0x4] sm:$0xf]
      %v3184 = vld [vmem:[%s3181 + $0x8] sm:$0xf]
      %v3185 = vld [vmem:[%s3181 + $0xc] sm:$0xf]
      %v3186 = vld [vmem:[%s3181 + $0x10] sm:$0xf]
      %v3187 = vld [vmem:[%s3181 + $0x14] sm:$0xf]
      %v3188 = vld [vmem:[%s3181 + $0x18] sm:$0xf]
      %v3189 = vld [vmem:[%s3181 + $0x1c] sm:$0xf]
      %v3190 = vld [vmem:[%s3181 + $0x20] sm:$0xf]
      %v3191 = vld [vmem:[%s3181 + $0x24] sm:$0xf]
      %v3192 = vld [vmem:[%s3181 + $0x28] sm:$0xf]
      %v3193 = vld [vmem:[%s3181 + $0x2c] sm:$0xf]
      %v3194 = vld [vmem:[%s3181 + $0x30] sm:$0xf]
      %v3195 = vld [vmem:[%s3181 + $0x34] sm:$0xf]
      %v3196 = vld [vmem:[%s3181 + $0x38] sm:$0xf]
      %v3197 = vld [vmem:[%s3181 + $0x3c] sm:$0xf]
      %v3214 = vunpack.c.l.b16 %v3182
      %v3215 = vunpack.c.l.b16 %v3183
      %v3216 = vunpack.c.l.b16 %v3184
      %v3217 = vunpack.c.l.b16 %v3185
      %v3218 = vunpack.c.l.b16 %v3186
      %v3219 = vunpack.c.l.b16 %v3187
      %v3220 = vunpack.c.l.b16 %v3188
      %v3221 = vunpack.c.l.b16 %v3189
      %v3222 = vunpack.c.l.b16 %v3190
      %v3223 = vunpack.c.l.b16 %v3191
      %v3224 = vunpack.c.l.b16 %v3192
      %v3225 = vunpack.c.l.b16 %v3193
      %v3226 = vunpack.c.l.b16 %v3194
      %v3227 = vunpack.c.l.b16 %v3195
      %v3228 = vunpack.c.l.b16 %v3196
      %v3229 = vunpack.c.l.b16 %v3197
      %v3230 = vpack.c.b16 %v3215, %v3214
      %v3231 = vpack.c.b16 %v3217, %v3216
      %v3232 = vpack.c.b16 %v3219, %v3218
      %v3233 = vpack.c.b16 %v3221, %v3220
      %v3234 = vpack.c.b16 %v3223, %v3222
      %v3235 = vpack.c.b16 %v3225, %v3224
      %v3236 = vpack.c.b16 %v3227, %v3226
      %v3237 = vpack.c.b16 %v3229, %v3228
      %3246 = vmatprep.subr.bf16.mxu0 0
      %3247 = vmatpush1.bf16.msra.mxu0 %v3230
      %3248 = vmatprep.subr.bf16.mxu0 0
      %3249 = vmatpush1.bf16.msra.mxu0 %v3231
      %3250 = vmatprep.subr.bf16.mxu0 0
      %3251 = vmatpush1.bf16.msra.mxu0 %v3232
      %3252 = vmatprep.subr.bf16.mxu0 0
      %3253 = vmatpush1.bf16.msra.mxu0 %v3233
      %3254 = vmatprep.subr.bf16.mxu0 0
      %3255 = vmatpush1.bf16.msra.mxu0 %v3234
      %3256 = vmatprep.subr.bf16.mxu0 0
      %3257 = vmatpush1.bf16.msra.mxu0 %v3235
      %3258 = vmatprep.subr.bf16.mxu0 0
      %3259 = vmatpush1.bf16.msra.mxu0 %v3236
      %3260 = vmatprep.subr.bf16.mxu0 0
      %3261 = vmatpush1.bf16.msra.mxu0 %v3237
      %3262 = vmatprep.subr.bf16.mxu0 0
      %3263 = vmatpush1.bf16.msra.mxu0 0
      %3264 = vmatprep.subr.bf16.mxu0 0
      %3265 = vmatpush1.bf16.msra.mxu0 0
      %3266 = vmatprep.subr.bf16.mxu0 0
      %3267 = vmatpush1.bf16.msra.mxu0 0
      %3268 = vmatprep.subr.bf16.mxu0 0
      %3269 = vmatpush1.bf16.msra.mxu0 0
      %3270 = vmatprep.subr.bf16.mxu0 0
      %3271 = vmatpush1.bf16.msra.mxu0 0
      %3272 = vmatprep.subr.bf16.mxu0 0
      %3273 = vmatpush1.bf16.msra.mxu0 0
      %3274 = vmatprep.subr.bf16.mxu0 0
      %3275 = vmatpush1.bf16.msra.mxu0 0
      %3276 = vmatprep.subr.bf16.mxu0 0
      %3277 = vmatpush1.bf16.msra.mxu0 0
      %3278 = vmatprep.mubr.bf16.mxu0 0
      %3279 = vmatmul.mubr.bf16.gmra.mrb[0].mxu0 %v3157
      %v3280 = vpop.f32.mrb[0].mxu0
      %v3281 = vadd.f32 0.0, %v3280
      %v3282 = vpop.f32.mrb[0].mxu0
      %v3283 = vpop.f32.mrb[0].mxu0
      %v3284 = vadd.f32 0.0, %v3283
      %v3285 = vpop.f32.mrb[0].mxu0
      %3286 = vmatprep.mubr.bf16.mxu0 0
      %3287 = vmatmul.mubr.bf16.gmra.mrb[0].mxu0 %v3158
      %v3288 = vpop.f32.mrb[0].mxu0
      %v3289 = vadd.f32 0.0, %v3288
      %v3290 = vpop.f32.mrb[0].mxu0
      %v3291 = vpop.f32.mrb[0].mxu0
      %v3292 = vadd.f32 0.0, %v3291
      %v3293 = vpop.f32.mrb[0].mxu0
      %3294 = vmatprep.mubr.bf16.mxu0 0
      %3295 = vmatmul.mubr.bf16.gmra.mrb[0].mxu0 %v3159
      %v3296 = vpop.f32.mrb[0].mxu0
      %v3297 = vadd.f32 0.0, %v3296
      %v3298 = vpop.f32.mrb[0].mxu0
      %v3299 = vpop.f32.mrb[0].mxu0
      %v3300 = vadd.f32 0.0, %v3299
      %v3301 = vpop.f32.mrb[0].mxu0
      %3302 = vmatprep.mubr.bf16.mxu0 0
      %3303 = vmatmul.mubr.bf16.gmra.mrb[0].mxu0 %v3160
      %v3304 = vpop.f32.mrb[0].mxu0
      %v3305 = vadd.f32 0.0, %v3304
      %v3306 = vpop.f32.mrb[0].mxu0
      %v3307 = vpop.f32.mrb[0].mxu0
      %v3308 = vadd.f32 0.0, %v3307
      %v3309 = vpop.f32.mrb[0].mxu0
      %3310 = vmatprep.mubr.bf16.mxu0 0
      %3311 = vmatmul.mubr.bf16.gmra.mrb[0].mxu0 %v3161
      %v3312 = vpop.f32.mrb[0].mxu0
      %v3313 = vadd.f32 0.0, %v3312
      %v3314 = vpop.f32.mrb[0].mxu0
      %v3315 = vpop.f32.mrb[0].mxu0
      %v3316 = vadd.f32 0.0, %v3315
      %v3317 = vpop.f32.mrb[0].mxu0
      %3318 = vmatprep.mubr.bf16.mxu0 0
      %3319 = vmatmul.mubr.bf16.gmra.mrb[0].mxu0 %v3162
      %v3320 = vpop.f32.mrb[0].mxu0
      %v3321 = vadd.f32 0.0, %v3320
      %v3322 = vpop.f32.mrb[0].mxu0
      %v3323 = vpop.f32.mrb[0].mxu0
      %v3324 = vadd.f32 0.0, %v3323
      %v3325 = vpop.f32.mrb[0].mxu0
      %3326 = vmatprep.mubr.bf16.mxu0 0
      %3327 = vmatmul.mubr.bf16.gmra.mrb[0].mxu0 %v3163
      %v3328 = vpop.f32.mrb[0].mxu0
      %v3329 = vadd.f32 0.0, %v3328
      %v3330 = vpop.f32.mrb[0].mxu0
      %v3331 = vpop.f32.mrb[0].mxu0
      %v3332 = vadd.f32 0.0, %v3331
      %v3333 = vpop.f32.mrb[0].mxu0
      %3334 = vmatprep.mubr.bf16.mxu0 0
      %3335 = vmatmul.mubr.bf16.gmra.mrb[0].mxu0 %v3164
      %v3336 = vpop.f32.mrb[0].mxu0
      %v3337 = vadd.f32 0.0, %v3336
      %v3338 = vpop.f32.mrb[0].mxu0
      %v3339 = vpop.f32.mrb[0].mxu0
      %v3340 = vadd.f32 0.0, %v3339
      %v3341 = vpop.f32.mrb[0].mxu0
      %3342 = vmatprep.mubr.bf16.mxu0 0
      %3343 = vmatmul.mubr.bf16.gmra.mrb[0].mxu0 %v3165
      %v3344 = vpop.f32.mrb[0].mxu0
      %v3345 = vadd.f32 0.0, %v3344
      %v3346 = vpop.f32.mrb[0].mxu0
      %v3347 = vpop.f32.mrb[0].mxu0
      %v3348 = vadd.f32 0.0, %v3347
      %v3349 = vpop.f32.mrb[0].mxu0
      %3350 = vmatprep.mubr.bf16.mxu0 0
      %3351 = vmatmul.mubr.bf16.gmra.mrb[0].mxu0 %v3166
      %v3352 = vpop.f32.mrb[0].mxu0
      %v3353 = vadd.f32 0.0, %v3352
      %v3354 = vpop.f32.mrb[0].mxu0
      %v3355 = vpop.f32.mrb[0].mxu0
      %v3356 = vadd.f32 0.0, %v3355
      %v3357 = vpop.f32.mrb[0].mxu0
      %3358 = vmatprep.mubr.bf16.mxu0 0
      %3359 = vmatmul.mubr.bf16.gmra.mrb[0].mxu0 %v3167
      %v3360 = vpop.f32.mrb[0].mxu0
      %v3361 = vadd.f32 0.0, %v3360
      %v3362 = vpop.f32.mrb[0].mxu0
      %v3363 = vpop.f32.mrb[0].mxu0
      %v3364 = vadd.f32 0.0, %v3363
      %v3365 = vpop.f32.mrb[0].mxu0
      %3366 = vmatprep.mubr.bf16.mxu0 0
      %3367 = vmatmul.mubr.bf16.gmra.mrb[0].mxu0 %v3168
      %v3368 = vpop.f32.mrb[0].mxu0
      %v3369 = vadd.f32 0.0, %v3368
      %v3370 = vpop.f32.mrb[0].mxu0
      %v3371 = vpop.f32.mrb[0].mxu0
      %v3372 = vadd.f32 0.0, %v3371
      %v3373 = vpop.f32.mrb[0].mxu0
      %3374 = vmatprep.mubr.bf16.mxu0 0
      %3375 = vmatmul.mubr.bf16.gmra.mrb[0].mxu0 %v3169
      %v3376 = vpop.f32.mrb[0].mxu0
      %v3377 = vadd.f32 0.0, %v3376
      %v3378 = vpop.f32.mrb[0].mxu0
      %v3379 = vpop.f32.mrb[0].mxu0
      %v3380 = vadd.f32 0.0, %v3379
      %v3381 = vpop.f32.mrb[0].mxu0
      %3382 = vmatprep.mubr.bf16.mxu0 0
      %3383 = vmatmul.mubr.bf16.gmra.mrb[0].mxu0 %v3170
      %v3384 = vpop.f32.mrb[0].mxu0
      %v3385 = vadd.f32 0.0, %v3384
      %v3386 = vpop.f32.mrb[0].mxu0
      %v3387 = vpop.f32.mrb[0].mxu0
      %v3388 = vadd.f32 0.0, %v3387
      %v3389 = vpop.f32.mrb[0].mxu0
      %3390 = vmatprep.mubr.bf16.mxu0 0
      %3391 = vmatmul.mubr.bf16.gmra.mrb[0].mxu0 %v3171
      %v3392 = vpop.f32.mrb[0].mxu0
      %v3393 = vadd.f32 0.0, %v3392
      %v3394 = vpop.f32.mrb[0].mxu0
      %v3395 = vpop.f32.mrb[0].mxu0
      %v3396 = vadd.f32 0.0, %v3395
      %v3397 = vpop.f32.mrb[0].mxu0
      %3398 = vmatprep.mubr.bf16.mxu0 0
      %3399 = vmatmul.mubr.bf16.gmra.mrb[0].mxu0 %v3172
      %v3400 = vpop.f32.mrb[0].mxu0
      %v3401 = vadd.f32 0.0, %v3400
      %v3402 = vpop.f32.mrb[0].mxu0
      %v3403 = vpop.f32.mrb[0].mxu0
      %v3404 = vadd.f32 0.0, %v3403
      %v3405 = vpop.f32.mrb[0].mxu0
      %3406 = vmatprep.mubr.bf16.mxu0 0
      %3407 = vmatmul.mubr.bf16.gmra.mrb[0].mxu0 %v3173
      %v3408 = vpop.f32.mrb[0].mxu0
      %v3409 = vadd.f32 0.0, %v3408
      %v3410 = vpop.f32.mrb[0].mxu0
      %v3411 = vpop.f32.mrb[0].mxu0
      %v3412 = vadd.f32 0.0, %v3411
      %v3413 = vpop.f32.mrb[0].mxu0
      %3414 = vmatprep.mubr.bf16.mxu0 0
      %3415 = vmatmul.mubr.bf16.gmra.mrb[0].mxu0 %v3174
      %v3416 = vpop.f32.mrb[0].mxu0
      %v3417 = vadd.f32 0.0, %v3416
      %v3418 = vpop.f32.mrb[0].mxu0
      %v3419 = vpop.f32.mrb[0].mxu0
      %v3420 = vadd.f32 0.0, %v3419
      %v3421 = vpop.f32.mrb[0].mxu0
      %3422 = vmatprep.mubr.bf16.mxu0 0
      %3423 = vmatmul.mubr.bf16.gmra.mrb[0].mxu0 %v3175
      %v3424 = vpop.f32.mrb[0].mxu0
      %v3425 = vadd.f32 0.0, %v3424
      %v3426 = vpop.f32.mrb[0].mxu0
      %v3427 = vpop.f32.mrb[0].mxu0
      %v3428 = vadd.f32 0.0, %v3427
      %v3429 = vpop.f32.mrb[0].mxu0
      %3430 = vmatprep.mubr.bf16.mxu0 0
      %3431 = vmatmul.mubr.bf16.gmra.mrb[0].mxu0 %v3176
      %v3432 = vpop.f32.mrb[0].mxu0
      %v3433 = vadd.f32 0.0, %v3432
      %v3434 = vpop.f32.mrb[0].mxu0
      %v3435 = vpop.f32.mrb[0].mxu0
      %v3436 = vadd.f32 0.0, %v3435
      %v3437 = vpop.f32.mrb[0].mxu0
      %3438 = vmatprep.mubr.bf16.mxu0 0
      %3439 = vmatmul.mubr.bf16.gmra.mrb[0].mxu0 %v3177
      %v3440 = vpop.f32.mrb[0].mxu0
      %v3441 = vadd.f32 0.0, %v3440
      %v3442 = vpop.f32.mrb[0].mxu0
      %v3443 = vpop.f32.mrb[0].mxu0
      %v3444 = vadd.f32 0.0, %v3443
      %v3445 = vpop.f32.mrb[0].mxu0
      %3446 = vmatprep.mubr.bf16.mxu0 0
      %3447 = vmatmul.mubr.bf16.gmra.mrb[0].mxu0 %v3178
      %v3448 = vpop.f32.mrb[0].mxu0
      %v3449 = vadd.f32 0.0, %v3448
      %v3450 = vpop.f32.mrb[0].mxu0
      %v3451 = vpop.f32.mrb[0].mxu0
      %v3452 = vadd.f32 0.0, %v3451
      %v3453 = vpop.f32.mrb[0].mxu0
      %3454 = vmatprep.mubr.bf16.mxu0 0
      %3455 = vmatmul.mubr.bf16.gmra.mrb[0].mxu0 %v3179
      %v3456 = vpop.f32.mrb[0].mxu0
      %v3457 = vadd.f32 0.0, %v3456
      %v3458 = vpop.f32.mrb[0].mxu0
      %v3459 = vpop.f32.mrb[0].mxu0
      %v3460 = vadd.f32 0.0, %v3459
      %v3461 = vpop.f32.mrb[0].mxu0
      %3462 = vmatprep.mubr.bf16.mxu0 0
      %3463 = vmatmul.mubr.bf16.gmra.mrb[0].mxu0 %v3180
      %v3464 = vpop.f32.mrb[0].mxu0
      %v3465 = vadd.f32 0.0, %v3464
      %v3466 = vpop.f32.mrb[0].mxu0
      %v3467 = vpop.f32.mrb[0].mxu0
      %v3468 = vadd.f32 0.0, %v3467
      %v3469 = vpop.f32.mrb[0].mxu0
      %3470 = vdwg.mxu0
      %v3471 = vadd.f32 %v3061, %v3281
      %v3472 = vadd.f32 %v3062, %v3284
      %v3473 = vadd.f32 %v3063, %v3289
      %v3474 = vadd.f32 %v3064, %v3292
      %v3475 = vadd.f32 %v3065, %v3297
      %v3476 = vadd.f32 %v3066, %v3300
      %v3477 = vadd.f32 %v3067, %v3305
      %v3478 = vadd.f32 %v3068, %v3308
      %v3479 = vadd.f32 %v3069, %v3313
      %v3480 = vadd.f32 %v3070, %v3316
      %v3481 = vadd.f32 %v3071, %v3321
      %v3482 = vadd.f32 %v3072, %v3324
      %v3483 = vadd.f32 %v3073, %v3329
      %v3484 = vadd.f32 %v3074, %v3332
      %v3485 = vadd.f32 %v3075, %v3337
      %v3486 = vadd.f32 %v3076, %v3340
      %v3487 = vadd.f32 %v3077, %v3345
      %v3488 = vadd.f32 %v3078, %v3348
      %v3489 = vadd.f32 %v3079, %v3353
      %v3490 = vadd.f32 %v3080, %v3356
      %v3491 = vadd.f32 %v3081, %v3361
      %v3492 = vadd.f32 %v3082, %v3364
      %v3493 = vadd.f32 %v3083, %v3369
      %v3494 = vadd.f32 %v3084, %v3372
      %v3495 = vadd.f32 %v3085, %v3377
      %v3496 = vadd.f32 %v3086, %v3380
      %v3497 = vadd.f32 %v3087, %v3385
      %v3498 = vadd.f32 %v3088, %v3388
      %v3499 = vadd.f32 %v3089, %v3393
      %v3500 = vadd.f32 %v3090, %v3396
      %v3501 = vadd.f32 %v3091, %v3401
      %v3502 = vadd.f32 %v3092, %v3404
      %v3503 = vadd.f32 %v3093, %v3409
      %v3504 = vadd.f32 %v3094, %v3412
      %v3505 = vadd.f32 %v3095, %v3417
      %v3506 = vadd.f32 %v3096, %v3420
      %v3507 = vadd.f32 %v3097, %v3425
      %v3508 = vadd.f32 %v3098, %v3428
      %v3509 = vadd.f32 %v3099, %v3433
      %v3510 = vadd.f32 %v3100, %v3436
      %v3511 = vadd.f32 %v3101, %v3441
      %v3512 = vadd.f32 %v3102, %v3444
      %v3513 = vadd.f32 %v3103, %v3449
      %v3514 = vadd.f32 %v3104, %v3452
      %v3515 = vadd.f32 %v3105, %v3457
      %v3516 = vadd.f32 %v3106, %v3460
      %v3517 = vadd.f32 %v3107, %v3465
      %v3518 = vadd.f32 %v3108, %v3468
      %v3519 = vld [vmem:[#allocation2 + $0x32] sm:$0xff]
      %v3520 = vld [vmem:[#allocation2 + $0x3a] sm:$0xff]
      %v3521 = vld [vmem:[#allocation2 + $0x42] sm:$0xff]
      %v3522 = vld [vmem:[#allocation2 + $0x4a] sm:$0xff]
      %v3523 = vld [vmem:[#allocation2 + $0x52] sm:$0xff]
      %v3524 = vld [vmem:[#allocation2 + $0x5a] sm:$0xff]
      %v3525 = vld [vmem:[#allocation2 + $0x62] sm:$0xff]
      %v3526 = vld [vmem:[#allocation2 + $0x6a] sm:$0xff]
      %v3527 = vld [vmem:[#allocation2 + $0x72] sm:$0xff]
      %v3528 = vld [vmem:[#allocation2 + $0x7a] sm:$0xff]
      %v3529 = vld [vmem:[#allocation2 + $0x82] sm:$0xff]
      %v3530 = vld [vmem:[#allocation2 + $0x8a] sm:$0xff]
      %v3531 = vld [vmem:[#allocation2 + $0x92] sm:$0xff]
      %v3532 = vld [vmem:[#allocation2 + $0x9a] sm:$0xff]
      %v3533 = vld [vmem:[#allocation2 + $0xa2] sm:$0xff]
      %v3534 = vld [vmem:[#allocation2 + $0xaa] sm:$0xff]
      %v3535 = vld [vmem:[#allocation2 + $0xb2] sm:$0xff]
      %v3536 = vld [vmem:[#allocation2 + $0xba] sm:$0xff]
      %v3537 = vld [vmem:[#allocation2 + $0xc2] sm:$0xff]
      %v3538 = vld [vmem:[#allocation2 + $0xca] sm:$0xff]
      %v3539 = vld [vmem:[#allocation2 + $0xd2] sm:$0xff]
      %v3540 = vld [vmem:[#allocation2 + $0xda] sm:$0xff]
      %v3541 = vld [vmem:[#allocation2 + $0xe2] sm:$0xff]
      %v3542 = vld [vmem:[#allocation2 + $0xea] sm:$0xff]
      %v3543 = vld [vmem:[#allocation2 + $0xf2] sm:$0xff]
      %v3544 = vld [vmem:[#allocation2 + $0xfa] sm:$0xff]
      %v3545 = vld [vmem:[#allocation2 + $0x102] sm:$0xff]
      %v3546 = vld [vmem:[#allocation2 + $0x10a] sm:$0xff]
      %v3547 = vld [vmem:[#allocation2 + $0x112] sm:$0xff]
      %v3548 = vld [vmem:[#allocation2 + $0x11a] sm:$0xff]
      %v3549 = vld [vmem:[#allocation2 + $0x122] sm:$0xff]
      %v3550 = vld [vmem:[#allocation2 + $0x12a] sm:$0xff]
      %v3551 = vld [vmem:[#allocation2 + $0x132] sm:$0xff]
      %v3552 = vld [vmem:[#allocation2 + $0x13a] sm:$0xff]
      %v3553 = vld [vmem:[#allocation2 + $0x142] sm:$0xff]
      %v3554 = vld [vmem:[#allocation2 + $0x14a] sm:$0xff]
      %v3555 = vld [vmem:[#allocation2 + $0x152] sm:$0xff]
      %v3556 = vld [vmem:[#allocation2 + $0x15a] sm:$0xff]
      %v3557 = vld [vmem:[#allocation2 + $0x162] sm:$0xff]
      %v3558 = vld [vmem:[#allocation2 + $0x16a] sm:$0xff]
      %v3559 = vld [vmem:[#allocation2 + $0x172] sm:$0xff]
      %v3560 = vld [vmem:[#allocation2 + $0x17a] sm:$0xff]
      %v3561 = vld [vmem:[#allocation2 + $0x182] sm:$0xff]
      %v3562 = vld [vmem:[#allocation2 + $0x18a] sm:$0xff]
      %v3563 = vld [vmem:[#allocation2 + $0x192] sm:$0xff]
      %v3564 = vld [vmem:[#allocation2 + $0x19a] sm:$0xff]
      %v3565 = vld [vmem:[#allocation2 + $0x1a2] sm:$0xff]
      %v3566 = vld [vmem:[#allocation2 + $0x1aa] sm:$0xff]
      %v3567 = vpack.c.bf16 %v3520, %v3519
      %v3568 = vpack.c.bf16 %v3522, %v3521
      %v3569 = vpack.c.bf16 %v3524, %v3523
      %v3570 = vpack.c.bf16 %v3526, %v3525
      %v3571 = vpack.c.bf16 %v3528, %v3527
      %v3572 = vpack.c.bf16 %v3530, %v3529
      %v3573 = vpack.c.bf16 %v3532, %v3531
      %v3574 = vpack.c.bf16 %v3534, %v3533
      %v3575 = vpack.c.bf16 %v3536, %v3535
      %v3576 = vpack.c.bf16 %v3538, %v3537
      %v3577 = vpack.c.bf16 %v3540, %v3539
      %v3578 = vpack.c.bf16 %v3542, %v3541
      %v3579 = vpack.c.bf16 %v3544, %v3543
      %v3580 = vpack.c.bf16 %v3546, %v3545
      %v3581 = vpack.c.bf16 %v3548, %v3547
      %v3582 = vpack.c.bf16 %v3550, %v3549
      %v3583 = vpack.c.bf16 %v3552, %v3551
      %v3584 = vpack.c.bf16 %v3554, %v3553
      %v3585 = vpack.c.bf16 %v3556, %v3555
      %v3586 = vpack.c.bf16 %v3558, %v3557
      %v3587 = vpack.c.bf16 %v3560, %v3559
      %v3588 = vpack.c.bf16 %v3562, %v3561
      %v3589 = vpack.c.bf16 %v3564, %v3563
      %v3590 = vpack.c.bf16 %v3566, %v3565
      %s3591 = scalar_lea.vmem %s1, 512
      %v3592 = vld [vmem:[%s3591] sm:$0xf]
      %v3593 = vld [vmem:[%s3591 + $0x4] sm:$0xf]
      %v3594 = vld [vmem:[%s3591 + $0x8] sm:$0xf]
      %v3595 = vld [vmem:[%s3591 + $0xc] sm:$0xf]
      %v3596 = vld [vmem:[%s3591 + $0x10] sm:$0xf]
      %v3597 = vld [vmem:[%s3591 + $0x14] sm:$0xf]
      %v3598 = vld [vmem:[%s3591 + $0x18] sm:$0xf]
      %v3599 = vld [vmem:[%s3591 + $0x1c] sm:$0xf]
      %v3600 = vld [vmem:[%s3591 + $0x20] sm:$0xf]
      %v3601 = vld [vmem:[%s3591 + $0x24] sm:$0xf]
      %v3602 = vld [vmem:[%s3591 + $0x28] sm:$0xf]
      %v3603 = vld [vmem:[%s3591 + $0x2c] sm:$0xf]
      %v3604 = vld [vmem:[%s3591 + $0x30] sm:$0xf]
      %v3605 = vld [vmem:[%s3591 + $0x34] sm:$0xf]
      %v3606 = vld [vmem:[%s3591 + $0x38] sm:$0xf]
      %v3607 = vld [vmem:[%s3591 + $0x3c] sm:$0xf]
      %v3624 = vunpack.c.l.b16 %v3592
      %v3625 = vunpack.c.l.b16 %v3593
      %v3626 = vunpack.c.l.b16 %v3594
      %v3627 = vunpack.c.l.b16 %v3595
      %v3628 = vunpack.c.l.b16 %v3596
      %v3629 = vunpack.c.l.b16 %v3597
      %v3630 = vunpack.c.l.b16 %v3598
      %v3631 = vunpack.c.l.b16 %v3599
      %v3632 = vunpack.c.l.b16 %v3600
      %v3633 = vunpack.c.l.b16 %v3601
      %v3634 = vunpack.c.l.b16 %v3602
      %v3635 = vunpack.c.l.b16 %v3603
      %v3636 = vunpack.c.l.b16 %v3604
      %v3637 = vunpack.c.l.b16 %v3605
      %v3638 = vunpack.c.l.b16 %v3606
      %v3639 = vunpack.c.l.b16 %v3607
      %v3640 = vpack.c.b16 %v3625, %v3624
      %v3641 = vpack.c.b16 %v3627, %v3626
      %v3642 = vpack.c.b16 %v3629, %v3628
      %v3643 = vpack.c.b16 %v3631, %v3630
      %v3644 = vpack.c.b16 %v3633, %v3632
      %v3645 = vpack.c.b16 %v3635, %v3634
      %v3646 = vpack.c.b16 %v3637, %v3636
      %v3647 = vpack.c.b16 %v3639, %v3638
      %3656 = vmatprep.subr.bf16.mxu0 0
      %3657 = vmatpush1.bf16.msra.mxu0 %v3640
      %3658 = vmatprep.subr.bf16.mxu0 0
      %3659 = vmatpush1.bf16.msra.mxu0 %v3641
      %3660 = vmatprep.subr.bf16.mxu0 0
      %3661 = vmatpush1.bf16.msra.mxu0 %v3642
      %3662 = vmatprep.subr.bf16.mxu0 0
      %3663 = vmatpush1.bf16.msra.mxu0 %v3643
      %3664 = vmatprep.subr.bf16.mxu0 0
      %3665 = vmatpush1.bf16.msra.mxu0 %v3644
      %3666 = vmatprep.subr.bf16.mxu0 0
      %3667 = vmatpush1.bf16.msra.mxu0 %v3645
      %3668 = vmatprep.subr.bf16.mxu0 0
      %3669 = vmatpush1.bf16.msra.mxu0 %v3646
      %3670 = vmatprep.subr.bf16.mxu0 0
      %3671 = vmatpush1.bf16.msra.mxu0 %v3647
      %3672 = vmatprep.subr.bf16.mxu0 0
      %3673 = vmatpush1.bf16.msra.mxu0 0
      %3674 = vmatprep.subr.bf16.mxu0 0
      %3675 = vmatpush1.bf16.msra.mxu0 0
      %3676 = vmatprep.subr.bf16.mxu0 0
      %3677 = vmatpush1.bf16.msra.mxu0 0
      %3678 = vmatprep.subr.bf16.mxu0 0
      %3679 = vmatpush1.bf16.msra.mxu0 0
      %3680 = vmatprep.subr.bf16.mxu0 0
      %3681 = vmatpush1.bf16.msra.mxu0 0
      %3682 = vmatprep.subr.bf16.mxu0 0
      %3683 = vmatpush1.bf16.msra.mxu0 0
      %3684 = vmatprep.subr.bf16.mxu0 0
      %3685 = vmatpush1.bf16.msra.mxu0 0
      %3686 = vmatprep.subr.bf16.mxu0 0
      %3687 = vmatpush1.bf16.msra.mxu0 0
      %3688 = vmatprep.mubr.bf16.mxu0 0
      %3689 = vmatmul.mubr.bf16.gmra.mrb[0].mxu0 %v3567
      %v3690 = vpop.f32.mrb[0].mxu0
      %v3691 = vadd.f32 0.0, %v3690
      %v3692 = vpop.f32.mrb[0].mxu0
      %v3693 = vpop.f32.mrb[0].mxu0
      %v3694 = vadd.f32 0.0, %v3693
      %v3695 = vpop.f32.mrb[0].mxu0
      %3696 = vmatprep.mubr.bf16.mxu0 0
      %3697 = vmatmul.mubr.bf16.gmra.mrb[0].mxu0 %v3568
      %v3698 = vpop.f32.mrb[0].mxu0
      %v3699 = vadd.f32 0.0, %v3698
      %v3700 = vpop.f32.mrb[0].mxu0
      %v3701 = vpop.f32.mrb[0].mxu0
      %v3702 = vadd.f32 0.0, %v3701
      %v3703 = vpop.f32.mrb[0].mxu0
      %3704 = vmatprep.mubr.bf16.mxu0 0
      %3705 = vmatmul.mubr.bf16.gmra.mrb[0].mxu0 %v3569
      %v3706 = vpop.f32.mrb[0].mxu0
      %v3707 = vadd.f32 0.0, %v3706
      %v3708 = vpop.f32.mrb[0].mxu0
      %v3709 = vpop.f32.mrb[0].mxu0
      %v3710 = vadd.f32 0.0, %v3709
      %v3711 = vpop.f32.mrb[0].mxu0
      %3712 = vmatprep.mubr.bf16.mxu0 0
      %3713 = vmatmul.mubr.bf16.gmra.mrb[0].mxu0 %v3570
      %v3714 = vpop.f32.mrb[0].mxu0
      %v3715 = vadd.f32 0.0, %v3714
      %v3716 = vpop.f32.mrb[0].mxu0
      %v3717 = vpop.f32.mrb[0].mxu0
      %v3718 = vadd.f32 0.0, %v3717
      %v3719 = vpop.f32.mrb[0].mxu0
      %3720 = vmatprep.mubr.bf16.mxu0 0
      %3721 = vmatmul.mubr.bf16.gmra.mrb[0].mxu0 %v3571
      %v3722 = vpop.f32.mrb[0].mxu0
      %v3723 = vadd.f32 0.0, %v3722
      %v3724 = vpop.f32.mrb[0].mxu0
      %v3725 = vpop.f32.mrb[0].mxu0
      %v3726 = vadd.f32 0.0, %v3725
      %v3727 = vpop.f32.mrb[0].mxu0
      %3728 = vmatprep.mubr.bf16.mxu0 0
      %3729 = vmatmul.mubr.bf16.gmra.mrb[0].mxu0 %v3572
      %v3730 = vpop.f32.mrb[0].mxu0
      %v3731 = vadd.f32 0.0, %v3730
      %v3732 = vpop.f32.mrb[0].mxu0
      %v3733 = vpop.f32.mrb[0].mxu0
      %v3734 = vadd.f32 0.0, %v3733
      %v3735 = vpop.f32.mrb[0].mxu0
      %3736 = vmatprep.mubr.bf16.mxu0 0
      %3737 = vmatmul.mubr.bf16.gmra.mrb[0].mxu0 %v3573
      %v3738 = vpop.f32.mrb[0].mxu0
      %v3739 = vadd.f32 0.0, %v3738
      %v3740 = vpop.f32.mrb[0].mxu0
      %v3741 = vpop.f32.mrb[0].mxu0
      %v3742 = vadd.f32 0.0, %v3741
      %v3743 = vpop.f32.mrb[0].mxu0
      %3744 = vmatprep.mubr.bf16.mxu0 0
      %3745 = vmatmul.mubr.bf16.gmra.mrb[0].mxu0 %v3574
      %v3746 = vpop.f32.mrb[0].mxu0
      %v3747 = vadd.f32 0.0, %v3746
      %v3748 = vpop.f32.mrb[0].mxu0
      %v3749 = vpop.f32.mrb[0].mxu0
      %v3750 = vadd.f32 0.0, %v3749
      %v3751 = vpop.f32.mrb[0].mxu0
      %3752 = vmatprep.mubr.bf16.mxu0 0
      %3753 = vmatmul.mubr.bf16.gmra.mrb[0].mxu0 %v3575
      %v3754 = vpop.f32.mrb[0].mxu0
      %v3755 = vadd.f32 0.0, %v3754
      %v3756 = vpop.f32.mrb[0].mxu0
      %v3757 = vpop.f32.mrb[0].mxu0
      %v3758 = vadd.f32 0.0, %v3757
      %v3759 = vpop.f32.mrb[0].mxu0
      %3760 = vmatprep.mubr.bf16.mxu0 0
      %3761 = vmatmul.mubr.bf16.gmra.mrb[0].mxu0 %v3576
      %v3762 = vpop.f32.mrb[0].mxu0
      %v3763 = vadd.f32 0.0, %v3762
      %v3764 = vpop.f32.mrb[0].mxu0
      %v3765 = vpop.f32.mrb[0].mxu0
      %v3766 = vadd.f32 0.0, %v3765
      %v3767 = vpop.f32.mrb[0].mxu0
      %3768 = vmatprep.mubr.bf16.mxu0 0
      %3769 = vmatmul.mubr.bf16.gmra.mrb[0].mxu0 %v3577
      %v3770 = vpop.f32.mrb[0].mxu0
      %v3771 = vadd.f32 0.0, %v3770
      %v3772 = vpop.f32.mrb[0].mxu0
      %v3773 = vpop.f32.mrb[0].mxu0
      %v3774 = vadd.f32 0.0, %v3773
      %v3775 = vpop.f32.mrb[0].mxu0
      %3776 = vmatprep.mubr.bf16.mxu0 0
      %3777 = vmatmul.mubr.bf16.gmra.mrb[0].mxu0 %v3578
      %v3778 = vpop.f32.mrb[0].mxu0
      %v3779 = vadd.f32 0.0, %v3778
      %v3780 = vpop.f32.mrb[0].mxu0
      %v3781 = vpop.f32.mrb[0].mxu0
      %v3782 = vadd.f32 0.0, %v3781
      %v3783 = vpop.f32.mrb[0].mxu0
      %3784 = vmatprep.mubr.bf16.mxu0 0
      %3785 = vmatmul.mubr.bf16.gmra.mrb[0].mxu0 %v3579
      %v3786 = vpop.f32.mrb[0].mxu0
      %v3787 = vadd.f32 0.0, %v3786
      %v3788 = vpop.f32.mrb[0].mxu0
      %v3789 = vpop.f32.mrb[0].mxu0
      %v3790 = vadd.f32 0.0, %v3789
      %v3791 = vpop.f32.mrb[0].mxu0
      %3792 = vmatprep.mubr.bf16.mxu0 0
      %3793 = vmatmul.mubr.bf16.gmra.mrb[0].mxu0 %v3580
      %v3794 = vpop.f32.mrb[0].mxu0
      %v3795 = vadd.f32 0.0, %v3794
      %v3796 = vpop.f32.mrb[0].mxu0
      %v3797 = vpop.f32.mrb[0].mxu0
      %v3798 = vadd.f32 0.0, %v3797
      %v3799 = vpop.f32.mrb[0].mxu0
      %3800 = vmatprep.mubr.bf16.mxu0 0
      %3801 = vmatmul.mubr.bf16.gmra.mrb[0].mxu0 %v3581
      %v3802 = vpop.f32.mrb[0].mxu0
      %v3803 = vadd.f32 0.0, %v3802
      %v3804 = vpop.f32.mrb[0].mxu0
      %v3805 = vpop.f32.mrb[0].mxu0
      %v3806 = vadd.f32 0.0, %v3805
      %v3807 = vpop.f32.mrb[0].mxu0
      %3808 = vmatprep.mubr.bf16.mxu0 0
      %3809 = vmatmul.mubr.bf16.gmra.mrb[0].mxu0 %v3582
      %v3810 = vpop.f32.mrb[0].mxu0
      %v3811 = vadd.f32 0.0, %v3810
      %v3812 = vpop.f32.mrb[0].mxu0
      %v3813 = vpop.f32.mrb[0].mxu0
      %v3814 = vadd.f32 0.0, %v3813
      %v3815 = vpop.f32.mrb[0].mxu0
      %3816 = vmatprep.mubr.bf16.mxu0 0
      %3817 = vmatmul.mubr.bf16.gmra.mrb[0].mxu0 %v3583
      %v3818 = vpop.f32.mrb[0].mxu0
      %v3819 = vadd.f32 0.0, %v3818
      %v3820 = vpop.f32.mrb[0].mxu0
      %v3821 = vpop.f32.mrb[0].mxu0
      %v3822 = vadd.f32 0.0, %v3821
      %v3823 = vpop.f32.mrb[0].mxu0
      %3824 = vmatprep.mubr.bf16.mxu0 0
      %3825 = vmatmul.mubr.bf16.gmra.mrb[0].mxu0 %v3584
      %v3826 = vpop.f32.mrb[0].mxu0
      %v3827 = vadd.f32 0.0, %v3826
      %v3828 = vpop.f32.mrb[0].mxu0
      %v3829 = vpop.f32.mrb[0].mxu0
      %v3830 = vadd.f32 0.0, %v3829
      %v3831 = vpop.f32.mrb[0].mxu0
      %3832 = vmatprep.mubr.bf16.mxu0 0
      %3833 = vmatmul.mubr.bf16.gmra.mrb[0].mxu0 %v3585
      %v3834 = vpop.f32.mrb[0].mxu0
      %v3835 = vadd.f32 0.0, %v3834
      %v3836 = vpop.f32.mrb[0].mxu0
      %v3837 = vpop.f32.mrb[0].mxu0
      %v3838 = vadd.f32 0.0, %v3837
      %v3839 = vpop.f32.mrb[0].mxu0
      %3840 = vmatprep.mubr.bf16.mxu0 0
      %3841 = vmatmul.mubr.bf16.gmra.mrb[0].mxu0 %v3586
      %v3842 = vpop.f32.mrb[0].mxu0
      %v3843 = vadd.f32 0.0, %v3842
      %v3844 = vpop.f32.mrb[0].mxu0
      %v3845 = vpop.f32.mrb[0].mxu0
      %v3846 = vadd.f32 0.0, %v3845
      %v3847 = vpop.f32.mrb[0].mxu0
      %3848 = vmatprep.mubr.bf16.mxu0 0
      %3849 = vmatmul.mubr.bf16.gmra.mrb[0].mxu0 %v3587
      %v3850 = vpop.f32.mrb[0].mxu0
      %v3851 = vadd.f32 0.0, %v3850
      %v3852 = vpop.f32.mrb[0].mxu0
      %v3853 = vpop.f32.mrb[0].mxu0
      %v3854 = vadd.f32 0.0, %v3853
      %v3855 = vpop.f32.mrb[0].mxu0
      %3856 = vmatprep.mubr.bf16.mxu0 0
      %3857 = vmatmul.mubr.bf16.gmra.mrb[0].mxu0 %v3588
      %v3858 = vpop.f32.mrb[0].mxu0
      %v3859 = vadd.f32 0.0, %v3858
      %v3860 = vpop.f32.mrb[0].mxu0
      %v3861 = vpop.f32.mrb[0].mxu0
      %v3862 = vadd.f32 0.0, %v3861
      %v3863 = vpop.f32.mrb[0].mxu0
      %3864 = vmatprep.mubr.bf16.mxu0 0
      %3865 = vmatmul.mubr.bf16.gmra.mrb[0].mxu0 %v3589
      %v3866 = vpop.f32.mrb[0].mxu0
      %v3867 = vadd.f32 0.0, %v3866
      %v3868 = vpop.f32.mrb[0].mxu0
      %v3869 = vpop.f32.mrb[0].mxu0
      %v3870 = vadd.f32 0.0, %v3869
      %v3871 = vpop.f32.mrb[0].mxu0
      %3872 = vmatprep.mubr.bf16.mxu0 0
      %3873 = vmatmul.mubr.bf16.gmra.mrb[0].mxu0 %v3590
      %v3874 = vpop.f32.mrb[0].mxu0
      %v3875 = vadd.f32 0.0, %v3874
      %v3876 = vpop.f32.mrb[0].mxu0
      %v3877 = vpop.f32.mrb[0].mxu0
      %v3878 = vadd.f32 0.0, %v3877
      %v3879 = vpop.f32.mrb[0].mxu0
      %3880 = vdwg.mxu0
      %v3881 = vadd.f32 %v3471, %v3691
      %v3882 = vadd.f32 %v3472, %v3694
      %v3883 = vadd.f32 %v3473, %v3699
      %v3884 = vadd.f32 %v3474, %v3702
      %v3885 = vadd.f32 %v3475, %v3707
      %v3886 = vadd.f32 %v3476, %v3710
      %v3887 = vadd.f32 %v3477, %v3715
      %v3888 = vadd.f32 %v3478, %v3718
      %v3889 = vadd.f32 %v3479, %v3723
      %v3890 = vadd.f32 %v3480, %v3726
      %v3891 = vadd.f32 %v3481, %v3731
      %v3892 = vadd.f32 %v3482, %v3734
      %v3893 = vadd.f32 %v3483, %v3739
      %v3894 = vadd.f32 %v3484, %v3742
      %v3895 = vadd.f32 %v3485, %v3747
      %v3896 = vadd.f32 %v3486, %v3750
      %v3897 = vadd.f32 %v3487, %v3755
      %v3898 = vadd.f32 %v3488, %v3758
      %v3899 = vadd.f32 %v3489, %v3763
      %v3900 = vadd.f32 %v3490, %v3766
      %v3901 = vadd.f32 %v3491, %v3771
      %v3902 = vadd.f32 %v3492, %v3774
      %v3903 = vadd.f32 %v3493, %v3779
      %v3904 = vadd.f32 %v3494, %v3782
      %v3905 = vadd.f32 %v3495, %v3787
      %v3906 = vadd.f32 %v3496, %v3790
      %v3907 = vadd.f32 %v3497, %v3795
      %v3908 = vadd.f32 %v3498, %v3798
      %v3909 = vadd.f32 %v3499, %v3803
      %v3910 = vadd.f32 %v3500, %v3806
      %v3911 = vadd.f32 %v3501, %v3811
      %v3912 = vadd.f32 %v3502, %v3814
      %v3913 = vadd.f32 %v3503, %v3819
      %v3914 = vadd.f32 %v3504, %v3822
      %v3915 = vadd.f32 %v3505, %v3827
      %v3916 = vadd.f32 %v3506, %v3830
      %v3917 = vadd.f32 %v3507, %v3835
      %v3918 = vadd.f32 %v3508, %v3838
      %v3919 = vadd.f32 %v3509, %v3843
      %v3920 = vadd.f32 %v3510, %v3846
      %v3921 = vadd.f32 %v3511, %v3851
      %v3922 = vadd.f32 %v3512, %v3854
      %v3923 = vadd.f32 %v3513, %v3859
      %v3924 = vadd.f32 %v3514, %v3862
      %v3925 = vadd.f32 %v3515, %v3867
      %v3926 = vadd.f32 %v3516, %v3870
      %v3927 = vadd.f32 %v3517, %v3875
      %v3928 = vadd.f32 %v3518, %v3878
      %v3929 = vld [vmem:[%s2] sm:$0x1]
      %v3931 = vlaneseq
      %v3932 = vshrl.u32 %v3931, 7
      %v3933 = vsub.s32 0, %v3932
      %v3934 = vrot.slane %v3929, %v3933
      %v3936 = vadd.f32 %v3881, %v3934
      %v3937 = vadd.f32 %v3882, %v3934
      %v3938 = vadd.f32 %v3883, %v3934
      %v3939 = vadd.f32 %v3884, %v3934
      %v3940 = vadd.f32 %v3885, %v3934
      %v3941 = vadd.f32 %v3886, %v3934
      %v3942 = vadd.f32 %v3887, %v3934
      %v3943 = vadd.f32 %v3888, %v3934
      %v3944 = vadd.f32 %v3889, %v3934
      %v3945 = vadd.f32 %v3890, %v3934
      %v3946 = vadd.f32 %v3891, %v3934
      %v3947 = vadd.f32 %v3892, %v3934
      %v3948 = vadd.f32 %v3893, %v3934
      %v3949 = vadd.f32 %v3894, %v3934
      %v3950 = vadd.f32 %v3895, %v3934
      %v3951 = vadd.f32 %v3896, %v3934
      %v3952 = vadd.f32 %v3897, %v3934
      %v3953 = vadd.f32 %v3898, %v3934
      %v3954 = vadd.f32 %v3899, %v3934
      %v3955 = vadd.f32 %v3900, %v3934
      %v3956 = vadd.f32 %v3901, %v3934
      %v3957 = vadd.f32 %v3902, %v3934
      %v3958 = vadd.f32 %v3903, %v3934
      %v3959 = vadd.f32 %v3904, %v3934
      %v3960 = vadd.f32 %v3905, %v3934
      %v3961 = vadd.f32 %v3906, %v3934
      %v3962 = vadd.f32 %v3907, %v3934
      %v3963 = vadd.f32 %v3908, %v3934
      %v3964 = vadd.f32 %v3909, %v3934
      %v3965 = vadd.f32 %v3910, %v3934
      %v3966 = vadd.f32 %v3911, %v3934
      %v3967 = vadd.f32 %v3912, %v3934
      %v3968 = vadd.f32 %v3913, %v3934
      %v3969 = vadd.f32 %v3914, %v3934
      %v3970 = vadd.f32 %v3915, %v3934
      %v3971 = vadd.f32 %v3916, %v3934
      %v3972 = vadd.f32 %v3917, %v3934
      %v3973 = vadd.f32 %v3918, %v3934
      %v3974 = vadd.f32 %v3919, %v3934
      %v3975 = vadd.f32 %v3920, %v3934
      %v3976 = vadd.f32 %v3921, %v3934
      %v3977 = vadd.f32 %v3922, %v3934
      %v3978 = vadd.f32 %v3923, %v3934
      %v3979 = vadd.f32 %v3924, %v3934
      %v3980 = vadd.f32 %v3925, %v3934
      %v3981 = vadd.f32 %v3926, %v3934
      %v3982 = vadd.f32 %v3927, %v3934
      %v3983 = vadd.f32 %v3928, %v3934
      %v3984 = vmax.f32 %v3936, 0.0
      %v3985 = vmax.f32 %v3937, 0.0
      %v3986 = vmax.f32 %v3938, 0.0
      %v3987 = vmax.f32 %v3939, 0.0
      %v3988 = vmax.f32 %v3940, 0.0
      %v3989 = vmax.f32 %v3941, 0.0
      %v3990 = vmax.f32 %v3942, 0.0
      %v3991 = vmax.f32 %v3943, 0.0
      %v3992 = vmax.f32 %v3944, 0.0
      %v3993 = vmax.f32 %v3945, 0.0
      %v3994 = vmax.f32 %v3946, 0.0
      %v3995 = vmax.f32 %v3947, 0.0
      %v3996 = vmax.f32 %v3948, 0.0
      %v3997 = vmax.f32 %v3949, 0.0
      %v3998 = vmax.f32 %v3950, 0.0
      %v3999 = vmax.f32 %v3951, 0.0
      %v4000 = vmax.f32 %v3952, 0.0
      %v4001 = vmax.f32 %v3953, 0.0
      %v4002 = vmax.f32 %v3954, 0.0
      %v4003 = vmax.f32 %v3955, 0.0
      %v4004 = vmax.f32 %v3956, 0.0
      %v4005 = vmax.f32 %v3957, 0.0
      %v4006 = vmax.f32 %v3958, 0.0
      %v4007 = vmax.f32 %v3959, 0.0
      %v4008 = vmax.f32 %v3960, 0.0
      %v4009 = vmax.f32 %v3961, 0.0
      %v4010 = vmax.f32 %v3962, 0.0
      %v4011 = vmax.f32 %v3963, 0.0
      %v4012 = vmax.f32 %v3964, 0.0
      %v4013 = vmax.f32 %v3965, 0.0
      %v4014 = vmax.f32 %v3966, 0.0
      %v4015 = vmax.f32 %v3967, 0.0
      %v4016 = vmax.f32 %v3968, 0.0
      %v4017 = vmax.f32 %v3969, 0.0
      %v4018 = vmax.f32 %v3970, 0.0
      %v4019 = vmax.f32 %v3971, 0.0
      %v4020 = vmax.f32 %v3972, 0.0
      %v4021 = vmax.f32 %v3973, 0.0
      %v4022 = vmax.f32 %v3974, 0.0
      %v4023 = vmax.f32 %v3975, 0.0
      %v4024 = vmax.f32 %v3976, 0.0
      %v4025 = vmax.f32 %v3977, 0.0
      %v4026 = vmax.f32 %v3978, 0.0
      %v4027 = vmax.f32 %v3979, 0.0
      %v4028 = vmax.f32 %v3980, 0.0
      %v4029 = vmax.f32 %v3981, 0.0
      %v4030 = vmax.f32 %v3982, 0.0
      %v4031 = vmax.f32 %v3983, 0.0
      %v4032 = vlaneseq
      %v4033 = vshrl.u32 %v4032, 7
      %v4034 = vadd.s32 %v4033, 8
      %v4035 = vadd.s32 %v4033, 16
      %v4036 = vadd.s32 %v4033, 24
      %v4037 = vadd.s32 %v4033, 32
      %v4038 = vadd.s32 %v4033, 40
      %v4039 = vadd.s32 %v4033, 48
      %v4040 = vadd.s32 %v4033, 56
      %v4041 = vadd.s32 %v4033, 64
      %v4042 = vadd.s32 %v4033, 72
      %v4043 = vadd.s32 %v4033, 80
      %v4044 = vadd.s32 %v4033, 88
      %v4045 = vadd.s32 %v4033, 96
      %v4046 = vadd.s32 %v4033, 104
      %v4047 = vadd.s32 %v4033, 112
      %v4048 = vadd.s32 %v4033, 120
      %v4049 = vadd.s32 %v4033, 128
      %v4050 = vadd.s32 %v4033, 136
      %v4051 = vadd.s32 %v4033, 144
      %v4052 = vadd.s32 %v4033, 152
      %v4053 = vadd.s32 %v4033, 160
      %v4054 = vadd.s32 %v4033, 168
      %v4055 = vadd.s32 %v4033, 176
      %v4056 = vadd.s32 %v4033, 184
      %v4057 = vadd.s32 %v4033, 192
      %v4058 = vadd.s32 %v4033, 200
      %v4059 = vadd.s32 %v4033, 208
      %v4060 = vadd.s32 %v4033, 216
      %v4061 = vadd.s32 %v4033, 224
      %v4062 = vadd.s32 %v4033, 232
      %v4063 = vadd.s32 %v4033, 240
      %v4064 = vadd.s32 %v4033, 248
      %v4065 = vadd.s32 %v4033, 256
      %v4066 = vadd.s32 %v4033, 264
      %v4067 = vadd.s32 %v4033, 272
      %v4068 = vadd.s32 %v4033, 280
      %v4069 = vadd.s32 %v4033, 288
      %v4070 = vadd.s32 %v4033, 296
      %v4071 = vadd.s32 %v4033, 304
      %v4072 = vadd.s32 %v4033, 312
      %v4073 = vadd.s32 %v4033, 320
      %v4074 = vadd.s32 %v4033, 328
      %v4075 = vadd.s32 %v4033, 336
      %v4076 = vadd.s32 %v4033, 344
      %v4077 = vadd.s32 %v4033, 352
      %v4078 = vadd.s32 %v4033, 360
      %v4079 = vadd.s32 %v4033, 368
      %v4080 = vadd.s32 %v4033, 376
      %vm4081 = vcmp.lt.s32.totalorder %v4033, 0
      %v4082 = vsub.s32 0, %v4033
      %v4083 = vsel %vm4081, %v4082, %v4033
      %v4084 = vmul.u32.u64.compose %v4083, 2863311531
      %v4085 = vextract.low.u32 %v4084
      %v4086 = vextract.high.u32 %v4084
      %v4087 = vshrl.u32 %v4086, 4
      %v4088 = vmul.u32 %v4087, 24
      %v4089 = vsub.s32 %v4083, %v4088
      %v4090 = vsub.s32 0, %v4089
      %v4091 = vsel %vm4081, %v4090, %v4089
      %vm4092 = vcmp.lt.s32.totalorder %v4034, 0
      %v4093 = vsub.s32 0, %v4034
      %v4094 = vsel %vm4092, %v4093, %v4034
      %v4095 = vmul.u32.u64.compose %v4094, 2863311531
      %v4096 = vextract.low.u32 %v4095
      %v4097 = vextract.high.u32 %v4095
      %v4098 = vshrl.u32 %v4097, 4
      %v4099 = vmul.u32 %v4098, 24
      %v4100 = vsub.s32 %v4094, %v4099
      %v4101 = vsub.s32 0, %v4100
      %v4102 = vsel %vm4092, %v4101, %v4100
      %vm4103 = vcmp.lt.s32.totalorder %v4035, 0
      %v4104 = vsub.s32 0, %v4035
      %v4105 = vsel %vm4103, %v4104, %v4035
      %v4106 = vmul.u32.u64.compose %v4105, 2863311531
      %v4107 = vextract.low.u32 %v4106
      %v4108 = vextract.high.u32 %v4106
      %v4109 = vshrl.u32 %v4108, 4
      %v4110 = vmul.u32 %v4109, 24
      %v4111 = vsub.s32 %v4105, %v4110
      %v4112 = vsub.s32 0, %v4111
      %v4113 = vsel %vm4103, %v4112, %v4111
      %vm4114 = vcmp.lt.s32.totalorder %v4036, 0
      %v4115 = vsub.s32 0, %v4036
      %v4116 = vsel %vm4114, %v4115, %v4036
      %v4117 = vmul.u32.u64.compose %v4116, 2863311531
      %v4118 = vextract.low.u32 %v4117
      %v4119 = vextract.high.u32 %v4117
      %v4120 = vshrl.u32 %v4119, 4
      %v4121 = vmul.u32 %v4120, 24
      %v4122 = vsub.s32 %v4116, %v4121
      %v4123 = vsub.s32 0, %v4122
      %v4124 = vsel %vm4114, %v4123, %v4122
      %vm4125 = vcmp.lt.s32.totalorder %v4037, 0
      %v4126 = vsub.s32 0, %v4037
      %v4127 = vsel %vm4125, %v4126, %v4037
      %v4128 = vmul.u32.u64.compose %v4127, 2863311531
      %v4129 = vextract.low.u32 %v4128
      %v4130 = vextract.high.u32 %v4128
      %v4131 = vshrl.u32 %v4130, 4
      %v4132 = vmul.u32 %v4131, 24
      %v4133 = vsub.s32 %v4127, %v4132
      %v4134 = vsub.s32 0, %v4133
      %v4135 = vsel %vm4125, %v4134, %v4133
      %vm4136 = vcmp.lt.s32.totalorder %v4038, 0
      %v4137 = vsub.s32 0, %v4038
      %v4138 = vsel %vm4136, %v4137, %v4038
      %v4139 = vmul.u32.u64.compose %v4138, 2863311531
      %v4140 = vextract.low.u32 %v4139
      %v4141 = vextract.high.u32 %v4139
      %v4142 = vshrl.u32 %v4141, 4
      %v4143 = vmul.u32 %v4142, 24
      %v4144 = vsub.s32 %v4138, %v4143
      %v4145 = vsub.s32 0, %v4144
      %v4146 = vsel %vm4136, %v4145, %v4144
      %vm4147 = vcmp.lt.s32.totalorder %v4039, 0
      %v4148 = vsub.s32 0, %v4039
      %v4149 = vsel %vm4147, %v4148, %v4039
      %v4150 = vmul.u32.u64.compose %v4149, 2863311531
      %v4151 = vextract.low.u32 %v4150
      %v4152 = vextract.high.u32 %v4150
      %v4153 = vshrl.u32 %v4152, 4
      %v4154 = vmul.u32 %v4153, 24
      %v4155 = vsub.s32 %v4149, %v4154
      %v4156 = vsub.s32 0, %v4155
      %v4157 = vsel %vm4147, %v4156, %v4155
      %vm4158 = vcmp.lt.s32.totalorder %v4040, 0
      %v4159 = vsub.s32 0, %v4040
      %v4160 = vsel %vm4158, %v4159, %v4040
      %v4161 = vmul.u32.u64.compose %v4160, 2863311531
      %v4162 = vextract.low.u32 %v4161
      %v4163 = vextract.high.u32 %v4161
      %v4164 = vshrl.u32 %v4163, 4
      %v4165 = vmul.u32 %v4164, 24
      %v4166 = vsub.s32 %v4160, %v4165
      %v4167 = vsub.s32 0, %v4166
      %v4168 = vsel %vm4158, %v4167, %v4166
      %vm4169 = vcmp.lt.s32.totalorder %v4041, 0
      %v4170 = vsub.s32 0, %v4041
      %v4171 = vsel %vm4169, %v4170, %v4041
      %v4172 = vmul.u32.u64.compose %v4171, 2863311531
      %v4173 = vextract.low.u32 %v4172
      %v4174 = vextract.high.u32 %v4172
      %v4175 = vshrl.u32 %v4174, 4
      %v4176 = vmul.u32 %v4175, 24
      %v4177 = vsub.s32 %v4171, %v4176
      %v4178 = vsub.s32 0, %v4177
      %v4179 = vsel %vm4169, %v4178, %v4177
      %vm4180 = vcmp.lt.s32.totalorder %v4042, 0
      %v4181 = vsub.s32 0, %v4042
      %v4182 = vsel %vm4180, %v4181, %v4042
      %v4183 = vmul.u32.u64.compose %v4182, 2863311531
      %v4184 = vextract.low.u32 %v4183
      %v4185 = vextract.high.u32 %v4183
      %v4186 = vshrl.u32 %v4185, 4
      %v4187 = vmul.u32 %v4186, 24
      %v4188 = vsub.s32 %v4182, %v4187
      %v4189 = vsub.s32 0, %v4188
      %v4190 = vsel %vm4180, %v4189, %v4188
      %vm4191 = vcmp.lt.s32.totalorder %v4043, 0
      %v4192 = vsub.s32 0, %v4043
      %v4193 = vsel %vm4191, %v4192, %v4043
      %v4194 = vmul.u32.u64.compose %v4193, 2863311531
      %v4195 = vextract.low.u32 %v4194
      %v4196 = vextract.high.u32 %v4194
      %v4197 = vshrl.u32 %v4196, 4
      %v4198 = vmul.u32 %v4197, 24
      %v4199 = vsub.s32 %v4193, %v4198
      %v4200 = vsub.s32 0, %v4199
      %v4201 = vsel %vm4191, %v4200, %v4199
      %vm4202 = vcmp.lt.s32.totalorder %v4044, 0
      %v4203 = vsub.s32 0, %v4044
      %v4204 = vsel %vm4202, %v4203, %v4044
      %v4205 = vmul.u32.u64.compose %v4204, 2863311531
      %v4206 = vextract.low.u32 %v4205
      %v4207 = vextract.high.u32 %v4205
      %v4208 = vshrl.u32 %v4207, 4
      %v4209 = vmul.u32 %v4208, 24
      %v4210 = vsub.s32 %v4204, %v4209
      %v4211 = vsub.s32 0, %v4210
      %v4212 = vsel %vm4202, %v4211, %v4210
      %vm4213 = vcmp.lt.s32.totalorder %v4045, 0
      %v4214 = vsub.s32 0, %v4045
      %v4215 = vsel %vm4213, %v4214, %v4045
      %v4216 = vmul.u32.u64.compose %v4215, 2863311531
      %v4217 = vextract.low.u32 %v4216
      %v4218 = vextract.high.u32 %v4216
      %v4219 = vshrl.u32 %v4218, 4
      %v4220 = vmul.u32 %v4219, 24
      %v4221 = vsub.s32 %v4215, %v4220
      %v4222 = vsub.s32 0, %v4221
      %v4223 = vsel %vm4213, %v4222, %v4221
      %vm4224 = vcmp.lt.s32.totalorder %v4046, 0
      %v4225 = vsub.s32 0, %v4046
      %v4226 = vsel %vm4224, %v4225, %v4046
      %v4227 = vmul.u32.u64.compose %v4226, 2863311531
      %v4228 = vextract.low.u32 %v4227
      %v4229 = vextract.high.u32 %v4227
      %v4230 = vshrl.u32 %v4229, 4
      %v4231 = vmul.u32 %v4230, 24
      %v4232 = vsub.s32 %v4226, %v4231
      %v4233 = vsub.s32 0, %v4232
      %v4234 = vsel %vm4224, %v4233, %v4232
      %vm4235 = vcmp.lt.s32.totalorder %v4047, 0
      %v4236 = vsub.s32 0, %v4047
      %v4237 = vsel %vm4235, %v4236, %v4047
      %v4238 = vmul.u32.u64.compose %v4237, 2863311531
      %v4239 = vextract.low.u32 %v4238
      %v4240 = vextract.high.u32 %v4238
      %v4241 = vshrl.u32 %v4240, 4
      %v4242 = vmul.u32 %v4241, 24
      %v4243 = vsub.s32 %v4237, %v4242
      %v4244 = vsub.s32 0, %v4243
      %v4245 = vsel %vm4235, %v4244, %v4243
      %vm4246 = vcmp.lt.s32.totalorder %v4048, 0
      %v4247 = vsub.s32 0, %v4048
      %v4248 = vsel %vm4246, %v4247, %v4048
      %v4249 = vmul.u32.u64.compose %v4248, 2863311531
      %v4250 = vextract.low.u32 %v4249
      %v4251 = vextract.high.u32 %v4249
      %v4252 = vshrl.u32 %v4251, 4
      %v4253 = vmul.u32 %v4252, 24
      %v4254 = vsub.s32 %v4248, %v4253
      %v4255 = vsub.s32 0, %v4254
      %v4256 = vsel %vm4246, %v4255, %v4254
      %vm4257 = vcmp.lt.s32.totalorder %v4049, 0
      %v4258 = vsub.s32 0, %v4049
      %v4259 = vsel %vm4257, %v4258, %v4049
      %v4260 = vmul.u32.u64.compose %v4259, 2863311531
      %v4261 = vextract.low.u32 %v4260
      %v4262 = vextract.high.u32 %v4260
      %v4263 = vshrl.u32 %v4262, 4
      %v4264 = vmul.u32 %v4263, 24
      %v4265 = vsub.s32 %v4259, %v4264
      %v4266 = vsub.s32 0, %v4265
      %v4267 = vsel %vm4257, %v4266, %v4265
      %vm4268 = vcmp.lt.s32.totalorder %v4050, 0
      %v4269 = vsub.s32 0, %v4050
      %v4270 = vsel %vm4268, %v4269, %v4050
      %v4271 = vmul.u32.u64.compose %v4270, 2863311531
      %v4272 = vextract.low.u32 %v4271
      %v4273 = vextract.high.u32 %v4271
      %v4274 = vshrl.u32 %v4273, 4
      %v4275 = vmul.u32 %v4274, 24
      %v4276 = vsub.s32 %v4270, %v4275
      %v4277 = vsub.s32 0, %v4276
      %v4278 = vsel %vm4268, %v4277, %v4276
      %vm4279 = vcmp.lt.s32.totalorder %v4051, 0
      %v4280 = vsub.s32 0, %v4051
      %v4281 = vsel %vm4279, %v4280, %v4051
      %v4282 = vmul.u32.u64.compose %v4281, 2863311531
      %v4283 = vextract.low.u32 %v4282
      %v4284 = vextract.high.u32 %v4282
      %v4285 = vshrl.u32 %v4284, 4
      %v4286 = vmul.u32 %v4285, 24
      %v4287 = vsub.s32 %v4281, %v4286
      %v4288 = vsub.s32 0, %v4287
      %v4289 = vsel %vm4279, %v4288, %v4287
      %vm4290 = vcmp.lt.s32.totalorder %v4052, 0
      %v4291 = vsub.s32 0, %v4052
      %v4292 = vsel %vm4290, %v4291, %v4052
      %v4293 = vmul.u32.u64.compose %v4292, 2863311531
      %v4294 = vextract.low.u32 %v4293
      %v4295 = vextract.high.u32 %v4293
      %v4296 = vshrl.u32 %v4295, 4
      %v4297 = vmul.u32 %v4296, 24
      %v4298 = vsub.s32 %v4292, %v4297
      %v4299 = vsub.s32 0, %v4298
      %v4300 = vsel %vm4290, %v4299, %v4298
      %vm4301 = vcmp.lt.s32.totalorder %v4053, 0
      %v4302 = vsub.s32 0, %v4053
      %v4303 = vsel %vm4301, %v4302, %v4053
      %v4304 = vmul.u32.u64.compose %v4303, 2863311531
      %v4305 = vextract.low.u32 %v4304
      %v4306 = vextract.high.u32 %v4304
      %v4307 = vshrl.u32 %v4306, 4
      %v4308 = vmul.u32 %v4307, 24
      %v4309 = vsub.s32 %v4303, %v4308
      %v4310 = vsub.s32 0, %v4309
      %v4311 = vsel %vm4301, %v4310, %v4309
      %vm4312 = vcmp.lt.s32.totalorder %v4054, 0
      %v4313 = vsub.s32 0, %v4054
      %v4314 = vsel %vm4312, %v4313, %v4054
      %v4315 = vmul.u32.u64.compose %v4314, 2863311531
      %v4316 = vextract.low.u32 %v4315
      %v4317 = vextract.high.u32 %v4315
      %v4318 = vshrl.u32 %v4317, 4
      %v4319 = vmul.u32 %v4318, 24
      %v4320 = vsub.s32 %v4314, %v4319
      %v4321 = vsub.s32 0, %v4320
      %v4322 = vsel %vm4312, %v4321, %v4320
      %vm4323 = vcmp.lt.s32.totalorder %v4055, 0
      %v4324 = vsub.s32 0, %v4055
      %v4325 = vsel %vm4323, %v4324, %v4055
      %v4326 = vmul.u32.u64.compose %v4325, 2863311531
      %v4327 = vextract.low.u32 %v4326
      %v4328 = vextract.high.u32 %v4326
      %v4329 = vshrl.u32 %v4328, 4
      %v4330 = vmul.u32 %v4329, 24
      %v4331 = vsub.s32 %v4325, %v4330
      %v4332 = vsub.s32 0, %v4331
      %v4333 = vsel %vm4323, %v4332, %v4331
      %vm4334 = vcmp.lt.s32.totalorder %v4056, 0
      %v4335 = vsub.s32 0, %v4056
      %v4336 = vsel %vm4334, %v4335, %v4056
      %v4337 = vmul.u32.u64.compose %v4336, 2863311531
      %v4338 = vextract.low.u32 %v4337
      %v4339 = vextract.high.u32 %v4337
      %v4340 = vshrl.u32 %v4339, 4
      %v4341 = vmul.u32 %v4340, 24
      %v4342 = vsub.s32 %v4336, %v4341
      %v4343 = vsub.s32 0, %v4342
      %v4344 = vsel %vm4334, %v4343, %v4342
      %vm4345 = vcmp.lt.s32.totalorder %v4057, 0
      %v4346 = vsub.s32 0, %v4057
      %v4347 = vsel %vm4345, %v4346, %v4057
      %v4348 = vmul.u32.u64.compose %v4347, 2863311531
      %v4349 = vextract.low.u32 %v4348
      %v4350 = vextract.high.u32 %v4348
      %v4351 = vshrl.u32 %v4350, 4
      %v4352 = vmul.u32 %v4351, 24
      %v4353 = vsub.s32 %v4347, %v4352
      %v4354 = vsub.s32 0, %v4353
      %v4355 = vsel %vm4345, %v4354, %v4353
      %vm4356 = vcmp.lt.s32.totalorder %v4058, 0
      %v4357 = vsub.s32 0, %v4058
      %v4358 = vsel %vm4356, %v4357, %v4058
      %v4359 = vmul.u32.u64.compose %v4358, 2863311531
      %v4360 = vextract.low.u32 %v4359
      %v4361 = vextract.high.u32 %v4359
      %v4362 = vshrl.u32 %v4361, 4
      %v4363 = vmul.u32 %v4362, 24
      %v4364 = vsub.s32 %v4358, %v4363
      %v4365 = vsub.s32 0, %v4364
      %v4366 = vsel %vm4356, %v4365, %v4364
      %vm4367 = vcmp.lt.s32.totalorder %v4059, 0
      %v4368 = vsub.s32 0, %v4059
      %v4369 = vsel %vm4367, %v4368, %v4059
      %v4370 = vmul.u32.u64.compose %v4369, 2863311531
      %v4371 = vextract.low.u32 %v4370
      %v4372 = vextract.high.u32 %v4370
      %v4373 = vshrl.u32 %v4372, 4
      %v4374 = vmul.u32 %v4373, 24
      %v4375 = vsub.s32 %v4369, %v4374
      %v4376 = vsub.s32 0, %v4375
      %v4377 = vsel %vm4367, %v4376, %v4375
      %vm4378 = vcmp.lt.s32.totalorder %v4060, 0
      %v4379 = vsub.s32 0, %v4060
      %v4380 = vsel %vm4378, %v4379, %v4060
      %v4381 = vmul.u32.u64.compose %v4380, 2863311531
      %v4382 = vextract.low.u32 %v4381
      %v4383 = vextract.high.u32 %v4381
      %v4384 = vshrl.u32 %v4383, 4
      %v4385 = vmul.u32 %v4384, 24
      %v4386 = vsub.s32 %v4380, %v4385
      %v4387 = vsub.s32 0, %v4386
      %v4388 = vsel %vm4378, %v4387, %v4386
      %vm4389 = vcmp.lt.s32.totalorder %v4061, 0
      %v4390 = vsub.s32 0, %v4061
      %v4391 = vsel %vm4389, %v4390, %v4061
      %v4392 = vmul.u32.u64.compose %v4391, 2863311531
      %v4393 = vextract.low.u32 %v4392
      %v4394 = vextract.high.u32 %v4392
      %v4395 = vshrl.u32 %v4394, 4
      %v4396 = vmul.u32 %v4395, 24
      %v4397 = vsub.s32 %v4391, %v4396
      %v4398 = vsub.s32 0, %v4397
      %v4399 = vsel %vm4389, %v4398, %v4397
      %vm4400 = vcmp.lt.s32.totalorder %v4062, 0
      %v4401 = vsub.s32 0, %v4062
      %v4402 = vsel %vm4400, %v4401, %v4062
      %v4403 = vmul.u32.u64.compose %v4402, 2863311531
      %v4404 = vextract.low.u32 %v4403
      %v4405 = vextract.high.u32 %v4403
      %v4406 = vshrl.u32 %v4405, 4
      %v4407 = vmul.u32 %v4406, 24
      %v4408 = vsub.s32 %v4402, %v4407
      %v4409 = vsub.s32 0, %v4408
      %v4410 = vsel %vm4400, %v4409, %v4408
      %vm4411 = vcmp.lt.s32.totalorder %v4063, 0
      %v4412 = vsub.s32 0, %v4063
      %v4413 = vsel %vm4411, %v4412, %v4063
      %v4414 = vmul.u32.u64.compose %v4413, 2863311531
      %v4415 = vextract.low.u32 %v4414
      %v4416 = vextract.high.u32 %v4414
      %v4417 = vshrl.u32 %v4416, 4
      %v4418 = vmul.u32 %v4417, 24
      %v4419 = vsub.s32 %v4413, %v4418
      %v4420 = vsub.s32 0, %v4419
      %v4421 = vsel %vm4411, %v4420, %v4419
      %vm4422 = vcmp.lt.s32.totalorder %v4064, 0
      %v4423 = vsub.s32 0, %v4064
      %v4424 = vsel %vm4422, %v4423, %v4064
      %v4425 = vmul.u32.u64.compose %v4424, 2863311531
      %v4426 = vextract.low.u32 %v4425
      %v4427 = vextract.high.u32 %v4425
      %v4428 = vshrl.u32 %v4427, 4
      %v4429 = vmul.u32 %v4428, 24
      %v4430 = vsub.s32 %v4424, %v4429
      %v4431 = vsub.s32 0, %v4430
      %v4432 = vsel %vm4422, %v4431, %v4430
      %vm4433 = vcmp.lt.s32.totalorder %v4065, 0
      %v4434 = vsub.s32 0, %v4065
      %v4435 = vsel %vm4433, %v4434, %v4065
      %v4436 = vmul.u32.u64.compose %v4435, 2863311531
      %v4437 = vextract.low.u32 %v4436
      %v4438 = vextract.high.u32 %v4436
      %v4439 = vshrl.u32 %v4438, 4
      %v4440 = vmul.u32 %v4439, 24
      %v4441 = vsub.s32 %v4435, %v4440
      %v4442 = vsub.s32 0, %v4441
      %v4443 = vsel %vm4433, %v4442, %v4441
      %vm4444 = vcmp.lt.s32.totalorder %v4066, 0
      %v4445 = vsub.s32 0, %v4066
      %v4446 = vsel %vm4444, %v4445, %v4066
      %v4447 = vmul.u32.u64.compose %v4446, 2863311531
      %v4448 = vextract.low.u32 %v4447
      %v4449 = vextract.high.u32 %v4447
      %v4450 = vshrl.u32 %v4449, 4
      %v4451 = vmul.u32 %v4450, 24
      %v4452 = vsub.s32 %v4446, %v4451
      %v4453 = vsub.s32 0, %v4452
      %v4454 = vsel %vm4444, %v4453, %v4452
      %vm4455 = vcmp.lt.s32.totalorder %v4067, 0
      %v4456 = vsub.s32 0, %v4067
      %v4457 = vsel %vm4455, %v4456, %v4067
      %v4458 = vmul.u32.u64.compose %v4457, 2863311531
      %v4459 = vextract.low.u32 %v4458
      %v4460 = vextract.high.u32 %v4458
      %v4461 = vshrl.u32 %v4460, 4
      %v4462 = vmul.u32 %v4461, 24
      %v4463 = vsub.s32 %v4457, %v4462
      %v4464 = vsub.s32 0, %v4463
      %v4465 = vsel %vm4455, %v4464, %v4463
      %vm4466 = vcmp.lt.s32.totalorder %v4068, 0
      %v4467 = vsub.s32 0, %v4068
      %v4468 = vsel %vm4466, %v4467, %v4068
      %v4469 = vmul.u32.u64.compose %v4468, 2863311531
      %v4470 = vextract.low.u32 %v4469
      %v4471 = vextract.high.u32 %v4469
      %v4472 = vshrl.u32 %v4471, 4
      %v4473 = vmul.u32 %v4472, 24
      %v4474 = vsub.s32 %v4468, %v4473
      %v4475 = vsub.s32 0, %v4474
      %v4476 = vsel %vm4466, %v4475, %v4474
      %vm4477 = vcmp.lt.s32.totalorder %v4069, 0
      %v4478 = vsub.s32 0, %v4069
      %v4479 = vsel %vm4477, %v4478, %v4069
      %v4480 = vmul.u32.u64.compose %v4479, 2863311531
      %v4481 = vextract.low.u32 %v4480
      %v4482 = vextract.high.u32 %v4480
      %v4483 = vshrl.u32 %v4482, 4
      %v4484 = vmul.u32 %v4483, 24
      %v4485 = vsub.s32 %v4479, %v4484
      %v4486 = vsub.s32 0, %v4485
      %v4487 = vsel %vm4477, %v4486, %v4485
      %vm4488 = vcmp.lt.s32.totalorder %v4070, 0
      %v4489 = vsub.s32 0, %v4070
      %v4490 = vsel %vm4488, %v4489, %v4070
      %v4491 = vmul.u32.u64.compose %v4490, 2863311531
      %v4492 = vextract.low.u32 %v4491
      %v4493 = vextract.high.u32 %v4491
      %v4494 = vshrl.u32 %v4493, 4
      %v4495 = vmul.u32 %v4494, 24
      %v4496 = vsub.s32 %v4490, %v4495
      %v4497 = vsub.s32 0, %v4496
      %v4498 = vsel %vm4488, %v4497, %v4496
      %vm4499 = vcmp.lt.s32.totalorder %v4071, 0
      %v4500 = vsub.s32 0, %v4071
      %v4501 = vsel %vm4499, %v4500, %v4071
      %v4502 = vmul.u32.u64.compose %v4501, 2863311531
      %v4503 = vextract.low.u32 %v4502
      %v4504 = vextract.high.u32 %v4502
      %v4505 = vshrl.u32 %v4504, 4
      %v4506 = vmul.u32 %v4505, 24
      %v4507 = vsub.s32 %v4501, %v4506
      %v4508 = vsub.s32 0, %v4507
      %v4509 = vsel %vm4499, %v4508, %v4507
      %vm4510 = vcmp.lt.s32.totalorder %v4072, 0
      %v4511 = vsub.s32 0, %v4072
      %v4512 = vsel %vm4510, %v4511, %v4072
      %v4513 = vmul.u32.u64.compose %v4512, 2863311531
      %v4514 = vextract.low.u32 %v4513
      %v4515 = vextract.high.u32 %v4513
      %v4516 = vshrl.u32 %v4515, 4
      %v4517 = vmul.u32 %v4516, 24
      %v4518 = vsub.s32 %v4512, %v4517
      %v4519 = vsub.s32 0, %v4518
      %v4520 = vsel %vm4510, %v4519, %v4518
      %vm4521 = vcmp.lt.s32.totalorder %v4073, 0
      %v4522 = vsub.s32 0, %v4073
      %v4523 = vsel %vm4521, %v4522, %v4073
      %v4524 = vmul.u32.u64.compose %v4523, 2863311531
      %v4525 = vextract.low.u32 %v4524
      %v4526 = vextract.high.u32 %v4524
      %v4527 = vshrl.u32 %v4526, 4
      %v4528 = vmul.u32 %v4527, 24
      %v4529 = vsub.s32 %v4523, %v4528
      %v4530 = vsub.s32 0, %v4529
      %v4531 = vsel %vm4521, %v4530, %v4529
      %vm4532 = vcmp.lt.s32.totalorder %v4074, 0
      %v4533 = vsub.s32 0, %v4074
      %v4534 = vsel %vm4532, %v4533, %v4074
      %v4535 = vmul.u32.u64.compose %v4534, 2863311531
      %v4536 = vextract.low.u32 %v4535
      %v4537 = vextract.high.u32 %v4535
      %v4538 = vshrl.u32 %v4537, 4
      %v4539 = vmul.u32 %v4538, 24
      %v4540 = vsub.s32 %v4534, %v4539
      %v4541 = vsub.s32 0, %v4540
      %v4542 = vsel %vm4532, %v4541, %v4540
      %vm4543 = vcmp.lt.s32.totalorder %v4075, 0
      %v4544 = vsub.s32 0, %v4075
      %v4545 = vsel %vm4543, %v4544, %v4075
      %v4546 = vmul.u32.u64.compose %v4545, 2863311531
      %v4547 = vextract.low.u32 %v4546
      %v4548 = vextract.high.u32 %v4546
      %v4549 = vshrl.u32 %v4548, 4
      %v4550 = vmul.u32 %v4549, 24
      %v4551 = vsub.s32 %v4545, %v4550
      %v4552 = vsub.s32 0, %v4551
      %v4553 = vsel %vm4543, %v4552, %v4551
      %vm4554 = vcmp.lt.s32.totalorder %v4076, 0
      %v4555 = vsub.s32 0, %v4076
      %v4556 = vsel %vm4554, %v4555, %v4076
      %v4557 = vmul.u32.u64.compose %v4556, 2863311531
      %v4558 = vextract.low.u32 %v4557
      %v4559 = vextract.high.u32 %v4557
      %v4560 = vshrl.u32 %v4559, 4
      %v4561 = vmul.u32 %v4560, 24
      %v4562 = vsub.s32 %v4556, %v4561
      %v4563 = vsub.s32 0, %v4562
      %v4564 = vsel %vm4554, %v4563, %v4562
      %vm4565 = vcmp.lt.s32.totalorder %v4077, 0
      %v4566 = vsub.s32 0, %v4077
      %v4567 = vsel %vm4565, %v4566, %v4077
      %v4568 = vmul.u32.u64.compose %v4567, 2863311531
      %v4569 = vextract.low.u32 %v4568
      %v4570 = vextract.high.u32 %v4568
      %v4571 = vshrl.u32 %v4570, 4
      %v4572 = vmul.u32 %v4571, 24
      %v4573 = vsub.s32 %v4567, %v4572
      %v4574 = vsub.s32 0, %v4573
      %v4575 = vsel %vm4565, %v4574, %v4573
      %vm4576 = vcmp.lt.s32.totalorder %v4078, 0
      %v4577 = vsub.s32 0, %v4078
      %v4578 = vsel %vm4576, %v4577, %v4078
      %v4579 = vmul.u32.u64.compose %v4578, 2863311531
      %v4580 = vextract.low.u32 %v4579
      %v4581 = vextract.high.u32 %v4579
      %v4582 = vshrl.u32 %v4581, 4
      %v4583 = vmul.u32 %v4582, 24
      %v4584 = vsub.s32 %v4578, %v4583
      %v4585 = vsub.s32 0, %v4584
      %v4586 = vsel %vm4576, %v4585, %v4584
      %vm4587 = vcmp.lt.s32.totalorder %v4079, 0
      %v4588 = vsub.s32 0, %v4079
      %v4589 = vsel %vm4587, %v4588, %v4079
      %v4590 = vmul.u32.u64.compose %v4589, 2863311531
      %v4591 = vextract.low.u32 %v4590
      %v4592 = vextract.high.u32 %v4590
      %v4593 = vshrl.u32 %v4592, 4
      %v4594 = vmul.u32 %v4593, 24
      %v4595 = vsub.s32 %v4589, %v4594
      %v4596 = vsub.s32 0, %v4595
      %v4597 = vsel %vm4587, %v4596, %v4595
      %vm4598 = vcmp.lt.s32.totalorder %v4080, 0
      %v4599 = vsub.s32 0, %v4080
      %v4600 = vsel %vm4598, %v4599, %v4080
      %v4601 = vmul.u32.u64.compose %v4600, 2863311531
      %v4602 = vextract.low.u32 %v4601
      %v4603 = vextract.high.u32 %v4601
      %v4604 = vshrl.u32 %v4603, 4
      %v4605 = vmul.u32 %v4604, 24
      %v4606 = vsub.s32 %v4600, %v4605
      %v4607 = vsub.s32 0, %v4606
      %v4608 = vsel %vm4598, %v4607, %v4606
      %vm4609 = vcmp.ne.s32.totalorder %v4091, 0
      %vm4610 = vcmp.ne.s32.totalorder %v4102, 0
      %vm4611 = vcmp.ne.s32.totalorder %v4113, 0
      %vm4612 = vcmp.ne.s32.totalorder %v4124, 0
      %vm4613 = vcmp.ne.s32.totalorder %v4135, 0
      %vm4614 = vcmp.ne.s32.totalorder %v4146, 0
      %vm4615 = vcmp.ne.s32.totalorder %v4157, 0
      %vm4616 = vcmp.ne.s32.totalorder %v4168, 0
      %vm4617 = vcmp.ne.s32.totalorder %v4179, 0
      %vm4618 = vcmp.ne.s32.totalorder %v4190, 0
      %vm4619 = vcmp.ne.s32.totalorder %v4201, 0
      %vm4620 = vcmp.ne.s32.totalorder %v4212, 0
      %vm4621 = vcmp.ne.s32.totalorder %v4223, 0
      %vm4622 = vcmp.ne.s32.totalorder %v4234, 0
      %vm4623 = vcmp.ne.s32.totalorder %v4245, 0
      %vm4624 = vcmp.ne.s32.totalorder %v4256, 0
      %vm4625 = vcmp.ne.s32.totalorder %v4267, 0
      %vm4626 = vcmp.ne.s32.totalorder %v4278, 0
      %vm4627 = vcmp.ne.s32.totalorder %v4289, 0
      %vm4628 = vcmp.ne.s32.totalorder %v4300, 0
      %vm4629 = vcmp.ne.s32.totalorder %v4311, 0
      %vm4630 = vcmp.ne.s32.totalorder %v4322, 0
      %vm4631 = vcmp.ne.s32.totalorder %v4333, 0
      %vm4632 = vcmp.ne.s32.totalorder %v4344, 0
      %vm4633 = vcmp.ne.s32.totalorder %v4355, 0
      %vm4634 = vcmp.ne.s32.totalorder %v4366, 0
      %vm4635 = vcmp.ne.s32.totalorder %v4377, 0
      %vm4636 = vcmp.ne.s32.totalorder %v4388, 0
      %vm4637 = vcmp.ne.s32.totalorder %v4399, 0
      %vm4638 = vcmp.ne.s32.totalorder %v4410, 0
      %vm4639 = vcmp.ne.s32.totalorder %v4421, 0
      %vm4640 = vcmp.ne.s32.totalorder %v4432, 0
      %vm4641 = vcmp.ne.s32.totalorder %v4443, 0
      %vm4642 = vcmp.ne.s32.totalorder %v4454, 0
      %vm4643 = vcmp.ne.s32.totalorder %v4465, 0
      %vm4644 = vcmp.ne.s32.totalorder %v4476, 0
      %vm4645 = vcmp.ne.s32.totalorder %v4487, 0
      %vm4646 = vcmp.ne.s32.totalorder %v4498, 0
      %vm4647 = vcmp.ne.s32.totalorder %v4509, 0
      %vm4648 = vcmp.ne.s32.totalorder %v4520, 0
      %vm4649 = vcmp.ne.s32.totalorder %v4531, 0
      %vm4650 = vcmp.ne.s32.totalorder %v4542, 0
      %vm4651 = vcmp.ne.s32.totalorder %v4553, 0
      %vm4652 = vcmp.ne.s32.totalorder %v4564, 0
      %vm4653 = vcmp.ne.s32.totalorder %v4575, 0
      %vm4654 = vcmp.ne.s32.totalorder %v4586, 0
      %vm4655 = vcmp.ne.s32.totalorder %v4597, 0
      %vm4656 = vcmp.ne.s32.totalorder %v4608, 0
      %vm4657 = vcmp.lt.s32.totalorder %v4091, 0
      %vm4658 = vcmp.lt.s32.totalorder %v4102, 0
      %vm4659 = vcmp.lt.s32.totalorder %v4113, 0
      %vm4660 = vcmp.lt.s32.totalorder %v4124, 0
      %vm4661 = vcmp.lt.s32.totalorder %v4135, 0
      %vm4662 = vcmp.lt.s32.totalorder %v4146, 0
      %vm4663 = vcmp.lt.s32.totalorder %v4157, 0
      %vm4664 = vcmp.lt.s32.totalorder %v4168, 0
      %vm4665 = vcmp.lt.s32.totalorder %v4179, 0
      %vm4666 = vcmp.lt.s32.totalorder %v4190, 0
      %vm4667 = vcmp.lt.s32.totalorder %v4201, 0
      %vm4668 = vcmp.lt.s32.totalorder %v4212, 0
      %vm4669 = vcmp.lt.s32.totalorder %v4223, 0
      %vm4670 = vcmp.lt.s32.totalorder %v4234, 0
      %vm4671 = vcmp.lt.s32.totalorder %v4245, 0
      %vm4672 = vcmp.lt.s32.totalorder %v4256, 0
      %vm4673 = vcmp.lt.s32.totalorder %v4267, 0
      %vm4674 = vcmp.lt.s32.totalorder %v4278, 0
      %vm4675 = vcmp.lt.s32.totalorder %v4289, 0
      %vm4676 = vcmp.lt.s32.totalorder %v4300, 0
      %vm4677 = vcmp.lt.s32.totalorder %v4311, 0
      %vm4678 = vcmp.lt.s32.totalorder %v4322, 0
      %vm4679 = vcmp.lt.s32.totalorder %v4333, 0
      %vm4680 = vcmp.lt.s32.totalorder %v4344, 0
      %vm4681 = vcmp.lt.s32.totalorder %v4355, 0
      %vm4682 = vcmp.lt.s32.totalorder %v4366, 0
      %vm4683 = vcmp.lt.s32.totalorder %v4377, 0
      %vm4684 = vcmp.lt.s32.totalorder %v4388, 0
      %vm4685 = vcmp.lt.s32.totalorder %v4399, 0
      %vm4686 = vcmp.lt.s32.totalorder %v4410, 0
      %vm4687 = vcmp.lt.s32.totalorder %v4421, 0
      %vm4688 = vcmp.lt.s32.totalorder %v4432, 0
      %vm4689 = vcmp.lt.s32.totalorder %v4443, 0
      %vm4690 = vcmp.lt.s32.totalorder %v4454, 0
      %vm4691 = vcmp.lt.s32.totalorder %v4465, 0
      %vm4692 = vcmp.lt.s32.totalorder %v4476, 0
      %vm4693 = vcmp.lt.s32.totalorder %v4487, 0
      %vm4694 = vcmp.lt.s32.totalorder %v4498, 0
      %vm4695 = vcmp.lt.s32.totalorder %v4509, 0
      %vm4696 = vcmp.lt.s32.totalorder %v4520, 0
      %vm4697 = vcmp.lt.s32.totalorder %v4531, 0
      %vm4698 = vcmp.lt.s32.totalorder %v4542, 0
      %vm4699 = vcmp.lt.s32.totalorder %v4553, 0
      %vm4700 = vcmp.lt.s32.totalorder %v4564, 0
      %vm4701 = vcmp.lt.s32.totalorder %v4575, 0
      %vm4702 = vcmp.lt.s32.totalorder %v4586, 0
      %vm4703 = vcmp.lt.s32.totalorder %v4597, 0
      %vm4704 = vcmp.lt.s32.totalorder %v4608, 0
      %vm4705 = vmand %vm4657, %vm4609
      %vm4706 = vmand %vm4658, %vm4610
      %vm4707 = vmand %vm4659, %vm4611
      %vm4708 = vmand %vm4660, %vm4612
      %vm4709 = vmand %vm4661, %vm4613
      %vm4710 = vmand %vm4662, %vm4614
      %vm4711 = vmand %vm4663, %vm4615
      %vm4712 = vmand %vm4664, %vm4616
      %vm4713 = vmand %vm4665, %vm4617
      %vm4714 = vmand %vm4666, %vm4618
      %vm4715 = vmand %vm4667, %vm4619
      %vm4716 = vmand %vm4668, %vm4620
      %vm4717 = vmand %vm4669, %vm4621
      %vm4718 = vmand %vm4670, %vm4622
      %vm4719 = vmand %vm4671, %vm4623
      %vm4720 = vmand %vm4672, %vm4624
      %vm4721 = vmand %vm4673, %vm4625
      %vm4722 = vmand %vm4674, %vm4626
      %vm4723 = vmand %vm4675, %vm4627
      %vm4724 = vmand %vm4676, %vm4628
      %vm4725 = vmand %vm4677, %vm4629
      %vm4726 = vmand %vm4678, %vm4630
      %vm4727 = vmand %vm4679, %vm4631
      %vm4728 = vmand %vm4680, %vm4632
      %vm4729 = vmand %vm4681, %vm4633
      %vm4730 = vmand %vm4682, %vm4634
      %vm4731 = vmand %vm4683, %vm4635
      %vm4732 = vmand %vm4684, %vm4636
      %vm4733 = vmand %vm4685, %vm4637
      %vm4734 = vmand %vm4686, %vm4638
      %vm4735 = vmand %vm4687, %vm4639
      %vm4736 = vmand %vm4688, %vm4640
      %vm4737 = vmand %vm4689, %vm4641
      %vm4738 = vmand %vm4690, %vm4642
      %vm4739 = vmand %vm4691, %vm4643
      %vm4740 = vmand %vm4692, %vm4644
      %vm4741 = vmand %vm4693, %vm4645
      %vm4742 = vmand %vm4694, %vm4646
      %vm4743 = vmand %vm4695, %vm4647
      %vm4744 = vmand %vm4696, %vm4648
      %vm4745 = vmand %vm4697, %vm4649
      %vm4746 = vmand %vm4698, %vm4650
      %vm4747 = vmand %vm4699, %vm4651
      %vm4748 = vmand %vm4700, %vm4652
      %vm4749 = vmand %vm4701, %vm4653
      %vm4750 = vmand %vm4702, %vm4654
      %vm4751 = vmand %vm4703, %vm4655
      %vm4752 = vmand %vm4704, %vm4656
      %v4753 = vadd.s32 %v4091, 24
      %v4754 = vadd.s32 %v4102, 24
      %v4755 = vadd.s32 %v4113, 24
      %v4756 = vadd.s32 %v4124, 24
      %v4757 = vadd.s32 %v4135, 24
      %v4758 = vadd.s32 %v4146, 24
      %v4759 = vadd.s32 %v4157, 24
      %v4760 = vadd.s32 %v4168, 24
      %v4761 = vadd.s32 %v4179, 24
      %v4762 = vadd.s32 %v4190, 24
      %v4763 = vadd.s32 %v4201, 24
      %v4764 = vadd.s32 %v4212, 24
      %v4765 = vadd.s32 %v4223, 24
      %v4766 = vadd.s32 %v4234, 24
      %v4767 = vadd.s32 %v4245, 24
      %v4768 = vadd.s32 %v4256, 24
      %v4769 = vadd.s32 %v4267, 24
      %v4770 = vadd.s32 %v4278, 24
      %v4771 = vadd.s32 %v4289, 24
      %v4772 = vadd.s32 %v4300, 24
      %v4773 = vadd.s32 %v4311, 24
      %v4774 = vadd.s32 %v4322, 24
      %v4775 = vadd.s32 %v4333, 24
      %v4776 = vadd.s32 %v4344, 24
      %v4777 = vadd.s32 %v4355, 24
      %v4778 = vadd.s32 %v4366, 24
      %v4779 = vadd.s32 %v4377, 24
      %v4780 = vadd.s32 %v4388, 24
      %v4781 = vadd.s32 %v4399, 24
      %v4782 = vadd.s32 %v4410, 24
      %v4783 = vadd.s32 %v4421, 24
      %v4784 = vadd.s32 %v4432, 24
      %v4785 = vadd.s32 %v4443, 24
      %v4786 = vadd.s32 %v4454, 24
      %v4787 = vadd.s32 %v4465, 24
      %v4788 = vadd.s32 %v4476, 24
      %v4789 = vadd.s32 %v4487, 24
      %v4790 = vadd.s32 %v4498, 24
      %v4791 = vadd.s32 %v4509, 24
      %v4792 = vadd.s32 %v4520, 24
      %v4793 = vadd.s32 %v4531, 24
      %v4794 = vadd.s32 %v4542, 24
      %v4795 = vadd.s32 %v4553, 24
      %v4796 = vadd.s32 %v4564, 24
      %v4797 = vadd.s32 %v4575, 24
      %v4798 = vadd.s32 %v4586, 24
      %v4799 = vadd.s32 %v4597, 24
      %v4800 = vadd.s32 %v4608, 24
      %v4801 = vsel %vm4705, %v4753, %v4091
      %v4802 = vsel %vm4706, %v4754, %v4102
      %v4803 = vsel %vm4707, %v4755, %v4113
      %v4804 = vsel %vm4708, %v4756, %v4124
      %v4805 = vsel %vm4709, %v4757, %v4135
      %v4806 = vsel %vm4710, %v4758, %v4146
      %v4807 = vsel %vm4711, %v4759, %v4157
      %v4808 = vsel %vm4712, %v4760, %v4168
      %v4809 = vsel %vm4713, %v4761, %v4179
      %v4810 = vsel %vm4714, %v4762, %v4190
      %v4811 = vsel %vm4715, %v4763, %v4201
      %v4812 = vsel %vm4716, %v4764, %v4212
      %v4813 = vsel %vm4717, %v4765, %v4223
      %v4814 = vsel %vm4718, %v4766, %v4234
      %v4815 = vsel %vm4719, %v4767, %v4245
      %v4816 = vsel %vm4720, %v4768, %v4256
      %v4817 = vsel %vm4721, %v4769, %v4267
      %v4818 = vsel %vm4722, %v4770, %v4278
      %v4819 = vsel %vm4723, %v4771, %v4289
      %v4820 = vsel %vm4724, %v4772, %v4300
      %v4821 = vsel %vm4725, %v4773, %v4311
      %v4822 = vsel %vm4726, %v4774, %v4322
      %v4823 = vsel %vm4727, %v4775, %v4333
      %v4824 = vsel %vm4728, %v4776, %v4344
      %v4825 = vsel %vm4729, %v4777, %v4355
      %v4826 = vsel %vm4730, %v4778, %v4366
      %v4827 = vsel %vm4731, %v4779, %v4377
      %v4828 = vsel %vm4732, %v4780, %v4388
      %v4829 = vsel %vm4733, %v4781, %v4399
      %v4830 = vsel %vm4734, %v4782, %v4410
      %v4831 = vsel %vm4735, %v4783, %v4421
      %v4832 = vsel %vm4736, %v4784, %v4432
      %v4833 = vsel %vm4737, %v4785, %v4443
      %v4834 = vsel %vm4738, %v4786, %v4454
      %v4835 = vsel %vm4739, %v4787, %v4465
      %v4836 = vsel %vm4740, %v4788, %v4476
      %v4837 = vsel %vm4741, %v4789, %v4487
      %v4838 = vsel %vm4742, %v4790, %v4498
      %v4839 = vsel %vm4743, %v4791, %v4509
      %v4840 = vsel %vm4744, %v4792, %v4520
      %v4841 = vsel %vm4745, %v4793, %v4531
      %v4842 = vsel %vm4746, %v4794, %v4542
      %v4843 = vsel %vm4747, %v4795, %v4553
      %v4844 = vsel %vm4748, %v4796, %v4564
      %v4845 = vsel %vm4749, %v4797, %v4575
      %v4846 = vsel %vm4750, %v4798, %v4586
      %v4847 = vsel %vm4751, %v4799, %v4597
      %v4848 = vsel %vm4752, %v4800, %v4608
      %vm4849 = vcmp.lt.s32.totalorder %v4801, 16
      %vm4850 = vcmp.lt.s32.totalorder %v4802, 16
      %vm4851 = vcmp.lt.s32.totalorder %v4803, 16
      %vm4852 = vcmp.lt.s32.totalorder %v4804, 16
      %vm4853 = vcmp.lt.s32.totalorder %v4805, 16
      %vm4854 = vcmp.lt.s32.totalorder %v4806, 16
      %vm4855 = vcmp.lt.s32.totalorder %v4807, 16
      %vm4856 = vcmp.lt.s32.totalorder %v4808, 16
      %vm4857 = vcmp.lt.s32.totalorder %v4809, 16
      %vm4858 = vcmp.lt.s32.totalorder %v4810, 16
      %vm4859 = vcmp.lt.s32.totalorder %v4811, 16
      %vm4860 = vcmp.lt.s32.totalorder %v4812, 16
      %vm4861 = vcmp.lt.s32.totalorder %v4813, 16
      %vm4862 = vcmp.lt.s32.totalorder %v4814, 16
      %vm4863 = vcmp.lt.s32.totalorder %v4815, 16
      %vm4864 = vcmp.lt.s32.totalorder %v4816, 16
      %vm4865 = vcmp.lt.s32.totalorder %v4817, 16
      %vm4866 = vcmp.lt.s32.totalorder %v4818, 16
      %vm4867 = vcmp.lt.s32.totalorder %v4819, 16
      %vm4868 = vcmp.lt.s32.totalorder %v4820, 16
      %vm4869 = vcmp.lt.s32.totalorder %v4821, 16
      %vm4870 = vcmp.lt.s32.totalorder %v4822, 16
      %vm4871 = vcmp.lt.s32.totalorder %v4823, 16
      %vm4872 = vcmp.lt.s32.totalorder %v4824, 16
      %vm4873 = vcmp.lt.s32.totalorder %v4825, 16
      %vm4874 = vcmp.lt.s32.totalorder %v4826, 16
      %vm4875 = vcmp.lt.s32.totalorder %v4827, 16
      %vm4876 = vcmp.lt.s32.totalorder %v4828, 16
      %vm4877 = vcmp.lt.s32.totalorder %v4829, 16
      %vm4878 = vcmp.lt.s32.totalorder %v4830, 16
      %vm4879 = vcmp.lt.s32.totalorder %v4831, 16
      %vm4880 = vcmp.lt.s32.totalorder %v4832, 16
      %vm4881 = vcmp.lt.s32.totalorder %v4833, 16
      %vm4882 = vcmp.lt.s32.totalorder %v4834, 16
      %vm4883 = vcmp.lt.s32.totalorder %v4835, 16
      %vm4884 = vcmp.lt.s32.totalorder %v4836, 16
      %vm4885 = vcmp.lt.s32.totalorder %v4837, 16
      %vm4886 = vcmp.lt.s32.totalorder %v4838, 16
      %vm4887 = vcmp.lt.s32.totalorder %v4839, 16
      %vm4888 = vcmp.lt.s32.totalorder %v4840, 16
      %vm4889 = vcmp.lt.s32.totalorder %v4841, 16
      %vm4890 = vcmp.lt.s32.totalorder %v4842, 16
      %vm4891 = vcmp.lt.s32.totalorder %v4843, 16
      %vm4892 = vcmp.lt.s32.totalorder %v4844, 16
      %vm4893 = vcmp.lt.s32.totalorder %v4845, 16
      %vm4894 = vcmp.lt.s32.totalorder %v4846, 16
      %vm4895 = vcmp.lt.s32.totalorder %v4847, 16
      %vm4896 = vcmp.lt.s32.totalorder %v4848, 16
      %v4897 = vsel %vm4849, %v3984, 0.0
      %v4898 = vsel %vm4850, %v3985, 0.0
      %v4899 = vsel %vm4851, %v3986, 0.0
      %v4900 = vsel %vm4852, %v3987, 0.0
      %v4901 = vsel %vm4853, %v3988, 0.0
      %v4902 = vsel %vm4854, %v3989, 0.0
      %v4903 = vsel %vm4855, %v3990, 0.0
      %v4904 = vsel %vm4856, %v3991, 0.0
      %v4905 = vsel %vm4857, %v3992, 0.0
      %v4906 = vsel %vm4858, %v3993, 0.0
      %v4907 = vsel %vm4859, %v3994, 0.0
      %v4908 = vsel %vm4860, %v3995, 0.0
      %v4909 = vsel %vm4861, %v3996, 0.0
      %v4910 = vsel %vm4862, %v3997, 0.0
      %v4911 = vsel %vm4863, %v3998, 0.0
      %v4912 = vsel %vm4864, %v3999, 0.0
      %v4913 = vsel %vm4865, %v4000, 0.0
      %v4914 = vsel %vm4866, %v4001, 0.0
      %v4915 = vsel %vm4867, %v4002, 0.0
      %v4916 = vsel %vm4868, %v4003, 0.0
      %v4917 = vsel %vm4869, %v4004, 0.0
      %v4918 = vsel %vm4870, %v4005, 0.0
      %v4919 = vsel %vm4871, %v4006, 0.0
      %v4920 = vsel %vm4872, %v4007, 0.0
      %v4921 = vsel %vm4873, %v4008, 0.0
      %v4922 = vsel %vm4874, %v4009, 0.0
      %v4923 = vsel %vm4875, %v4010, 0.0
      %v4924 = vsel %vm4876, %v4011, 0.0
      %v4925 = vsel %vm4877, %v4012, 0.0
      %v4926 = vsel %vm4878, %v4013, 0.0
      %v4927 = vsel %vm4879, %v4014, 0.0
      %v4928 = vsel %vm4880, %v4015, 0.0
      %v4929 = vsel %vm4881, %v4016, 0.0
      %v4930 = vsel %vm4882, %v4017, 0.0
      %v4931 = vsel %vm4883, %v4018, 0.0
      %v4932 = vsel %vm4884, %v4019, 0.0
      %v4933 = vsel %vm4885, %v4020, 0.0
      %v4934 = vsel %vm4886, %v4021, 0.0
      %v4935 = vsel %vm4887, %v4022, 0.0
      %v4936 = vsel %vm4888, %v4023, 0.0
      %v4937 = vsel %vm4889, %v4024, 0.0
      %v4938 = vsel %vm4890, %v4025, 0.0
      %v4939 = vsel %vm4891, %v4026, 0.0
      %v4940 = vsel %vm4892, %v4027, 0.0
      %v4941 = vsel %vm4893, %v4028, 0.0
      %v4942 = vsel %vm4894, %v4029, 0.0
      %v4943 = vsel %vm4895, %v4030, 0.0
      %v4944 = vsel %vm4896, %v4031, 0.0
      %4945 = vst [vmem:[#allocation2 + $0x19] sm:$0xff] %v4897
      %4946 = vst [vmem:[#allocation2 + $0x21] sm:$0xff] %v4898
      %4947 = vst [vmem:[#allocation2 + $0x29] sm:$0xff] %v4899
      %4948 = vst [vmem:[#allocation2 + $0x31] sm:$0xff] %v4900
      %4949 = vst [vmem:[#allocation2 + $0x39] sm:$0xff] %v4901
      %4950 = vst [vmem:[#allocation2 + $0x41] sm:$0xff] %v4902
      %4951 = vst [vmem:[#allocation2 + $0x49] sm:$0xff] %v4903
      %4952 = vst [vmem:[#allocation2 + $0x51] sm:$0xff] %v4904
      %4953 = vst [vmem:[#allocation2 + $0x59] sm:$0xff] %v4905
      %4954 = vst [vmem:[#allocation2 + $0x61] sm:$0xff] %v4906
      %4955 = vst [vmem:[#allocation2 + $0x69] sm:$0xff] %v4907
      %4956 = vst [vmem:[#allocation2 + $0x71] sm:$0xff] %v4908
      %4957 = vst [vmem:[#allocation2 + $0x79] sm:$0xff] %v4909
      %4958 = vst [vmem:[#allocation2 + $0x81] sm:$0xff] %v4910
      %4959 = vst [vmem:[#allocation2 + $0x89] sm:$0xff] %v4911
      %4960 = vst [vmem:[#allocation2 + $0x91] sm:$0xff] %v4912
      %4961 = vst [vmem:[#allocation2 + $0x99] sm:$0xff] %v4913
      %4962 = vst [vmem:[#allocation2 + $0xa1] sm:$0xff] %v4914
      %4963 = vst [vmem:[#allocation2 + $0xa9] sm:$0xff] %v4915
      %4964 = vst [vmem:[#allocation2 + $0xb1] sm:$0xff] %v4916
      %4965 = vst [vmem:[#allocation2 + $0xb9] sm:$0xff] %v4917
      %4966 = vst [vmem:[#allocation2 + $0xc1] sm:$0xff] %v4918
      %4967 = vst [vmem:[#allocation2 + $0xc9] sm:$0xff] %v4919
      %4968 = vst [vmem:[#allocation2 + $0xd1] sm:$0xff] %v4920
      %4969 = vst [vmem:[#allocation2 + $0xd9] sm:$0xff] %v4921
      %4970 = vst [vmem:[#allocation2 + $0xe1] sm:$0xff] %v4922
      %4971 = vst [vmem:[#allocation2 + $0xe9] sm:$0xff] %v4923
      %4972 = vst [vmem:[#allocation2 + $0xf1] sm:$0xff] %v4924
      %4973 = vst [vmem:[#allocation2 + $0xf9] sm:$0xff] %v4925
      %4974 = vst [vmem:[#allocation2 + $0x101] sm:$0xff] %v4926
      %4975 = vst [vmem:[#allocation2 + $0x109] sm:$0xff] %v4927
      %4976 = vst [vmem:[#allocation2 + $0x111] sm:$0xff] %v4928
      %4977 = vst [vmem:[#allocation2 + $0x119] sm:$0xff] %v4929
      %4978 = vst [vmem:[#allocation2 + $0x121] sm:$0xff] %v4930
      %4979 = vst [vmem:[#allocation2 + $0x129] sm:$0xff] %v4931
      %4980 = vst [vmem:[#allocation2 + $0x131] sm:$0xff] %v4932
      %4981 = vst [vmem:[#allocation2 + $0x139] sm:$0xff] %v4933
      %4982 = vst [vmem:[#allocation2 + $0x141] sm:$0xff] %v4934
      %4983 = vst [vmem:[#allocation2 + $0x149] sm:$0xff] %v4935
      %4984 = vst [vmem:[#allocation2 + $0x151] sm:$0xff] %v4936
      %4985 = vst [vmem:[#allocation2 + $0x159] sm:$0xff] %v4937
      %4986 = vst [vmem:[#allocation2 + $0x161] sm:$0xff] %v4938
      %4987 = vst [vmem:[#allocation2 + $0x169] sm:$0xff] %v4939
      %4988 = vst [vmem:[#allocation2 + $0x171] sm:$0xff] %v4940
      %4989 = vst [vmem:[#allocation2 + $0x179] sm:$0xff] %v4941
      %4990 = vst [vmem:[#allocation2 + $0x181] sm:$0xff] %v4942
      %4991 = vst [vmem:[#allocation2 + $0x189] sm:$0xff] %v4943
      %4992 = vst [vmem:[#allocation2 + $0x191] sm:$0xff] %v4944
      %v4993 = vld [vmem:[#allocation2] sm:$0xff]
      %v4994 = vld [vmem:[#allocation2 + $0x8] sm:$0xff]
      %v4995 = vld [vmem:[#allocation2 + $0x10] sm:$0xff]
      %v4996 = vld [vmem:[#allocation2 + $0x18] sm:$0xff]
      %v4997 = vld [vmem:[#allocation2 + $0x20] sm:$0xff]
      %v4998 = vld [vmem:[#allocation2 + $0x28] sm:$0xff]
      %v4999 = vld [vmem:[#allocation2 + $0x30] sm:$0xff]
      %v5000 = vld [vmem:[#allocation2 + $0x38] sm:$0xff]
      %v5001 = vld [vmem:[#allocation2 + $0x40] sm:$0xff]
      %v5002 = vld [vmem:[#allocation2 + $0x48] sm:$0xff]
      %v5003 = vld [vmem:[#allocation2 + $0x50] sm:$0xff]
      %v5004 = vld [vmem:[#allocation2 + $0x58] sm:$0xff]
      %v5005 = vld [vmem:[#allocation2 + $0x60] sm:$0xff]
      %v5006 = vld [vmem:[#allocation2 + $0x68] sm:$0xff]
      %v5007 = vld [vmem:[#allocation2 + $0x70] sm:$0xff]
      %v5008 = vld [vmem:[#allocation2 + $0x78] sm:$0xff]
      %v5009 = vld [vmem:[#allocation2 + $0x80] sm:$0xff]
      %v5010 = vld [vmem:[#allocation2 + $0x88] sm:$0xff]
      %v5011 = vld [vmem:[#allocation2 + $0x90] sm:$0xff]
      %v5012 = vld [vmem:[#allocation2 + $0x98] sm:$0xff]
      %v5013 = vld [vmem:[#allocation2 + $0xa0] sm:$0xff]
      %v5014 = vld [vmem:[#allocation2 + $0xa8] sm:$0xff]
      %v5015 = vld [vmem:[#allocation2 + $0xb0] sm:$0xff]
      %v5016 = vld [vmem:[#allocation2 + $0xb8] sm:$0xff]
      %v5017 = vld [vmem:[#allocation2 + $0xc0] sm:$0xff]
      %v5018 = vld [vmem:[#allocation2 + $0xc8] sm:$0xff]
      %v5019 = vld [vmem:[#allocation2 + $0xd0] sm:$0xff]
      %v5020 = vld [vmem:[#allocation2 + $0xd8] sm:$0xff]
      %v5021 = vld [vmem:[#allocation2 + $0xe0] sm:$0xff]
      %v5022 = vld [vmem:[#allocation2 + $0xe8] sm:$0xff]
      %v5023 = vld [vmem:[#allocation2 + $0xf0] sm:$0xff]
      %v5024 = vld [vmem:[#allocation2 + $0xf8] sm:$0xff]
      %v5025 = vld [vmem:[#allocation2 + $0x100] sm:$0xff]
      %v5026 = vld [vmem:[#allocation2 + $0x108] sm:$0xff]
      %v5027 = vld [vmem:[#allocation2 + $0x110] sm:$0xff]
      %v5028 = vld [vmem:[#allocation2 + $0x118] sm:$0xff]
      %v5029 = vld [vmem:[#allocation2 + $0x120] sm:$0xff]
      %v5030 = vld [vmem:[#allocation2 + $0x128] sm:$0xff]
      %v5031 = vld [vmem:[#allocation2 + $0x130] sm:$0xff]
      %v5032 = vld [vmem:[#allocation2 + $0x138] sm:$0xff]
      %v5033 = vld [vmem:[#allocation2 + $0x140] sm:$0xff]
      %v5034 = vld [vmem:[#allocation2 + $0x148] sm:$0xff]
      %v5035 = vld [vmem:[#allocation2 + $0x150] sm:$0xff]
      %v5036 = vld [vmem:[#allocation2 + $0x158] sm:$0xff]
      %v5037 = vld [vmem:[#allocation2 + $0x160] sm:$0xff]
      %v5038 = vld [vmem:[#allocation2 + $0x168] sm:$0xff]
      %v5039 = vld [vmem:[#allocation2 + $0x170] sm:$0xff]
      %v5040 = vld [vmem:[#allocation2 + $0x178] sm:$0xff]
      %v5041 = vpack.c.bf16 %v4994, %v4993
      %v5042 = vpack.c.bf16 %v4996, %v4995
      %v5043 = vpack.c.bf16 %v4998, %v4997
      %v5044 = vpack.c.bf16 %v5000, %v4999
      %v5045 = vpack.c.bf16 %v5002, %v5001
      %v5046 = vpack.c.bf16 %v5004, %v5003
      %v5047 = vpack.c.bf16 %v5006, %v5005
      %v5048 = vpack.c.bf16 %v5008, %v5007
      %v5049 = vpack.c.bf16 %v5010, %v5009
      %v5050 = vpack.c.bf16 %v5012, %v5011
      %v5051 = vpack.c.bf16 %v5014, %v5013
      %v5052 = vpack.c.bf16 %v5016, %v5015
      %v5053 = vpack.c.bf16 %v5018, %v5017
      %v5054 = vpack.c.bf16 %v5020, %v5019
      %v5055 = vpack.c.bf16 %v5022, %v5021
      %v5056 = vpack.c.bf16 %v5024, %v5023
      %v5057 = vpack.c.bf16 %v5026, %v5025
      %v5058 = vpack.c.bf16 %v5028, %v5027
      %v5059 = vpack.c.bf16 %v5030, %v5029
      %v5060 = vpack.c.bf16 %v5032, %v5031
      %v5061 = vpack.c.bf16 %v5034, %v5033
      %v5062 = vpack.c.bf16 %v5036, %v5035
      %v5063 = vpack.c.bf16 %v5038, %v5037
      %v5064 = vpack.c.bf16 %v5040, %v5039
      %s5065 = scalar_lea.vmem %s1, 576
      %v5066 = vld [vmem:[%s5065] sm:$0xf]
      %v5067 = vld [vmem:[%s5065 + $0x4] sm:$0xf]
      %v5068 = vld [vmem:[%s5065 + $0x8] sm:$0xf]
      %v5069 = vld [vmem:[%s5065 + $0xc] sm:$0xf]
      %v5070 = vld [vmem:[%s5065 + $0x10] sm:$0xf]
      %v5071 = vld [vmem:[%s5065 + $0x14] sm:$0xf]
      %v5072 = vld [vmem:[%s5065 + $0x18] sm:$0xf]
      %v5073 = vld [vmem:[%s5065 + $0x1c] sm:$0xf]
      %v5074 = vld [vmem:[%s5065 + $0x20] sm:$0xf]
      %v5075 = vld [vmem:[%s5065 + $0x24] sm:$0xf]
      %v5076 = vld [vmem:[%s5065 + $0x28] sm:$0xf]
      %v5077 = vld [vmem:[%s5065 + $0x2c] sm:$0xf]
      %v5078 = vld [vmem:[%s5065 + $0x30] sm:$0xf]
      %v5079 = vld [vmem:[%s5065 + $0x34] sm:$0xf]
      %v5080 = vld [vmem:[%s5065 + $0x38] sm:$0xf]
      %v5081 = vld [vmem:[%s5065 + $0x3c] sm:$0xf]
      %v5082 = vld [vmem:[#allocation2 + $0x1] sm:$0xff]
      %v5083 = vld [vmem:[#allocation2 + $0x9] sm:$0xff]
      %v5084 = vld [vmem:[#allocation2 + $0x11] sm:$0xff]
      %v5085 = vld [vmem:[#allocation2 + $0x19] sm:$0xff]
      %v5086 = vld [vmem:[#allocation2 + $0x21] sm:$0xff]
      %v5087 = vld [vmem:[#allocation2 + $0x29] sm:$0xff]
      %v5088 = vld [vmem:[#allocation2 + $0x31] sm:$0xff]
      %v5089 = vld [vmem:[#allocation2 + $0x39] sm:$0xff]
      %v5090 = vld [vmem:[#allocation2 + $0x41] sm:$0xff]
      %v5091 = vld [vmem:[#allocation2 + $0x49] sm:$0xff]
      %v5092 = vld [vmem:[#allocation2 + $0x51] sm:$0xff]
      %v5093 = vld [vmem:[#allocation2 + $0x59] sm:$0xff]
      %v5094 = vld [vmem:[#allocation2 + $0x61] sm:$0xff]
      %v5095 = vld [vmem:[#allocation2 + $0x69] sm:$0xff]
      %v5096 = vld [vmem:[#allocation2 + $0x71] sm:$0xff]
      %v5097 = vld [vmem:[#allocation2 + $0x79] sm:$0xff]
      %v5098 = vld [vmem:[#allocation2 + $0x81] sm:$0xff]
      %v5099 = vld [vmem:[#allocation2 + $0x89] sm:$0xff]
      %v5100 = vld [vmem:[#allocation2 + $0x91] sm:$0xff]
      %v5101 = vld [vmem:[#allocation2 + $0x99] sm:$0xff]
      %v5102 = vld [vmem:[#allocation2 + $0xa1] sm:$0xff]
      %v5103 = vld [vmem:[#allocation2 + $0xa9] sm:$0xff]
      %v5104 = vld [vmem:[#allocation2 + $0xb1] sm:$0xff]
      %v5105 = vld [vmem:[#allocation2 + $0xb9] sm:$0xff]
      %v5106 = vld [vmem:[#allocation2 + $0xc1] sm:$0xff]
      %v5107 = vld [vmem:[#allocation2 + $0xc9] sm:$0xff]
      %v5108 = vld [vmem:[#allocation2 + $0xd1] sm:$0xff]
      %v5109 = vld [vmem:[#allocation2 + $0xd9] sm:$0xff]
      %v5110 = vld [vmem:[#allocation2 + $0xe1] sm:$0xff]
      %v5111 = vld [vmem:[#allocation2 + $0xe9] sm:$0xff]
      %v5112 = vld [vmem:[#allocation2 + $0xf1] sm:$0xff]
      %v5113 = vld [vmem:[#allocation2 + $0xf9] sm:$0xff]
      %v5114 = vld [vmem:[#allocation2 + $0x101] sm:$0xff]
      %v5115 = vld [vmem:[#allocation2 + $0x109] sm:$0xff]
      %v5116 = vld [vmem:[#allocation2 + $0x111] sm:$0xff]
      %v5117 = vld [vmem:[#allocation2 + $0x119] sm:$0xff]
      %v5118 = vld [vmem:[#allocation2 + $0x121] sm:$0xff]
      %v5119 = vld [vmem:[#allocation2 + $0x129] sm:$0xff]
      %v5120 = vld [vmem:[#allocation2 + $0x131] sm:$0xff]
      %v5121 = vld [vmem:[#allocation2 + $0x139] sm:$0xff]
      %v5122 = vld [vmem:[#allocation2 + $0x141] sm:$0xff]
      %v5123 = vld [vmem:[#allocation2 + $0x149] sm:$0xff]
      %v5124 = vld [vmem:[#allocation2 + $0x151] sm:$0xff]
      %v5125 = vld [vmem:[#allocation2 + $0x159] sm:$0xff]
      %v5126 = vld [vmem:[#allocation2 + $0x161] sm:$0xff]
      %v5127 = vld [vmem:[#allocation2 + $0x169] sm:$0xff]
      %v5128 = vld [vmem:[#allocation2 + $0x171] sm:$0xff]
      %v5129 = vld [vmem:[#allocation2 + $0x179] sm:$0xff]
      %v5130 = vpack.c.bf16 %v5083, %v5082
      %v5131 = vpack.c.bf16 %v5085, %v5084
      %v5132 = vpack.c.bf16 %v5087, %v5086
      %v5133 = vpack.c.bf16 %v5089, %v5088
      %v5134 = vpack.c.bf16 %v5091, %v5090
      %v5135 = vpack.c.bf16 %v5093, %v5092
      %v5136 = vpack.c.bf16 %v5095, %v5094
      %v5137 = vpack.c.bf16 %v5097, %v5096
      %v5138 = vpack.c.bf16 %v5099, %v5098
      %v5139 = vpack.c.bf16 %v5101, %v5100
      %v5140 = vpack.c.bf16 %v5103, %v5102
      %v5141 = vpack.c.bf16 %v5105, %v5104
      %v5142 = vpack.c.bf16 %v5107, %v5106
      %v5143 = vpack.c.bf16 %v5109, %v5108
      %v5144 = vpack.c.bf16 %v5111, %v5110
      %v5145 = vpack.c.bf16 %v5113, %v5112
      %v5146 = vpack.c.bf16 %v5115, %v5114
      %v5147 = vpack.c.bf16 %v5117, %v5116
      %v5148 = vpack.c.bf16 %v5119, %v5118
      %v5149 = vpack.c.bf16 %v5121, %v5120
      %v5150 = vpack.c.bf16 %v5123, %v5122
      %v5151 = vpack.c.bf16 %v5125, %v5124
      %v5152 = vpack.c.bf16 %v5127, %v5126
      %v5153 = vpack.c.bf16 %v5129, %v5128
      %s5154 = scalar_lea.vmem %s1, 640
      %v5155 = vld [vmem:[%s5154] sm:$0xf]
      %v5156 = vld [vmem:[%s5154 + $0x4] sm:$0xf]
      %v5157 = vld [vmem:[%s5154 + $0x8] sm:$0xf]
      %v5158 = vld [vmem:[%s5154 + $0xc] sm:$0xf]
      %v5159 = vld [vmem:[%s5154 + $0x10] sm:$0xf]
      %v5160 = vld [vmem:[%s5154 + $0x14] sm:$0xf]
      %v5161 = vld [vmem:[%s5154 + $0x18] sm:$0xf]
      %v5162 = vld [vmem:[%s5154 + $0x1c] sm:$0xf]
      %v5163 = vld [vmem:[%s5154 + $0x20] sm:$0xf]
      %v5164 = vld [vmem:[%s5154 + $0x24] sm:$0xf]
      %v5165 = vld [vmem:[%s5154 + $0x28] sm:$0xf]
      %v5166 = vld [vmem:[%s5154 + $0x2c] sm:$0xf]
      %v5167 = vld [vmem:[%s5154 + $0x30] sm:$0xf]
      %v5168 = vld [vmem:[%s5154 + $0x34] sm:$0xf]
      %v5169 = vld [vmem:[%s5154 + $0x38] sm:$0xf]
      %v5170 = vld [vmem:[%s5154 + $0x3c] sm:$0xf]
      %v5187 = vunpack.c.l.b16 %v5155
      %v5188 = vunpack.c.l.b16 %v5156
      %v5189 = vunpack.c.l.b16 %v5157
      %v5190 = vunpack.c.l.b16 %v5158
      %v5191 = vunpack.c.l.b16 %v5159
      %v5192 = vunpack.c.l.b16 %v5160
      %v5193 = vunpack.c.l.b16 %v5161
      %v5194 = vunpack.c.l.b16 %v5162
      %v5195 = vunpack.c.l.b16 %v5163
      %v5196 = vunpack.c.l.b16 %v5164
      %v5197 = vunpack.c.l.b16 %v5165
      %v5198 = vunpack.c.l.b16 %v5166
      %v5199 = vunpack.c.l.b16 %v5167
      %v5200 = vunpack.c.l.b16 %v5168
      %v5201 = vunpack.c.l.b16 %v5169
      %v5202 = vunpack.c.l.b16 %v5170
      %v5203 = vpack.c.b16 %v5188, %v5187
      %v5204 = vpack.c.b16 %v5190, %v5189
      %v5205 = vpack.c.b16 %v5192, %v5191
      %v5206 = vpack.c.b16 %v5194, %v5193
      %v5207 = vpack.c.b16 %v5196, %v5195
      %v5208 = vpack.c.b16 %v5198, %v5197
      %v5209 = vpack.c.b16 %v5200, %v5199
      %v5210 = vpack.c.b16 %v5202, %v5201
      %5219 = vmatprep.subr.bf16.mxu0 0
      %5220 = vmatpush1.bf16.msra.mxu0 %v5203
      %5221 = vmatprep.subr.bf16.mxu0 0
      %5222 = vmatpush1.bf16.msra.mxu0 %v5204
      %5223 = vmatprep.subr.bf16.mxu0 0
      %5224 = vmatpush1.bf16.msra.mxu0 %v5205
      %5225 = vmatprep.subr.bf16.mxu0 0
      %5226 = vmatpush1.bf16.msra.mxu0 %v5206
      %5227 = vmatprep.subr.bf16.mxu0 0
      %5228 = vmatpush1.bf16.msra.mxu0 %v5207
      %5229 = vmatprep.subr.bf16.mxu0 0
      %5230 = vmatpush1.bf16.msra.mxu0 %v5208
      %5231 = vmatprep.subr.bf16.mxu0 0
      %5232 = vmatpush1.bf16.msra.mxu0 %v5209
      %5233 = vmatprep.subr.bf16.mxu0 0
      %5234 = vmatpush1.bf16.msra.mxu0 %v5210
      %5235 = vmatprep.subr.bf16.mxu0 0
      %5236 = vmatpush1.bf16.msra.mxu0 0
      %5237 = vmatprep.subr.bf16.mxu0 0
      %5238 = vmatpush1.bf16.msra.mxu0 0
      %5239 = vmatprep.subr.bf16.mxu0 0
      %5240 = vmatpush1.bf16.msra.mxu0 0
      %5241 = vmatprep.subr.bf16.mxu0 0
      %5242 = vmatpush1.bf16.msra.mxu0 0
      %5243 = vmatprep.subr.bf16.mxu0 0
      %5244 = vmatpush1.bf16.msra.mxu0 0
      %5245 = vmatprep.subr.bf16.mxu0 0
      %5246 = vmatpush1.bf16.msra.mxu0 0
      %5247 = vmatprep.subr.bf16.mxu0 0
      %5248 = vmatpush1.bf16.msra.mxu0 0
      %5249 = vmatprep.subr.bf16.mxu0 0
      %5250 = vmatpush1.bf16.msra.mxu0 0
      %5251 = vmatprep.mubr.bf16.mxu0 0
      %5252 = vmatmul.mubr.bf16.gmra.mrb[0].mxu0 %v5130
      %v5253 = vpop.f32.mrb[0].mxu0
      %v5254 = vadd.f32 0.0, %v5253
      %v5255 = vpop.f32.mrb[0].mxu0
      %v5256 = vpop.f32.mrb[0].mxu0
      %v5257 = vadd.f32 0.0, %v5256
      %v5258 = vpop.f32.mrb[0].mxu0
      %5259 = vmatprep.mubr.bf16.mxu0 0
      %5260 = vmatmul.mubr.bf16.gmra.mrb[0].mxu0 %v5131
      %v5261 = vpop.f32.mrb[0].mxu0
      %v5262 = vadd.f32 0.0, %v5261
      %v5263 = vpop.f32.mrb[0].mxu0
      %v5264 = vpop.f32.mrb[0].mxu0
      %v5265 = vadd.f32 0.0, %v5264
      %v5266 = vpop.f32.mrb[0].mxu0
      %5267 = vmatprep.mubr.bf16.mxu0 0
      %5268 = vmatmul.mubr.bf16.gmra.mrb[0].mxu0 %v5132
      %v5269 = vpop.f32.mrb[0].mxu0
      %v5270 = vadd.f32 0.0, %v5269
      %v5271 = vpop.f32.mrb[0].mxu0
      %v5272 = vpop.f32.mrb[0].mxu0
      %v5273 = vadd.f32 0.0, %v5272
      %v5274 = vpop.f32.mrb[0].mxu0
      %5275 = vmatprep.mubr.bf16.mxu0 0
      %5276 = vmatmul.mubr.bf16.gmra.mrb[0].mxu0 %v5133
      %v5277 = vpop.f32.mrb[0].mxu0
      %v5278 = vadd.f32 0.0, %v5277
      %v5279 = vpop.f32.mrb[0].mxu0
      %v5280 = vpop.f32.mrb[0].mxu0
      %v5281 = vadd.f32 0.0, %v5280
      %v5282 = vpop.f32.mrb[0].mxu0
      %5283 = vmatprep.mubr.bf16.mxu0 0
      %5284 = vmatmul.mubr.bf16.gmra.mrb[0].mxu0 %v5134
      %v5285 = vpop.f32.mrb[0].mxu0
      %v5286 = vadd.f32 0.0, %v5285
      %v5287 = vpop.f32.mrb[0].mxu0
      %v5288 = vpop.f32.mrb[0].mxu0
      %v5289 = vadd.f32 0.0, %v5288
      %v5290 = vpop.f32.mrb[0].mxu0
      %5291 = vmatprep.mubr.bf16.mxu0 0
      %5292 = vmatmul.mubr.bf16.gmra.mrb[0].mxu0 %v5135
      %v5293 = vpop.f32.mrb[0].mxu0
      %v5294 = vadd.f32 0.0, %v5293
      %v5295 = vpop.f32.mrb[0].mxu0
      %v5296 = vpop.f32.mrb[0].mxu0
      %v5297 = vadd.f32 0.0, %v5296
      %v5298 = vpop.f32.mrb[0].mxu0
      %5299 = vmatprep.mubr.bf16.mxu0 0
      %5300 = vmatmul.mubr.bf16.gmra.mrb[0].mxu0 %v5136
      %v5301 = vpop.f32.mrb[0].mxu0
      %v5302 = vadd.f32 0.0, %v5301
      %v5303 = vpop.f32.mrb[0].mxu0
      %v5304 = vpop.f32.mrb[0].mxu0
      %v5305 = vadd.f32 0.0, %v5304
      %v5306 = vpop.f32.mrb[0].mxu0
      %5307 = vmatprep.mubr.bf16.mxu0 0
      %5308 = vmatmul.mubr.bf16.gmra.mrb[0].mxu0 %v5137
      %v5309 = vpop.f32.mrb[0].mxu0
      %v5310 = vadd.f32 0.0, %v5309
      %v5311 = vpop.f32.mrb[0].mxu0
      %v5312 = vpop.f32.mrb[0].mxu0
      %v5313 = vadd.f32 0.0, %v5312
      %v5314 = vpop.f32.mrb[0].mxu0
      %5315 = vmatprep.mubr.bf16.mxu0 0
      %5316 = vmatmul.mubr.bf16.gmra.mrb[0].mxu0 %v5138
      %v5317 = vpop.f32.mrb[0].mxu0
      %v5318 = vadd.f32 0.0, %v5317
      %v5319 = vpop.f32.mrb[0].mxu0
      %v5320 = vpop.f32.mrb[0].mxu0
      %v5321 = vadd.f32 0.0, %v5320
      %v5322 = vpop.f32.mrb[0].mxu0
      %5323 = vmatprep.mubr.bf16.mxu0 0
      %5324 = vmatmul.mubr.bf16.gmra.mrb[0].mxu0 %v5139
      %v5325 = vpop.f32.mrb[0].mxu0
      %v5326 = vadd.f32 0.0, %v5325
      %v5327 = vpop.f32.mrb[0].mxu0
      %v5328 = vpop.f32.mrb[0].mxu0
      %v5329 = vadd.f32 0.0, %v5328
      %v5330 = vpop.f32.mrb[0].mxu0
      %5331 = vmatprep.mubr.bf16.mxu0 0
      %5332 = vmatmul.mubr.bf16.gmra.mrb[0].mxu0 %v5140
      %v5333 = vpop.f32.mrb[0].mxu0
      %v5334 = vadd.f32 0.0, %v5333
      %v5335 = vpop.f32.mrb[0].mxu0
      %v5336 = vpop.f32.mrb[0].mxu0
      %v5337 = vadd.f32 0.0, %v5336
      %v5338 = vpop.f32.mrb[0].mxu0
      %5339 = vmatprep.mubr.bf16.mxu0 0
      %5340 = vmatmul.mubr.bf16.gmra.mrb[0].mxu0 %v5141
      %v5341 = vpop.f32.mrb[0].mxu0
      %v5342 = vadd.f32 0.0, %v5341
      %v5343 = vpop.f32.mrb[0].mxu0
      %v5344 = vpop.f32.mrb[0].mxu0
      %v5345 = vadd.f32 0.0, %v5344
      %v5346 = vpop.f32.mrb[0].mxu0
      %5347 = vmatprep.mubr.bf16.mxu0 0
      %5348 = vmatmul.mubr.bf16.gmra.mrb[0].mxu0 %v5142
      %v5349 = vpop.f32.mrb[0].mxu0
      %v5350 = vadd.f32 0.0, %v5349
      %v5351 = vpop.f32.mrb[0].mxu0
      %v5352 = vpop.f32.mrb[0].mxu0
      %v5353 = vadd.f32 0.0, %v5352
      %v5354 = vpop.f32.mrb[0].mxu0
      %5355 = vmatprep.mubr.bf16.mxu0 0
      %5356 = vmatmul.mubr.bf16.gmra.mrb[0].mxu0 %v5143
      %v5357 = vpop.f32.mrb[0].mxu0
      %v5358 = vadd.f32 0.0, %v5357
      %v5359 = vpop.f32.mrb[0].mxu0
      %v5360 = vpop.f32.mrb[0].mxu0
      %v5361 = vadd.f32 0.0, %v5360
      %v5362 = vpop.f32.mrb[0].mxu0
      %5363 = vmatprep.mubr.bf16.mxu0 0
      %5364 = vmatmul.mubr.bf16.gmra.mrb[0].mxu0 %v5144
      %v5365 = vpop.f32.mrb[0].mxu0
      %v5366 = vadd.f32 0.0, %v5365
      %v5367 = vpop.f32.mrb[0].mxu0
      %v5368 = vpop.f32.mrb[0].mxu0
      %v5369 = vadd.f32 0.0, %v5368
      %v5370 = vpop.f32.mrb[0].mxu0
      %5371 = vmatprep.mubr.bf16.mxu0 0
      %5372 = vmatmul.mubr.bf16.gmra.mrb[0].mxu0 %v5145
      %v5373 = vpop.f32.mrb[0].mxu0
      %v5374 = vadd.f32 0.0, %v5373
      %v5375 = vpop.f32.mrb[0].mxu0
      %v5376 = vpop.f32.mrb[0].mxu0
      %v5377 = vadd.f32 0.0, %v5376
      %v5378 = vpop.f32.mrb[0].mxu0
      %5379 = vmatprep.mubr.bf16.mxu0 0
      %5380 = vmatmul.mubr.bf16.gmra.mrb[0].mxu0 %v5146
      %v5381 = vpop.f32.mrb[0].mxu0
      %v5382 = vadd.f32 0.0, %v5381
      %v5383 = vpop.f32.mrb[0].mxu0
      %v5384 = vpop.f32.mrb[0].mxu0
      %v5385 = vadd.f32 0.0, %v5384
      %v5386 = vpop.f32.mrb[0].mxu0
      %5387 = vmatprep.mubr.bf16.mxu0 0
      %5388 = vmatmul.mubr.bf16.gmra.mrb[0].mxu0 %v5147
      %v5389 = vpop.f32.mrb[0].mxu0
      %v5390 = vadd.f32 0.0, %v5389
      %v5391 = vpop.f32.mrb[0].mxu0
      %v5392 = vpop.f32.mrb[0].mxu0
      %v5393 = vadd.f32 0.0, %v5392
      %v5394 = vpop.f32.mrb[0].mxu0
      %5395 = vmatprep.mubr.bf16.mxu0 0
      %5396 = vmatmul.mubr.bf16.gmra.mrb[0].mxu0 %v5148
      %v5397 = vpop.f32.mrb[0].mxu0
      %v5398 = vadd.f32 0.0, %v5397
      %v5399 = vpop.f32.mrb[0].mxu0
      %v5400 = vpop.f32.mrb[0].mxu0
      %v5401 = vadd.f32 0.0, %v5400
      %v5402 = vpop.f32.mrb[0].mxu0
      %5403 = vmatprep.mubr.bf16.mxu0 0
      %5404 = vmatmul.mubr.bf16.gmra.mrb[0].mxu0 %v5149
      %v5405 = vpop.f32.mrb[0].mxu0
      %v5406 = vadd.f32 0.0, %v5405
      %v5407 = vpop.f32.mrb[0].mxu0
      %v5408 = vpop.f32.mrb[0].mxu0
      %v5409 = vadd.f32 0.0, %v5408
      %v5410 = vpop.f32.mrb[0].mxu0
      %5411 = vmatprep.mubr.bf16.mxu0 0
      %5412 = vmatmul.mubr.bf16.gmra.mrb[0].mxu0 %v5150
      %v5413 = vpop.f32.mrb[0].mxu0
      %v5414 = vadd.f32 0.0, %v5413
      %v5415 = vpop.f32.mrb[0].mxu0
      %v5416 = vpop.f32.mrb[0].mxu0
      %v5417 = vadd.f32 0.0, %v5416
      %v5418 = vpop.f32.mrb[0].mxu0
      %5419 = vmatprep.mubr.bf16.mxu0 0
      %5420 = vmatmul.mubr.bf16.gmra.mrb[0].mxu0 %v5151
      %v5421 = vpop.f32.mrb[0].mxu0
      %v5422 = vadd.f32 0.0, %v5421
      %v5423 = vpop.f32.mrb[0].mxu0
      %v5424 = vpop.f32.mrb[0].mxu0
      %v5425 = vadd.f32 0.0, %v5424
      %v5426 = vpop.f32.mrb[0].mxu0
      %5427 = vmatprep.mubr.bf16.mxu0 0
      %5428 = vmatmul.mubr.bf16.gmra.mrb[0].mxu0 %v5152
      %v5429 = vpop.f32.mrb[0].mxu0
      %v5430 = vadd.f32 0.0, %v5429
      %v5431 = vpop.f32.mrb[0].mxu0
      %v5432 = vpop.f32.mrb[0].mxu0
      %v5433 = vadd.f32 0.0, %v5432
      %v5434 = vpop.f32.mrb[0].mxu0
      %5435 = vmatprep.mubr.bf16.mxu0 0
      %5436 = vmatmul.mubr.bf16.gmra.mrb[0].mxu0 %v5153
      %v5437 = vpop.f32.mrb[0].mxu0
      %v5438 = vadd.f32 0.0, %v5437
      %v5439 = vpop.f32.mrb[0].mxu0
      %v5440 = vpop.f32.mrb[0].mxu0
      %v5441 = vadd.f32 0.0, %v5440
      %v5442 = vpop.f32.mrb[0].mxu0
      %5443 = vdwg.mxu0
      %v5460 = vunpack.c.l.b16 %v5066
      %v5461 = vunpack.c.l.b16 %v5067
      %v5462 = vunpack.c.l.b16 %v5068
      %v5463 = vunpack.c.l.b16 %v5069
      %v5464 = vunpack.c.l.b16 %v5070
      %v5465 = vunpack.c.l.b16 %v5071
      %v5466 = vunpack.c.l.b16 %v5072
      %v5467 = vunpack.c.l.b16 %v5073
      %v5468 = vunpack.c.l.b16 %v5074
      %v5469 = vunpack.c.l.b16 %v5075
      %v5470 = vunpack.c.l.b16 %v5076
      %v5471 = vunpack.c.l.b16 %v5077
      %v5472 = vunpack.c.l.b16 %v5078
      %v5473 = vunpack.c.l.b16 %v5079
      %v5474 = vunpack.c.l.b16 %v5080
      %v5475 = vunpack.c.l.b16 %v5081
      %v5476 = vpack.c.b16 %v5461, %v5460
      %v5477 = vpack.c.b16 %v5463, %v5462
      %v5478 = vpack.c.b16 %v5465, %v5464
      %v5479 = vpack.c.b16 %v5467, %v5466
      %v5480 = vpack.c.b16 %v5469, %v5468
      %v5481 = vpack.c.b16 %v5471, %v5470
      %v5482 = vpack.c.b16 %v5473, %v5472
      %v5483 = vpack.c.b16 %v5475, %v5474
      %5492 = vmatprep.subr.bf16.mxu0 0
      %5493 = vmatpush1.bf16.msra.mxu0 %v5476
      %5494 = vmatprep.subr.bf16.mxu0 0
      %5495 = vmatpush1.bf16.msra.mxu0 %v5477
      %5496 = vmatprep.subr.bf16.mxu0 0
      %5497 = vmatpush1.bf16.msra.mxu0 %v5478
      %5498 = vmatprep.subr.bf16.mxu0 0
      %5499 = vmatpush1.bf16.msra.mxu0 %v5479
      %5500 = vmatprep.subr.bf16.mxu0 0
      %5501 = vmatpush1.bf16.msra.mxu0 %v5480
      %5502 = vmatprep.subr.bf16.mxu0 0
      %5503 = vmatpush1.bf16.msra.mxu0 %v5481
      %5504 = vmatprep.subr.bf16.mxu0 0
      %5505 = vmatpush1.bf16.msra.mxu0 %v5482
      %5506 = vmatprep.subr.bf16.mxu0 0
      %5507 = vmatpush1.bf16.msra.mxu0 %v5483
      %5508 = vmatprep.subr.bf16.mxu0 0
      %5509 = vmatpush1.bf16.msra.mxu0 0
      %5510 = vmatprep.subr.bf16.mxu0 0
      %5511 = vmatpush1.bf16.msra.mxu0 0
      %5512 = vmatprep.subr.bf16.mxu0 0
      %5513 = vmatpush1.bf16.msra.mxu0 0
      %5514 = vmatprep.subr.bf16.mxu0 0
      %5515 = vmatpush1.bf16.msra.mxu0 0
      %5516 = vmatprep.subr.bf16.mxu0 0
      %5517 = vmatpush1.bf16.msra.mxu0 0
      %5518 = vmatprep.subr.bf16.mxu0 0
      %5519 = vmatpush1.bf16.msra.mxu0 0
      %5520 = vmatprep.subr.bf16.mxu0 0
      %5521 = vmatpush1.bf16.msra.mxu0 0
      %5522 = vmatprep.subr.bf16.mxu0 0
      %5523 = vmatpush1.bf16.msra.mxu0 0
      %5524 = vmatprep.mubr.bf16.mxu0 0
      %5525 = vmatmul.mubr.bf16.gmra.mrb[0].mxu0 %v5041
      %v5526 = vpop.f32.mrb[0].mxu0
      %v5527 = vadd.f32 %v5254, %v5526
      %v5528 = vpop.f32.mrb[0].mxu0
      %v5529 = vpop.f32.mrb[0].mxu0
      %v5530 = vadd.f32 %v5257, %v5529
      %v5531 = vpop.f32.mrb[0].mxu0
      %5532 = vmatprep.mubr.bf16.mxu0 0
      %5533 = vmatmul.mubr.bf16.gmra.mrb[0].mxu0 %v5042
      %v5534 = vpop.f32.mrb[0].mxu0
      %v5535 = vadd.f32 %v5262, %v5534
      %v5536 = vpop.f32.mrb[0].mxu0
      %v5537 = vpop.f32.mrb[0].mxu0
      %v5538 = vadd.f32 %v5265, %v5537
      %v5539 = vpop.f32.mrb[0].mxu0
      %5540 = vmatprep.mubr.bf16.mxu0 0
      %5541 = vmatmul.mubr.bf16.gmra.mrb[0].mxu0 %v5043
      %v5542 = vpop.f32.mrb[0].mxu0
      %v5543 = vadd.f32 %v5270, %v5542
      %v5544 = vpop.f32.mrb[0].mxu0
      %v5545 = vpop.f32.mrb[0].mxu0
      %v5546 = vadd.f32 %v5273, %v5545
      %v5547 = vpop.f32.mrb[0].mxu0
      %5548 = vmatprep.mubr.bf16.mxu0 0
      %5549 = vmatmul.mubr.bf16.gmra.mrb[0].mxu0 %v5044
      %v5550 = vpop.f32.mrb[0].mxu0
      %v5551 = vadd.f32 %v5278, %v5550
      %v5552 = vpop.f32.mrb[0].mxu0
      %v5553 = vpop.f32.mrb[0].mxu0
      %v5554 = vadd.f32 %v5281, %v5553
      %v5555 = vpop.f32.mrb[0].mxu0
      %5556 = vmatprep.mubr.bf16.mxu0 0
      %5557 = vmatmul.mubr.bf16.gmra.mrb[0].mxu0 %v5045
      %v5558 = vpop.f32.mrb[0].mxu0
      %v5559 = vadd.f32 %v5286, %v5558
      %v5560 = vpop.f32.mrb[0].mxu0
      %v5561 = vpop.f32.mrb[0].mxu0
      %v5562 = vadd.f32 %v5289, %v5561
      %v5563 = vpop.f32.mrb[0].mxu0
      %5564 = vmatprep.mubr.bf16.mxu0 0
      %5565 = vmatmul.mubr.bf16.gmra.mrb[0].mxu0 %v5046
      %v5566 = vpop.f32.mrb[0].mxu0
      %v5567 = vadd.f32 %v5294, %v5566
      %v5568 = vpop.f32.mrb[0].mxu0
      %v5569 = vpop.f32.mrb[0].mxu0
      %v5570 = vadd.f32 %v5297, %v5569
      %v5571 = vpop.f32.mrb[0].mxu0
      %5572 = vmatprep.mubr.bf16.mxu0 0
      %5573 = vmatmul.mubr.bf16.gmra.mrb[0].mxu0 %v5047
      %v5574 = vpop.f32.mrb[0].mxu0
      %v5575 = vadd.f32 %v5302, %v5574
      %v5576 = vpop.f32.mrb[0].mxu0
      %v5577 = vpop.f32.mrb[0].mxu0
      %v5578 = vadd.f32 %v5305, %v5577
      %v5579 = vpop.f32.mrb[0].mxu0
      %5580 = vmatprep.mubr.bf16.mxu0 0
      %5581 = vmatmul.mubr.bf16.gmra.mrb[0].mxu0 %v5048
      %v5582 = vpop.f32.mrb[0].mxu0
      %v5583 = vadd.f32 %v5310, %v5582
      %v5584 = vpop.f32.mrb[0].mxu0
      %v5585 = vpop.f32.mrb[0].mxu0
      %v5586 = vadd.f32 %v5313, %v5585
      %v5587 = vpop.f32.mrb[0].mxu0
      %5588 = vmatprep.mubr.bf16.mxu0 0
      %5589 = vmatmul.mubr.bf16.gmra.mrb[0].mxu0 %v5049
      %v5590 = vpop.f32.mrb[0].mxu0
      %v5591 = vadd.f32 %v5318, %v5590
      %v5592 = vpop.f32.mrb[0].mxu0
      %v5593 = vpop.f32.mrb[0].mxu0
      %v5594 = vadd.f32 %v5321, %v5593
      %v5595 = vpop.f32.mrb[0].mxu0
      %5596 = vmatprep.mubr.bf16.mxu0 0
      %5597 = vmatmul.mubr.bf16.gmra.mrb[0].mxu0 %v5050
      %v5598 = vpop.f32.mrb[0].mxu0
      %v5599 = vadd.f32 %v5326, %v5598
      %v5600 = vpop.f32.mrb[0].mxu0
      %v5601 = vpop.f32.mrb[0].mxu0
      %v5602 = vadd.f32 %v5329, %v5601
      %v5603 = vpop.f32.mrb[0].mxu0
      %5604 = vmatprep.mubr.bf16.mxu0 0
      %5605 = vmatmul.mubr.bf16.gmra.mrb[0].mxu0 %v5051
      %v5606 = vpop.f32.mrb[0].mxu0
      %v5607 = vadd.f32 %v5334, %v5606
      %v5608 = vpop.f32.mrb[0].mxu0
      %v5609 = vpop.f32.mrb[0].mxu0
      %v5610 = vadd.f32 %v5337, %v5609
      %v5611 = vpop.f32.mrb[0].mxu0
      %5612 = vmatprep.mubr.bf16.mxu0 0
      %5613 = vmatmul.mubr.bf16.gmra.mrb[0].mxu0 %v5052
      %v5614 = vpop.f32.mrb[0].mxu0
      %v5615 = vadd.f32 %v5342, %v5614
      %v5616 = vpop.f32.mrb[0].mxu0
      %v5617 = vpop.f32.mrb[0].mxu0
      %v5618 = vadd.f32 %v5345, %v5617
      %v5619 = vpop.f32.mrb[0].mxu0
      %5620 = vmatprep.mubr.bf16.mxu0 0
      %5621 = vmatmul.mubr.bf16.gmra.mrb[0].mxu0 %v5053
      %v5622 = vpop.f32.mrb[0].mxu0
      %v5623 = vadd.f32 %v5350, %v5622
      %v5624 = vpop.f32.mrb[0].mxu0
      %v5625 = vpop.f32.mrb[0].mxu0
      %v5626 = vadd.f32 %v5353, %v5625
      %v5627 = vpop.f32.mrb[0].mxu0
      %5628 = vmatprep.mubr.bf16.mxu0 0
      %5629 = vmatmul.mubr.bf16.gmra.mrb[0].mxu0 %v5054
      %v5630 = vpop.f32.mrb[0].mxu0
      %v5631 = vadd.f32 %v5358, %v5630
      %v5632 = vpop.f32.mrb[0].mxu0
      %v5633 = vpop.f32.mrb[0].mxu0
      %v5634 = vadd.f32 %v5361, %v5633
      %v5635 = vpop.f32.mrb[0].mxu0
      %5636 = vmatprep.mubr.bf16.mxu0 0
      %5637 = vmatmul.mubr.bf16.gmra.mrb[0].mxu0 %v5055
      %v5638 = vpop.f32.mrb[0].mxu0
      %v5639 = vadd.f32 %v5366, %v5638
      %v5640 = vpop.f32.mrb[0].mxu0
      %v5641 = vpop.f32.mrb[0].mxu0
      %v5642 = vadd.f32 %v5369, %v5641
      %v5643 = vpop.f32.mrb[0].mxu0
      %5644 = vmatprep.mubr.bf16.mxu0 0
      %5645 = vmatmul.mubr.bf16.gmra.mrb[0].mxu0 %v5056
      %v5646 = vpop.f32.mrb[0].mxu0
      %v5647 = vadd.f32 %v5374, %v5646
      %v5648 = vpop.f32.mrb[0].mxu0
      %v5649 = vpop.f32.mrb[0].mxu0
      %v5650 = vadd.f32 %v5377, %v5649
      %v5651 = vpop.f32.mrb[0].mxu0
      %5652 = vmatprep.mubr.bf16.mxu0 0
      %5653 = vmatmul.mubr.bf16.gmra.mrb[0].mxu0 %v5057
      %v5654 = vpop.f32.mrb[0].mxu0
      %v5655 = vadd.f32 %v5382, %v5654
      %v5656 = vpop.f32.mrb[0].mxu0
      %v5657 = vpop.f32.mrb[0].mxu0
      %v5658 = vadd.f32 %v5385, %v5657
      %v5659 = vpop.f32.mrb[0].mxu0
      %5660 = vmatprep.mubr.bf16.mxu0 0
      %5661 = vmatmul.mubr.bf16.gmra.mrb[0].mxu0 %v5058
      %v5662 = vpop.f32.mrb[0].mxu0
      %v5663 = vadd.f32 %v5390, %v5662
      %v5664 = vpop.f32.mrb[0].mxu0
      %v5665 = vpop.f32.mrb[0].mxu0
      %v5666 = vadd.f32 %v5393, %v5665
      %v5667 = vpop.f32.mrb[0].mxu0
      %5668 = vmatprep.mubr.bf16.mxu0 0
      %5669 = vmatmul.mubr.bf16.gmra.mrb[0].mxu0 %v5059
      %v5670 = vpop.f32.mrb[0].mxu0
      %v5671 = vadd.f32 %v5398, %v5670
      %v5672 = vpop.f32.mrb[0].mxu0
      %v5673 = vpop.f32.mrb[0].mxu0
      %v5674 = vadd.f32 %v5401, %v5673
      %v5675 = vpop.f32.mrb[0].mxu0
      %5676 = vmatprep.mubr.bf16.mxu0 0
      %5677 = vmatmul.mubr.bf16.gmra.mrb[0].mxu0 %v5060
      %v5678 = vpop.f32.mrb[0].mxu0
      %v5679 = vadd.f32 %v5406, %v5678
      %v5680 = vpop.f32.mrb[0].mxu0
      %v5681 = vpop.f32.mrb[0].mxu0
      %v5682 = vadd.f32 %v5409, %v5681
      %v5683 = vpop.f32.mrb[0].mxu0
      %5684 = vmatprep.mubr.bf16.mxu0 0
      %5685 = vmatmul.mubr.bf16.gmra.mrb[0].mxu0 %v5061
      %v5686 = vpop.f32.mrb[0].mxu0
      %v5687 = vadd.f32 %v5414, %v5686
      %v5688 = vpop.f32.mrb[0].mxu0
      %v5689 = vpop.f32.mrb[0].mxu0
      %v5690 = vadd.f32 %v5417, %v5689
      %v5691 = vpop.f32.mrb[0].mxu0
      %5692 = vmatprep.mubr.bf16.mxu0 0
      %5693 = vmatmul.mubr.bf16.gmra.mrb[0].mxu0 %v5062
      %v5694 = vpop.f32.mrb[0].mxu0
      %v5695 = vadd.f32 %v5422, %v5694
      %v5696 = vpop.f32.mrb[0].mxu0
      %v5697 = vpop.f32.mrb[0].mxu0
      %v5698 = vadd.f32 %v5425, %v5697
      %v5699 = vpop.f32.mrb[0].mxu0
      %5700 = vmatprep.mubr.bf16.mxu0 0
      %5701 = vmatmul.mubr.bf16.gmra.mrb[0].mxu0 %v5063
      %v5702 = vpop.f32.mrb[0].mxu0
      %v5703 = vadd.f32 %v5430, %v5702
      %v5704 = vpop.f32.mrb[0].mxu0
      %v5705 = vpop.f32.mrb[0].mxu0
      %v5706 = vadd.f32 %v5433, %v5705
      %v5707 = vpop.f32.mrb[0].mxu0
      %5708 = vmatprep.mubr.bf16.mxu0 0
      %5709 = vmatmul.mubr.bf16.gmra.mrb[0].mxu0 %v5064
      %v5710 = vpop.f32.mrb[0].mxu0
      %v5711 = vadd.f32 %v5438, %v5710
      %v5712 = vpop.f32.mrb[0].mxu0
      %v5713 = vpop.f32.mrb[0].mxu0
      %v5714 = vadd.f32 %v5441, %v5713
      %v5715 = vpop.f32.mrb[0].mxu0
      %5716 = vdwg.mxu0
      %v5717 = vld [vmem:[#allocation2 + $0x2] sm:$0xff]
      %v5718 = vld [vmem:[#allocation2 + $0xa] sm:$0xff]
      %v5719 = vld [vmem:[#allocation2 + $0x12] sm:$0xff]
      %v5720 = vld [vmem:[#allocation2 + $0x1a] sm:$0xff]
      %v5721 = vld [vmem:[#allocation2 + $0x22] sm:$0xff]
      %v5722 = vld [vmem:[#allocation2 + $0x2a] sm:$0xff]
      %v5723 = vld [vmem:[#allocation2 + $0x32] sm:$0xff]
      %v5724 = vld [vmem:[#allocation2 + $0x3a] sm:$0xff]
      %v5725 = vld [vmem:[#allocation2 + $0x42] sm:$0xff]
      %v5726 = vld [vmem:[#allocation2 + $0x4a] sm:$0xff]
      %v5727 = vld [vmem:[#allocation2 + $0x52] sm:$0xff]
      %v5728 = vld [vmem:[#allocation2 + $0x5a] sm:$0xff]
      %v5729 = vld [vmem:[#allocation2 + $0x62] sm:$0xff]
      %v5730 = vld [vmem:[#allocation2 + $0x6a] sm:$0xff]
      %v5731 = vld [vmem:[#allocation2 + $0x72] sm:$0xff]
      %v5732 = vld [vmem:[#allocation2 + $0x7a] sm:$0xff]
      %v5733 = vld [vmem:[#allocation2 + $0x82] sm:$0xff]
      %v5734 = vld [vmem:[#allocation2 + $0x8a] sm:$0xff]
      %v5735 = vld [vmem:[#allocation2 + $0x92] sm:$0xff]
      %v5736 = vld [vmem:[#allocation2 + $0x9a] sm:$0xff]
      %v5737 = vld [vmem:[#allocation2 + $0xa2] sm:$0xff]
      %v5738 = vld [vmem:[#allocation2 + $0xaa] sm:$0xff]
      %v5739 = vld [vmem:[#allocation2 + $0xb2] sm:$0xff]
      %v5740 = vld [vmem:[#allocation2 + $0xba] sm:$0xff]
      %v5741 = vld [vmem:[#allocation2 + $0xc2] sm:$0xff]
      %v5742 = vld [vmem:[#allocation2 + $0xca] sm:$0xff]
      %v5743 = vld [vmem:[#allocation2 + $0xd2] sm:$0xff]
      %v5744 = vld [vmem:[#allocation2 + $0xda] sm:$0xff]
      %v5745 = vld [vmem:[#allocation2 + $0xe2] sm:$0xff]
      %v5746 = vld [vmem:[#allocation2 + $0xea] sm:$0xff]
      %v5747 = vld [vmem:[#allocation2 + $0xf2] sm:$0xff]
      %v5748 = vld [vmem:[#allocation2 + $0xfa] sm:$0xff]
      %v5749 = vld [vmem:[#allocation2 + $0x102] sm:$0xff]
      %v5750 = vld [vmem:[#allocation2 + $0x10a] sm:$0xff]
      %v5751 = vld [vmem:[#allocation2 + $0x112] sm:$0xff]
      %v5752 = vld [vmem:[#allocation2 + $0x11a] sm:$0xff]
      %v5753 = vld [vmem:[#allocation2 + $0x122] sm:$0xff]
      %v5754 = vld [vmem:[#allocation2 + $0x12a] sm:$0xff]
      %v5755 = vld [vmem:[#allocation2 + $0x132] sm:$0xff]
      %v5756 = vld [vmem:[#allocation2 + $0x13a] sm:$0xff]
      %v5757 = vld [vmem:[#allocation2 + $0x142] sm:$0xff]
      %v5758 = vld [vmem:[#allocation2 + $0x14a] sm:$0xff]
      %v5759 = vld [vmem:[#allocation2 + $0x152] sm:$0xff]
      %v5760 = vld [vmem:[#allocation2 + $0x15a] sm:$0xff]
      %v5761 = vld [vmem:[#allocation2 + $0x162] sm:$0xff]
      %v5762 = vld [vmem:[#allocation2 + $0x16a] sm:$0xff]
      %v5763 = vld [vmem:[#allocation2 + $0x172] sm:$0xff]
      %v5764 = vld [vmem:[#allocation2 + $0x17a] sm:$0xff]
      %v5765 = vpack.c.bf16 %v5718, %v5717
      %v5766 = vpack.c.bf16 %v5720, %v5719
      %v5767 = vpack.c.bf16 %v5722, %v5721
      %v5768 = vpack.c.bf16 %v5724, %v5723
      %v5769 = vpack.c.bf16 %v5726, %v5725
      %v5770 = vpack.c.bf16 %v5728, %v5727
      %v5771 = vpack.c.bf16 %v5730, %v5729
      %v5772 = vpack.c.bf16 %v5732, %v5731
      %v5773 = vpack.c.bf16 %v5734, %v5733
      %v5774 = vpack.c.bf16 %v5736, %v5735
      %v5775 = vpack.c.bf16 %v5738, %v5737
      %v5776 = vpack.c.bf16 %v5740, %v5739
      %v5777 = vpack.c.bf16 %v5742, %v5741
      %v5778 = vpack.c.bf16 %v5744, %v5743
      %v5779 = vpack.c.bf16 %v5746, %v5745
      %v5780 = vpack.c.bf16 %v5748, %v5747
      %v5781 = vpack.c.bf16 %v5750, %v5749
      %v5782 = vpack.c.bf16 %v5752, %v5751
      %v5783 = vpack.c.bf16 %v5754, %v5753
      %v5784 = vpack.c.bf16 %v5756, %v5755
      %v5785 = vpack.c.bf16 %v5758, %v5757
      %v5786 = vpack.c.bf16 %v5760, %v5759
      %v5787 = vpack.c.bf16 %v5762, %v5761
      %v5788 = vpack.c.bf16 %v5764, %v5763
      %s5789 = scalar_lea.vmem %s1, 704
      %v5790 = vld [vmem:[%s5789] sm:$0xf]
      %v5791 = vld [vmem:[%s5789 + $0x4] sm:$0xf]
      %v5792 = vld [vmem:[%s5789 + $0x8] sm:$0xf]
      %v5793 = vld [vmem:[%s5789 + $0xc] sm:$0xf]
      %v5794 = vld [vmem:[%s5789 + $0x10] sm:$0xf]
      %v5795 = vld [vmem:[%s5789 + $0x14] sm:$0xf]
      %v5796 = vld [vmem:[%s5789 + $0x18] sm:$0xf]
      %v5797 = vld [vmem:[%s5789 + $0x1c] sm:$0xf]
      %v5798 = vld [vmem:[%s5789 + $0x20] sm:$0xf]
      %v5799 = vld [vmem:[%s5789 + $0x24] sm:$0xf]
      %v5800 = vld [vmem:[%s5789 + $0x28] sm:$0xf]
      %v5801 = vld [vmem:[%s5789 + $0x2c] sm:$0xf]
      %v5802 = vld [vmem:[%s5789 + $0x30] sm:$0xf]
      %v5803 = vld [vmem:[%s5789 + $0x34] sm:$0xf]
      %v5804 = vld [vmem:[%s5789 + $0x38] sm:$0xf]
      %v5805 = vld [vmem:[%s5789 + $0x3c] sm:$0xf]
      %v5822 = vunpack.c.l.b16 %v5790
      %v5823 = vunpack.c.l.b16 %v5791
      %v5824 = vunpack.c.l.b16 %v5792
      %v5825 = vunpack.c.l.b16 %v5793
      %v5826 = vunpack.c.l.b16 %v5794
      %v5827 = vunpack.c.l.b16 %v5795
      %v5828 = vunpack.c.l.b16 %v5796
      %v5829 = vunpack.c.l.b16 %v5797
      %v5830 = vunpack.c.l.b16 %v5798
      %v5831 = vunpack.c.l.b16 %v5799
      %v5832 = vunpack.c.l.b16 %v5800
      %v5833 = vunpack.c.l.b16 %v5801
      %v5834 = vunpack.c.l.b16 %v5802
      %v5835 = vunpack.c.l.b16 %v5803
      %v5836 = vunpack.c.l.b16 %v5804
      %v5837 = vunpack.c.l.b16 %v5805
      %v5838 = vpack.c.b16 %v5823, %v5822
      %v5839 = vpack.c.b16 %v5825, %v5824
      %v5840 = vpack.c.b16 %v5827, %v5826
      %v5841 = vpack.c.b16 %v5829, %v5828
      %v5842 = vpack.c.b16 %v5831, %v5830
      %v5843 = vpack.c.b16 %v5833, %v5832
      %v5844 = vpack.c.b16 %v5835, %v5834
      %v5845 = vpack.c.b16 %v5837, %v5836
      %5854 = vmatprep.subr.bf16.mxu0 0
      %5855 = vmatpush1.bf16.msra.mxu0 %v5838
      %5856 = vmatprep.subr.bf16.mxu0 0
      %5857 = vmatpush1.bf16.msra.mxu0 %v5839
      %5858 = vmatprep.subr.bf16.mxu0 0
      %5859 = vmatpush1.bf16.msra.mxu0 %v5840
      %5860 = vmatprep.subr.bf16.mxu0 0
      %5861 = vmatpush1.bf16.msra.mxu0 %v5841
      %5862 = vmatprep.subr.bf16.mxu0 0
      %5863 = vmatpush1.bf16.msra.mxu0 %v5842
      %5864 = vmatprep.subr.bf16.mxu0 0
      %5865 = vmatpush1.bf16.msra.mxu0 %v5843
      %5866 = vmatprep.subr.bf16.mxu0 0
      %5867 = vmatpush1.bf16.msra.mxu0 %v5844
      %5868 = vmatprep.subr.bf16.mxu0 0
      %5869 = vmatpush1.bf16.msra.mxu0 %v5845
      %5870 = vmatprep.subr.bf16.mxu0 0
      %5871 = vmatpush1.bf16.msra.mxu0 0
      %5872 = vmatprep.subr.bf16.mxu0 0
      %5873 = vmatpush1.bf16.msra.mxu0 0
      %5874 = vmatprep.subr.bf16.mxu0 0
      %5875 = vmatpush1.bf16.msra.mxu0 0
      %5876 = vmatprep.subr.bf16.mxu0 0
      %5877 = vmatpush1.bf16.msra.mxu0 0
      %5878 = vmatprep.subr.bf16.mxu0 0
      %5879 = vmatpush1.bf16.msra.mxu0 0
      %5880 = vmatprep.subr.bf16.mxu0 0
      %5881 = vmatpush1.bf16.msra.mxu0 0
      %5882 = vmatprep.subr.bf16.mxu0 0
      %5883 = vmatpush1.bf16.msra.mxu0 0
      %5884 = vmatprep.subr.bf16.mxu0 0
      %5885 = vmatpush1.bf16.msra.mxu0 0
      %5886 = vmatprep.mubr.bf16.mxu0 0
      %5887 = vmatmul.mubr.bf16.gmra.mrb[0].mxu0 %v5765
      %v5888 = vpop.f32.mrb[0].mxu0
      %v5889 = vadd.f32 0.0, %v5888
      %v5890 = vpop.f32.mrb[0].mxu0
      %v5891 = vpop.f32.mrb[0].mxu0
      %v5892 = vadd.f32 0.0, %v5891
      %v5893 = vpop.f32.mrb[0].mxu0
      %5894 = vmatprep.mubr.bf16.mxu0 0
      %5895 = vmatmul.mubr.bf16.gmra.mrb[0].mxu0 %v5766
      %v5896 = vpop.f32.mrb[0].mxu0
      %v5897 = vadd.f32 0.0, %v5896
      %v5898 = vpop.f32.mrb[0].mxu0
      %v5899 = vpop.f32.mrb[0].mxu0
      %v5900 = vadd.f32 0.0, %v5899
      %v5901 = vpop.f32.mrb[0].mxu0
      %5902 = vmatprep.mubr.bf16.mxu0 0
      %5903 = vmatmul.mubr.bf16.gmra.mrb[0].mxu0 %v5767
      %v5904 = vpop.f32.mrb[0].mxu0
      %v5905 = vadd.f32 0.0, %v5904
      %v5906 = vpop.f32.mrb[0].mxu0
      %v5907 = vpop.f32.mrb[0].mxu0
      %v5908 = vadd.f32 0.0, %v5907
      %v5909 = vpop.f32.mrb[0].mxu0
      %5910 = vmatprep.mubr.bf16.mxu0 0
      %5911 = vmatmul.mubr.bf16.gmra.mrb[0].mxu0 %v5768
      %v5912 = vpop.f32.mrb[0].mxu0
      %v5913 = vadd.f32 0.0, %v5912
      %v5914 = vpop.f32.mrb[0].mxu0
      %v5915 = vpop.f32.mrb[0].mxu0
      %v5916 = vadd.f32 0.0, %v5915
      %v5917 = vpop.f32.mrb[0].mxu0
      %5918 = vmatprep.mubr.bf16.mxu0 0
      %5919 = vmatmul.mubr.bf16.gmra.mrb[0].mxu0 %v5769
      %v5920 = vpop.f32.mrb[0].mxu0
      %v5921 = vadd.f32 0.0, %v5920
      %v5922 = vpop.f32.mrb[0].mxu0
      %v5923 = vpop.f32.mrb[0].mxu0
      %v5924 = vadd.f32 0.0, %v5923
      %v5925 = vpop.f32.mrb[0].mxu0
      %5926 = vmatprep.mubr.bf16.mxu0 0
      %5927 = vmatmul.mubr.bf16.gmra.mrb[0].mxu0 %v5770
      %v5928 = vpop.f32.mrb[0].mxu0
      %v5929 = vadd.f32 0.0, %v5928
      %v5930 = vpop.f32.mrb[0].mxu0
      %v5931 = vpop.f32.mrb[0].mxu0
      %v5932 = vadd.f32 0.0, %v5931
      %v5933 = vpop.f32.mrb[0].mxu0
      %5934 = vmatprep.mubr.bf16.mxu0 0
      %5935 = vmatmul.mubr.bf16.gmra.mrb[0].mxu0 %v5771
      %v5936 = vpop.f32.mrb[0].mxu0
      %v5937 = vadd.f32 0.0, %v5936
      %v5938 = vpop.f32.mrb[0].mxu0
      %v5939 = vpop.f32.mrb[0].mxu0
      %v5940 = vadd.f32 0.0, %v5939
      %v5941 = vpop.f32.mrb[0].mxu0
      %5942 = vmatprep.mubr.bf16.mxu0 0
      %5943 = vmatmul.mubr.bf16.gmra.mrb[0].mxu0 %v5772
      %v5944 = vpop.f32.mrb[0].mxu0
      %v5945 = vadd.f32 0.0, %v5944
      %v5946 = vpop.f32.mrb[0].mxu0
      %v5947 = vpop.f32.mrb[0].mxu0
      %v5948 = vadd.f32 0.0, %v5947
      %v5949 = vpop.f32.mrb[0].mxu0
      %5950 = vmatprep.mubr.bf16.mxu0 0
      %5951 = vmatmul.mubr.bf16.gmra.mrb[0].mxu0 %v5773
      %v5952 = vpop.f32.mrb[0].mxu0
      %v5953 = vadd.f32 0.0, %v5952
      %v5954 = vpop.f32.mrb[0].mxu0
      %v5955 = vpop.f32.mrb[0].mxu0
      %v5956 = vadd.f32 0.0, %v5955
      %v5957 = vpop.f32.mrb[0].mxu0
      %5958 = vmatprep.mubr.bf16.mxu0 0
      %5959 = vmatmul.mubr.bf16.gmra.mrb[0].mxu0 %v5774
      %v5960 = vpop.f32.mrb[0].mxu0
      %v5961 = vadd.f32 0.0, %v5960
      %v5962 = vpop.f32.mrb[0].mxu0
      %v5963 = vpop.f32.mrb[0].mxu0
      %v5964 = vadd.f32 0.0, %v5963
      %v5965 = vpop.f32.mrb[0].mxu0
      %5966 = vmatprep.mubr.bf16.mxu0 0
      %5967 = vmatmul.mubr.bf16.gmra.mrb[0].mxu0 %v5775
      %v5968 = vpop.f32.mrb[0].mxu0
      %v5969 = vadd.f32 0.0, %v5968
      %v5970 = vpop.f32.mrb[0].mxu0
      %v5971 = vpop.f32.mrb[0].mxu0
      %v5972 = vadd.f32 0.0, %v5971
      %v5973 = vpop.f32.mrb[0].mxu0
      %5974 = vmatprep.mubr.bf16.mxu0 0
      %5975 = vmatmul.mubr.bf16.gmra.mrb[0].mxu0 %v5776
      %v5976 = vpop.f32.mrb[0].mxu0
      %v5977 = vadd.f32 0.0, %v5976
      %v5978 = vpop.f32.mrb[0].mxu0
      %v5979 = vpop.f32.mrb[0].mxu0
      %v5980 = vadd.f32 0.0, %v5979
      %v5981 = vpop.f32.mrb[0].mxu0
      %5982 = vmatprep.mubr.bf16.mxu0 0
      %5983 = vmatmul.mubr.bf16.gmra.mrb[0].mxu0 %v5777
      %v5984 = vpop.f32.mrb[0].mxu0
      %v5985 = vadd.f32 0.0, %v5984
      %v5986 = vpop.f32.mrb[0].mxu0
      %v5987 = vpop.f32.mrb[0].mxu0
      %v5988 = vadd.f32 0.0, %v5987
      %v5989 = vpop.f32.mrb[0].mxu0
      %5990 = vmatprep.mubr.bf16.mxu0 0
      %5991 = vmatmul.mubr.bf16.gmra.mrb[0].mxu0 %v5778
      %v5992 = vpop.f32.mrb[0].mxu0
      %v5993 = vadd.f32 0.0, %v5992
      %v5994 = vpop.f32.mrb[0].mxu0
      %v5995 = vpop.f32.mrb[0].mxu0
      %v5996 = vadd.f32 0.0, %v5995
      %v5997 = vpop.f32.mrb[0].mxu0
      %5998 = vmatprep.mubr.bf16.mxu0 0
      %5999 = vmatmul.mubr.bf16.gmra.mrb[0].mxu0 %v5779
      %v6000 = vpop.f32.mrb[0].mxu0
      %v6001 = vadd.f32 0.0, %v6000
      %v6002 = vpop.f32.mrb[0].mxu0
      %v6003 = vpop.f32.mrb[0].mxu0
      %v6004 = vadd.f32 0.0, %v6003
      %v6005 = vpop.f32.mrb[0].mxu0
      %6006 = vmatprep.mubr.bf16.mxu0 0
      %6007 = vmatmul.mubr.bf16.gmra.mrb[0].mxu0 %v5780
      %v6008 = vpop.f32.mrb[0].mxu0
      %v6009 = vadd.f32 0.0, %v6008
      %v6010 = vpop.f32.mrb[0].mxu0
      %v6011 = vpop.f32.mrb[0].mxu0
      %v6012 = vadd.f32 0.0, %v6011
      %v6013 = vpop.f32.mrb[0].mxu0
      %6014 = vmatprep.mubr.bf16.mxu0 0
      %6015 = vmatmul.mubr.bf16.gmra.mrb[0].mxu0 %v5781
      %v6016 = vpop.f32.mrb[0].mxu0
      %v6017 = vadd.f32 0.0, %v6016
      %v6018 = vpop.f32.mrb[0].mxu0
      %v6019 = vpop.f32.mrb[0].mxu0
      %v6020 = vadd.f32 0.0, %v6019
      %v6021 = vpop.f32.mrb[0].mxu0
      %6022 = vmatprep.mubr.bf16.mxu0 0
      %6023 = vmatmul.mubr.bf16.gmra.mrb[0].mxu0 %v5782
      %v6024 = vpop.f32.mrb[0].mxu0
      %v6025 = vadd.f32 0.0, %v6024
      %v6026 = vpop.f32.mrb[0].mxu0
      %v6027 = vpop.f32.mrb[0].mxu0
      %v6028 = vadd.f32 0.0, %v6027
      %v6029 = vpop.f32.mrb[0].mxu0
      %6030 = vmatprep.mubr.bf16.mxu0 0
      %6031 = vmatmul.mubr.bf16.gmra.mrb[0].mxu0 %v5783
      %v6032 = vpop.f32.mrb[0].mxu0
      %v6033 = vadd.f32 0.0, %v6032
      %v6034 = vpop.f32.mrb[0].mxu0
      %v6035 = vpop.f32.mrb[0].mxu0
      %v6036 = vadd.f32 0.0, %v6035
      %v6037 = vpop.f32.mrb[0].mxu0
      %6038 = vmatprep.mubr.bf16.mxu0 0
      %6039 = vmatmul.mubr.bf16.gmra.mrb[0].mxu0 %v5784
      %v6040 = vpop.f32.mrb[0].mxu0
      %v6041 = vadd.f32 0.0, %v6040
      %v6042 = vpop.f32.mrb[0].mxu0
      %v6043 = vpop.f32.mrb[0].mxu0
      %v6044 = vadd.f32 0.0, %v6043
      %v6045 = vpop.f32.mrb[0].mxu0
      %6046 = vmatprep.mubr.bf16.mxu0 0
      %6047 = vmatmul.mubr.bf16.gmra.mrb[0].mxu0 %v5785
      %v6048 = vpop.f32.mrb[0].mxu0
      %v6049 = vadd.f32 0.0, %v6048
      %v6050 = vpop.f32.mrb[0].mxu0
      %v6051 = vpop.f32.mrb[0].mxu0
      %v6052 = vadd.f32 0.0, %v6051
      %v6053 = vpop.f32.mrb[0].mxu0
      %6054 = vmatprep.mubr.bf16.mxu0 0
      %6055 = vmatmul.mubr.bf16.gmra.mrb[0].mxu0 %v5786
      %v6056 = vpop.f32.mrb[0].mxu0
      %v6057 = vadd.f32 0.0, %v6056
      %v6058 = vpop.f32.mrb[0].mxu0
      %v6059 = vpop.f32.mrb[0].mxu0
      %v6060 = vadd.f32 0.0, %v6059
      %v6061 = vpop.f32.mrb[0].mxu0
      %6062 = vmatprep.mubr.bf16.mxu0 0
      %6063 = vmatmul.mubr.bf16.gmra.mrb[0].mxu0 %v5787
      %v6064 = vpop.f32.mrb[0].mxu0
      %v6065 = vadd.f32 0.0, %v6064
      %v6066 = vpop.f32.mrb[0].mxu0
      %v6067 = vpop.f32.mrb[0].mxu0
      %v6068 = vadd.f32 0.0, %v6067
      %v6069 = vpop.f32.mrb[0].mxu0
      %6070 = vmatprep.mubr.bf16.mxu0 0
      %6071 = vmatmul.mubr.bf16.gmra.mrb[0].mxu0 %v5788
      %v6072 = vpop.f32.mrb[0].mxu0
      %v6073 = vadd.f32 0.0, %v6072
      %v6074 = vpop.f32.mrb[0].mxu0
      %v6075 = vpop.f32.mrb[0].mxu0
      %v6076 = vadd.f32 0.0, %v6075
      %v6077 = vpop.f32.mrb[0].mxu0
      %6078 = vdwg.mxu0
      %v6079 = vadd.f32 %v5527, %v5889
      %v6080 = vadd.f32 %v5530, %v5892
      %v6081 = vadd.f32 %v5535, %v5897
      %v6082 = vadd.f32 %v5538, %v5900
      %v6083 = vadd.f32 %v5543, %v5905
      %v6084 = vadd.f32 %v5546, %v5908
      %v6085 = vadd.f32 %v5551, %v5913
      %v6086 = vadd.f32 %v5554, %v5916
      %v6087 = vadd.f32 %v5559, %v5921
      %v6088 = vadd.f32 %v5562, %v5924
      %v6089 = vadd.f32 %v5567, %v5929
      %v6090 = vadd.f32 %v5570, %v5932
      %v6091 = vadd.f32 %v5575, %v5937
      %v6092 = vadd.f32 %v5578, %v5940
      %v6093 = vadd.f32 %v5583, %v5945
      %v6094 = vadd.f32 %v5586, %v5948
      %v6095 = vadd.f32 %v5591, %v5953
      %v6096 = vadd.f32 %v5594, %v5956
      %v6097 = vadd.f32 %v5599, %v5961
      %v6098 = vadd.f32 %v5602, %v5964
      %v6099 = vadd.f32 %v5607, %v5969
      %v6100 = vadd.f32 %v5610, %v5972
      %v6101 = vadd.f32 %v5615, %v5977
      %v6102 = vadd.f32 %v5618, %v5980
      %v6103 = vadd.f32 %v5623, %v5985
      %v6104 = vadd.f32 %v5626, %v5988
      %v6105 = vadd.f32 %v5631, %v5993
      %v6106 = vadd.f32 %v5634, %v5996
      %v6107 = vadd.f32 %v5639, %v6001
      %v6108 = vadd.f32 %v5642, %v6004
      %v6109 = vadd.f32 %v5647, %v6009
      %v6110 = vadd.f32 %v5650, %v6012
      %v6111 = vadd.f32 %v5655, %v6017
      %v6112 = vadd.f32 %v5658, %v6020
      %v6113 = vadd.f32 %v5663, %v6025
      %v6114 = vadd.f32 %v5666, %v6028
      %v6115 = vadd.f32 %v5671, %v6033
      %v6116 = vadd.f32 %v5674, %v6036
      %v6117 = vadd.f32 %v5679, %v6041
      %v6118 = vadd.f32 %v5682, %v6044
      %v6119 = vadd.f32 %v5687, %v6049
      %v6120 = vadd.f32 %v5690, %v6052
      %v6121 = vadd.f32 %v5695, %v6057
      %v6122 = vadd.f32 %v5698, %v6060
      %v6123 = vadd.f32 %v5703, %v6065
      %v6124 = vadd.f32 %v5706, %v6068
      %v6125 = vadd.f32 %v5711, %v6073
      %v6126 = vadd.f32 %v5714, %v6076
      %v6127 = vld [vmem:[#allocation2 + $0x18] sm:$0xff]
      %v6128 = vld [vmem:[#allocation2 + $0x20] sm:$0xff]
      %v6129 = vld [vmem:[#allocation2 + $0x28] sm:$0xff]
      %v6130 = vld [vmem:[#allocation2 + $0x30] sm:$0xff]
      %v6131 = vld [vmem:[#allocation2 + $0x38] sm:$0xff]
      %v6132 = vld [vmem:[#allocation2 + $0x40] sm:$0xff]
      %v6133 = vld [vmem:[#allocation2 + $0x48] sm:$0xff]
      %v6134 = vld [vmem:[#allocation2 + $0x50] sm:$0xff]
      %v6135 = vld [vmem:[#allocation2 + $0x58] sm:$0xff]
      %v6136 = vld [vmem:[#allocation2 + $0x60] sm:$0xff]
      %v6137 = vld [vmem:[#allocation2 + $0x68] sm:$0xff]
      %v6138 = vld [vmem:[#allocation2 + $0x70] sm:$0xff]
      %v6139 = vld [vmem:[#allocation2 + $0x78] sm:$0xff]
      %v6140 = vld [vmem:[#allocation2 + $0x80] sm:$0xff]
      %v6141 = vld [vmem:[#allocation2 + $0x88] sm:$0xff]
      %v6142 = vld [vmem:[#allocation2 + $0x90] sm:$0xff]
      %v6143 = vld [vmem:[#allocation2 + $0x98] sm:$0xff]
      %v6144 = vld [vmem:[#allocation2 + $0xa0] sm:$0xff]
      %v6145 = vld [vmem:[#allocation2 + $0xa8] sm:$0xff]
      %v6146 = vld [vmem:[#allocation2 + $0xb0] sm:$0xff]
      %v6147 = vld [vmem:[#allocation2 + $0xb8] sm:$0xff]
      %v6148 = vld [vmem:[#allocation2 + $0xc0] sm:$0xff]
      %v6149 = vld [vmem:[#allocation2 + $0xc8] sm:$0xff]
      %v6150 = vld [vmem:[#allocation2 + $0xd0] sm:$0xff]
      %v6151 = vld [vmem:[#allocation2 + $0xd8] sm:$0xff]
      %v6152 = vld [vmem:[#allocation2 + $0xe0] sm:$0xff]
      %v6153 = vld [vmem:[#allocation2 + $0xe8] sm:$0xff]
      %v6154 = vld [vmem:[#allocation2 + $0xf0] sm:$0xff]
      %v6155 = vld [vmem:[#allocation2 + $0xf8] sm:$0xff]
      %v6156 = vld [vmem:[#allocation2 + $0x100] sm:$0xff]
      %v6157 = vld [vmem:[#allocation2 + $0x108] sm:$0xff]
      %v6158 = vld [vmem:[#allocation2 + $0x110] sm:$0xff]
      %v6159 = vld [vmem:[#allocation2 + $0x118] sm:$0xff]
      %v6160 = vld [vmem:[#allocation2 + $0x120] sm:$0xff]
      %v6161 = vld [vmem:[#allocation2 + $0x128] sm:$0xff]
      %v6162 = vld [vmem:[#allocation2 + $0x130] sm:$0xff]
      %v6163 = vld [vmem:[#allocation2 + $0x138] sm:$0xff]
      %v6164 = vld [vmem:[#allocation2 + $0x140] sm:$0xff]
      %v6165 = vld [vmem:[#allocation2 + $0x148] sm:$0xff]
      %v6166 = vld [vmem:[#allocation2 + $0x150] sm:$0xff]
      %v6167 = vld [vmem:[#allocation2 + $0x158] sm:$0xff]
      %v6168 = vld [vmem:[#allocation2 + $0x160] sm:$0xff]
      %v6169 = vld [vmem:[#allocation2 + $0x168] sm:$0xff]
      %v6170 = vld [vmem:[#allocation2 + $0x170] sm:$0xff]
      %v6171 = vld [vmem:[#allocation2 + $0x178] sm:$0xff]
      %v6172 = vld [vmem:[#allocation2 + $0x180] sm:$0xff]
      %v6173 = vld [vmem:[#allocation2 + $0x188] sm:$0xff]
      %v6174 = vld [vmem:[#allocation2 + $0x190] sm:$0xff]
      %v6175 = vpack.c.bf16 %v6128, %v6127
      %v6176 = vpack.c.bf16 %v6130, %v6129
      %v6177 = vpack.c.bf16 %v6132, %v6131
      %v6178 = vpack.c.bf16 %v6134, %v6133
      %v6179 = vpack.c.bf16 %v6136, %v6135
      %v6180 = vpack.c.bf16 %v6138, %v6137
      %v6181 = vpack.c.bf16 %v6140, %v6139
      %v6182 = vpack.c.bf16 %v6142, %v6141
      %v6183 = vpack.c.bf16 %v6144, %v6143
      %v6184 = vpack.c.bf16 %v6146, %v6145
      %v6185 = vpack.c.bf16 %v6148, %v6147
      %v6186 = vpack.c.bf16 %v6150, %v6149
      %v6187 = vpack.c.bf16 %v6152, %v6151
      %v6188 = vpack.c.bf16 %v6154, %v6153
      %v6189 = vpack.c.bf16 %v6156, %v6155
      %v6190 = vpack.c.bf16 %v6158, %v6157
      %v6191 = vpack.c.bf16 %v6160, %v6159
      %v6192 = vpack.c.bf16 %v6162, %v6161
      %v6193 = vpack.c.bf16 %v6164, %v6163
      %v6194 = vpack.c.bf16 %v6166, %v6165
      %v6195 = vpack.c.bf16 %v6168, %v6167
      %v6196 = vpack.c.bf16 %v6170, %v6169
      %v6197 = vpack.c.bf16 %v6172, %v6171
      %v6198 = vpack.c.bf16 %v6174, %v6173
      %s6199 = scalar_lea.vmem %s1, 768
      %v6200 = vld [vmem:[%s6199] sm:$0xf]
      %v6201 = vld [vmem:[%s6199 + $0x4] sm:$0xf]
      %v6202 = vld [vmem:[%s6199 + $0x8] sm:$0xf]
      %v6203 = vld [vmem:[%s6199 + $0xc] sm:$0xf]
      %v6204 = vld [vmem:[%s6199 + $0x10] sm:$0xf]
      %v6205 = vld [vmem:[%s6199 + $0x14] sm:$0xf]
      %v6206 = vld [vmem:[%s6199 + $0x18] sm:$0xf]
      %v6207 = vld [vmem:[%s6199 + $0x1c] sm:$0xf]
      %v6208 = vld [vmem:[%s6199 + $0x20] sm:$0xf]
      %v6209 = vld [vmem:[%s6199 + $0x24] sm:$0xf]
      %v6210 = vld [vmem:[%s6199 + $0x28] sm:$0xf]
      %v6211 = vld [vmem:[%s6199 + $0x2c] sm:$0xf]
      %v6212 = vld [vmem:[%s6199 + $0x30] sm:$0xf]
      %v6213 = vld [vmem:[%s6199 + $0x34] sm:$0xf]
      %v6214 = vld [vmem:[%s6199 + $0x38] sm:$0xf]
      %v6215 = vld [vmem:[%s6199 + $0x3c] sm:$0xf]
      %v6232 = vunpack.c.l.b16 %v6200
      %v6233 = vunpack.c.l.b16 %v6201
      %v6234 = vunpack.c.l.b16 %v6202
      %v6235 = vunpack.c.l.b16 %v6203
      %v6236 = vunpack.c.l.b16 %v6204
      %v6237 = vunpack.c.l.b16 %v6205
      %v6238 = vunpack.c.l.b16 %v6206
      %v6239 = vunpack.c.l.b16 %v6207
      %v6240 = vunpack.c.l.b16 %v6208
      %v6241 = vunpack.c.l.b16 %v6209
      %v6242 = vunpack.c.l.b16 %v6210
      %v6243 = vunpack.c.l.b16 %v6211
      %v6244 = vunpack.c.l.b16 %v6212
      %v6245 = vunpack.c.l.b16 %v6213
      %v6246 = vunpack.c.l.b16 %v6214
      %v6247 = vunpack.c.l.b16 %v6215
      %v6248 = vpack.c.b16 %v6233, %v6232
      %v6249 = vpack.c.b16 %v6235, %v6234
      %v6250 = vpack.c.b16 %v6237, %v6236
      %v6251 = vpack.c.b16 %v6239, %v6238
      %v6252 = vpack.c.b16 %v6241, %v6240
      %v6253 = vpack.c.b16 %v6243, %v6242
      %v6254 = vpack.c.b16 %v6245, %v6244
      %v6255 = vpack.c.b16 %v6247, %v6246
      %6264 = vmatprep.subr.bf16.mxu0 0
      %6265 = vmatpush1.bf16.msra.mxu0 %v6248
      %6266 = vmatprep.subr.bf16.mxu0 0
      %6267 = vmatpush1.bf16.msra.mxu0 %v6249
      %6268 = vmatprep.subr.bf16.mxu0 0
      %6269 = vmatpush1.bf16.msra.mxu0 %v6250
      %6270 = vmatprep.subr.bf16.mxu0 0
      %6271 = vmatpush1.bf16.msra.mxu0 %v6251
      %6272 = vmatprep.subr.bf16.mxu0 0
      %6273 = vmatpush1.bf16.msra.mxu0 %v6252
      %6274 = vmatprep.subr.bf16.mxu0 0
      %6275 = vmatpush1.bf16.msra.mxu0 %v6253
      %6276 = vmatprep.subr.bf16.mxu0 0
      %6277 = vmatpush1.bf16.msra.mxu0 %v6254
      %6278 = vmatprep.subr.bf16.mxu0 0
      %6279 = vmatpush1.bf16.msra.mxu0 %v6255
      %6280 = vmatprep.subr.bf16.mxu0 0
      %6281 = vmatpush1.bf16.msra.mxu0 0
      %6282 = vmatprep.subr.bf16.mxu0 0
      %6283 = vmatpush1.bf16.msra.mxu0 0
      %6284 = vmatprep.subr.bf16.mxu0 0
      %6285 = vmatpush1.bf16.msra.mxu0 0
      %6286 = vmatprep.subr.bf16.mxu0 0
      %6287 = vmatpush1.bf16.msra.mxu0 0
      %6288 = vmatprep.subr.bf16.mxu0 0
      %6289 = vmatpush1.bf16.msra.mxu0 0
      %6290 = vmatprep.subr.bf16.mxu0 0
      %6291 = vmatpush1.bf16.msra.mxu0 0
      %6292 = vmatprep.subr.bf16.mxu0 0
      %6293 = vmatpush1.bf16.msra.mxu0 0
      %6294 = vmatprep.subr.bf16.mxu0 0
      %6295 = vmatpush1.bf16.msra.mxu0 0
      %6296 = vmatprep.mubr.bf16.mxu0 0
      %6297 = vmatmul.mubr.bf16.gmra.mrb[0].mxu0 %v6175
      %v6298 = vpop.f32.mrb[0].mxu0
      %v6299 = vadd.f32 0.0, %v6298
      %v6300 = vpop.f32.mrb[0].mxu0
      %v6301 = vpop.f32.mrb[0].mxu0
      %v6302 = vadd.f32 0.0, %v6301
      %v6303 = vpop.f32.mrb[0].mxu0
      %6304 = vmatprep.mubr.bf16.mxu0 0
      %6305 = vmatmul.mubr.bf16.gmra.mrb[0].mxu0 %v6176
      %v6306 = vpop.f32.mrb[0].mxu0
      %v6307 = vadd.f32 0.0, %v6306
      %v6308 = vpop.f32.mrb[0].mxu0
      %v6309 = vpop.f32.mrb[0].mxu0
      %v6310 = vadd.f32 0.0, %v6309
      %v6311 = vpop.f32.mrb[0].mxu0
      %6312 = vmatprep.mubr.bf16.mxu0 0
      %6313 = vmatmul.mubr.bf16.gmra.mrb[0].mxu0 %v6177
      %v6314 = vpop.f32.mrb[0].mxu0
      %v6315 = vadd.f32 0.0, %v6314
      %v6316 = vpop.f32.mrb[0].mxu0
      %v6317 = vpop.f32.mrb[0].mxu0
      %v6318 = vadd.f32 0.0, %v6317
      %v6319 = vpop.f32.mrb[0].mxu0
      %6320 = vmatprep.mubr.bf16.mxu0 0
      %6321 = vmatmul.mubr.bf16.gmra.mrb[0].mxu0 %v6178
      %v6322 = vpop.f32.mrb[0].mxu0
      %v6323 = vadd.f32 0.0, %v6322
      %v6324 = vpop.f32.mrb[0].mxu0
      %v6325 = vpop.f32.mrb[0].mxu0
      %v6326 = vadd.f32 0.0, %v6325
      %v6327 = vpop.f32.mrb[0].mxu0
      %6328 = vmatprep.mubr.bf16.mxu0 0
      %6329 = vmatmul.mubr.bf16.gmra.mrb[0].mxu0 %v6179
      %v6330 = vpop.f32.mrb[0].mxu0
      %v6331 = vadd.f32 0.0, %v6330
      %v6332 = vpop.f32.mrb[0].mxu0
      %v6333 = vpop.f32.mrb[0].mxu0
      %v6334 = vadd.f32 0.0, %v6333
      %v6335 = vpop.f32.mrb[0].mxu0
      %6336 = vmatprep.mubr.bf16.mxu0 0
      %6337 = vmatmul.mubr.bf16.gmra.mrb[0].mxu0 %v6180
      %v6338 = vpop.f32.mrb[0].mxu0
      %v6339 = vadd.f32 0.0, %v6338
      %v6340 = vpop.f32.mrb[0].mxu0
      %v6341 = vpop.f32.mrb[0].mxu0
      %v6342 = vadd.f32 0.0, %v6341
      %v6343 = vpop.f32.mrb[0].mxu0
      %6344 = vmatprep.mubr.bf16.mxu0 0
      %6345 = vmatmul.mubr.bf16.gmra.mrb[0].mxu0 %v6181
      %v6346 = vpop.f32.mrb[0].mxu0
      %v6347 = vadd.f32 0.0, %v6346
      %v6348 = vpop.f32.mrb[0].mxu0
      %v6349 = vpop.f32.mrb[0].mxu0
      %v6350 = vadd.f32 0.0, %v6349
      %v6351 = vpop.f32.mrb[0].mxu0
      %6352 = vmatprep.mubr.bf16.mxu0 0
      %6353 = vmatmul.mubr.bf16.gmra.mrb[0].mxu0 %v6182
      %v6354 = vpop.f32.mrb[0].mxu0
      %v6355 = vadd.f32 0.0, %v6354
      %v6356 = vpop.f32.mrb[0].mxu0
      %v6357 = vpop.f32.mrb[0].mxu0
      %v6358 = vadd.f32 0.0, %v6357
      %v6359 = vpop.f32.mrb[0].mxu0
      %6360 = vmatprep.mubr.bf16.mxu0 0
      %6361 = vmatmul.mubr.bf16.gmra.mrb[0].mxu0 %v6183
      %v6362 = vpop.f32.mrb[0].mxu0
      %v6363 = vadd.f32 0.0, %v6362
      %v6364 = vpop.f32.mrb[0].mxu0
      %v6365 = vpop.f32.mrb[0].mxu0
      %v6366 = vadd.f32 0.0, %v6365
      %v6367 = vpop.f32.mrb[0].mxu0
      %6368 = vmatprep.mubr.bf16.mxu0 0
      %6369 = vmatmul.mubr.bf16.gmra.mrb[0].mxu0 %v6184
      %v6370 = vpop.f32.mrb[0].mxu0
      %v6371 = vadd.f32 0.0, %v6370
      %v6372 = vpop.f32.mrb[0].mxu0
      %v6373 = vpop.f32.mrb[0].mxu0
      %v6374 = vadd.f32 0.0, %v6373
      %v6375 = vpop.f32.mrb[0].mxu0
      %6376 = vmatprep.mubr.bf16.mxu0 0
      %6377 = vmatmul.mubr.bf16.gmra.mrb[0].mxu0 %v6185
      %v6378 = vpop.f32.mrb[0].mxu0
      %v6379 = vadd.f32 0.0, %v6378
      %v6380 = vpop.f32.mrb[0].mxu0
      %v6381 = vpop.f32.mrb[0].mxu0
      %v6382 = vadd.f32 0.0, %v6381
      %v6383 = vpop.f32.mrb[0].mxu0
      %6384 = vmatprep.mubr.bf16.mxu0 0
      %6385 = vmatmul.mubr.bf16.gmra.mrb[0].mxu0 %v6186
      %v6386 = vpop.f32.mrb[0].mxu0
      %v6387 = vadd.f32 0.0, %v6386
      %v6388 = vpop.f32.mrb[0].mxu0
      %v6389 = vpop.f32.mrb[0].mxu0
      %v6390 = vadd.f32 0.0, %v6389
      %v6391 = vpop.f32.mrb[0].mxu0
      %6392 = vmatprep.mubr.bf16.mxu0 0
      %6393 = vmatmul.mubr.bf16.gmra.mrb[0].mxu0 %v6187
      %v6394 = vpop.f32.mrb[0].mxu0
      %v6395 = vadd.f32 0.0, %v6394
      %v6396 = vpop.f32.mrb[0].mxu0
      %v6397 = vpop.f32.mrb[0].mxu0
      %v6398 = vadd.f32 0.0, %v6397
      %v6399 = vpop.f32.mrb[0].mxu0
      %6400 = vmatprep.mubr.bf16.mxu0 0
      %6401 = vmatmul.mubr.bf16.gmra.mrb[0].mxu0 %v6188
      %v6402 = vpop.f32.mrb[0].mxu0
      %v6403 = vadd.f32 0.0, %v6402
      %v6404 = vpop.f32.mrb[0].mxu0
      %v6405 = vpop.f32.mrb[0].mxu0
      %v6406 = vadd.f32 0.0, %v6405
      %v6407 = vpop.f32.mrb[0].mxu0
      %6408 = vmatprep.mubr.bf16.mxu0 0
      %6409 = vmatmul.mubr.bf16.gmra.mrb[0].mxu0 %v6189
      %v6410 = vpop.f32.mrb[0].mxu0
      %v6411 = vadd.f32 0.0, %v6410
      %v6412 = vpop.f32.mrb[0].mxu0
      %v6413 = vpop.f32.mrb[0].mxu0
      %v6414 = vadd.f32 0.0, %v6413
      %v6415 = vpop.f32.mrb[0].mxu0
      %6416 = vmatprep.mubr.bf16.mxu0 0
      %6417 = vmatmul.mubr.bf16.gmra.mrb[0].mxu0 %v6190
      %v6418 = vpop.f32.mrb[0].mxu0
      %v6419 = vadd.f32 0.0, %v6418
      %v6420 = vpop.f32.mrb[0].mxu0
      %v6421 = vpop.f32.mrb[0].mxu0
      %v6422 = vadd.f32 0.0, %v6421
      %v6423 = vpop.f32.mrb[0].mxu0
      %6424 = vmatprep.mubr.bf16.mxu0 0
      %6425 = vmatmul.mubr.bf16.gmra.mrb[0].mxu0 %v6191
      %v6426 = vpop.f32.mrb[0].mxu0
      %v6427 = vadd.f32 0.0, %v6426
      %v6428 = vpop.f32.mrb[0].mxu0
      %v6429 = vpop.f32.mrb[0].mxu0
      %v6430 = vadd.f32 0.0, %v6429
      %v6431 = vpop.f32.mrb[0].mxu0
      %6432 = vmatprep.mubr.bf16.mxu0 0
      %6433 = vmatmul.mubr.bf16.gmra.mrb[0].mxu0 %v6192
      %v6434 = vpop.f32.mrb[0].mxu0
      %v6435 = vadd.f32 0.0, %v6434
      %v6436 = vpop.f32.mrb[0].mxu0
      %v6437 = vpop.f32.mrb[0].mxu0
      %v6438 = vadd.f32 0.0, %v6437
      %v6439 = vpop.f32.mrb[0].mxu0
      %6440 = vmatprep.mubr.bf16.mxu0 0
      %6441 = vmatmul.mubr.bf16.gmra.mrb[0].mxu0 %v6193
      %v6442 = vpop.f32.mrb[0].mxu0
      %v6443 = vadd.f32 0.0, %v6442
      %v6444 = vpop.f32.mrb[0].mxu0
      %v6445 = vpop.f32.mrb[0].mxu0
      %v6446 = vadd.f32 0.0, %v6445
      %v6447 = vpop.f32.mrb[0].mxu0
      %6448 = vmatprep.mubr.bf16.mxu0 0
      %6449 = vmatmul.mubr.bf16.gmra.mrb[0].mxu0 %v6194
      %v6450 = vpop.f32.mrb[0].mxu0
      %v6451 = vadd.f32 0.0, %v6450
      %v6452 = vpop.f32.mrb[0].mxu0
      %v6453 = vpop.f32.mrb[0].mxu0
      %v6454 = vadd.f32 0.0, %v6453
      %v6455 = vpop.f32.mrb[0].mxu0
      %6456 = vmatprep.mubr.bf16.mxu0 0
      %6457 = vmatmul.mubr.bf16.gmra.mrb[0].mxu0 %v6195
      %v6458 = vpop.f32.mrb[0].mxu0
      %v6459 = vadd.f32 0.0, %v6458
      %v6460 = vpop.f32.mrb[0].mxu0
      %v6461 = vpop.f32.mrb[0].mxu0
      %v6462 = vadd.f32 0.0, %v6461
      %v6463 = vpop.f32.mrb[0].mxu0
      %6464 = vmatprep.mubr.bf16.mxu0 0
      %6465 = vmatmul.mubr.bf16.gmra.mrb[0].mxu0 %v6196
      %v6466 = vpop.f32.mrb[0].mxu0
      %v6467 = vadd.f32 0.0, %v6466
      %v6468 = vpop.f32.mrb[0].mxu0
      %v6469 = vpop.f32.mrb[0].mxu0
      %v6470 = vadd.f32 0.0, %v6469
      %v6471 = vpop.f32.mrb[0].mxu0
      %6472 = vmatprep.mubr.bf16.mxu0 0
      %6473 = vmatmul.mubr.bf16.gmra.mrb[0].mxu0 %v6197
      %v6474 = vpop.f32.mrb[0].mxu0
      %v6475 = vadd.f32 0.0, %v6474
      %v6476 = vpop.f32.mrb[0].mxu0
      %v6477 = vpop.f32.mrb[0].mxu0
      %v6478 = vadd.f32 0.0, %v6477
      %v6479 = vpop.f32.mrb[0].mxu0
      %6480 = vmatprep.mubr.bf16.mxu0 0
      %6481 = vmatmul.mubr.bf16.gmra.mrb[0].mxu0 %v6198
      %v6482 = vpop.f32.mrb[0].mxu0
      %v6483 = vadd.f32 0.0, %v6482
      %v6484 = vpop.f32.mrb[0].mxu0
      %v6485 = vpop.f32.mrb[0].mxu0
      %v6486 = vadd.f32 0.0, %v6485
      %v6487 = vpop.f32.mrb[0].mxu0
      %6488 = vdwg.mxu0
      %v6489 = vadd.f32 %v6079, %v6299
      %v6490 = vadd.f32 %v6080, %v6302
      %v6491 = vadd.f32 %v6081, %v6307
      %v6492 = vadd.f32 %v6082, %v6310
      %v6493 = vadd.f32 %v6083, %v6315
      %v6494 = vadd.f32 %v6084, %v6318
      %v6495 = vadd.f32 %v6085, %v6323
      %v6496 = vadd.f32 %v6086, %v6326
      %v6497 = vadd.f32 %v6087, %v6331
      %v6498 = vadd.f32 %v6088, %v6334
      %v6499 = vadd.f32 %v6089, %v6339
      %v6500 = vadd.f32 %v6090, %v6342
      %v6501 = vadd.f32 %v6091, %v6347
      %v6502 = vadd.f32 %v6092, %v6350
      %v6503 = vadd.f32 %v6093, %v6355
      %v6504 = vadd.f32 %v6094, %v6358
      %v6505 = vadd.f32 %v6095, %v6363
      %v6506 = vadd.f32 %v6096, %v6366
      %v6507 = vadd.f32 %v6097, %v6371
      %v6508 = vadd.f32 %v6098, %v6374
      %v6509 = vadd.f32 %v6099, %v6379
      %v6510 = vadd.f32 %v6100, %v6382
      %v6511 = vadd.f32 %v6101, %v6387
      %v6512 = vadd.f32 %v6102, %v6390
      %v6513 = vadd.f32 %v6103, %v6395
      %v6514 = vadd.f32 %v6104, %v6398
      %v6515 = vadd.f32 %v6105, %v6403
      %v6516 = vadd.f32 %v6106, %v6406
      %v6517 = vadd.f32 %v6107, %v6411
      %v6518 = vadd.f32 %v6108, %v6414
      %v6519 = vadd.f32 %v6109, %v6419
      %v6520 = vadd.f32 %v6110, %v6422
      %v6521 = vadd.f32 %v6111, %v6427
      %v6522 = vadd.f32 %v6112, %v6430
      %v6523 = vadd.f32 %v6113, %v6435
      %v6524 = vadd.f32 %v6114, %v6438
      %v6525 = vadd.f32 %v6115, %v6443
      %v6526 = vadd.f32 %v6116, %v6446
      %v6527 = vadd.f32 %v6117, %v6451
      %v6528 = vadd.f32 %v6118, %v6454
      %v6529 = vadd.f32 %v6119, %v6459
      %v6530 = vadd.f32 %v6120, %v6462
      %v6531 = vadd.f32 %v6121, %v6467
      %v6532 = vadd.f32 %v6122, %v6470
      %v6533 = vadd.f32 %v6123, %v6475
      %v6534 = vadd.f32 %v6124, %v6478
      %v6535 = vadd.f32 %v6125, %v6483
      %v6536 = vadd.f32 %v6126, %v6486
      %v6537 = vld [vmem:[#allocation2 + $0x19] sm:$0xff]
      %v6538 = vld [vmem:[#allocation2 + $0x21] sm:$0xff]
      %v6539 = vld [vmem:[#allocation2 + $0x29] sm:$0xff]
      %v6540 = vld [vmem:[#allocation2 + $0x31] sm:$0xff]
      %v6541 = vld [vmem:[#allocation2 + $0x39] sm:$0xff]
      %v6542 = vld [vmem:[#allocation2 + $0x41] sm:$0xff]
      %v6543 = vld [vmem:[#allocation2 + $0x49] sm:$0xff]
      %v6544 = vld [vmem:[#allocation2 + $0x51] sm:$0xff]
      %v6545 = vld [vmem:[#allocation2 + $0x59] sm:$0xff]
      %v6546 = vld [vmem:[#allocation2 + $0x61] sm:$0xff]
      %v6547 = vld [vmem:[#allocation2 + $0x69] sm:$0xff]
      %v6548 = vld [vmem:[#allocation2 + $0x71] sm:$0xff]
      %v6549 = vld [vmem:[#allocation2 + $0x79] sm:$0xff]
      %v6550 = vld [vmem:[#allocation2 + $0x81] sm:$0xff]
      %v6551 = vld [vmem:[#allocation2 + $0x89] sm:$0xff]
      %v6552 = vld [vmem:[#allocation2 + $0x91] sm:$0xff]
      %v6553 = vld [vmem:[#allocation2 + $0x99] sm:$0xff]
      %v6554 = vld [vmem:[#allocation2 + $0xa1] sm:$0xff]
      %v6555 = vld [vmem:[#allocation2 + $0xa9] sm:$0xff]
      %v6556 = vld [vmem:[#allocation2 + $0xb1] sm:$0xff]
      %v6557 = vld [vmem:[#allocation2 + $0xb9] sm:$0xff]
      %v6558 = vld [vmem:[#allocation2 + $0xc1] sm:$0xff]
      %v6559 = vld [vmem:[#allocation2 + $0xc9] sm:$0xff]
      %v6560 = vld [vmem:[#allocation2 + $0xd1] sm:$0xff]
      %v6561 = vld [vmem:[#allocation2 + $0xd9] sm:$0xff]
      %v6562 = vld [vmem:[#allocation2 + $0xe1] sm:$0xff]
      %v6563 = vld [vmem:[#allocation2 + $0xe9] sm:$0xff]
      %v6564 = vld [vmem:[#allocation2 + $0xf1] sm:$0xff]
      %v6565 = vld [vmem:[#allocation2 + $0xf9] sm:$0xff]
      %v6566 = vld [vmem:[#allocation2 + $0x101] sm:$0xff]
      %v6567 = vld [vmem:[#allocation2 + $0x109] sm:$0xff]
      %v6568 = vld [vmem:[#allocation2 + $0x111] sm:$0xff]
      %v6569 = vld [vmem:[#allocation2 + $0x119] sm:$0xff]
      %v6570 = vld [vmem:[#allocation2 + $0x121] sm:$0xff]
      %v6571 = vld [vmem:[#allocation2 + $0x129] sm:$0xff]
      %v6572 = vld [vmem:[#allocation2 + $0x131] sm:$0xff]
      %v6573 = vld [vmem:[#allocation2 + $0x139] sm:$0xff]
      %v6574 = vld [vmem:[#allocation2 + $0x141] sm:$0xff]
      %v6575 = vld [vmem:[#allocation2 + $0x149] sm:$0xff]
      %v6576 = vld [vmem:[#allocation2 + $0x151] sm:$0xff]
      %v6577 = vld [vmem:[#allocation2 + $0x159] sm:$0xff]
      %v6578 = vld [vmem:[#allocation2 + $0x161] sm:$0xff]
      %v6579 = vld [vmem:[#allocation2 + $0x169] sm:$0xff]
      %v6580 = vld [vmem:[#allocation2 + $0x171] sm:$0xff]
      %v6581 = vld [vmem:[#allocation2 + $0x179] sm:$0xff]
      %v6582 = vld [vmem:[#allocation2 + $0x181] sm:$0xff]
      %v6583 = vld [vmem:[#allocation2 + $0x189] sm:$0xff]
      %v6584 = vld [vmem:[#allocation2 + $0x191] sm:$0xff]
      %v6585 = vpack.c.bf16 %v6538, %v6537
      %v6586 = vpack.c.bf16 %v6540, %v6539
      %v6587 = vpack.c.bf16 %v6542, %v6541
      %v6588 = vpack.c.bf16 %v6544, %v6543
      %v6589 = vpack.c.bf16 %v6546, %v6545
      %v6590 = vpack.c.bf16 %v6548, %v6547
      %v6591 = vpack.c.bf16 %v6550, %v6549
      %v6592 = vpack.c.bf16 %v6552, %v6551
      %v6593 = vpack.c.bf16 %v6554, %v6553
      %v6594 = vpack.c.bf16 %v6556, %v6555
      %v6595 = vpack.c.bf16 %v6558, %v6557
      %v6596 = vpack.c.bf16 %v6560, %v6559
      %v6597 = vpack.c.bf16 %v6562, %v6561
      %v6598 = vpack.c.bf16 %v6564, %v6563
      %v6599 = vpack.c.bf16 %v6566, %v6565
      %v6600 = vpack.c.bf16 %v6568, %v6567
      %v6601 = vpack.c.bf16 %v6570, %v6569
      %v6602 = vpack.c.bf16 %v6572, %v6571
      %v6603 = vpack.c.bf16 %v6574, %v6573
      %v6604 = vpack.c.bf16 %v6576, %v6575
      %v6605 = vpack.c.bf16 %v6578, %v6577
      %v6606 = vpack.c.bf16 %v6580, %v6579
      %v6607 = vpack.c.bf16 %v6582, %v6581
      %v6608 = vpack.c.bf16 %v6584, %v6583
      %s6609 = scalar_lea.vmem %s1, 832
      %v6610 = vld [vmem:[%s6609] sm:$0xf]
      %v6611 = vld [vmem:[%s6609 + $0x4] sm:$0xf]
      %v6612 = vld [vmem:[%s6609 + $0x8] sm:$0xf]
      %v6613 = vld [vmem:[%s6609 + $0xc] sm:$0xf]
      %v6614 = vld [vmem:[%s6609 + $0x10] sm:$0xf]
      %v6615 = vld [vmem:[%s6609 + $0x14] sm:$0xf]
      %v6616 = vld [vmem:[%s6609 + $0x18] sm:$0xf]
      %v6617 = vld [vmem:[%s6609 + $0x1c] sm:$0xf]
      %v6618 = vld [vmem:[%s6609 + $0x20] sm:$0xf]
      %v6619 = vld [vmem:[%s6609 + $0x24] sm:$0xf]
      %v6620 = vld [vmem:[%s6609 + $0x28] sm:$0xf]
      %v6621 = vld [vmem:[%s6609 + $0x2c] sm:$0xf]
      %v6622 = vld [vmem:[%s6609 + $0x30] sm:$0xf]
      %v6623 = vld [vmem:[%s6609 + $0x34] sm:$0xf]
      %v6624 = vld [vmem:[%s6609 + $0x38] sm:$0xf]
      %v6625 = vld [vmem:[%s6609 + $0x3c] sm:$0xf]
      %v6642 = vunpack.c.l.b16 %v6610
      %v6643 = vunpack.c.l.b16 %v6611
      %v6644 = vunpack.c.l.b16 %v6612
      %v6645 = vunpack.c.l.b16 %v6613
      %v6646 = vunpack.c.l.b16 %v6614
      %v6647 = vunpack.c.l.b16 %v6615
      %v6648 = vunpack.c.l.b16 %v6616
      %v6649 = vunpack.c.l.b16 %v6617
      %v6650 = vunpack.c.l.b16 %v6618
      %v6651 = vunpack.c.l.b16 %v6619
      %v6652 = vunpack.c.l.b16 %v6620
      %v6653 = vunpack.c.l.b16 %v6621
      %v6654 = vunpack.c.l.b16 %v6622
      %v6655 = vunpack.c.l.b16 %v6623
      %v6656 = vunpack.c.l.b16 %v6624
      %v6657 = vunpack.c.l.b16 %v6625
      %v6658 = vpack.c.b16 %v6643, %v6642
      %v6659 = vpack.c.b16 %v6645, %v6644
      %v6660 = vpack.c.b16 %v6647, %v6646
      %v6661 = vpack.c.b16 %v6649, %v6648
      %v6662 = vpack.c.b16 %v6651, %v6650
      %v6663 = vpack.c.b16 %v6653, %v6652
      %v6664 = vpack.c.b16 %v6655, %v6654
      %v6665 = vpack.c.b16 %v6657, %v6656
      %6674 = vmatprep.subr.bf16.mxu0 0
      %6675 = vmatpush1.bf16.msra.mxu0 %v6658
      %6676 = vmatprep.subr.bf16.mxu0 0
      %6677 = vmatpush1.bf16.msra.mxu0 %v6659
      %6678 = vmatprep.subr.bf16.mxu0 0
      %6679 = vmatpush1.bf16.msra.mxu0 %v6660
      %6680 = vmatprep.subr.bf16.mxu0 0
      %6681 = vmatpush1.bf16.msra.mxu0 %v6661
      %6682 = vmatprep.subr.bf16.mxu0 0
      %6683 = vmatpush1.bf16.msra.mxu0 %v6662
      %6684 = vmatprep.subr.bf16.mxu0 0
      %6685 = vmatpush1.bf16.msra.mxu0 %v6663
      %6686 = vmatprep.subr.bf16.mxu0 0
      %6687 = vmatpush1.bf16.msra.mxu0 %v6664
      %6688 = vmatprep.subr.bf16.mxu0 0
      %6689 = vmatpush1.bf16.msra.mxu0 %v6665
      %6690 = vmatprep.subr.bf16.mxu0 0
      %6691 = vmatpush1.bf16.msra.mxu0 0
      %6692 = vmatprep.subr.bf16.mxu0 0
      %6693 = vmatpush1.bf16.msra.mxu0 0
      %6694 = vmatprep.subr.bf16.mxu0 0
      %6695 = vmatpush1.bf16.msra.mxu0 0
      %6696 = vmatprep.subr.bf16.mxu0 0
      %6697 = vmatpush1.bf16.msra.mxu0 0
      %6698 = vmatprep.subr.bf16.mxu0 0
      %6699 = vmatpush1.bf16.msra.mxu0 0
      %6700 = vmatprep.subr.bf16.mxu0 0
      %6701 = vmatpush1.bf16.msra.mxu0 0
      %6702 = vmatprep.subr.bf16.mxu0 0
      %6703 = vmatpush1.bf16.msra.mxu0 0
      %6704 = vmatprep.subr.bf16.mxu0 0
      %6705 = vmatpush1.bf16.msra.mxu0 0
      %6706 = vmatprep.mubr.bf16.mxu0 0
      %6707 = vmatmul.mubr.bf16.gmra.mrb[0].mxu0 %v6585
      %v6708 = vpop.f32.mrb[0].mxu0
      %v6709 = vadd.f32 0.0, %v6708
      %v6710 = vpop.f32.mrb[0].mxu0
      %v6711 = vpop.f32.mrb[0].mxu0
      %v6712 = vadd.f32 0.0, %v6711
      %v6713 = vpop.f32.mrb[0].mxu0
      %6714 = vmatprep.mubr.bf16.mxu0 0
      %6715 = vmatmul.mubr.bf16.gmra.mrb[0].mxu0 %v6586
      %v6716 = vpop.f32.mrb[0].mxu0
      %v6717 = vadd.f32 0.0, %v6716
      %v6718 = vpop.f32.mrb[0].mxu0
      %v6719 = vpop.f32.mrb[0].mxu0
      %v6720 = vadd.f32 0.0, %v6719
      %v6721 = vpop.f32.mrb[0].mxu0
      %6722 = vmatprep.mubr.bf16.mxu0 0
      %6723 = vmatmul.mubr.bf16.gmra.mrb[0].mxu0 %v6587
      %v6724 = vpop.f32.mrb[0].mxu0
      %v6725 = vadd.f32 0.0, %v6724
      %v6726 = vpop.f32.mrb[0].mxu0
      %v6727 = vpop.f32.mrb[0].mxu0
      %v6728 = vadd.f32 0.0, %v6727
      %v6729 = vpop.f32.mrb[0].mxu0
      %6730 = vmatprep.mubr.bf16.mxu0 0
      %6731 = vmatmul.mubr.bf16.gmra.mrb[0].mxu0 %v6588
      %v6732 = vpop.f32.mrb[0].mxu0
      %v6733 = vadd.f32 0.0, %v6732
      %v6734 = vpop.f32.mrb[0].mxu0
      %v6735 = vpop.f32.mrb[0].mxu0
      %v6736 = vadd.f32 0.0, %v6735
      %v6737 = vpop.f32.mrb[0].mxu0
      %6738 = vmatprep.mubr.bf16.mxu0 0
      %6739 = vmatmul.mubr.bf16.gmra.mrb[0].mxu0 %v6589
      %v6740 = vpop.f32.mrb[0].mxu0
      %v6741 = vadd.f32 0.0, %v6740
      %v6742 = vpop.f32.mrb[0].mxu0
      %v6743 = vpop.f32.mrb[0].mxu0
      %v6744 = vadd.f32 0.0, %v6743
      %v6745 = vpop.f32.mrb[0].mxu0
      %6746 = vmatprep.mubr.bf16.mxu0 0
      %6747 = vmatmul.mubr.bf16.gmra.mrb[0].mxu0 %v6590
      %v6748 = vpop.f32.mrb[0].mxu0
      %v6749 = vadd.f32 0.0, %v6748
      %v6750 = vpop.f32.mrb[0].mxu0
      %v6751 = vpop.f32.mrb[0].mxu0
      %v6752 = vadd.f32 0.0, %v6751
      %v6753 = vpop.f32.mrb[0].mxu0
      %6754 = vmatprep.mubr.bf16.mxu0 0
      %6755 = vmatmul.mubr.bf16.gmra.mrb[0].mxu0 %v6591
      %v6756 = vpop.f32.mrb[0].mxu0
      %v6757 = vadd.f32 0.0, %v6756
      %v6758 = vpop.f32.mrb[0].mxu0
      %v6759 = vpop.f32.mrb[0].mxu0
      %v6760 = vadd.f32 0.0, %v6759
      %v6761 = vpop.f32.mrb[0].mxu0
      %6762 = vmatprep.mubr.bf16.mxu0 0
      %6763 = vmatmul.mubr.bf16.gmra.mrb[0].mxu0 %v6592
      %v6764 = vpop.f32.mrb[0].mxu0
      %v6765 = vadd.f32 0.0, %v6764
      %v6766 = vpop.f32.mrb[0].mxu0
      %v6767 = vpop.f32.mrb[0].mxu0
      %v6768 = vadd.f32 0.0, %v6767
      %v6769 = vpop.f32.mrb[0].mxu0
      %6770 = vmatprep.mubr.bf16.mxu0 0
      %6771 = vmatmul.mubr.bf16.gmra.mrb[0].mxu0 %v6593
      %v6772 = vpop.f32.mrb[0].mxu0
      %v6773 = vadd.f32 0.0, %v6772
      %v6774 = vpop.f32.mrb[0].mxu0
      %v6775 = vpop.f32.mrb[0].mxu0
      %v6776 = vadd.f32 0.0, %v6775
      %v6777 = vpop.f32.mrb[0].mxu0
      %6778 = vmatprep.mubr.bf16.mxu0 0
      %6779 = vmatmul.mubr.bf16.gmra.mrb[0].mxu0 %v6594
      %v6780 = vpop.f32.mrb[0].mxu0
      %v6781 = vadd.f32 0.0, %v6780
      %v6782 = vpop.f32.mrb[0].mxu0
      %v6783 = vpop.f32.mrb[0].mxu0
      %v6784 = vadd.f32 0.0, %v6783
      %v6785 = vpop.f32.mrb[0].mxu0
      %6786 = vmatprep.mubr.bf16.mxu0 0
      %6787 = vmatmul.mubr.bf16.gmra.mrb[0].mxu0 %v6595
      %v6788 = vpop.f32.mrb[0].mxu0
      %v6789 = vadd.f32 0.0, %v6788
      %v6790 = vpop.f32.mrb[0].mxu0
      %v6791 = vpop.f32.mrb[0].mxu0
      %v6792 = vadd.f32 0.0, %v6791
      %v6793 = vpop.f32.mrb[0].mxu0
      %6794 = vmatprep.mubr.bf16.mxu0 0
      %6795 = vmatmul.mubr.bf16.gmra.mrb[0].mxu0 %v6596
      %v6796 = vpop.f32.mrb[0].mxu0
      %v6797 = vadd.f32 0.0, %v6796
      %v6798 = vpop.f32.mrb[0].mxu0
      %v6799 = vpop.f32.mrb[0].mxu0
      %v6800 = vadd.f32 0.0, %v6799
      %v6801 = vpop.f32.mrb[0].mxu0
      %6802 = vmatprep.mubr.bf16.mxu0 0
      %6803 = vmatmul.mubr.bf16.gmra.mrb[0].mxu0 %v6597
      %v6804 = vpop.f32.mrb[0].mxu0
      %v6805 = vadd.f32 0.0, %v6804
      %v6806 = vpop.f32.mrb[0].mxu0
      %v6807 = vpop.f32.mrb[0].mxu0
      %v6808 = vadd.f32 0.0, %v6807
      %v6809 = vpop.f32.mrb[0].mxu0
      %6810 = vmatprep.mubr.bf16.mxu0 0
      %6811 = vmatmul.mubr.bf16.gmra.mrb[0].mxu0 %v6598
      %v6812 = vpop.f32.mrb[0].mxu0
      %v6813 = vadd.f32 0.0, %v6812
      %v6814 = vpop.f32.mrb[0].mxu0
      %v6815 = vpop.f32.mrb[0].mxu0
      %v6816 = vadd.f32 0.0, %v6815
      %v6817 = vpop.f32.mrb[0].mxu0
      %6818 = vmatprep.mubr.bf16.mxu0 0
      %6819 = vmatmul.mubr.bf16.gmra.mrb[0].mxu0 %v6599
      %v6820 = vpop.f32.mrb[0].mxu0
      %v6821 = vadd.f32 0.0, %v6820
      %v6822 = vpop.f32.mrb[0].mxu0
      %v6823 = vpop.f32.mrb[0].mxu0
      %v6824 = vadd.f32 0.0, %v6823
      %v6825 = vpop.f32.mrb[0].mxu0
      %6826 = vmatprep.mubr.bf16.mxu0 0
      %6827 = vmatmul.mubr.bf16.gmra.mrb[0].mxu0 %v6600
      %v6828 = vpop.f32.mrb[0].mxu0
      %v6829 = vadd.f32 0.0, %v6828
      %v6830 = vpop.f32.mrb[0].mxu0
      %v6831 = vpop.f32.mrb[0].mxu0
      %v6832 = vadd.f32 0.0, %v6831
      %v6833 = vpop.f32.mrb[0].mxu0
      %6834 = vmatprep.mubr.bf16.mxu0 0
      %6835 = vmatmul.mubr.bf16.gmra.mrb[0].mxu0 %v6601
      %v6836 = vpop.f32.mrb[0].mxu0
      %v6837 = vadd.f32 0.0, %v6836
      %v6838 = vpop.f32.mrb[0].mxu0
      %v6839 = vpop.f32.mrb[0].mxu0
      %v6840 = vadd.f32 0.0, %v6839
      %v6841 = vpop.f32.mrb[0].mxu0
      %6842 = vmatprep.mubr.bf16.mxu0 0
      %6843 = vmatmul.mubr.bf16.gmra.mrb[0].mxu0 %v6602
      %v6844 = vpop.f32.mrb[0].mxu0
      %v6845 = vadd.f32 0.0, %v6844
      %v6846 = vpop.f32.mrb[0].mxu0
      %v6847 = vpop.f32.mrb[0].mxu0
      %v6848 = vadd.f32 0.0, %v6847
      %v6849 = vpop.f32.mrb[0].mxu0
      %6850 = vmatprep.mubr.bf16.mxu0 0
      %6851 = vmatmul.mubr.bf16.gmra.mrb[0].mxu0 %v6603
      %v6852 = vpop.f32.mrb[0].mxu0
      %v6853 = vadd.f32 0.0, %v6852
      %v6854 = vpop.f32.mrb[0].mxu0
      %v6855 = vpop.f32.mrb[0].mxu0
      %v6856 = vadd.f32 0.0, %v6855
      %v6857 = vpop.f32.mrb[0].mxu0
      %6858 = vmatprep.mubr.bf16.mxu0 0
      %6859 = vmatmul.mubr.bf16.gmra.mrb[0].mxu0 %v6604
      %v6860 = vpop.f32.mrb[0].mxu0
      %v6861 = vadd.f32 0.0, %v6860
      %v6862 = vpop.f32.mrb[0].mxu0
      %v6863 = vpop.f32.mrb[0].mxu0
      %v6864 = vadd.f32 0.0, %v6863
      %v6865 = vpop.f32.mrb[0].mxu0
      %6866 = vmatprep.mubr.bf16.mxu0 0
      %6867 = vmatmul.mubr.bf16.gmra.mrb[0].mxu0 %v6605
      %v6868 = vpop.f32.mrb[0].mxu0
      %v6869 = vadd.f32 0.0, %v6868
      %v6870 = vpop.f32.mrb[0].mxu0
      %v6871 = vpop.f32.mrb[0].mxu0
      %v6872 = vadd.f32 0.0, %v6871
      %v6873 = vpop.f32.mrb[0].mxu0
      %6874 = vmatprep.mubr.bf16.mxu0 0
      %6875 = vmatmul.mubr.bf16.gmra.mrb[0].mxu0 %v6606
      %v6876 = vpop.f32.mrb[0].mxu0
      %v6877 = vadd.f32 0.0, %v6876
      %v6878 = vpop.f32.mrb[0].mxu0
      %v6879 = vpop.f32.mrb[0].mxu0
      %v6880 = vadd.f32 0.0, %v6879
      %v6881 = vpop.f32.mrb[0].mxu0
      %6882 = vmatprep.mubr.bf16.mxu0 0
      %6883 = vmatmul.mubr.bf16.gmra.mrb[0].mxu0 %v6607
      %v6884 = vpop.f32.mrb[0].mxu0
      %v6885 = vadd.f32 0.0, %v6884
      %v6886 = vpop.f32.mrb[0].mxu0
      %v6887 = vpop.f32.mrb[0].mxu0
      %v6888 = vadd.f32 0.0, %v6887
      %v6889 = vpop.f32.mrb[0].mxu0
      %6890 = vmatprep.mubr.bf16.mxu0 0
      %6891 = vmatmul.mubr.bf16.gmra.mrb[0].mxu0 %v6608
      %v6892 = vpop.f32.mrb[0].mxu0
      %v6893 = vadd.f32 0.0, %v6892
      %v6894 = vpop.f32.mrb[0].mxu0
      %v6895 = vpop.f32.mrb[0].mxu0
      %v6896 = vadd.f32 0.0, %v6895
      %v6897 = vpop.f32.mrb[0].mxu0
      %6898 = vdwg.mxu0
      %v6899 = vadd.f32 %v6489, %v6709
      %v6900 = vadd.f32 %v6490, %v6712
      %v6901 = vadd.f32 %v6491, %v6717
      %v6902 = vadd.f32 %v6492, %v6720
      %v6903 = vadd.f32 %v6493, %v6725
      %v6904 = vadd.f32 %v6494, %v6728
      %v6905 = vadd.f32 %v6495, %v6733
      %v6906 = vadd.f32 %v6496, %v6736
      %v6907 = vadd.f32 %v6497, %v6741
      %v6908 = vadd.f32 %v6498, %v6744
      %v6909 = vadd.f32 %v6499, %v6749
      %v6910 = vadd.f32 %v6500, %v6752
      %v6911 = vadd.f32 %v6501, %v6757
      %v6912 = vadd.f32 %v6502, %v6760
      %v6913 = vadd.f32 %v6503, %v6765
      %v6914 = vadd.f32 %v6504, %v6768
      %v6915 = vadd.f32 %v6505, %v6773
      %v6916 = vadd.f32 %v6506, %v6776
      %v6917 = vadd.f32 %v6507, %v6781
      %v6918 = vadd.f32 %v6508, %v6784
      %v6919 = vadd.f32 %v6509, %v6789
      %v6920 = vadd.f32 %v6510, %v6792
      %v6921 = vadd.f32 %v6511, %v6797
      %v6922 = vadd.f32 %v6512, %v6800
      %v6923 = vadd.f32 %v6513, %v6805
      %v6924 = vadd.f32 %v6514, %v6808
      %v6925 = vadd.f32 %v6515, %v6813
      %v6926 = vadd.f32 %v6516, %v6816
      %v6927 = vadd.f32 %v6517, %v6821
      %v6928 = vadd.f32 %v6518, %v6824
      %v6929 = vadd.f32 %v6519, %v6829
      %v6930 = vadd.f32 %v6520, %v6832
      %v6931 = vadd.f32 %v6521, %v6837
      %v6932 = vadd.f32 %v6522, %v6840
      %v6933 = vadd.f32 %v6523, %v6845
      %v6934 = vadd.f32 %v6524, %v6848
      %v6935 = vadd.f32 %v6525, %v6853
      %v6936 = vadd.f32 %v6526, %v6856
      %v6937 = vadd.f32 %v6527, %v6861
      %v6938 = vadd.f32 %v6528, %v6864
      %v6939 = vadd.f32 %v6529, %v6869
      %v6940 = vadd.f32 %v6530, %v6872
      %v6941 = vadd.f32 %v6531, %v6877
      %v6942 = vadd.f32 %v6532, %v6880
      %v6943 = vadd.f32 %v6533, %v6885
      %v6944 = vadd.f32 %v6534, %v6888
      %v6945 = vadd.f32 %v6535, %v6893
      %v6946 = vadd.f32 %v6536, %v6896
      %v6947 = vld [vmem:[#allocation2 + $0x1a] sm:$0xff]
      %v6948 = vld [vmem:[#allocation2 + $0x22] sm:$0xff]
      %v6949 = vld [vmem:[#allocation2 + $0x2a] sm:$0xff]
      %v6950 = vld [vmem:[#allocation2 + $0x32] sm:$0xff]
      %v6951 = vld [vmem:[#allocation2 + $0x3a] sm:$0xff]
      %v6952 = vld [vmem:[#allocation2 + $0x42] sm:$0xff]
      %v6953 = vld [vmem:[#allocation2 + $0x4a] sm:$0xff]
      %v6954 = vld [vmem:[#allocation2 + $0x52] sm:$0xff]
      %v6955 = vld [vmem:[#allocation2 + $0x5a] sm:$0xff]
      %v6956 = vld [vmem:[#allocation2 + $0x62] sm:$0xff]
      %v6957 = vld [vmem:[#allocation2 + $0x6a] sm:$0xff]
      %v6958 = vld [vmem:[#allocation2 + $0x72] sm:$0xff]
      %v6959 = vld [vmem:[#allocation2 + $0x7a] sm:$0xff]
      %v6960 = vld [vmem:[#allocation2 + $0x82] sm:$0xff]
      %v6961 = vld [vmem:[#allocation2 + $0x8a] sm:$0xff]
      %v6962 = vld [vmem:[#allocation2 + $0x92] sm:$0xff]
      %v6963 = vld [vmem:[#allocation2 + $0x9a] sm:$0xff]
      %v6964 = vld [vmem:[#allocation2 + $0xa2] sm:$0xff]
      %v6965 = vld [vmem:[#allocation2 + $0xaa] sm:$0xff]
      %v6966 = vld [vmem:[#allocation2 + $0xb2] sm:$0xff]
      %v6967 = vld [vmem:[#allocation2 + $0xba] sm:$0xff]
      %v6968 = vld [vmem:[#allocation2 + $0xc2] sm:$0xff]
      %v6969 = vld [vmem:[#allocation2 + $0xca] sm:$0xff]
      %v6970 = vld [vmem:[#allocation2 + $0xd2] sm:$0xff]
      %v6971 = vld [vmem:[#allocation2 + $0xda] sm:$0xff]
      %v6972 = vld [vmem:[#allocation2 + $0xe2] sm:$0xff]
      %v6973 = vld [vmem:[#allocation2 + $0xea] sm:$0xff]
      %v6974 = vld [vmem:[#allocation2 + $0xf2] sm:$0xff]
      %v6975 = vld [vmem:[#allocation2 + $0xfa] sm:$0xff]
      %v6976 = vld [vmem:[#allocation2 + $0x102] sm:$0xff]
      %v6977 = vld [vmem:[#allocation2 + $0x10a] sm:$0xff]
      %v6978 = vld [vmem:[#allocation2 + $0x112] sm:$0xff]
      %v6979 = vld [vmem:[#allocation2 + $0x11a] sm:$0xff]
      %v6980 = vld [vmem:[#allocation2 + $0x122] sm:$0xff]
      %v6981 = vld [vmem:[#allocation2 + $0x12a] sm:$0xff]
      %v6982 = vld [vmem:[#allocation2 + $0x132] sm:$0xff]
      %v6983 = vld [vmem:[#allocation2 + $0x13a] sm:$0xff]
      %v6984 = vld [vmem:[#allocation2 + $0x142] sm:$0xff]
      %v6985 = vld [vmem:[#allocation2 + $0x14a] sm:$0xff]
      %v6986 = vld [vmem:[#allocation2 + $0x152] sm:$0xff]
      %v6987 = vld [vmem:[#allocation2 + $0x15a] sm:$0xff]
      %v6988 = vld [vmem:[#allocation2 + $0x162] sm:$0xff]
      %v6989 = vld [vmem:[#allocation2 + $0x16a] sm:$0xff]
      %v6990 = vld [vmem:[#allocation2 + $0x172] sm:$0xff]
      %v6991 = vld [vmem:[#allocation2 + $0x17a] sm:$0xff]
      %v6992 = vld [vmem:[#allocation2 + $0x182] sm:$0xff]
      %v6993 = vld [vmem:[#allocation2 + $0x18a] sm:$0xff]
      %v6994 = vld [vmem:[#allocation2 + $0x192] sm:$0xff]
      %v6995 = vpack.c.bf16 %v6948, %v6947
      %v6996 = vpack.c.bf16 %v6950, %v6949
      %v6997 = vpack.c.bf16 %v6952, %v6951
      %v6998 = vpack.c.bf16 %v6954, %v6953
      %v6999 = vpack.c.bf16 %v6956, %v6955
      %v7000 = vpack.c.bf16 %v6958, %v6957
      %v7001 = vpack.c.bf16 %v6960, %v6959
      %v7002 = vpack.c.bf16 %v6962, %v6961
      %v7003 = vpack.c.bf16 %v6964, %v6963
      %v7004 = vpack.c.bf16 %v6966, %v6965
      %v7005 = vpack.c.bf16 %v6968, %v6967
      %v7006 = vpack.c.bf16 %v6970, %v6969
      %v7007 = vpack.c.bf16 %v6972, %v6971
      %v7008 = vpack.c.bf16 %v6974, %v6973
      %v7009 = vpack.c.bf16 %v6976, %v6975
      %v7010 = vpack.c.bf16 %v6978, %v6977
      %v7011 = vpack.c.bf16 %v6980, %v6979
      %v7012 = vpack.c.bf16 %v6982, %v6981
      %v7013 = vpack.c.bf16 %v6984, %v6983
      %v7014 = vpack.c.bf16 %v6986, %v6985
      %v7015 = vpack.c.bf16 %v6988, %v6987
      %v7016 = vpack.c.bf16 %v6990, %v6989
      %v7017 = vpack.c.bf16 %v6992, %v6991
      %v7018 = vpack.c.bf16 %v6994, %v6993
      %s7019 = scalar_lea.vmem %s1, 896
      %v7020 = vld [vmem:[%s7019] sm:$0xf]
      %v7021 = vld [vmem:[%s7019 + $0x4] sm:$0xf]
      %v7022 = vld [vmem:[%s7019 + $0x8] sm:$0xf]
      %v7023 = vld [vmem:[%s7019 + $0xc] sm:$0xf]
      %v7024 = vld [vmem:[%s7019 + $0x10] sm:$0xf]
      %v7025 = vld [vmem:[%s7019 + $0x14] sm:$0xf]
      %v7026 = vld [vmem:[%s7019 + $0x18] sm:$0xf]
      %v7027 = vld [vmem:[%s7019 + $0x1c] sm:$0xf]
      %v7028 = vld [vmem:[%s7019 + $0x20] sm:$0xf]
      %v7029 = vld [vmem:[%s7019 + $0x24] sm:$0xf]
      %v7030 = vld [vmem:[%s7019 + $0x28] sm:$0xf]
      %v7031 = vld [vmem:[%s7019 + $0x2c] sm:$0xf]
      %v7032 = vld [vmem:[%s7019 + $0x30] sm:$0xf]
      %v7033 = vld [vmem:[%s7019 + $0x34] sm:$0xf]
      %v7034 = vld [vmem:[%s7019 + $0x38] sm:$0xf]
      %v7035 = vld [vmem:[%s7019 + $0x3c] sm:$0xf]
      %v7052 = vunpack.c.l.b16 %v7020
      %v7053 = vunpack.c.l.b16 %v7021
      %v7054 = vunpack.c.l.b16 %v7022
      %v7055 = vunpack.c.l.b16 %v7023
      %v7056 = vunpack.c.l.b16 %v7024
      %v7057 = vunpack.c.l.b16 %v7025
      %v7058 = vunpack.c.l.b16 %v7026
      %v7059 = vunpack.c.l.b16 %v7027
      %v7060 = vunpack.c.l.b16 %v7028
      %v7061 = vunpack.c.l.b16 %v7029
      %v7062 = vunpack.c.l.b16 %v7030
      %v7063 = vunpack.c.l.b16 %v7031
      %v7064 = vunpack.c.l.b16 %v7032
      %v7065 = vunpack.c.l.b16 %v7033
      %v7066 = vunpack.c.l.b16 %v7034
      %v7067 = vunpack.c.l.b16 %v7035
      %v7068 = vpack.c.b16 %v7053, %v7052
      %v7069 = vpack.c.b16 %v7055, %v7054
      %v7070 = vpack.c.b16 %v7057, %v7056
      %v7071 = vpack.c.b16 %v7059, %v7058
      %v7072 = vpack.c.b16 %v7061, %v7060
      %v7073 = vpack.c.b16 %v7063, %v7062
      %v7074 = vpack.c.b16 %v7065, %v7064
      %v7075 = vpack.c.b16 %v7067, %v7066
      %7084 = vmatprep.subr.bf16.mxu0 0
      %7085 = vmatpush1.bf16.msra.mxu0 %v7068
      %7086 = vmatprep.subr.bf16.mxu0 0
      %7087 = vmatpush1.bf16.msra.mxu0 %v7069
      %7088 = vmatprep.subr.bf16.mxu0 0
      %7089 = vmatpush1.bf16.msra.mxu0 %v7070
      %7090 = vmatprep.subr.bf16.mxu0 0
      %7091 = vmatpush1.bf16.msra.mxu0 %v7071
      %7092 = vmatprep.subr.bf16.mxu0 0
      %7093 = vmatpush1.bf16.msra.mxu0 %v7072
      %7094 = vmatprep.subr.bf16.mxu0 0
      %7095 = vmatpush1.bf16.msra.mxu0 %v7073
      %7096 = vmatprep.subr.bf16.mxu0 0
      %7097 = vmatpush1.bf16.msra.mxu0 %v7074
      %7098 = vmatprep.subr.bf16.mxu0 0
      %7099 = vmatpush1.bf16.msra.mxu0 %v7075
      %7100 = vmatprep.subr.bf16.mxu0 0
      %7101 = vmatpush1.bf16.msra.mxu0 0
      %7102 = vmatprep.subr.bf16.mxu0 0
      %7103 = vmatpush1.bf16.msra.mxu0 0
      %7104 = vmatprep.subr.bf16.mxu0 0
      %7105 = vmatpush1.bf16.msra.mxu0 0
      %7106 = vmatprep.subr.bf16.mxu0 0
      %7107 = vmatpush1.bf16.msra.mxu0 0
      %7108 = vmatprep.subr.bf16.mxu0 0
      %7109 = vmatpush1.bf16.msra.mxu0 0
      %7110 = vmatprep.subr.bf16.mxu0 0
      %7111 = vmatpush1.bf16.msra.mxu0 0
      %7112 = vmatprep.subr.bf16.mxu0 0
      %7113 = vmatpush1.bf16.msra.mxu0 0
      %7114 = vmatprep.subr.bf16.mxu0 0
      %7115 = vmatpush1.bf16.msra.mxu0 0
      %7116 = vmatprep.mubr.bf16.mxu0 0
      %7117 = vmatmul.mubr.bf16.gmra.mrb[0].mxu0 %v6995
      %v7118 = vpop.f32.mrb[0].mxu0
      %v7119 = vadd.f32 0.0, %v7118
      %v7120 = vpop.f32.mrb[0].mxu0
      %v7121 = vpop.f32.mrb[0].mxu0
      %v7122 = vadd.f32 0.0, %v7121
      %v7123 = vpop.f32.mrb[0].mxu0
      %7124 = vmatprep.mubr.bf16.mxu0 0
      %7125 = vmatmul.mubr.bf16.gmra.mrb[0].mxu0 %v6996
      %v7126 = vpop.f32.mrb[0].mxu0
      %v7127 = vadd.f32 0.0, %v7126
      %v7128 = vpop.f32.mrb[0].mxu0
      %v7129 = vpop.f32.mrb[0].mxu0
      %v7130 = vadd.f32 0.0, %v7129
      %v7131 = vpop.f32.mrb[0].mxu0
      %7132 = vmatprep.mubr.bf16.mxu0 0
      %7133 = vmatmul.mubr.bf16.gmra.mrb[0].mxu0 %v6997
      %v7134 = vpop.f32.mrb[0].mxu0
      %v7135 = vadd.f32 0.0, %v7134
      %v7136 = vpop.f32.mrb[0].mxu0
      %v7137 = vpop.f32.mrb[0].mxu0
      %v7138 = vadd.f32 0.0, %v7137
      %v7139 = vpop.f32.mrb[0].mxu0
      %7140 = vmatprep.mubr.bf16.mxu0 0
      %7141 = vmatmul.mubr.bf16.gmra.mrb[0].mxu0 %v6998
      %v7142 = vpop.f32.mrb[0].mxu0
      %v7143 = vadd.f32 0.0, %v7142
      %v7144 = vpop.f32.mrb[0].mxu0
      %v7145 = vpop.f32.mrb[0].mxu0
      %v7146 = vadd.f32 0.0, %v7145
      %v7147 = vpop.f32.mrb[0].mxu0
      %7148 = vmatprep.mubr.bf16.mxu0 0
      %7149 = vmatmul.mubr.bf16.gmra.mrb[0].mxu0 %v6999
      %v7150 = vpop.f32.mrb[0].mxu0
      %v7151 = vadd.f32 0.0, %v7150
      %v7152 = vpop.f32.mrb[0].mxu0
      %v7153 = vpop.f32.mrb[0].mxu0
      %v7154 = vadd.f32 0.0, %v7153
      %v7155 = vpop.f32.mrb[0].mxu0
      %7156 = vmatprep.mubr.bf16.mxu0 0
      %7157 = vmatmul.mubr.bf16.gmra.mrb[0].mxu0 %v7000
      %v7158 = vpop.f32.mrb[0].mxu0
      %v7159 = vadd.f32 0.0, %v7158
      %v7160 = vpop.f32.mrb[0].mxu0
      %v7161 = vpop.f32.mrb[0].mxu0
      %v7162 = vadd.f32 0.0, %v7161
      %v7163 = vpop.f32.mrb[0].mxu0
      %7164 = vmatprep.mubr.bf16.mxu0 0
      %7165 = vmatmul.mubr.bf16.gmra.mrb[0].mxu0 %v7001
      %v7166 = vpop.f32.mrb[0].mxu0
      %v7167 = vadd.f32 0.0, %v7166
      %v7168 = vpop.f32.mrb[0].mxu0
      %v7169 = vpop.f32.mrb[0].mxu0
      %v7170 = vadd.f32 0.0, %v7169
      %v7171 = vpop.f32.mrb[0].mxu0
      %7172 = vmatprep.mubr.bf16.mxu0 0
      %7173 = vmatmul.mubr.bf16.gmra.mrb[0].mxu0 %v7002
      %v7174 = vpop.f32.mrb[0].mxu0
      %v7175 = vadd.f32 0.0, %v7174
      %v7176 = vpop.f32.mrb[0].mxu0
      %v7177 = vpop.f32.mrb[0].mxu0
      %v7178 = vadd.f32 0.0, %v7177
      %v7179 = vpop.f32.mrb[0].mxu0
      %7180 = vmatprep.mubr.bf16.mxu0 0
      %7181 = vmatmul.mubr.bf16.gmra.mrb[0].mxu0 %v7003
      %v7182 = vpop.f32.mrb[0].mxu0
      %v7183 = vadd.f32 0.0, %v7182
      %v7184 = vpop.f32.mrb[0].mxu0
      %v7185 = vpop.f32.mrb[0].mxu0
      %v7186 = vadd.f32 0.0, %v7185
      %v7187 = vpop.f32.mrb[0].mxu0
      %7188 = vmatprep.mubr.bf16.mxu0 0
      %7189 = vmatmul.mubr.bf16.gmra.mrb[0].mxu0 %v7004
      %v7190 = vpop.f32.mrb[0].mxu0
      %v7191 = vadd.f32 0.0, %v7190
      %v7192 = vpop.f32.mrb[0].mxu0
      %v7193 = vpop.f32.mrb[0].mxu0
      %v7194 = vadd.f32 0.0, %v7193
      %v7195 = vpop.f32.mrb[0].mxu0
      %7196 = vmatprep.mubr.bf16.mxu0 0
      %7197 = vmatmul.mubr.bf16.gmra.mrb[0].mxu0 %v7005
      %v7198 = vpop.f32.mrb[0].mxu0
      %v7199 = vadd.f32 0.0, %v7198
      %v7200 = vpop.f32.mrb[0].mxu0
      %v7201 = vpop.f32.mrb[0].mxu0
      %v7202 = vadd.f32 0.0, %v7201
      %v7203 = vpop.f32.mrb[0].mxu0
      %7204 = vmatprep.mubr.bf16.mxu0 0
      %7205 = vmatmul.mubr.bf16.gmra.mrb[0].mxu0 %v7006
      %v7206 = vpop.f32.mrb[0].mxu0
      %v7207 = vadd.f32 0.0, %v7206
      %v7208 = vpop.f32.mrb[0].mxu0
      %v7209 = vpop.f32.mrb[0].mxu0
      %v7210 = vadd.f32 0.0, %v7209
      %v7211 = vpop.f32.mrb[0].mxu0
      %7212 = vmatprep.mubr.bf16.mxu0 0
      %7213 = vmatmul.mubr.bf16.gmra.mrb[0].mxu0 %v7007
      %v7214 = vpop.f32.mrb[0].mxu0
      %v7215 = vadd.f32 0.0, %v7214
      %v7216 = vpop.f32.mrb[0].mxu0
      %v7217 = vpop.f32.mrb[0].mxu0
      %v7218 = vadd.f32 0.0, %v7217
      %v7219 = vpop.f32.mrb[0].mxu0
      %7220 = vmatprep.mubr.bf16.mxu0 0
      %7221 = vmatmul.mubr.bf16.gmra.mrb[0].mxu0 %v7008
      %v7222 = vpop.f32.mrb[0].mxu0
      %v7223 = vadd.f32 0.0, %v7222
      %v7224 = vpop.f32.mrb[0].mxu0
      %v7225 = vpop.f32.mrb[0].mxu0
      %v7226 = vadd.f32 0.0, %v7225
      %v7227 = vpop.f32.mrb[0].mxu0
      %7228 = vmatprep.mubr.bf16.mxu0 0
      %7229 = vmatmul.mubr.bf16.gmra.mrb[0].mxu0 %v7009
      %v7230 = vpop.f32.mrb[0].mxu0
      %v7231 = vadd.f32 0.0, %v7230
      %v7232 = vpop.f32.mrb[0].mxu0
      %v7233 = vpop.f32.mrb[0].mxu0
      %v7234 = vadd.f32 0.0, %v7233
      %v7235 = vpop.f32.mrb[0].mxu0
      %7236 = vmatprep.mubr.bf16.mxu0 0
      %7237 = vmatmul.mubr.bf16.gmra.mrb[0].mxu0 %v7010
      %v7238 = vpop.f32.mrb[0].mxu0
      %v7239 = vadd.f32 0.0, %v7238
      %v7240 = vpop.f32.mrb[0].mxu0
      %v7241 = vpop.f32.mrb[0].mxu0
      %v7242 = vadd.f32 0.0, %v7241
      %v7243 = vpop.f32.mrb[0].mxu0
      %7244 = vmatprep.mubr.bf16.mxu0 0
      %7245 = vmatmul.mubr.bf16.gmra.mrb[0].mxu0 %v7011
      %v7246 = vpop.f32.mrb[0].mxu0
      %v7247 = vadd.f32 0.0, %v7246
      %v7248 = vpop.f32.mrb[0].mxu0
      %v7249 = vpop.f32.mrb[0].mxu0
      %v7250 = vadd.f32 0.0, %v7249
      %v7251 = vpop.f32.mrb[0].mxu0
      %7252 = vmatprep.mubr.bf16.mxu0 0
      %7253 = vmatmul.mubr.bf16.gmra.mrb[0].mxu0 %v7012
      %v7254 = vpop.f32.mrb[0].mxu0
      %v7255 = vadd.f32 0.0, %v7254
      %v7256 = vpop.f32.mrb[0].mxu0
      %v7257 = vpop.f32.mrb[0].mxu0
      %v7258 = vadd.f32 0.0, %v7257
      %v7259 = vpop.f32.mrb[0].mxu0
      %7260 = vmatprep.mubr.bf16.mxu0 0
      %7261 = vmatmul.mubr.bf16.gmra.mrb[0].mxu0 %v7013
      %v7262 = vpop.f32.mrb[0].mxu0
      %v7263 = vadd.f32 0.0, %v7262
      %v7264 = vpop.f32.mrb[0].mxu0
      %v7265 = vpop.f32.mrb[0].mxu0
      %v7266 = vadd.f32 0.0, %v7265
      %v7267 = vpop.f32.mrb[0].mxu0
      %7268 = vmatprep.mubr.bf16.mxu0 0
      %7269 = vmatmul.mubr.bf16.gmra.mrb[0].mxu0 %v7014
      %v7270 = vpop.f32.mrb[0].mxu0
      %v7271 = vadd.f32 0.0, %v7270
      %v7272 = vpop.f32.mrb[0].mxu0
      %v7273 = vpop.f32.mrb[0].mxu0
      %v7274 = vadd.f32 0.0, %v7273
      %v7275 = vpop.f32.mrb[0].mxu0
      %7276 = vmatprep.mubr.bf16.mxu0 0
      %7277 = vmatmul.mubr.bf16.gmra.mrb[0].mxu0 %v7015
      %v7278 = vpop.f32.mrb[0].mxu0
      %v7279 = vadd.f32 0.0, %v7278
      %v7280 = vpop.f32.mrb[0].mxu0
      %v7281 = vpop.f32.mrb[0].mxu0
      %v7282 = vadd.f32 0.0, %v7281
      %v7283 = vpop.f32.mrb[0].mxu0
      %7284 = vmatprep.mubr.bf16.mxu0 0
      %7285 = vmatmul.mubr.bf16.gmra.mrb[0].mxu0 %v7016
      %v7286 = vpop.f32.mrb[0].mxu0
      %v7287 = vadd.f32 0.0, %v7286
      %v7288 = vpop.f32.mrb[0].mxu0
      %v7289 = vpop.f32.mrb[0].mxu0
      %v7290 = vadd.f32 0.0, %v7289
      %v7291 = vpop.f32.mrb[0].mxu0
      %7292 = vmatprep.mubr.bf16.mxu0 0
      %7293 = vmatmul.mubr.bf16.gmra.mrb[0].mxu0 %v7017
      %v7294 = vpop.f32.mrb[0].mxu0
      %v7295 = vadd.f32 0.0, %v7294
      %v7296 = vpop.f32.mrb[0].mxu0
      %v7297 = vpop.f32.mrb[0].mxu0
      %v7298 = vadd.f32 0.0, %v7297
      %v7299 = vpop.f32.mrb[0].mxu0
      %7300 = vmatprep.mubr.bf16.mxu0 0
      %7301 = vmatmul.mubr.bf16.gmra.mrb[0].mxu0 %v7018
      %v7302 = vpop.f32.mrb[0].mxu0
      %v7303 = vadd.f32 0.0, %v7302
      %v7304 = vpop.f32.mrb[0].mxu0
      %v7305 = vpop.f32.mrb[0].mxu0
      %v7306 = vadd.f32 0.0, %v7305
      %v7307 = vpop.f32.mrb[0].mxu0
      %7308 = vdwg.mxu0
      %v7309 = vadd.f32 %v6899, %v7119
      %v7310 = vadd.f32 %v6900, %v7122
      %v7311 = vadd.f32 %v6901, %v7127
      %v7312 = vadd.f32 %v6902, %v7130
      %v7313 = vadd.f32 %v6903, %v7135
      %v7314 = vadd.f32 %v6904, %v7138
      %v7315 = vadd.f32 %v6905, %v7143
      %v7316 = vadd.f32 %v6906, %v7146
      %v7317 = vadd.f32 %v6907, %v7151
      %v7318 = vadd.f32 %v6908, %v7154
      %v7319 = vadd.f32 %v6909, %v7159
      %v7320 = vadd.f32 %v6910, %v7162
      %v7321 = vadd.f32 %v6911, %v7167
      %v7322 = vadd.f32 %v6912, %v7170
      %v7323 = vadd.f32 %v6913, %v7175
      %v7324 = vadd.f32 %v6914, %v7178
      %v7325 = vadd.f32 %v6915, %v7183
      %v7326 = vadd.f32 %v6916, %v7186
      %v7327 = vadd.f32 %v6917, %v7191
      %v7328 = vadd.f32 %v6918, %v7194
      %v7329 = vadd.f32 %v6919, %v7199
      %v7330 = vadd.f32 %v6920, %v7202
      %v7331 = vadd.f32 %v6921, %v7207
      %v7332 = vadd.f32 %v6922, %v7210
      %v7333 = vadd.f32 %v6923, %v7215
      %v7334 = vadd.f32 %v6924, %v7218
      %v7335 = vadd.f32 %v6925, %v7223
      %v7336 = vadd.f32 %v6926, %v7226
      %v7337 = vadd.f32 %v6927, %v7231
      %v7338 = vadd.f32 %v6928, %v7234
      %v7339 = vadd.f32 %v6929, %v7239
      %v7340 = vadd.f32 %v6930, %v7242
      %v7341 = vadd.f32 %v6931, %v7247
      %v7342 = vadd.f32 %v6932, %v7250
      %v7343 = vadd.f32 %v6933, %v7255
      %v7344 = vadd.f32 %v6934, %v7258
      %v7345 = vadd.f32 %v6935, %v7263
      %v7346 = vadd.f32 %v6936, %v7266
      %v7347 = vadd.f32 %v6937, %v7271
      %v7348 = vadd.f32 %v6938, %v7274
      %v7349 = vadd.f32 %v6939, %v7279
      %v7350 = vadd.f32 %v6940, %v7282
      %v7351 = vadd.f32 %v6941, %v7287
      %v7352 = vadd.f32 %v6942, %v7290
      %v7353 = vadd.f32 %v6943, %v7295
      %v7354 = vadd.f32 %v6944, %v7298
      %v7355 = vadd.f32 %v6945, %v7303
      %v7356 = vadd.f32 %v6946, %v7306
      %v7357 = vld [vmem:[#allocation2 + $0x30] sm:$0xff]
      %v7358 = vld [vmem:[#allocation2 + $0x38] sm:$0xff]
      %v7359 = vld [vmem:[#allocation2 + $0x40] sm:$0xff]
      %v7360 = vld [vmem:[#allocation2 + $0x48] sm:$0xff]
      %v7361 = vld [vmem:[#allocation2 + $0x50] sm:$0xff]
      %v7362 = vld [vmem:[#allocation2 + $0x58] sm:$0xff]
      %v7363 = vld [vmem:[#allocation2 + $0x60] sm:$0xff]
      %v7364 = vld [vmem:[#allocation2 + $0x68] sm:$0xff]
      %v7365 = vld [vmem:[#allocation2 + $0x70] sm:$0xff]
      %v7366 = vld [vmem:[#allocation2 + $0x78] sm:$0xff]
      %v7367 = vld [vmem:[#allocation2 + $0x80] sm:$0xff]
      %v7368 = vld [vmem:[#allocation2 + $0x88] sm:$0xff]
      %v7369 = vld [vmem:[#allocation2 + $0x90] sm:$0xff]
      %v7370 = vld [vmem:[#allocation2 + $0x98] sm:$0xff]
      %v7371 = vld [vmem:[#allocation2 + $0xa0] sm:$0xff]
      %v7372 = vld [vmem:[#allocation2 + $0xa8] sm:$0xff]
      %v7373 = vld [vmem:[#allocation2 + $0xb0] sm:$0xff]
      %v7374 = vld [vmem:[#allocation2 + $0xb8] sm:$0xff]
      %v7375 = vld [vmem:[#allocation2 + $0xc0] sm:$0xff]
      %v7376 = vld [vmem:[#allocation2 + $0xc8] sm:$0xff]
      %v7377 = vld [vmem:[#allocation2 + $0xd0] sm:$0xff]
      %v7378 = vld [vmem:[#allocation2 + $0xd8] sm:$0xff]
      %v7379 = vld [vmem:[#allocation2 + $0xe0] sm:$0xff]
      %v7380 = vld [vmem:[#allocation2 + $0xe8] sm:$0xff]
      %v7381 = vld [vmem:[#allocation2 + $0xf0] sm:$0xff]
      %v7382 = vld [vmem:[#allocation2 + $0xf8] sm:$0xff]
      %v7383 = vld [vmem:[#allocation2 + $0x100] sm:$0xff]
      %v7384 = vld [vmem:[#allocation2 + $0x108] sm:$0xff]
      %v7385 = vld [vmem:[#allocation2 + $0x110] sm:$0xff]
      %v7386 = vld [vmem:[#allocation2 + $0x118] sm:$0xff]
      %v7387 = vld [vmem:[#allocation2 + $0x120] sm:$0xff]
      %v7388 = vld [vmem:[#allocation2 + $0x128] sm:$0xff]
      %v7389 = vld [vmem:[#allocation2 + $0x130] sm:$0xff]
      %v7390 = vld [vmem:[#allocation2 + $0x138] sm:$0xff]
      %v7391 = vld [vmem:[#allocation2 + $0x140] sm:$0xff]
      %v7392 = vld [vmem:[#allocation2 + $0x148] sm:$0xff]
      %v7393 = vld [vmem:[#allocation2 + $0x150] sm:$0xff]
      %v7394 = vld [vmem:[#allocation2 + $0x158] sm:$0xff]
      %v7395 = vld [vmem:[#allocation2 + $0x160] sm:$0xff]
      %v7396 = vld [vmem:[#allocation2 + $0x168] sm:$0xff]
      %v7397 = vld [vmem:[#allocation2 + $0x170] sm:$0xff]
      %v7398 = vld [vmem:[#allocation2 + $0x178] sm:$0xff]
      %v7399 = vld [vmem:[#allocation2 + $0x180] sm:$0xff]
      %v7400 = vld [vmem:[#allocation2 + $0x188] sm:$0xff]
      %v7401 = vld [vmem:[#allocation2 + $0x190] sm:$0xff]
      %v7402 = vld [vmem:[#allocation2 + $0x198] sm:$0xff]
      %v7403 = vld [vmem:[#allocation2 + $0x1a0] sm:$0xff]
      %v7404 = vld [vmem:[#allocation2 + $0x1a8] sm:$0xff]
      %v7405 = vpack.c.bf16 %v7358, %v7357
      %v7406 = vpack.c.bf16 %v7360, %v7359
      %v7407 = vpack.c.bf16 %v7362, %v7361
      %v7408 = vpack.c.bf16 %v7364, %v7363
      %v7409 = vpack.c.bf16 %v7366, %v7365
      %v7410 = vpack.c.bf16 %v7368, %v7367
      %v7411 = vpack.c.bf16 %v7370, %v7369
      %v7412 = vpack.c.bf16 %v7372, %v7371
      %v7413 = vpack.c.bf16 %v7374, %v7373
      %v7414 = vpack.c.bf16 %v7376, %v7375
      %v7415 = vpack.c.bf16 %v7378, %v7377
      %v7416 = vpack.c.bf16 %v7380, %v7379
      %v7417 = vpack.c.bf16 %v7382, %v7381
      %v7418 = vpack.c.bf16 %v7384, %v7383
      %v7419 = vpack.c.bf16 %v7386, %v7385
      %v7420 = vpack.c.bf16 %v7388, %v7387
      %v7421 = vpack.c.bf16 %v7390, %v7389
      %v7422 = vpack.c.bf16 %v7392, %v7391
      %v7423 = vpack.c.bf16 %v7394, %v7393
      %v7424 = vpack.c.bf16 %v7396, %v7395
      %v7425 = vpack.c.bf16 %v7398, %v7397
      %v7426 = vpack.c.bf16 %v7400, %v7399
      %v7427 = vpack.c.bf16 %v7402, %v7401
      %v7428 = vpack.c.bf16 %v7404, %v7403
      %s7429 = scalar_lea.vmem %s1, 960
      %v7430 = vld [vmem:[%s7429] sm:$0xf]
      %v7431 = vld [vmem:[%s7429 + $0x4] sm:$0xf]
      %v7432 = vld [vmem:[%s7429 + $0x8] sm:$0xf]
      %v7433 = vld [vmem:[%s7429 + $0xc] sm:$0xf]
      %v7434 = vld [vmem:[%s7429 + $0x10] sm:$0xf]
      %v7435 = vld [vmem:[%s7429 + $0x14] sm:$0xf]
      %v7436 = vld [vmem:[%s7429 + $0x18] sm:$0xf]
      %v7437 = vld [vmem:[%s7429 + $0x1c] sm:$0xf]
      %v7438 = vld [vmem:[%s7429 + $0x20] sm:$0xf]
      %v7439 = vld [vmem:[%s7429 + $0x24] sm:$0xf]
      %v7440 = vld [vmem:[%s7429 + $0x28] sm:$0xf]
      %v7441 = vld [vmem:[%s7429 + $0x2c] sm:$0xf]
      %v7442 = vld [vmem:[%s7429 + $0x30] sm:$0xf]
      %v7443 = vld [vmem:[%s7429 + $0x34] sm:$0xf]
      %v7444 = vld [vmem:[%s7429 + $0x38] sm:$0xf]
      %v7445 = vld [vmem:[%s7429 + $0x3c] sm:$0xf]
      %v7462 = vunpack.c.l.b16 %v7430
      %v7463 = vunpack.c.l.b16 %v7431
      %v7464 = vunpack.c.l.b16 %v7432
      %v7465 = vunpack.c.l.b16 %v7433
      %v7466 = vunpack.c.l.b16 %v7434
      %v7467 = vunpack.c.l.b16 %v7435
      %v7468 = vunpack.c.l.b16 %v7436
      %v7469 = vunpack.c.l.b16 %v7437
      %v7470 = vunpack.c.l.b16 %v7438
      %v7471 = vunpack.c.l.b16 %v7439
      %v7472 = vunpack.c.l.b16 %v7440
      %v7473 = vunpack.c.l.b16 %v7441
      %v7474 = vunpack.c.l.b16 %v7442
      %v7475 = vunpack.c.l.b16 %v7443
      %v7476 = vunpack.c.l.b16 %v7444
      %v7477 = vunpack.c.l.b16 %v7445
      %v7478 = vpack.c.b16 %v7463, %v7462
      %v7479 = vpack.c.b16 %v7465, %v7464
      %v7480 = vpack.c.b16 %v7467, %v7466
      %v7481 = vpack.c.b16 %v7469, %v7468
      %v7482 = vpack.c.b16 %v7471, %v7470
      %v7483 = vpack.c.b16 %v7473, %v7472
      %v7484 = vpack.c.b16 %v7475, %v7474
      %v7485 = vpack.c.b16 %v7477, %v7476
      %7494 = vmatprep.subr.bf16.mxu0 0
      %7495 = vmatpush1.bf16.msra.mxu0 %v7478
      %7496 = vmatprep.subr.bf16.mxu0 0
      %7497 = vmatpush1.bf16.msra.mxu0 %v7479
      %7498 = vmatprep.subr.bf16.mxu0 0
      %7499 = vmatpush1.bf16.msra.mxu0 %v7480
      %7500 = vmatprep.subr.bf16.mxu0 0
      %7501 = vmatpush1.bf16.msra.mxu0 %v7481
      %7502 = vmatprep.subr.bf16.mxu0 0
      %7503 = vmatpush1.bf16.msra.mxu0 %v7482
      %7504 = vmatprep.subr.bf16.mxu0 0
      %7505 = vmatpush1.bf16.msra.mxu0 %v7483
      %7506 = vmatprep.subr.bf16.mxu0 0
      %7507 = vmatpush1.bf16.msra.mxu0 %v7484
      %7508 = vmatprep.subr.bf16.mxu0 0
      %7509 = vmatpush1.bf16.msra.mxu0 %v7485
      %7510 = vmatprep.subr.bf16.mxu0 0
      %7511 = vmatpush1.bf16.msra.mxu0 0
      %7512 = vmatprep.subr.bf16.mxu0 0
      %7513 = vmatpush1.bf16.msra.mxu0 0
      %7514 = vmatprep.subr.bf16.mxu0 0
      %7515 = vmatpush1.bf16.msra.mxu0 0
      %7516 = vmatprep.subr.bf16.mxu0 0
      %7517 = vmatpush1.bf16.msra.mxu0 0
      %7518 = vmatprep.subr.bf16.mxu0 0
      %7519 = vmatpush1.bf16.msra.mxu0 0
      %7520 = vmatprep.subr.bf16.mxu0 0
      %7521 = vmatpush1.bf16.msra.mxu0 0
      %7522 = vmatprep.subr.bf16.mxu0 0
      %7523 = vmatpush1.bf16.msra.mxu0 0
      %7524 = vmatprep.subr.bf16.mxu0 0
      %7525 = vmatpush1.bf16.msra.mxu0 0
      %7526 = vmatprep.mubr.bf16.mxu0 0
      %7527 = vmatmul.mubr.bf16.gmra.mrb[0].mxu0 %v7405
      %v7528 = vpop.f32.mrb[0].mxu0
      %v7529 = vadd.f32 0.0, %v7528
      %v7530 = vpop.f32.mrb[0].mxu0
      %v7531 = vpop.f32.mrb[0].mxu0
      %v7532 = vadd.f32 0.0, %v7531
      %v7533 = vpop.f32.mrb[0].mxu0
      %7534 = vmatprep.mubr.bf16.mxu0 0
      %7535 = vmatmul.mubr.bf16.gmra.mrb[0].mxu0 %v7406
      %v7536 = vpop.f32.mrb[0].mxu0
      %v7537 = vadd.f32 0.0, %v7536
      %v7538 = vpop.f32.mrb[0].mxu0
      %v7539 = vpop.f32.mrb[0].mxu0
      %v7540 = vadd.f32 0.0, %v7539
      %v7541 = vpop.f32.mrb[0].mxu0
      %7542 = vmatprep.mubr.bf16.mxu0 0
      %7543 = vmatmul.mubr.bf16.gmra.mrb[0].mxu0 %v7407
      %v7544 = vpop.f32.mrb[0].mxu0
      %v7545 = vadd.f32 0.0, %v7544
      %v7546 = vpop.f32.mrb[0].mxu0
      %v7547 = vpop.f32.mrb[0].mxu0
      %v7548 = vadd.f32 0.0, %v7547
      %v7549 = vpop.f32.mrb[0].mxu0
      %7550 = vmatprep.mubr.bf16.mxu0 0
      %7551 = vmatmul.mubr.bf16.gmra.mrb[0].mxu0 %v7408
      %v7552 = vpop.f32.mrb[0].mxu0
      %v7553 = vadd.f32 0.0, %v7552
      %v7554 = vpop.f32.mrb[0].mxu0
      %v7555 = vpop.f32.mrb[0].mxu0
      %v7556 = vadd.f32 0.0, %v7555
      %v7557 = vpop.f32.mrb[0].mxu0
      %7558 = vmatprep.mubr.bf16.mxu0 0
      %7559 = vmatmul.mubr.bf16.gmra.mrb[0].mxu0 %v7409
      %v7560 = vpop.f32.mrb[0].mxu0
      %v7561 = vadd.f32 0.0, %v7560
      %v7562 = vpop.f32.mrb[0].mxu0
      %v7563 = vpop.f32.mrb[0].mxu0
      %v7564 = vadd.f32 0.0, %v7563
      %v7565 = vpop.f32.mrb[0].mxu0
      %7566 = vmatprep.mubr.bf16.mxu0 0
      %7567 = vmatmul.mubr.bf16.gmra.mrb[0].mxu0 %v7410
      %v7568 = vpop.f32.mrb[0].mxu0
      %v7569 = vadd.f32 0.0, %v7568
      %v7570 = vpop.f32.mrb[0].mxu0
      %v7571 = vpop.f32.mrb[0].mxu0
      %v7572 = vadd.f32 0.0, %v7571
      %v7573 = vpop.f32.mrb[0].mxu0
      %7574 = vmatprep.mubr.bf16.mxu0 0
      %7575 = vmatmul.mubr.bf16.gmra.mrb[0].mxu0 %v7411
      %v7576 = vpop.f32.mrb[0].mxu0
      %v7577 = vadd.f32 0.0, %v7576
      %v7578 = vpop.f32.mrb[0].mxu0
      %v7579 = vpop.f32.mrb[0].mxu0
      %v7580 = vadd.f32 0.0, %v7579
      %v7581 = vpop.f32.mrb[0].mxu0
      %7582 = vmatprep.mubr.bf16.mxu0 0
      %7583 = vmatmul.mubr.bf16.gmra.mrb[0].mxu0 %v7412
      %v7584 = vpop.f32.mrb[0].mxu0
      %v7585 = vadd.f32 0.0, %v7584
      %v7586 = vpop.f32.mrb[0].mxu0
      %v7587 = vpop.f32.mrb[0].mxu0
      %v7588 = vadd.f32 0.0, %v7587
      %v7589 = vpop.f32.mrb[0].mxu0
      %7590 = vmatprep.mubr.bf16.mxu0 0
      %7591 = vmatmul.mubr.bf16.gmra.mrb[0].mxu0 %v7413
      %v7592 = vpop.f32.mrb[0].mxu0
      %v7593 = vadd.f32 0.0, %v7592
      %v7594 = vpop.f32.mrb[0].mxu0
      %v7595 = vpop.f32.mrb[0].mxu0
      %v7596 = vadd.f32 0.0, %v7595
      %v7597 = vpop.f32.mrb[0].mxu0
      %7598 = vmatprep.mubr.bf16.mxu0 0
      %7599 = vmatmul.mubr.bf16.gmra.mrb[0].mxu0 %v7414
      %v7600 = vpop.f32.mrb[0].mxu0
      %v7601 = vadd.f32 0.0, %v7600
      %v7602 = vpop.f32.mrb[0].mxu0
      %v7603 = vpop.f32.mrb[0].mxu0
      %v7604 = vadd.f32 0.0, %v7603
      %v7605 = vpop.f32.mrb[0].mxu0
      %7606 = vmatprep.mubr.bf16.mxu0 0
      %7607 = vmatmul.mubr.bf16.gmra.mrb[0].mxu0 %v7415
      %v7608 = vpop.f32.mrb[0].mxu0
      %v7609 = vadd.f32 0.0, %v7608
      %v7610 = vpop.f32.mrb[0].mxu0
      %v7611 = vpop.f32.mrb[0].mxu0
      %v7612 = vadd.f32 0.0, %v7611
      %v7613 = vpop.f32.mrb[0].mxu0
      %7614 = vmatprep.mubr.bf16.mxu0 0
      %7615 = vmatmul.mubr.bf16.gmra.mrb[0].mxu0 %v7416
      %v7616 = vpop.f32.mrb[0].mxu0
      %v7617 = vadd.f32 0.0, %v7616
      %v7618 = vpop.f32.mrb[0].mxu0
      %v7619 = vpop.f32.mrb[0].mxu0
      %v7620 = vadd.f32 0.0, %v7619
      %v7621 = vpop.f32.mrb[0].mxu0
      %7622 = vmatprep.mubr.bf16.mxu0 0
      %7623 = vmatmul.mubr.bf16.gmra.mrb[0].mxu0 %v7417
      %v7624 = vpop.f32.mrb[0].mxu0
      %v7625 = vadd.f32 0.0, %v7624
      %v7626 = vpop.f32.mrb[0].mxu0
      %v7627 = vpop.f32.mrb[0].mxu0
      %v7628 = vadd.f32 0.0, %v7627
      %v7629 = vpop.f32.mrb[0].mxu0
      %7630 = vmatprep.mubr.bf16.mxu0 0
      %7631 = vmatmul.mubr.bf16.gmra.mrb[0].mxu0 %v7418
      %v7632 = vpop.f32.mrb[0].mxu0
      %v7633 = vadd.f32 0.0, %v7632
      %v7634 = vpop.f32.mrb[0].mxu0
      %v7635 = vpop.f32.mrb[0].mxu0
      %v7636 = vadd.f32 0.0, %v7635
      %v7637 = vpop.f32.mrb[0].mxu0
      %7638 = vmatprep.mubr.bf16.mxu0 0
      %7639 = vmatmul.mubr.bf16.gmra.mrb[0].mxu0 %v7419
      %v7640 = vpop.f32.mrb[0].mxu0
      %v7641 = vadd.f32 0.0, %v7640
      %v7642 = vpop.f32.mrb[0].mxu0
      %v7643 = vpop.f32.mrb[0].mxu0
      %v7644 = vadd.f32 0.0, %v7643
      %v7645 = vpop.f32.mrb[0].mxu0
      %7646 = vmatprep.mubr.bf16.mxu0 0
      %7647 = vmatmul.mubr.bf16.gmra.mrb[0].mxu0 %v7420
      %v7648 = vpop.f32.mrb[0].mxu0
      %v7649 = vadd.f32 0.0, %v7648
      %v7650 = vpop.f32.mrb[0].mxu0
      %v7651 = vpop.f32.mrb[0].mxu0
      %v7652 = vadd.f32 0.0, %v7651
      %v7653 = vpop.f32.mrb[0].mxu0
      %7654 = vmatprep.mubr.bf16.mxu0 0
      %7655 = vmatmul.mubr.bf16.gmra.mrb[0].mxu0 %v7421
      %v7656 = vpop.f32.mrb[0].mxu0
      %v7657 = vadd.f32 0.0, %v7656
      %v7658 = vpop.f32.mrb[0].mxu0
      %v7659 = vpop.f32.mrb[0].mxu0
      %v7660 = vadd.f32 0.0, %v7659
      %v7661 = vpop.f32.mrb[0].mxu0
      %7662 = vmatprep.mubr.bf16.mxu0 0
      %7663 = vmatmul.mubr.bf16.gmra.mrb[0].mxu0 %v7422
      %v7664 = vpop.f32.mrb[0].mxu0
      %v7665 = vadd.f32 0.0, %v7664
      %v7666 = vpop.f32.mrb[0].mxu0
      %v7667 = vpop.f32.mrb[0].mxu0
      %v7668 = vadd.f32 0.0, %v7667
      %v7669 = vpop.f32.mrb[0].mxu0
      %7670 = vmatprep.mubr.bf16.mxu0 0
      %7671 = vmatmul.mubr.bf16.gmra.mrb[0].mxu0 %v7423
      %v7672 = vpop.f32.mrb[0].mxu0
      %v7673 = vadd.f32 0.0, %v7672
      %v7674 = vpop.f32.mrb[0].mxu0
      %v7675 = vpop.f32.mrb[0].mxu0
      %v7676 = vadd.f32 0.0, %v7675
      %v7677 = vpop.f32.mrb[0].mxu0
      %7678 = vmatprep.mubr.bf16.mxu0 0
      %7679 = vmatmul.mubr.bf16.gmra.mrb[0].mxu0 %v7424
      %v7680 = vpop.f32.mrb[0].mxu0
      %v7681 = vadd.f32 0.0, %v7680
      %v7682 = vpop.f32.mrb[0].mxu0
      %v7683 = vpop.f32.mrb[0].mxu0
      %v7684 = vadd.f32 0.0, %v7683
      %v7685 = vpop.f32.mrb[0].mxu0
      %7686 = vmatprep.mubr.bf16.mxu0 0
      %7687 = vmatmul.mubr.bf16.gmra.mrb[0].mxu0 %v7425
      %v7688 = vpop.f32.mrb[0].mxu0
      %v7689 = vadd.f32 0.0, %v7688
      %v7690 = vpop.f32.mrb[0].mxu0
      %v7691 = vpop.f32.mrb[0].mxu0
      %v7692 = vadd.f32 0.0, %v7691
      %v7693 = vpop.f32.mrb[0].mxu0
      %7694 = vmatprep.mubr.bf16.mxu0 0
      %7695 = vmatmul.mubr.bf16.gmra.mrb[0].mxu0 %v7426
      %v7696 = vpop.f32.mrb[0].mxu0
      %v7697 = vadd.f32 0.0, %v7696
      %v7698 = vpop.f32.mrb[0].mxu0
      %v7699 = vpop.f32.mrb[0].mxu0
      %v7700 = vadd.f32 0.0, %v7699
      %v7701 = vpop.f32.mrb[0].mxu0
      %7702 = vmatprep.mubr.bf16.mxu0 0
      %7703 = vmatmul.mubr.bf16.gmra.mrb[0].mxu0 %v7427
      %v7704 = vpop.f32.mrb[0].mxu0
      %v7705 = vadd.f32 0.0, %v7704
      %v7706 = vpop.f32.mrb[0].mxu0
      %v7707 = vpop.f32.mrb[0].mxu0
      %v7708 = vadd.f32 0.0, %v7707
      %v7709 = vpop.f32.mrb[0].mxu0
      %7710 = vmatprep.mubr.bf16.mxu0 0
      %7711 = vmatmul.mubr.bf16.gmra.mrb[0].mxu0 %v7428
      %v7712 = vpop.f32.mrb[0].mxu0
      %v7713 = vadd.f32 0.0, %v7712
      %v7714 = vpop.f32.mrb[0].mxu0
      %v7715 = vpop.f32.mrb[0].mxu0
      %v7716 = vadd.f32 0.0, %v7715
      %v7717 = vpop.f32.mrb[0].mxu0
      %7718 = vdwg.mxu0
      %v7719 = vadd.f32 %v7309, %v7529
      %v7720 = vadd.f32 %v7310, %v7532
      %v7721 = vadd.f32 %v7311, %v7537
      %v7722 = vadd.f32 %v7312, %v7540
      %v7723 = vadd.f32 %v7313, %v7545
      %v7724 = vadd.f32 %v7314, %v7548
      %v7725 = vadd.f32 %v7315, %v7553
      %v7726 = vadd.f32 %v7316, %v7556
      %v7727 = vadd.f32 %v7317, %v7561
      %v7728 = vadd.f32 %v7318, %v7564
      %v7729 = vadd.f32 %v7319, %v7569
      %v7730 = vadd.f32 %v7320, %v7572
      %v7731 = vadd.f32 %v7321, %v7577
      %v7732 = vadd.f32 %v7322, %v7580
      %v7733 = vadd.f32 %v7323, %v7585
      %v7734 = vadd.f32 %v7324, %v7588
      %v7735 = vadd.f32 %v7325, %v7593
      %v7736 = vadd.f32 %v7326, %v7596
      %v7737 = vadd.f32 %v7327, %v7601
      %v7738 = vadd.f32 %v7328, %v7604
      %v7739 = vadd.f32 %v7329, %v7609
      %v7740 = vadd.f32 %v7330, %v7612
      %v7741 = vadd.f32 %v7331, %v7617
      %v7742 = vadd.f32 %v7332, %v7620
      %v7743 = vadd.f32 %v7333, %v7625
      %v7744 = vadd.f32 %v7334, %v7628
      %v7745 = vadd.f32 %v7335, %v7633
      %v7746 = vadd.f32 %v7336, %v7636
      %v7747 = vadd.f32 %v7337, %v7641
      %v7748 = vadd.f32 %v7338, %v7644
      %v7749 = vadd.f32 %v7339, %v7649
      %v7750 = vadd.f32 %v7340, %v7652
      %v7751 = vadd.f32 %v7341, %v7657
      %v7752 = vadd.f32 %v7342, %v7660
      %v7753 = vadd.f32 %v7343, %v7665
      %v7754 = vadd.f32 %v7344, %v7668
      %v7755 = vadd.f32 %v7345, %v7673
      %v7756 = vadd.f32 %v7346, %v7676
      %v7757 = vadd.f32 %v7347, %v7681
      %v7758 = vadd.f32 %v7348, %v7684
      %v7759 = vadd.f32 %v7349, %v7689
      %v7760 = vadd.f32 %v7350, %v7692
      %v7761 = vadd.f32 %v7351, %v7697
      %v7762 = vadd.f32 %v7352, %v7700
      %v7763 = vadd.f32 %v7353, %v7705
      %v7764 = vadd.f32 %v7354, %v7708
      %v7765 = vadd.f32 %v7355, %v7713
      %v7766 = vadd.f32 %v7356, %v7716
      %v7767 = vld [vmem:[#allocation2 + $0x31] sm:$0xff]
      %v7768 = vld [vmem:[#allocation2 + $0x39] sm:$0xff]
      %v7769 = vld [vmem:[#allocation2 + $0x41] sm:$0xff]
      %v7770 = vld [vmem:[#allocation2 + $0x49] sm:$0xff]
      %v7771 = vld [vmem:[#allocation2 + $0x51] sm:$0xff]
      %v7772 = vld [vmem:[#allocation2 + $0x59] sm:$0xff]
      %v7773 = vld [vmem:[#allocation2 + $0x61] sm:$0xff]
      %v7774 = vld [vmem:[#allocation2 + $0x69] sm:$0xff]
      %v7775 = vld [vmem:[#allocation2 + $0x71] sm:$0xff]
      %v7776 = vld [vmem:[#allocation2 + $0x79] sm:$0xff]
      %v7777 = vld [vmem:[#allocation2 + $0x81] sm:$0xff]
      %v7778 = vld [vmem:[#allocation2 + $0x89] sm:$0xff]
      %v7779 = vld [vmem:[#allocation2 + $0x91] sm:$0xff]
      %v7780 = vld [vmem:[#allocation2 + $0x99] sm:$0xff]
      %v7781 = vld [vmem:[#allocation2 + $0xa1] sm:$0xff]
      %v7782 = vld [vmem:[#allocation2 + $0xa9] sm:$0xff]
      %v7783 = vld [vmem:[#allocation2 + $0xb1] sm:$0xff]
      %v7784 = vld [vmem:[#allocation2 + $0xb9] sm:$0xff]
      %v7785 = vld [vmem:[#allocation2 + $0xc1] sm:$0xff]
      %v7786 = vld [vmem:[#allocation2 + $0xc9] sm:$0xff]
      %v7787 = vld [vmem:[#allocation2 + $0xd1] sm:$0xff]
      %v7788 = vld [vmem:[#allocation2 + $0xd9] sm:$0xff]
      %v7789 = vld [vmem:[#allocation2 + $0xe1] sm:$0xff]
      %v7790 = vld [vmem:[#allocation2 + $0xe9] sm:$0xff]
      %v7791 = vld [vmem:[#allocation2 + $0xf1] sm:$0xff]
      %v7792 = vld [vmem:[#allocation2 + $0xf9] sm:$0xff]
      %v7793 = vld [vmem:[#allocation2 + $0x101] sm:$0xff]
      %v7794 = vld [vmem:[#allocation2 + $0x109] sm:$0xff]
      %v7795 = vld [vmem:[#allocation2 + $0x111] sm:$0xff]
      %v7796 = vld [vmem:[#allocation2 + $0x119] sm:$0xff]
      %v7797 = vld [vmem:[#allocation2 + $0x121] sm:$0xff]
      %v7798 = vld [vmem:[#allocation2 + $0x129] sm:$0xff]
      %v7799 = vld [vmem:[#allocation2 + $0x131] sm:$0xff]
      %v7800 = vld [vmem:[#allocation2 + $0x139] sm:$0xff]
      %v7801 = vld [vmem:[#allocation2 + $0x141] sm:$0xff]
      %v7802 = vld [vmem:[#allocation2 + $0x149] sm:$0xff]
      %v7803 = vld [vmem:[#allocation2 + $0x151] sm:$0xff]
      %v7804 = vld [vmem:[#allocation2 + $0x159] sm:$0xff]
      %v7805 = vld [vmem:[#allocation2 + $0x161] sm:$0xff]
      %v7806 = vld [vmem:[#allocation2 + $0x169] sm:$0xff]
      %v7807 = vld [vmem:[#allocation2 + $0x171] sm:$0xff]
      %v7808 = vld [vmem:[#allocation2 + $0x179] sm:$0xff]
      %v7809 = vld [vmem:[#allocation2 + $0x181] sm:$0xff]
      %v7810 = vld [vmem:[#allocation2 + $0x189] sm:$0xff]
      %v7811 = vld [vmem:[#allocation2 + $0x191] sm:$0xff]
      %v7812 = vld [vmem:[#allocation2 + $0x199] sm:$0xff]
      %v7813 = vld [vmem:[#allocation2 + $0x1a1] sm:$0xff]
      %v7814 = vld [vmem:[#allocation2 + $0x1a9] sm:$0xff]
      %v7815 = vpack.c.bf16 %v7768, %v7767
      %v7816 = vpack.c.bf16 %v7770, %v7769
      %v7817 = vpack.c.bf16 %v7772, %v7771
      %v7818 = vpack.c.bf16 %v7774, %v7773
      %v7819 = vpack.c.bf16 %v7776, %v7775
      %v7820 = vpack.c.bf16 %v7778, %v7777
      %v7821 = vpack.c.bf16 %v7780, %v7779
      %v7822 = vpack.c.bf16 %v7782, %v7781
      %v7823 = vpack.c.bf16 %v7784, %v7783
      %v7824 = vpack.c.bf16 %v7786, %v7785
      %v7825 = vpack.c.bf16 %v7788, %v7787
      %v7826 = vpack.c.bf16 %v7790, %v7789
      %v7827 = vpack.c.bf16 %v7792, %v7791
      %v7828 = vpack.c.bf16 %v7794, %v7793
      %v7829 = vpack.c.bf16 %v7796, %v7795
      %v7830 = vpack.c.bf16 %v7798, %v7797
      %v7831 = vpack.c.bf16 %v7800, %v7799
      %v7832 = vpack.c.bf16 %v7802, %v7801
      %v7833 = vpack.c.bf16 %v7804, %v7803
      %v7834 = vpack.c.bf16 %v7806, %v7805
      %v7835 = vpack.c.bf16 %v7808, %v7807
      %v7836 = vpack.c.bf16 %v7810, %v7809
      %v7837 = vpack.c.bf16 %v7812, %v7811
      %v7838 = vpack.c.bf16 %v7814, %v7813
      %s7839 = scalar_lea.vmem %s1, 1024
      %v7840 = vld [vmem:[%s7839] sm:$0xf]
      %v7841 = vld [vmem:[%s7839 + $0x4] sm:$0xf]
      %v7842 = vld [vmem:[%s7839 + $0x8] sm:$0xf]
      %v7843 = vld [vmem:[%s7839 + $0xc] sm:$0xf]
      %v7844 = vld [vmem:[%s7839 + $0x10] sm:$0xf]
      %v7845 = vld [vmem:[%s7839 + $0x14] sm:$0xf]
      %v7846 = vld [vmem:[%s7839 + $0x18] sm:$0xf]
      %v7847 = vld [vmem:[%s7839 + $0x1c] sm:$0xf]
      %v7848 = vld [vmem:[%s7839 + $0x20] sm:$0xf]
      %v7849 = vld [vmem:[%s7839 + $0x24] sm:$0xf]
      %v7850 = vld [vmem:[%s7839 + $0x28] sm:$0xf]
      %v7851 = vld [vmem:[%s7839 + $0x2c] sm:$0xf]
      %v7852 = vld [vmem:[%s7839 + $0x30] sm:$0xf]
      %v7853 = vld [vmem:[%s7839 + $0x34] sm:$0xf]
      %v7854 = vld [vmem:[%s7839 + $0x38] sm:$0xf]
      %v7855 = vld [vmem:[%s7839 + $0x3c] sm:$0xf]
      %v7872 = vunpack.c.l.b16 %v7840
      %v7873 = vunpack.c.l.b16 %v7841
      %v7874 = vunpack.c.l.b16 %v7842
      %v7875 = vunpack.c.l.b16 %v7843
      %v7876 = vunpack.c.l.b16 %v7844
      %v7877 = vunpack.c.l.b16 %v7845
      %v7878 = vunpack.c.l.b16 %v7846
      %v7879 = vunpack.c.l.b16 %v7847
      %v7880 = vunpack.c.l.b16 %v7848
      %v7881 = vunpack.c.l.b16 %v7849
      %v7882 = vunpack.c.l.b16 %v7850
      %v7883 = vunpack.c.l.b16 %v7851
      %v7884 = vunpack.c.l.b16 %v7852
      %v7885 = vunpack.c.l.b16 %v7853
      %v7886 = vunpack.c.l.b16 %v7854
      %v7887 = vunpack.c.l.b16 %v7855
      %v7888 = vpack.c.b16 %v7873, %v7872
      %v7889 = vpack.c.b16 %v7875, %v7874
      %v7890 = vpack.c.b16 %v7877, %v7876
      %v7891 = vpack.c.b16 %v7879, %v7878
      %v7892 = vpack.c.b16 %v7881, %v7880
      %v7893 = vpack.c.b16 %v7883, %v7882
      %v7894 = vpack.c.b16 %v7885, %v7884
      %v7895 = vpack.c.b16 %v7887, %v7886
      %7904 = vmatprep.subr.bf16.mxu0 0
      %7905 = vmatpush1.bf16.msra.mxu0 %v7888
      %7906 = vmatprep.subr.bf16.mxu0 0
      %7907 = vmatpush1.bf16.msra.mxu0 %v7889
      %7908 = vmatprep.subr.bf16.mxu0 0
      %7909 = vmatpush1.bf16.msra.mxu0 %v7890
      %7910 = vmatprep.subr.bf16.mxu0 0
      %7911 = vmatpush1.bf16.msra.mxu0 %v7891
      %7912 = vmatprep.subr.bf16.mxu0 0
      %7913 = vmatpush1.bf16.msra.mxu0 %v7892
      %7914 = vmatprep.subr.bf16.mxu0 0
      %7915 = vmatpush1.bf16.msra.mxu0 %v7893
      %7916 = vmatprep.subr.bf16.mxu0 0
      %7917 = vmatpush1.bf16.msra.mxu0 %v7894
      %7918 = vmatprep.subr.bf16.mxu0 0
      %7919 = vmatpush1.bf16.msra.mxu0 %v7895
      %7920 = vmatprep.subr.bf16.mxu0 0
      %7921 = vmatpush1.bf16.msra.mxu0 0
      %7922 = vmatprep.subr.bf16.mxu0 0
      %7923 = vmatpush1.bf16.msra.mxu0 0
      %7924 = vmatprep.subr.bf16.mxu0 0
      %7925 = vmatpush1.bf16.msra.mxu0 0
      %7926 = vmatprep.subr.bf16.mxu0 0
      %7927 = vmatpush1.bf16.msra.mxu0 0
      %7928 = vmatprep.subr.bf16.mxu0 0
      %7929 = vmatpush1.bf16.msra.mxu0 0
      %7930 = vmatprep.subr.bf16.mxu0 0
      %7931 = vmatpush1.bf16.msra.mxu0 0
      %7932 = vmatprep.subr.bf16.mxu0 0
      %7933 = vmatpush1.bf16.msra.mxu0 0
      %7934 = vmatprep.subr.bf16.mxu0 0
      %7935 = vmatpush1.bf16.msra.mxu0 0
      %7936 = vmatprep.mubr.bf16.mxu0 0
      %7937 = vmatmul.mubr.bf16.gmra.mrb[0].mxu0 %v7815
      %v7938 = vpop.f32.mrb[0].mxu0
      %v7939 = vadd.f32 0.0, %v7938
      %v7940 = vpop.f32.mrb[0].mxu0
      %v7941 = vpop.f32.mrb[0].mxu0
      %v7942 = vadd.f32 0.0, %v7941
      %v7943 = vpop.f32.mrb[0].mxu0
      %7944 = vmatprep.mubr.bf16.mxu0 0
      %7945 = vmatmul.mubr.bf16.gmra.mrb[0].mxu0 %v7816
      %v7946 = vpop.f32.mrb[0].mxu0
      %v7947 = vadd.f32 0.0, %v7946
      %v7948 = vpop.f32.mrb[0].mxu0
      %v7949 = vpop.f32.mrb[0].mxu0
      %v7950 = vadd.f32 0.0, %v7949
      %v7951 = vpop.f32.mrb[0].mxu0
      %7952 = vmatprep.mubr.bf16.mxu0 0
      %7953 = vmatmul.mubr.bf16.gmra.mrb[0].mxu0 %v7817
      %v7954 = vpop.f32.mrb[0].mxu0
      %v7955 = vadd.f32 0.0, %v7954
      %v7956 = vpop.f32.mrb[0].mxu0
      %v7957 = vpop.f32.mrb[0].mxu0
      %v7958 = vadd.f32 0.0, %v7957
      %v7959 = vpop.f32.mrb[0].mxu0
      %7960 = vmatprep.mubr.bf16.mxu0 0
      %7961 = vmatmul.mubr.bf16.gmra.mrb[0].mxu0 %v7818
      %v7962 = vpop.f32.mrb[0].mxu0
      %v7963 = vadd.f32 0.0, %v7962
      %v7964 = vpop.f32.mrb[0].mxu0
      %v7965 = vpop.f32.mrb[0].mxu0
      %v7966 = vadd.f32 0.0, %v7965
      %v7967 = vpop.f32.mrb[0].mxu0
      %7968 = vmatprep.mubr.bf16.mxu0 0
      %7969 = vmatmul.mubr.bf16.gmra.mrb[0].mxu0 %v7819
      %v7970 = vpop.f32.mrb[0].mxu0
      %v7971 = vadd.f32 0.0, %v7970
      %v7972 = vpop.f32.mrb[0].mxu0
      %v7973 = vpop.f32.mrb[0].mxu0
      %v7974 = vadd.f32 0.0, %v7973
      %v7975 = vpop.f32.mrb[0].mxu0
      %7976 = vmatprep.mubr.bf16.mxu0 0
      %7977 = vmatmul.mubr.bf16.gmra.mrb[0].mxu0 %v7820
      %v7978 = vpop.f32.mrb[0].mxu0
      %v7979 = vadd.f32 0.0, %v7978
      %v7980 = vpop.f32.mrb[0].mxu0
      %v7981 = vpop.f32.mrb[0].mxu0
      %v7982 = vadd.f32 0.0, %v7981
      %v7983 = vpop.f32.mrb[0].mxu0
      %7984 = vmatprep.mubr.bf16.mxu0 0
      %7985 = vmatmul.mubr.bf16.gmra.mrb[0].mxu0 %v7821
      %v7986 = vpop.f32.mrb[0].mxu0
      %v7987 = vadd.f32 0.0, %v7986
      %v7988 = vpop.f32.mrb[0].mxu0
      %v7989 = vpop.f32.mrb[0].mxu0
      %v7990 = vadd.f32 0.0, %v7989
      %v7991 = vpop.f32.mrb[0].mxu0
      %7992 = vmatprep.mubr.bf16.mxu0 0
      %7993 = vmatmul.mubr.bf16.gmra.mrb[0].mxu0 %v7822
      %v7994 = vpop.f32.mrb[0].mxu0
      %v7995 = vadd.f32 0.0, %v7994
      %v7996 = vpop.f32.mrb[0].mxu0
      %v7997 = vpop.f32.mrb[0].mxu0
      %v7998 = vadd.f32 0.0, %v7997
      %v7999 = vpop.f32.mrb[0].mxu0
      %8000 = vmatprep.mubr.bf16.mxu0 0
      %8001 = vmatmul.mubr.bf16.gmra.mrb[0].mxu0 %v7823
      %v8002 = vpop.f32.mrb[0].mxu0
      %v8003 = vadd.f32 0.0, %v8002
      %v8004 = vpop.f32.mrb[0].mxu0
      %v8005 = vpop.f32.mrb[0].mxu0
      %v8006 = vadd.f32 0.0, %v8005
      %v8007 = vpop.f32.mrb[0].mxu0
      %8008 = vmatprep.mubr.bf16.mxu0 0
      %8009 = vmatmul.mubr.bf16.gmra.mrb[0].mxu0 %v7824
      %v8010 = vpop.f32.mrb[0].mxu0
      %v8011 = vadd.f32 0.0, %v8010
      %v8012 = vpop.f32.mrb[0].mxu0
      %v8013 = vpop.f32.mrb[0].mxu0
      %v8014 = vadd.f32 0.0, %v8013
      %v8015 = vpop.f32.mrb[0].mxu0
      %8016 = vmatprep.mubr.bf16.mxu0 0
      %8017 = vmatmul.mubr.bf16.gmra.mrb[0].mxu0 %v7825
      %v8018 = vpop.f32.mrb[0].mxu0
      %v8019 = vadd.f32 0.0, %v8018
      %v8020 = vpop.f32.mrb[0].mxu0
      %v8021 = vpop.f32.mrb[0].mxu0
      %v8022 = vadd.f32 0.0, %v8021
      %v8023 = vpop.f32.mrb[0].mxu0
      %8024 = vmatprep.mubr.bf16.mxu0 0
      %8025 = vmatmul.mubr.bf16.gmra.mrb[0].mxu0 %v7826
      %v8026 = vpop.f32.mrb[0].mxu0
      %v8027 = vadd.f32 0.0, %v8026
      %v8028 = vpop.f32.mrb[0].mxu0
      %v8029 = vpop.f32.mrb[0].mxu0
      %v8030 = vadd.f32 0.0, %v8029
      %v8031 = vpop.f32.mrb[0].mxu0
      %8032 = vmatprep.mubr.bf16.mxu0 0
      %8033 = vmatmul.mubr.bf16.gmra.mrb[0].mxu0 %v7827
      %v8034 = vpop.f32.mrb[0].mxu0
      %v8035 = vadd.f32 0.0, %v8034
      %v8036 = vpop.f32.mrb[0].mxu0
      %v8037 = vpop.f32.mrb[0].mxu0
      %v8038 = vadd.f32 0.0, %v8037
      %v8039 = vpop.f32.mrb[0].mxu0
      %8040 = vmatprep.mubr.bf16.mxu0 0
      %8041 = vmatmul.mubr.bf16.gmra.mrb[0].mxu0 %v7828
      %v8042 = vpop.f32.mrb[0].mxu0
      %v8043 = vadd.f32 0.0, %v8042
      %v8044 = vpop.f32.mrb[0].mxu0
      %v8045 = vpop.f32.mrb[0].mxu0
      %v8046 = vadd.f32 0.0, %v8045
      %v8047 = vpop.f32.mrb[0].mxu0
      %8048 = vmatprep.mubr.bf16.mxu0 0
      %8049 = vmatmul.mubr.bf16.gmra.mrb[0].mxu0 %v7829
      %v8050 = vpop.f32.mrb[0].mxu0
      %v8051 = vadd.f32 0.0, %v8050
      %v8052 = vpop.f32.mrb[0].mxu0
      %v8053 = vpop.f32.mrb[0].mxu0
      %v8054 = vadd.f32 0.0, %v8053
      %v8055 = vpop.f32.mrb[0].mxu0
      %8056 = vmatprep.mubr.bf16.mxu0 0
      %8057 = vmatmul.mubr.bf16.gmra.mrb[0].mxu0 %v7830
      %v8058 = vpop.f32.mrb[0].mxu0
      %v8059 = vadd.f32 0.0, %v8058
      %v8060 = vpop.f32.mrb[0].mxu0
      %v8061 = vpop.f32.mrb[0].mxu0
      %v8062 = vadd.f32 0.0, %v8061
      %v8063 = vpop.f32.mrb[0].mxu0
      %8064 = vmatprep.mubr.bf16.mxu0 0
      %8065 = vmatmul.mubr.bf16.gmra.mrb[0].mxu0 %v7831
      %v8066 = vpop.f32.mrb[0].mxu0
      %v8067 = vadd.f32 0.0, %v8066
      %v8068 = vpop.f32.mrb[0].mxu0
      %v8069 = vpop.f32.mrb[0].mxu0
      %v8070 = vadd.f32 0.0, %v8069
      %v8071 = vpop.f32.mrb[0].mxu0
      %8072 = vmatprep.mubr.bf16.mxu0 0
      %8073 = vmatmul.mubr.bf16.gmra.mrb[0].mxu0 %v7832
      %v8074 = vpop.f32.mrb[0].mxu0
      %v8075 = vadd.f32 0.0, %v8074
      %v8076 = vpop.f32.mrb[0].mxu0
      %v8077 = vpop.f32.mrb[0].mxu0
      %v8078 = vadd.f32 0.0, %v8077
      %v8079 = vpop.f32.mrb[0].mxu0
      %8080 = vmatprep.mubr.bf16.mxu0 0
      %8081 = vmatmul.mubr.bf16.gmra.mrb[0].mxu0 %v7833
      %v8082 = vpop.f32.mrb[0].mxu0
      %v8083 = vadd.f32 0.0, %v8082
      %v8084 = vpop.f32.mrb[0].mxu0
      %v8085 = vpop.f32.mrb[0].mxu0
      %v8086 = vadd.f32 0.0, %v8085
      %v8087 = vpop.f32.mrb[0].mxu0
      %8088 = vmatprep.mubr.bf16.mxu0 0
      %8089 = vmatmul.mubr.bf16.gmra.mrb[0].mxu0 %v7834
      %v8090 = vpop.f32.mrb[0].mxu0
      %v8091 = vadd.f32 0.0, %v8090
      %v8092 = vpop.f32.mrb[0].mxu0
      %v8093 = vpop.f32.mrb[0].mxu0
      %v8094 = vadd.f32 0.0, %v8093
      %v8095 = vpop.f32.mrb[0].mxu0
      %8096 = vmatprep.mubr.bf16.mxu0 0
      %8097 = vmatmul.mubr.bf16.gmra.mrb[0].mxu0 %v7835
      %v8098 = vpop.f32.mrb[0].mxu0
      %v8099 = vadd.f32 0.0, %v8098
      %v8100 = vpop.f32.mrb[0].mxu0
      %v8101 = vpop.f32.mrb[0].mxu0
      %v8102 = vadd.f32 0.0, %v8101
      %v8103 = vpop.f32.mrb[0].mxu0
      %8104 = vmatprep.mubr.bf16.mxu0 0
      %8105 = vmatmul.mubr.bf16.gmra.mrb[0].mxu0 %v7836
      %v8106 = vpop.f32.mrb[0].mxu0
      %v8107 = vadd.f32 0.0, %v8106
      %v8108 = vpop.f32.mrb[0].mxu0
      %v8109 = vpop.f32.mrb[0].mxu0
      %v8110 = vadd.f32 0.0, %v8109
      %v8111 = vpop.f32.mrb[0].mxu0
      %8112 = vmatprep.mubr.bf16.mxu0 0
      %8113 = vmatmul.mubr.bf16.gmra.mrb[0].mxu0 %v7837
      %v8114 = vpop.f32.mrb[0].mxu0
      %v8115 = vadd.f32 0.0, %v8114
      %v8116 = vpop.f32.mrb[0].mxu0
      %v8117 = vpop.f32.mrb[0].mxu0
      %v8118 = vadd.f32 0.0, %v8117
      %v8119 = vpop.f32.mrb[0].mxu0
      %8120 = vmatprep.mubr.bf16.mxu0 0
      %8121 = vmatmul.mubr.bf16.gmra.mrb[0].mxu0 %v7838
      %v8122 = vpop.f32.mrb[0].mxu0
      %v8123 = vadd.f32 0.0, %v8122
      %v8124 = vpop.f32.mrb[0].mxu0
      %v8125 = vpop.f32.mrb[0].mxu0
      %v8126 = vadd.f32 0.0, %v8125
      %v8127 = vpop.f32.mrb[0].mxu0
      %8128 = vdwg.mxu0
      %v8129 = vadd.f32 %v7719, %v7939
      %v8130 = vadd.f32 %v7720, %v7942
      %v8131 = vadd.f32 %v7721, %v7947
      %v8132 = vadd.f32 %v7722, %v7950
      %v8133 = vadd.f32 %v7723, %v7955
      %v8134 = vadd.f32 %v7724, %v7958
      %v8135 = vadd.f32 %v7725, %v7963
      %v8136 = vadd.f32 %v7726, %v7966
      %v8137 = vadd.f32 %v7727, %v7971
      %v8138 = vadd.f32 %v7728, %v7974
      %v8139 = vadd.f32 %v7729, %v7979
      %v8140 = vadd.f32 %v7730, %v7982
      %v8141 = vadd.f32 %v7731, %v7987
      %v8142 = vadd.f32 %v7732, %v7990
      %v8143 = vadd.f32 %v7733, %v7995
      %v8144 = vadd.f32 %v7734, %v7998
      %v8145 = vadd.f32 %v7735, %v8003
      %v8146 = vadd.f32 %v7736, %v8006
      %v8147 = vadd.f32 %v7737, %v8011
      %v8148 = vadd.f32 %v7738, %v8014
      %v8149 = vadd.f32 %v7739, %v8019
      %v8150 = vadd.f32 %v7740, %v8022
      %v8151 = vadd.f32 %v7741, %v8027
      %v8152 = vadd.f32 %v7742, %v8030
      %v8153 = vadd.f32 %v7743, %v8035
      %v8154 = vadd.f32 %v7744, %v8038
      %v8155 = vadd.f32 %v7745, %v8043
      %v8156 = vadd.f32 %v7746, %v8046
      %v8157 = vadd.f32 %v7747, %v8051
      %v8158 = vadd.f32 %v7748, %v8054
      %v8159 = vadd.f32 %v7749, %v8059
      %v8160 = vadd.f32 %v7750, %v8062
      %v8161 = vadd.f32 %v7751, %v8067
      %v8162 = vadd.f32 %v7752, %v8070
      %v8163 = vadd.f32 %v7753, %v8075
      %v8164 = vadd.f32 %v7754, %v8078
      %v8165 = vadd.f32 %v7755, %v8083
      %v8166 = vadd.f32 %v7756, %v8086
      %v8167 = vadd.f32 %v7757, %v8091
      %v8168 = vadd.f32 %v7758, %v8094
      %v8169 = vadd.f32 %v7759, %v8099
      %v8170 = vadd.f32 %v7760, %v8102
      %v8171 = vadd.f32 %v7761, %v8107
      %v8172 = vadd.f32 %v7762, %v8110
      %v8173 = vadd.f32 %v7763, %v8115
      %v8174 = vadd.f32 %v7764, %v8118
      %v8175 = vadd.f32 %v7765, %v8123
      %v8176 = vadd.f32 %v7766, %v8126
      %v8177 = vld [vmem:[#allocation2 + $0x32] sm:$0xff]
      %v8178 = vld [vmem:[#allocation2 + $0x3a] sm:$0xff]
      %v8179 = vld [vmem:[#allocation2 + $0x42] sm:$0xff]
      %v8180 = vld [vmem:[#allocation2 + $0x4a] sm:$0xff]
      %v8181 = vld [vmem:[#allocation2 + $0x52] sm:$0xff]
      %v8182 = vld [vmem:[#allocation2 + $0x5a] sm:$0xff]
      %v8183 = vld [vmem:[#allocation2 + $0x62] sm:$0xff]
      %v8184 = vld [vmem:[#allocation2 + $0x6a] sm:$0xff]
      %v8185 = vld [vmem:[#allocation2 + $0x72] sm:$0xff]
      %v8186 = vld [vmem:[#allocation2 + $0x7a] sm:$0xff]
      %v8187 = vld [vmem:[#allocation2 + $0x82] sm:$0xff]
      %v8188 = vld [vmem:[#allocation2 + $0x8a] sm:$0xff]
      %v8189 = vld [vmem:[#allocation2 + $0x92] sm:$0xff]
      %v8190 = vld [vmem:[#allocation2 + $0x9a] sm:$0xff]
      %v8191 = vld [vmem:[#allocation2 + $0xa2] sm:$0xff]
      %v8192 = vld [vmem:[#allocation2 + $0xaa] sm:$0xff]
      %v8193 = vld [vmem:[#allocation2 + $0xb2] sm:$0xff]
      %v8194 = vld [vmem:[#allocation2 + $0xba] sm:$0xff]
      %v8195 = vld [vmem:[#allocation2 + $0xc2] sm:$0xff]
      %v8196 = vld [vmem:[#allocation2 + $0xca] sm:$0xff]
      %v8197 = vld [vmem:[#allocation2 + $0xd2] sm:$0xff]
      %v8198 = vld [vmem:[#allocation2 + $0xda] sm:$0xff]
      %v8199 = vld [vmem:[#allocation2 + $0xe2] sm:$0xff]
      %v8200 = vld [vmem:[#allocation2 + $0xea] sm:$0xff]
      %v8201 = vld [vmem:[#allocation2 + $0xf2] sm:$0xff]
      %v8202 = vld [vmem:[#allocation2 + $0xfa] sm:$0xff]
      %v8203 = vld [vmem:[#allocation2 + $0x102] sm:$0xff]
      %v8204 = vld [vmem:[#allocation2 + $0x10a] sm:$0xff]
      %v8205 = vld [vmem:[#allocation2 + $0x112] sm:$0xff]
      %v8206 = vld [vmem:[#allocation2 + $0x11a] sm:$0xff]
      %v8207 = vld [vmem:[#allocation2 + $0x122] sm:$0xff]
      %v8208 = vld [vmem:[#allocation2 + $0x12a] sm:$0xff]
      %v8209 = vld [vmem:[#allocation2 + $0x132] sm:$0xff]
      %v8210 = vld [vmem:[#allocation2 + $0x13a] sm:$0xff]
      %v8211 = vld [vmem:[#allocation2 + $0x142] sm:$0xff]
      %v8212 = vld [vmem:[#allocation2 + $0x14a] sm:$0xff]
      %v8213 = vld [vmem:[#allocation2 + $0x152] sm:$0xff]
      %v8214 = vld [vmem:[#allocation2 + $0x15a] sm:$0xff]
      %v8215 = vld [vmem:[#allocation2 + $0x162] sm:$0xff]
      %v8216 = vld [vmem:[#allocation2 + $0x16a] sm:$0xff]
      %v8217 = vld [vmem:[#allocation2 + $0x172] sm:$0xff]
      %v8218 = vld [vmem:[#allocation2 + $0x17a] sm:$0xff]
      %v8219 = vld [vmem:[#allocation2 + $0x182] sm:$0xff]
      %v8220 = vld [vmem:[#allocation2 + $0x18a] sm:$0xff]
      %v8221 = vld [vmem:[#allocation2 + $0x192] sm:$0xff]
      %v8222 = vld [vmem:[#allocation2 + $0x19a] sm:$0xff]
      %v8223 = vld [vmem:[#allocation2 + $0x1a2] sm:$0xff]
      %v8224 = vld [vmem:[#allocation2 + $0x1aa] sm:$0xff]
      %v8225 = vpack.c.bf16 %v8178, %v8177
      %v8226 = vpack.c.bf16 %v8180, %v8179
      %v8227 = vpack.c.bf16 %v8182, %v8181
      %v8228 = vpack.c.bf16 %v8184, %v8183
      %v8229 = vpack.c.bf16 %v8186, %v8185
      %v8230 = vpack.c.bf16 %v8188, %v8187
      %v8231 = vpack.c.bf16 %v8190, %v8189
      %v8232 = vpack.c.bf16 %v8192, %v8191
      %v8233 = vpack.c.bf16 %v8194, %v8193
      %v8234 = vpack.c.bf16 %v8196, %v8195
      %v8235 = vpack.c.bf16 %v8198, %v8197
      %v8236 = vpack.c.bf16 %v8200, %v8199
      %v8237 = vpack.c.bf16 %v8202, %v8201
      %v8238 = vpack.c.bf16 %v8204, %v8203
      %v8239 = vpack.c.bf16 %v8206, %v8205
      %v8240 = vpack.c.bf16 %v8208, %v8207
      %v8241 = vpack.c.bf16 %v8210, %v8209
      %v8242 = vpack.c.bf16 %v8212, %v8211
      %v8243 = vpack.c.bf16 %v8214, %v8213
      %v8244 = vpack.c.bf16 %v8216, %v8215
      %v8245 = vpack.c.bf16 %v8218, %v8217
      %v8246 = vpack.c.bf16 %v8220, %v8219
      %v8247 = vpack.c.bf16 %v8222, %v8221
      %v8248 = vpack.c.bf16 %v8224, %v8223
      %s8249 = scalar_lea.vmem %s1, 1088
      %v8250 = vld [vmem:[%s8249] sm:$0xf]
      %v8251 = vld [vmem:[%s8249 + $0x4] sm:$0xf]
      %v8252 = vld [vmem:[%s8249 + $0x8] sm:$0xf]
      %v8253 = vld [vmem:[%s8249 + $0xc] sm:$0xf]
      %v8254 = vld [vmem:[%s8249 + $0x10] sm:$0xf]
      %v8255 = vld [vmem:[%s8249 + $0x14] sm:$0xf]
      %v8256 = vld [vmem:[%s8249 + $0x18] sm:$0xf]
      %v8257 = vld [vmem:[%s8249 + $0x1c] sm:$0xf]
      %v8258 = vld [vmem:[%s8249 + $0x20] sm:$0xf]
      %v8259 = vld [vmem:[%s8249 + $0x24] sm:$0xf]
      %v8260 = vld [vmem:[%s8249 + $0x28] sm:$0xf]
      %v8261 = vld [vmem:[%s8249 + $0x2c] sm:$0xf]
      %v8262 = vld [vmem:[%s8249 + $0x30] sm:$0xf]
      %v8263 = vld [vmem:[%s8249 + $0x34] sm:$0xf]
      %v8264 = vld [vmem:[%s8249 + $0x38] sm:$0xf]
      %v8265 = vld [vmem:[%s8249 + $0x3c] sm:$0xf]
      %v8282 = vunpack.c.l.b16 %v8250
      %v8283 = vunpack.c.l.b16 %v8251
      %v8284 = vunpack.c.l.b16 %v8252
      %v8285 = vunpack.c.l.b16 %v8253
      %v8286 = vunpack.c.l.b16 %v8254
      %v8287 = vunpack.c.l.b16 %v8255
      %v8288 = vunpack.c.l.b16 %v8256
      %v8289 = vunpack.c.l.b16 %v8257
      %v8290 = vunpack.c.l.b16 %v8258
      %v8291 = vunpack.c.l.b16 %v8259
      %v8292 = vunpack.c.l.b16 %v8260
      %v8293 = vunpack.c.l.b16 %v8261
      %v8294 = vunpack.c.l.b16 %v8262
      %v8295 = vunpack.c.l.b16 %v8263
      %v8296 = vunpack.c.l.b16 %v8264
      %v8297 = vunpack.c.l.b16 %v8265
      %v8298 = vpack.c.b16 %v8283, %v8282
      %v8299 = vpack.c.b16 %v8285, %v8284
      %v8300 = vpack.c.b16 %v8287, %v8286
      %v8301 = vpack.c.b16 %v8289, %v8288
      %v8302 = vpack.c.b16 %v8291, %v8290
      %v8303 = vpack.c.b16 %v8293, %v8292
      %v8304 = vpack.c.b16 %v8295, %v8294
      %v8305 = vpack.c.b16 %v8297, %v8296
      %8314 = vmatprep.subr.bf16.mxu0 0
      %8315 = vmatpush1.bf16.msra.mxu0 %v8298
      %8316 = vmatprep.subr.bf16.mxu0 0
      %8317 = vmatpush1.bf16.msra.mxu0 %v8299
      %8318 = vmatprep.subr.bf16.mxu0 0
      %8319 = vmatpush1.bf16.msra.mxu0 %v8300
      %8320 = vmatprep.subr.bf16.mxu0 0
      %8321 = vmatpush1.bf16.msra.mxu0 %v8301
      %8322 = vmatprep.subr.bf16.mxu0 0
      %8323 = vmatpush1.bf16.msra.mxu0 %v8302
      %8324 = vmatprep.subr.bf16.mxu0 0
      %8325 = vmatpush1.bf16.msra.mxu0 %v8303
      %8326 = vmatprep.subr.bf16.mxu0 0
      %8327 = vmatpush1.bf16.msra.mxu0 %v8304
      %8328 = vmatprep.subr.bf16.mxu0 0
      %8329 = vmatpush1.bf16.msra.mxu0 %v8305
      %8330 = vmatprep.subr.bf16.mxu0 0
      %8331 = vmatpush1.bf16.msra.mxu0 0
      %8332 = vmatprep.subr.bf16.mxu0 0
      %8333 = vmatpush1.bf16.msra.mxu0 0
      %8334 = vmatprep.subr.bf16.mxu0 0
      %8335 = vmatpush1.bf16.msra.mxu0 0
      %8336 = vmatprep.subr.bf16.mxu0 0
      %8337 = vmatpush1.bf16.msra.mxu0 0
      %8338 = vmatprep.subr.bf16.mxu0 0
      %8339 = vmatpush1.bf16.msra.mxu0 0
      %8340 = vmatprep.subr.bf16.mxu0 0
      %8341 = vmatpush1.bf16.msra.mxu0 0
      %8342 = vmatprep.subr.bf16.mxu0 0
      %8343 = vmatpush1.bf16.msra.mxu0 0
      %8344 = vmatprep.subr.bf16.mxu0 0
      %8345 = vmatpush1.bf16.msra.mxu0 0
      %8346 = vmatprep.mubr.bf16.mxu0 0
      %8347 = vmatmul.mubr.bf16.gmra.mrb[0].mxu0 %v8225
      %v8348 = vpop.f32.mrb[0].mxu0
      %v8349 = vadd.f32 0.0, %v8348
      %v8350 = vpop.f32.mrb[0].mxu0
      %v8351 = vpop.f32.mrb[0].mxu0
      %v8352 = vadd.f32 0.0, %v8351
      %v8353 = vpop.f32.mrb[0].mxu0
      %8354 = vmatprep.mubr.bf16.mxu0 0
      %8355 = vmatmul.mubr.bf16.gmra.mrb[0].mxu0 %v8226
      %v8356 = vpop.f32.mrb[0].mxu0
      %v8357 = vadd.f32 0.0, %v8356
      %v8358 = vpop.f32.mrb[0].mxu0
      %v8359 = vpop.f32.mrb[0].mxu0
      %v8360 = vadd.f32 0.0, %v8359
      %v8361 = vpop.f32.mrb[0].mxu0
      %8362 = vmatprep.mubr.bf16.mxu0 0
      %8363 = vmatmul.mubr.bf16.gmra.mrb[0].mxu0 %v8227
      %v8364 = vpop.f32.mrb[0].mxu0
      %v8365 = vadd.f32 0.0, %v8364
      %v8366 = vpop.f32.mrb[0].mxu0
      %v8367 = vpop.f32.mrb[0].mxu0
      %v8368 = vadd.f32 0.0, %v8367
      %v8369 = vpop.f32.mrb[0].mxu0
      %8370 = vmatprep.mubr.bf16.mxu0 0
      %8371 = vmatmul.mubr.bf16.gmra.mrb[0].mxu0 %v8228
      %v8372 = vpop.f32.mrb[0].mxu0
      %v8373 = vadd.f32 0.0, %v8372
      %v8374 = vpop.f32.mrb[0].mxu0
      %v8375 = vpop.f32.mrb[0].mxu0
      %v8376 = vadd.f32 0.0, %v8375
      %v8377 = vpop.f32.mrb[0].mxu0
      %8378 = vmatprep.mubr.bf16.mxu0 0
      %8379 = vmatmul.mubr.bf16.gmra.mrb[0].mxu0 %v8229
      %v8380 = vpop.f32.mrb[0].mxu0
      %v8381 = vadd.f32 0.0, %v8380
      %v8382 = vpop.f32.mrb[0].mxu0
      %v8383 = vpop.f32.mrb[0].mxu0
      %v8384 = vadd.f32 0.0, %v8383
      %v8385 = vpop.f32.mrb[0].mxu0
      %8386 = vmatprep.mubr.bf16.mxu0 0
      %8387 = vmatmul.mubr.bf16.gmra.mrb[0].mxu0 %v8230
      %v8388 = vpop.f32.mrb[0].mxu0
      %v8389 = vadd.f32 0.0, %v8388
      %v8390 = vpop.f32.mrb[0].mxu0
      %v8391 = vpop.f32.mrb[0].mxu0
      %v8392 = vadd.f32 0.0, %v8391
      %v8393 = vpop.f32.mrb[0].mxu0
      %8394 = vmatprep.mubr.bf16.mxu0 0
      %8395 = vmatmul.mubr.bf16.gmra.mrb[0].mxu0 %v8231
      %v8396 = vpop.f32.mrb[0].mxu0
      %v8397 = vadd.f32 0.0, %v8396
      %v8398 = vpop.f32.mrb[0].mxu0
      %v8399 = vpop.f32.mrb[0].mxu0
      %v8400 = vadd.f32 0.0, %v8399
      %v8401 = vpop.f32.mrb[0].mxu0
      %8402 = vmatprep.mubr.bf16.mxu0 0
      %8403 = vmatmul.mubr.bf16.gmra.mrb[0].mxu0 %v8232
      %v8404 = vpop.f32.mrb[0].mxu0
      %v8405 = vadd.f32 0.0, %v8404
      %v8406 = vpop.f32.mrb[0].mxu0
      %v8407 = vpop.f32.mrb[0].mxu0
      %v8408 = vadd.f32 0.0, %v8407
      %v8409 = vpop.f32.mrb[0].mxu0
      %8410 = vmatprep.mubr.bf16.mxu0 0
      %8411 = vmatmul.mubr.bf16.gmra.mrb[0].mxu0 %v8233
      %v8412 = vpop.f32.mrb[0].mxu0
      %v8413 = vadd.f32 0.0, %v8412
      %v8414 = vpop.f32.mrb[0].mxu0
      %v8415 = vpop.f32.mrb[0].mxu0
      %v8416 = vadd.f32 0.0, %v8415
      %v8417 = vpop.f32.mrb[0].mxu0
      %8418 = vmatprep.mubr.bf16.mxu0 0
      %8419 = vmatmul.mubr.bf16.gmra.mrb[0].mxu0 %v8234
      %v8420 = vpop.f32.mrb[0].mxu0
      %v8421 = vadd.f32 0.0, %v8420
      %v8422 = vpop.f32.mrb[0].mxu0
      %v8423 = vpop.f32.mrb[0].mxu0
      %v8424 = vadd.f32 0.0, %v8423
      %v8425 = vpop.f32.mrb[0].mxu0
      %8426 = vmatprep.mubr.bf16.mxu0 0
      %8427 = vmatmul.mubr.bf16.gmra.mrb[0].mxu0 %v8235
      %v8428 = vpop.f32.mrb[0].mxu0
      %v8429 = vadd.f32 0.0, %v8428
      %v8430 = vpop.f32.mrb[0].mxu0
      %v8431 = vpop.f32.mrb[0].mxu0
      %v8432 = vadd.f32 0.0, %v8431
      %v8433 = vpop.f32.mrb[0].mxu0
      %8434 = vmatprep.mubr.bf16.mxu0 0
      %8435 = vmatmul.mubr.bf16.gmra.mrb[0].mxu0 %v8236
      %v8436 = vpop.f32.mrb[0].mxu0
      %v8437 = vadd.f32 0.0, %v8436
      %v8438 = vpop.f32.mrb[0].mxu0
      %v8439 = vpop.f32.mrb[0].mxu0
      %v8440 = vadd.f32 0.0, %v8439
      %v8441 = vpop.f32.mrb[0].mxu0
      %8442 = vmatprep.mubr.bf16.mxu0 0
      %8443 = vmatmul.mubr.bf16.gmra.mrb[0].mxu0 %v8237
      %v8444 = vpop.f32.mrb[0].mxu0
      %v8445 = vadd.f32 0.0, %v8444
      %v8446 = vpop.f32.mrb[0].mxu0
      %v8447 = vpop.f32.mrb[0].mxu0
      %v8448 = vadd.f32 0.0, %v8447
      %v8449 = vpop.f32.mrb[0].mxu0
      %8450 = vmatprep.mubr.bf16.mxu0 0
      %8451 = vmatmul.mubr.bf16.gmra.mrb[0].mxu0 %v8238
      %v8452 = vpop.f32.mrb[0].mxu0
      %v8453 = vadd.f32 0.0, %v8452
      %v8454 = vpop.f32.mrb[0].mxu0
      %v8455 = vpop.f32.mrb[0].mxu0
      %v8456 = vadd.f32 0.0, %v8455
      %v8457 = vpop.f32.mrb[0].mxu0
      %8458 = vmatprep.mubr.bf16.mxu0 0
      %8459 = vmatmul.mubr.bf16.gmra.mrb[0].mxu0 %v8239
      %v8460 = vpop.f32.mrb[0].mxu0
      %v8461 = vadd.f32 0.0, %v8460
      %v8462 = vpop.f32.mrb[0].mxu0
      %v8463 = vpop.f32.mrb[0].mxu0
      %v8464 = vadd.f32 0.0, %v8463
      %v8465 = vpop.f32.mrb[0].mxu0
      %8466 = vmatprep.mubr.bf16.mxu0 0
      %8467 = vmatmul.mubr.bf16.gmra.mrb[0].mxu0 %v8240
      %v8468 = vpop.f32.mrb[0].mxu0
      %v8469 = vadd.f32 0.0, %v8468
      %v8470 = vpop.f32.mrb[0].mxu0
      %v8471 = vpop.f32.mrb[0].mxu0
      %v8472 = vadd.f32 0.0, %v8471
      %v8473 = vpop.f32.mrb[0].mxu0
      %8474 = vmatprep.mubr.bf16.mxu0 0
      %8475 = vmatmul.mubr.bf16.gmra.mrb[0].mxu0 %v8241
      %v8476 = vpop.f32.mrb[0].mxu0
      %v8477 = vadd.f32 0.0, %v8476
      %v8478 = vpop.f32.mrb[0].mxu0
      %v8479 = vpop.f32.mrb[0].mxu0
      %v8480 = vadd.f32 0.0, %v8479
      %v8481 = vpop.f32.mrb[0].mxu0
      %8482 = vmatprep.mubr.bf16.mxu0 0
      %8483 = vmatmul.mubr.bf16.gmra.mrb[0].mxu0 %v8242
      %v8484 = vpop.f32.mrb[0].mxu0
      %v8485 = vadd.f32 0.0, %v8484
      %v8486 = vpop.f32.mrb[0].mxu0
      %v8487 = vpop.f32.mrb[0].mxu0
      %v8488 = vadd.f32 0.0, %v8487
      %v8489 = vpop.f32.mrb[0].mxu0
      %8490 = vmatprep.mubr.bf16.mxu0 0
      %8491 = vmatmul.mubr.bf16.gmra.mrb[0].mxu0 %v8243
      %v8492 = vpop.f32.mrb[0].mxu0
      %v8493 = vadd.f32 0.0, %v8492
      %v8494 = vpop.f32.mrb[0].mxu0
      %v8495 = vpop.f32.mrb[0].mxu0
      %v8496 = vadd.f32 0.0, %v8495
      %v8497 = vpop.f32.mrb[0].mxu0
      %8498 = vmatprep.mubr.bf16.mxu0 0
      %8499 = vmatmul.mubr.bf16.gmra.mrb[0].mxu0 %v8244
      %v8500 = vpop.f32.mrb[0].mxu0
      %v8501 = vadd.f32 0.0, %v8500
      %v8502 = vpop.f32.mrb[0].mxu0
      %v8503 = vpop.f32.mrb[0].mxu0
      %v8504 = vadd.f32 0.0, %v8503
      %v8505 = vpop.f32.mrb[0].mxu0
      %8506 = vmatprep.mubr.bf16.mxu0 0
      %8507 = vmatmul.mubr.bf16.gmra.mrb[0].mxu0 %v8245
      %v8508 = vpop.f32.mrb[0].mxu0
      %v8509 = vadd.f32 0.0, %v8508
      %v8510 = vpop.f32.mrb[0].mxu0
      %v8511 = vpop.f32.mrb[0].mxu0
      %v8512 = vadd.f32 0.0, %v8511
      %v8513 = vpop.f32.mrb[0].mxu0
      %8514 = vmatprep.mubr.bf16.mxu0 0
      %8515 = vmatmul.mubr.bf16.gmra.mrb[0].mxu0 %v8246
      %v8516 = vpop.f32.mrb[0].mxu0
      %v8517 = vadd.f32 0.0, %v8516
      %v8518 = vpop.f32.mrb[0].mxu0
      %v8519 = vpop.f32.mrb[0].mxu0
      %v8520 = vadd.f32 0.0, %v8519
      %v8521 = vpop.f32.mrb[0].mxu0
      %8522 = vmatprep.mubr.bf16.mxu0 0
      %8523 = vmatmul.mubr.bf16.gmra.mrb[0].mxu0 %v8247
      %v8524 = vpop.f32.mrb[0].mxu0
      %v8525 = vadd.f32 0.0, %v8524
      %v8526 = vpop.f32.mrb[0].mxu0
      %v8527 = vpop.f32.mrb[0].mxu0
      %v8528 = vadd.f32 0.0, %v8527
      %v8529 = vpop.f32.mrb[0].mxu0
      %8530 = vmatprep.mubr.bf16.mxu0 0
      %8531 = vmatmul.mubr.bf16.gmra.mrb[0].mxu0 %v8248
      %v8532 = vpop.f32.mrb[0].mxu0
      %v8533 = vadd.f32 0.0, %v8532
      %v8534 = vpop.f32.mrb[0].mxu0
      %v8535 = vpop.f32.mrb[0].mxu0
      %v8536 = vadd.f32 0.0, %v8535
      %v8537 = vpop.f32.mrb[0].mxu0
      %8538 = vdwg.mxu0
      %v8539 = vadd.f32 %v8129, %v8349
      %v8540 = vadd.f32 %v8130, %v8352
      %v8541 = vadd.f32 %v8131, %v8357
      %v8542 = vadd.f32 %v8132, %v8360
      %v8543 = vadd.f32 %v8133, %v8365
      %v8544 = vadd.f32 %v8134, %v8368
      %v8545 = vadd.f32 %v8135, %v8373
      %v8546 = vadd.f32 %v8136, %v8376
      %v8547 = vadd.f32 %v8137, %v8381
      %v8548 = vadd.f32 %v8138, %v8384
      %v8549 = vadd.f32 %v8139, %v8389
      %v8550 = vadd.f32 %v8140, %v8392
      %v8551 = vadd.f32 %v8141, %v8397
      %v8552 = vadd.f32 %v8142, %v8400
      %v8553 = vadd.f32 %v8143, %v8405
      %v8554 = vadd.f32 %v8144, %v8408
      %v8555 = vadd.f32 %v8145, %v8413
      %v8556 = vadd.f32 %v8146, %v8416
      %v8557 = vadd.f32 %v8147, %v8421
      %v8558 = vadd.f32 %v8148, %v8424
      %v8559 = vadd.f32 %v8149, %v8429
      %v8560 = vadd.f32 %v8150, %v8432
      %v8561 = vadd.f32 %v8151, %v8437
      %v8562 = vadd.f32 %v8152, %v8440
      %v8563 = vadd.f32 %v8153, %v8445
      %v8564 = vadd.f32 %v8154, %v8448
      %v8565 = vadd.f32 %v8155, %v8453
      %v8566 = vadd.f32 %v8156, %v8456
      %v8567 = vadd.f32 %v8157, %v8461
      %v8568 = vadd.f32 %v8158, %v8464
      %v8569 = vadd.f32 %v8159, %v8469
      %v8570 = vadd.f32 %v8160, %v8472
      %v8571 = vadd.f32 %v8161, %v8477
      %v8572 = vadd.f32 %v8162, %v8480
      %v8573 = vadd.f32 %v8163, %v8485
      %v8574 = vadd.f32 %v8164, %v8488
      %v8575 = vadd.f32 %v8165, %v8493
      %v8576 = vadd.f32 %v8166, %v8496
      %v8577 = vadd.f32 %v8167, %v8501
      %v8578 = vadd.f32 %v8168, %v8504
      %v8579 = vadd.f32 %v8169, %v8509
      %v8580 = vadd.f32 %v8170, %v8512
      %v8581 = vadd.f32 %v8171, %v8517
      %v8582 = vadd.f32 %v8172, %v8520
      %v8583 = vadd.f32 %v8173, %v8525
      %v8584 = vadd.f32 %v8174, %v8528
      %v8585 = vadd.f32 %v8175, %v8533
      %v8586 = vadd.f32 %v8176, %v8536
      %s8587 = scalar_lea.vmem %s2, 1
      %v8588 = vld [vmem:[%s8587] sm:$0x1]
      %v8590 = vlaneseq
      %v8591 = vshrl.u32 %v8590, 7
      %v8592 = vsub.s32 0, %v8591
      %v8593 = vrot.slane %v8588, %v8592
      %v8595 = vadd.f32 %v8539, %v8593
      %v8596 = vadd.f32 %v8540, %v8593
      %v8597 = vadd.f32 %v8541, %v8593
      %v8598 = vadd.f32 %v8542, %v8593
      %v8599 = vadd.f32 %v8543, %v8593
      %v8600 = vadd.f32 %v8544, %v8593
      %v8601 = vadd.f32 %v8545, %v8593
      %v8602 = vadd.f32 %v8546, %v8593
      %v8603 = vadd.f32 %v8547, %v8593
      %v8604 = vadd.f32 %v8548, %v8593
      %v8605 = vadd.f32 %v8549, %v8593
      %v8606 = vadd.f32 %v8550, %v8593
      %v8607 = vadd.f32 %v8551, %v8593
      %v8608 = vadd.f32 %v8552, %v8593
      %v8609 = vadd.f32 %v8553, %v8593
      %v8610 = vadd.f32 %v8554, %v8593
      %v8611 = vadd.f32 %v8555, %v8593
      %v8612 = vadd.f32 %v8556, %v8593
      %v8613 = vadd.f32 %v8557, %v8593
      %v8614 = vadd.f32 %v8558, %v8593
      %v8615 = vadd.f32 %v8559, %v8593
      %v8616 = vadd.f32 %v8560, %v8593
      %v8617 = vadd.f32 %v8561, %v8593
      %v8618 = vadd.f32 %v8562, %v8593
      %v8619 = vadd.f32 %v8563, %v8593
      %v8620 = vadd.f32 %v8564, %v8593
      %v8621 = vadd.f32 %v8565, %v8593
      %v8622 = vadd.f32 %v8566, %v8593
      %v8623 = vadd.f32 %v8567, %v8593
      %v8624 = vadd.f32 %v8568, %v8593
      %v8625 = vadd.f32 %v8569, %v8593
      %v8626 = vadd.f32 %v8570, %v8593
      %v8627 = vadd.f32 %v8571, %v8593
      %v8628 = vadd.f32 %v8572, %v8593
      %v8629 = vadd.f32 %v8573, %v8593
      %v8630 = vadd.f32 %v8574, %v8593
      %v8631 = vadd.f32 %v8575, %v8593
      %v8632 = vadd.f32 %v8576, %v8593
      %v8633 = vadd.f32 %v8577, %v8593
      %v8634 = vadd.f32 %v8578, %v8593
      %v8635 = vadd.f32 %v8579, %v8593
      %v8636 = vadd.f32 %v8580, %v8593
      %v8637 = vadd.f32 %v8581, %v8593
      %v8638 = vadd.f32 %v8582, %v8593
      %v8639 = vadd.f32 %v8583, %v8593
      %v8640 = vadd.f32 %v8584, %v8593
      %v8641 = vadd.f32 %v8585, %v8593
      %v8642 = vadd.f32 %v8586, %v8593
      %v8643 = vmax.f32 %v8595, 0.0
      %v8644 = vmax.f32 %v8596, 0.0
      %v8645 = vmax.f32 %v8597, 0.0
      %v8646 = vmax.f32 %v8598, 0.0
      %v8647 = vmax.f32 %v8599, 0.0
      %v8648 = vmax.f32 %v8600, 0.0
      %v8649 = vmax.f32 %v8601, 0.0
      %v8650 = vmax.f32 %v8602, 0.0
      %v8651 = vmax.f32 %v8603, 0.0
      %v8652 = vmax.f32 %v8604, 0.0
      %v8653 = vmax.f32 %v8605, 0.0
      %v8654 = vmax.f32 %v8606, 0.0
      %v8655 = vmax.f32 %v8607, 0.0
      %v8656 = vmax.f32 %v8608, 0.0
      %v8657 = vmax.f32 %v8609, 0.0
      %v8658 = vmax.f32 %v8610, 0.0
      %v8659 = vmax.f32 %v8611, 0.0
      %v8660 = vmax.f32 %v8612, 0.0
      %v8661 = vmax.f32 %v8613, 0.0
      %v8662 = vmax.f32 %v8614, 0.0
      %v8663 = vmax.f32 %v8615, 0.0
      %v8664 = vmax.f32 %v8616, 0.0
      %v8665 = vmax.f32 %v8617, 0.0
      %v8666 = vmax.f32 %v8618, 0.0
      %v8667 = vmax.f32 %v8619, 0.0
      %v8668 = vmax.f32 %v8620, 0.0
      %v8669 = vmax.f32 %v8621, 0.0
      %v8670 = vmax.f32 %v8622, 0.0
      %v8671 = vmax.f32 %v8623, 0.0
      %v8672 = vmax.f32 %v8624, 0.0
      %v8673 = vmax.f32 %v8625, 0.0
      %v8674 = vmax.f32 %v8626, 0.0
      %v8675 = vmax.f32 %v8627, 0.0
      %v8676 = vmax.f32 %v8628, 0.0
      %v8677 = vmax.f32 %v8629, 0.0
      %v8678 = vmax.f32 %v8630, 0.0
      %v8679 = vmax.f32 %v8631, 0.0
      %v8680 = vmax.f32 %v8632, 0.0
      %v8681 = vmax.f32 %v8633, 0.0
      %v8682 = vmax.f32 %v8634, 0.0
      %v8683 = vmax.f32 %v8635, 0.0
      %v8684 = vmax.f32 %v8636, 0.0
      %v8685 = vmax.f32 %v8637, 0.0
      %v8686 = vmax.f32 %v8638, 0.0
      %v8687 = vmax.f32 %v8639, 0.0
      %v8688 = vmax.f32 %v8640, 0.0
      %v8689 = vmax.f32 %v8641, 0.0
      %v8690 = vmax.f32 %v8642, 0.0
      %8691 = vst.msk [vmem:[%s170] sm:$0xff] %vm281, %v8643
      %8692 = vst.msk [vmem:[%s170 + $0x8] sm:$0xff] %vm281, %v8644
      %8693 = vst.msk [vmem:[%s170 + $0x10] sm:$0xff] %vm281, %v8645
      %8694 = vst.msk [vmem:[%s170 + $0x18] sm:$0xff] %vm281, %v8646
      %8695 = vst.msk [vmem:[%s170 + $0x20] sm:$0xff] %vm281, %v8647
      %8696 = vst.msk [vmem:[%s170 + $0x28] sm:$0xff] %vm281, %v8648
      %8697 = vst.msk [vmem:[%s170 + $0x30] sm:$0xff] %vm281, %v8649
      %8698 = vst.msk [vmem:[%s170 + $0x38] sm:$0xff] %vm281, %v8650
      %8699 = vst.msk [vmem:[%s170 + $0x40] sm:$0xff] %vm281, %v8651
      %8700 = vst.msk [vmem:[%s170 + $0x48] sm:$0xff] %vm281, %v8652
      %8701 = vst.msk [vmem:[%s170 + $0x50] sm:$0xff] %vm281, %v8653
      %8702 = vst.msk [vmem:[%s170 + $0x58] sm:$0xff] %vm281, %v8654
      %8703 = vst.msk [vmem:[%s170 + $0x60] sm:$0xff] %vm281, %v8655
      %8704 = vst.msk [vmem:[%s170 + $0x68] sm:$0xff] %vm281, %v8656
      %8705 = vst.msk [vmem:[%s170 + $0x70] sm:$0xff] %vm281, %v8657
      %8706 = vst.msk [vmem:[%s170 + $0x78] sm:$0xff] %vm281, %v8658
      %8707 = vst.msk [vmem:[%s170 + $0x80] sm:$0xff] %vm281, %v8659
      %8708 = vst.msk [vmem:[%s170 + $0x88] sm:$0xff] %vm281, %v8660
      %8709 = vst.msk [vmem:[%s170 + $0x90] sm:$0xff] %vm281, %v8661
      %8710 = vst.msk [vmem:[%s170 + $0x98] sm:$0xff] %vm281, %v8662
      %8711 = vst.msk [vmem:[%s170 + $0xa0] sm:$0xff] %vm281, %v8663
      %8712 = vst.msk [vmem:[%s170 + $0xa8] sm:$0xff] %vm281, %v8664
      %8713 = vst.msk [vmem:[%s170 + $0xb0] sm:$0xff] %vm281, %v8665
      %8714 = vst.msk [vmem:[%s170 + $0xb8] sm:$0xff] %vm281, %v8666
      %8715 = vst.msk [vmem:[%s170 + $0xc0] sm:$0xff] %vm281, %v8667
      %8716 = vst.msk [vmem:[%s170 + $0xc8] sm:$0xff] %vm281, %v8668
      %8717 = vst.msk [vmem:[%s170 + $0xd0] sm:$0xff] %vm281, %v8669
      %8718 = vst.msk [vmem:[%s170 + $0xd8] sm:$0xff] %vm281, %v8670
      %8719 = vst.msk [vmem:[%s170 + $0xe0] sm:$0xff] %vm281, %v8671
      %8720 = vst.msk [vmem:[%s170 + $0xe8] sm:$0xff] %vm281, %v8672
      %8721 = vst.msk [vmem:[%s170 + $0xf0] sm:$0xff] %vm281, %v8673
      %8722 = vst.msk [vmem:[%s170 + $0xf8] sm:$0xff] %vm281, %v8674
      %8723 = vst.msk [vmem:[%s170 + $0x100] sm:$0xff] %vm281, %v8675
      %8724 = vst.msk [vmem:[%s170 + $0x108] sm:$0xff] %vm281, %v8676
      %8725 = vst.msk [vmem:[%s170 + $0x110] sm:$0xff] %vm281, %v8677
      %8726 = vst.msk [vmem:[%s170 + $0x118] sm:$0xff] %vm281, %v8678
      %8727 = vst.msk [vmem:[%s170 + $0x120] sm:$0xff] %vm281, %v8679
      %8728 = vst.msk [vmem:[%s170 + $0x128] sm:$0xff] %vm281, %v8680
      %8729 = vst.msk [vmem:[%s170 + $0x130] sm:$0xff] %vm281, %v8681
      %8730 = vst.msk [vmem:[%s170 + $0x138] sm:$0xff] %vm281, %v8682
      %8731 = vst.msk [vmem:[%s170 + $0x140] sm:$0xff] %vm281, %v8683
      %8732 = vst.msk [vmem:[%s170 + $0x148] sm:$0xff] %vm281, %v8684
      %8733 = vst.msk [vmem:[%s170 + $0x150] sm:$0xff] %vm281, %v8685
      %8734 = vst.msk [vmem:[%s170 + $0x158] sm:$0xff] %vm281, %v8686
      %8735 = vst.msk [vmem:[%s170 + $0x160] sm:$0xff] %vm281, %v8687
      %8736 = vst.msk [vmem:[%s170 + $0x168] sm:$0xff] %vm281, %v8688
      %8737 = vst.msk [vmem:[%s170 + $0x170] sm:$0xff] %vm281, %v8689
      %8738 = vst.msk [vmem:[%s170 + $0x178] sm:$0xff] %vm281, %v8690
      %p8739 = scmp.lt.s32.totalorder %s14, 1
      %s8740 = scalar_select %p8739, %s14, 1
      %s8741 = smul.addr %s8740, 48
      %s8742 = smul.addr %s8741, 8
      %s8743 = scalar_lea.vmem %s3, %s8742
      // Predicated region
      $region33: #{_dense_block_forward.1} parent=31 // pred_check
        %p8744 = pneg %p100
      $region34: #{_dense_block_forward.1} parent=31 // pred_check_branch
        %8746 = sbr.rel (%p8744) target = $region36
      $region35: #{_dense_block_forward.1} parent=31 // pred_region
        _
      $region36: #{_dense_block_forward.1} parent=31 // pred_fallthru
        _
    $region32: #{_dense_block_forward.1} parent=5 // pred_fallthru
      _
    %p8747 = scmp.le.s32.totalorder 2, %s9
    // Predicated region
    $region37: #{_dense_block_forward.1} parent=5 // pred_check
      %p8748 = pneg %p8747
    $region38: #{_dense_block_forward.1} parent=5 // pred_check_branch
      %8750 = sbr.rel (%p8748) target = $region40
    $region39: #{_dense_block_forward.1} parent=5 // pred_region
      %s8751 = ssub.s32 %s9, 2
      // Predicated region
      $region41: #{_dense_block_forward.1} parent=39 // pred_check
        %p8752 = pneg %p106
      $region42: #{_dense_block_forward.1} parent=39 // pred_check_branch
        %8754 = sbr.rel (%p8752) target = $region44
      $region43: #{_dense_block_forward.1} parent=39 // pred_region
        %p8755 = scmp.lt.s32.totalorder %s15, 1
        %s8756 = scalar_select %p8755, %s15, 1
        %s8757 = smul.addr %s8756, 48
        %s8758 = smul.addr %s8757, 8
        %s8759 = scalar_lea.vmem %s3, %s8758
      $region44: #{_dense_block_forward.1} parent=39 // pred_fallthru
        _
    $region40: #{_dense_block_forward.1} parent=5 // pred_fallthru
      _
  $region6: #{_dense_block_forward.1} parent=0 // loop_footer
    %s13 = sadd.s32 1, %s9
  $region7: #{_dense_block_forward.1} parent=0 // loop_footer_branch
    %8 = sbr.rel target = $region3
  $region8: #{_dense_block_forward.1} parent=0 // loop_exit
    _

</llo_original>
